<compile_context>
chip_gen: v6e
topology: v6e:2x2x1
jax: 0.10.0
libtpu: 0.0.40
codegen_flags: <defaults>
</compile_context>

<pallas_src>
import math
import jax
import jax.numpy as jnp
from jax.experimental import pallas as pl
from jax.experimental.pallas import tpu as pltpu

BN_EPS = 1e-5


# ------------------------------ fused kernel --------------------------------

def _make_emcam_kernel(EXc, NC, H, W):
    HW = H * W
    PAD = -(-(3 * W + 3) // 128) * 128       # lane-aligned pad covering 7x7 / 5x5 overhang
    CTR = PAD
    BUFW = PAD + HW + PAD

    def kernel(x_ref, cab_w1t_ref, cab_w2_ref, sab_w_ref, mask_ref,
               p1w_ref, p1b_ref, dw1_ref, dw3_ref, dw5_ref, dwb_ref,
               p2w_ref, p2b_ref, o_ref, sab_pad, dw_pad):
        x = x_ref[0]                                          # (C, HW)

        # Hoisted column-validity mask rows (offset -3..+3 -> row off+3), (1, HW) each.
        mrow = {off: mask_ref[off + 3] for off in (-3, -2, -1, 1, 2, 3)}

        # Zero the 128-lane pad strips (aligned, full-vreg stores).  Unconditional:
        # the batch axis is "parallel", so with 2 TensorCores the second core never
        # executes program_id==0 and a pl.when guard would leave its pads garbage.
        sab_pad[:, :, 0:PAD] = jnp.zeros((2, 1, PAD), jnp.float32)
        sab_pad[:, :, PAD + HW:BUFW] = jnp.zeros((2, 1, PAD), jnp.float32)
        dw_pad[:, 0:PAD] = jnp.zeros((EXc, PAD), jnp.float32)
        dw_pad[:, PAD + HW:BUFW] = jnp.zeros((EXc, PAD), jnp.float32)

        # ---- CAB: channel attention (avg/max pool over lanes + tiny MLP) ----
        avg = jnp.mean(x, axis=1, keepdims=True)              # (C, 1)
        mx = jnp.max(x, axis=1, keepdims=True)                # (C, 1)

        def mlp(v):                                           # v: (C, 1)
            h = jnp.maximum(
                jnp.sum(cab_w1t_ref[...] * v, axis=0, keepdims=True), 0.0)   # (1, R)
            return jnp.sum(cab_w2_ref[...] * h, axis=1, keepdims=True)       # (C, 1)

        att_c = jax.nn.sigmoid(mlp(avg) + mlp(mx))
        d1 = x * att_c                                        # (C, HW)

        # ---- SAB: 7x7 conv over [mean_c, max_c], taps grouped by column offset ----
        sab_pad[0, :, CTR:CTR + HW] = jnp.mean(d1, axis=0, keepdims=True)
        sab_pad[1, :, CTR:CTR + HW] = jnp.max(d1, axis=0, keepdims=True)

        acc = jnp.zeros((1, HW), jnp.float32)
        for djo in range(-3, 4):
            grp = jnp.zeros((1, HW), jnp.float32)
            for dio in range(-3, 4):
                base = CTR + dio * W + djo
                t = (dio + 3) * 7 + (djo + 3)
                grp = grp + sab_w_ref[0, t] * sab_pad[0, :, base:base + HW] \
                          + sab_w_ref[1, t] * sab_pad[1, :, base:base + HW]
            acc = acc + (grp if djo == 0 else grp * mrow[djo])
        d1 = d1 * jax.nn.sigmoid(acc)                         # (C, HW)

        # ---- MSCB: pconv1 -> MSDC -> pconv2, processed in EXc-channel chunks ----
        o_ref[0] = d1 + p2b_ref[...]                          # skip connection + pconv2 BN bias

        @pl.loop(0, NC)
        def _mscb_chunk(c):
            # pconv1 (BN folded) + ReLU for this chunk of expanded channels.
            pout = jnp.maximum(
                jnp.dot(p1w_ref[c], d1, preferred_element_type=jnp.float32)
                + p1b_ref[c], 0.0)                            # (EXc, HW)
            dw_pad[:, CTR:CTR + HW] = pout                    # lane-aligned center store

            # Merged k=3 / k=5 depthwise taps: each shifted slice is loaded once;
            # the column-wrap mask is applied once per column-offset group.
            w3 = dw3_ref[c]                                   # (EXc, 9)
            w5 = dw5_ref[c]                                   # (EXc, 25)
            acc3 = jnp.zeros((EXc, HW), jnp.float32)
            acc5 = jnp.zeros((EXc, HW), jnp.float32)
            for djo in range(-2, 3):
                g5 = jnp.zeros((EXc, HW), jnp.float32)
                g3 = jnp.zeros((EXc, HW), jnp.float32) if abs(djo) <= 1 else None
                for dio in range(-2, 3):
                    base = CTR + dio * W + djo
                    s = dw_pad[:, base:base + HW]             # shared (EXc, HW) slice
                    t5 = (dio + 2) * 5 + (djo + 2)
                    g5 = g5 + w5[:, t5:t5 + 1] * s
                    if abs(dio) <= 1 and abs(djo) <= 1:
                        t3 = (dio + 1) * 3 + (djo + 1)
                        g3 = g3 + w3[:, t3:t3 + 1] * s
                if djo != 0:
                    g5 = g5 * mrow[djo]
                    if g3 is not None:
                        g3 = g3 * mrow[djo]
                acc5 = acc5 + g5
                if g3 is not None:
                    acc3 = acc3 + g3

            # ReLU6 per scale (BN biases folded), summed (dw_parallel=True, add=True).
            dwb = dwb_ref[c]                                  # (EXc, 3)
            pc = dw_pad[:, CTR:CTR + HW]                      # aligned reload (pout dead across taps)
            dsum = jnp.clip(pc * dw1_ref[c] + dwb[:, 0:1], 0.0, 6.0)
            dsum = dsum + jnp.clip(acc3 + dwb[:, 1:2], 0.0, 6.0)
            dsum = dsum + jnp.clip(acc5 + dwb[:, 2:3], 0.0, 6.0)

            # pconv2 (shuffle + BN folded) accumulated straight into the output block.
            o_ref[0] = o_ref[0] + jnp.dot(p2w_ref[c], dsum,
                                          preferred_element_type=jnp.float32)

    return kernel, BUFW


# ------------------------- params: init & one-time prep ----------------------

def _bn_fold(gamma, beta, rmean, rvar):
    scale = gamma / jnp.sqrt(rvar + BN_EPS)
    bias = beta - rmean * scale
    return scale, bias


def init_emcam_params(key, in_channels, out_channels=None, expansion_factor=6, ratio=16):
    """Deterministic synthetic init matching the module's init_weights('normal')."""
    if out_channels is None:
        out_channels = in_channels
    C, Cout = in_channels, out_channels
    assert C == Cout, "this implementation covers the default in_channels == out_channels"
    EX = int(C * expansion_factor)
    r = ratio if C >= ratio else C
    R = max(C // r, 1)
    std = 0.02
    ks = jax.random.split(key, 8)
    norm = lambda k, shape: std * jax.random.normal(k, shape, jnp.float32)
    ones = lambda shape: jnp.ones(shape, jnp.float32)
    zeros = lambda shape: jnp.zeros(shape, jnp.float32)
    return dict(
        cab_fc1_w=norm(ks[0], (R, C)),          # torch Conv2d(C,R,1) weight
        cab_fc2_w=norm(ks[1], (C, R)),          # torch Conv2d(R,C,1) weight
        sab_w=norm(ks[2], (2, 49)),             # torch Conv2d(2,1,7) weight
        pconv1_w=norm(ks[3], (EX, C)),          # torch Conv2d(C,EX,1)
        bn1_g=ones((EX,)), bn1_b=zeros((EX,)), bn1_rm=zeros((EX,)), bn1_rv=ones((EX,)),
        dw1_w=norm(ks[4], (1, EX)),             # depthwise k=1: (1*1, EX)
        dw3_w=norm(ks[5], (9, EX)),             # depthwise k=3: (3*3, EX)
        dw5_w=norm(ks[6], (25, EX)),            # depthwise k=5: (5*5, EX)
        bn_dw_g=ones((3, EX)), bn_dw_b=zeros((3, EX)),
        bn_dw_rm=zeros((3, EX)), bn_dw_rv=ones((3, EX)),
        pconv2_w=norm(ks[7], (Cout, EX)),       # torch Conv2d(EX,Cout,1)
        bn2_g=ones((Cout,)), bn2_b=zeros((Cout,)), bn2_rm=zeros((Cout,)), bn2_rv=ones((Cout,)),
    )


def prepare_emcam_params(p, H, W, ex_chunk=32):
    """One-time host-side preprocessing (outside jit): fold eval-mode BN into the
    conv weights, fold the channel shuffle into the pconv2 weight, split every
    EX-dimension weight into EXc-channel chunks (leading chunk axis), and build
    the column-offset validity mask table."""
    HW = H * W
    EX, C = p['pconv1_w'].shape
    Cout = p['pconv2_w'].shape[0]

    EXc = next((c for c in (ex_chunk, 32, 16, 8) if EX % c == 0), EX)
    NC = EX // EXc

    s1, b1 = _bn_fold(p['bn1_g'], p['bn1_b'], p['bn1_rm'], p['bn1_rv'])
    s_dw, b_dw = _bn_fold(p['bn_dw_g'], p['bn_dw_b'], p['bn_dw_rm'], p['bn_dw_rv'])
    s2, b2 = _bn_fold(p['bn2_g'], p['bn2_b'], p['bn2_rm'], p['bn2_rv'])

    # channel shuffle folded into pconv2 weight (m = post-shuffle position)
    groups = math.gcd(EX, Cout)
    cpg = EX // groups
    m = jnp.arange(EX)
    n_of_m = (m % cpg) * groups + (m // cpg)
    w2_eff = p['pconv2_w'][:, n_of_m] * s2[:, None]                 # (Cout, EX)

    # column-offset validity masks for offsets -3..+3 on the flattened HW axis
    j = jnp.arange(HW) % W
    mask = jnp.stack([((j + off >= 0) & (j + off < W)).astype(jnp.float32)
                      for off in range(-3, 4)], axis=0)             # (7, HW)

    return dict(
        cab_w1t=p['cab_fc1_w'].T,                                   # (C, R)
        cab_w2=p['cab_fc2_w'],                                      # (C, R)
        sab_w=p['sab_w'],                                           # (2, 49)
        mask=mask.reshape(7, 1, HW),                                # (7, 1, HW)
        p1w=(p['pconv1_w'] * s1[:, None]).reshape(NC, EXc, C),      # (NC, EXc, C)
        p1b=b1.reshape(NC, EXc, 1),                                 # (NC, EXc, 1)
        dw1=(p['dw1_w'][0] * s_dw[0]).reshape(NC, EXc, 1),          # (NC, EXc, 1)
        dw3=(p['dw3_w'] * s_dw[1][None, :]).T.reshape(NC, EXc, 9),  # (NC, EXc, 9)
        dw5=(p['dw5_w'] * s_dw[2][None, :]).T.reshape(NC, EXc, 25), # (NC, EXc, 25)
        dwb=b_dw.T.reshape(NC, EXc, 3),                             # (NC, EXc, 3)
        p2w=w2_eff.reshape(Cout, NC, EXc).transpose(1, 0, 2),       # (NC, Cout, EXc)
        p2b=b2[:, None],                                            # (Cout, 1)
    )


# ------------------------------ forward wrapper ------------------------------

def emcam_forward(x_nchw, pp):
    B, C, H, W = x_nchw.shape
    HW = H * W
    R = pp['cab_w1t'].shape[1]
    NC, EXc, _ = pp['p1w'].shape

    x_flat = x_nchw.reshape(B, C, HW).astype(jnp.float32)     # pure reshape (no transpose)

    kernel, BUFW = _make_emcam_kernel(EXc, NC, H, W)

    out_flat = pl.pallas_call(
        kernel,
        grid=(B,),
        in_specs=[
            pl.BlockSpec((1, C, HW), lambda b: (b, 0, 0)),     # x
            pl.BlockSpec((C, R), lambda b: (0, 0)),            # CAB fc1^T
            pl.BlockSpec((C, R), lambda b: (0, 0)),            # CAB fc2
            pl.BlockSpec((2, 49), lambda b: (0, 0),
                         memory_space=pltpu.MemorySpace.SMEM), # SAB 7x7 weights (scalars)
            pl.BlockSpec((7, 1, HW), lambda b: (0, 0, 0)),     # column-offset masks
            pl.BlockSpec((NC, EXc, C), lambda b: (0, 0, 0)),   # pconv1 weight chunks (BN folded)
            pl.BlockSpec((NC, EXc, 1), lambda b: (0, 0, 0)),   # pconv1 bias chunks
            pl.BlockSpec((NC, EXc, 1), lambda b: (0, 0, 0)),   # dw k=1 weight chunks
            pl.BlockSpec((NC, EXc, 9), lambda b: (0, 0, 0)),   # dw k=3 weight chunks
            pl.BlockSpec((NC, EXc, 25), lambda b: (0, 0, 0)),  # dw k=5 weight chunks
            pl.BlockSpec((NC, EXc, 3), lambda b: (0, 0, 0)),   # dw BN bias chunks
            pl.BlockSpec((NC, C, EXc), lambda b: (0, 0, 0)),   # pconv2 weight chunks (shuffle+BN folded)
            pl.BlockSpec((C, 1), lambda b: (0, 0)),            # pconv2 bias
        ],
        out_specs=pl.BlockSpec((1, C, HW), lambda b: (b, 0, 0)),
        out_shape=jax.ShapeDtypeStruct((B, C, HW), jnp.float32),
        scratch_shapes=[pltpu.VMEM((2, 1, BUFW), jnp.float32),   # SAB padded planes
                        pltpu.VMEM((EXc, BUFW), jnp.float32)],   # MSDC padded chunk input
        compiler_params=pltpu.CompilerParams(dimension_semantics=("parallel",)),
    )(x_flat, pp['cab_w1t'], pp['cab_w2'], pp['sab_w'], pp['mask'],
      pp['p1w'], pp['p1b'], pp['dw1'], pp['dw3'], pp['dw5'], pp['dwb'],
      pp['p2w'], pp['p2b'])

    return out_flat.reshape(B, C, H, W)                       # pure reshape back to NCHW


# ----------------------------- pure-JAX reference ----------------------------

def emcam_reference(x_nchw, p):
    x = jnp.transpose(x_nchw, (0, 2, 3, 1)).astype(jnp.float32)     # NHWC
    B, H, W, C = x.shape
    EX = p['pconv1_w'].shape[0]
    Cout = p['pconv2_w'].shape[0]

    # CAB
    avg = jnp.mean(x, axis=(1, 2))
    mx = jnp.max(x, axis=(1, 2))
    mlp = lambda v: jnp.maximum(v @ p['cab_fc1_w'].T, 0.0) @ p['cab_fc2_w'].T
    att = jax.nn.sigmoid(mlp(avg) + mlp(mx))
    d1 = x * att[:, None, None, :]

    # SAB
    cat = jnp.concatenate([jnp.mean(d1, axis=3, keepdims=True),
                           jnp.max(d1, axis=3, keepdims=True)], axis=3)
    w_sab = p['sab_w'].reshape(2, 7, 7).transpose(1, 2, 0)[:, :, :, None]
    sa = jax.lax.conv_general_dilated(cat, w_sab, (1, 1), [(3, 3), (3, 3)],
                                      dimension_numbers=('NHWC', 'HWIO', 'NHWC'))
    d1 = d1 * jax.nn.sigmoid(sa)

    bn = lambda y, g, b, rm, rv: (y - rm) / jnp.sqrt(rv + BN_EPS) * g + b

    # pconv1
    p1 = jnp.maximum(bn(jnp.einsum('bhwc,ec->bhwe', d1, p['pconv1_w']),
                        p['bn1_g'], p['bn1_b'], p['bn1_rm'], p['bn1_rv']), 0.0)

    # MSDC
    def dwconv(y, w_flat, k):
        w = w_flat.reshape(k, k, EX)[:, :, None, :]
        pad = k // 2
        return jax.lax.conv_general_dilated(
            y, w, (1, 1), [(pad, pad), (pad, pad)],
            dimension_numbers=('NHWC', 'HWIO', 'NHWC'), feature_group_count=EX)

    dout = 0.0
    for i, (k, wname) in enumerate([(1, 'dw1_w'), (3, 'dw3_w'), (5, 'dw5_w')]):
        y = dwconv(p1, p[wname], k)
        y = jnp.clip(bn(y, p['bn_dw_g'][i], p['bn_dw_b'][i],
                        p['bn_dw_rm'][i], p['bn_dw_rv'][i]), 0.0, 6.0)
        dout = dout + y

    # channel shuffle + pconv2 + BN + skip
    groups = math.gcd(EX, Cout)
    cpg = EX // groups
    dout = dout.reshape(B, H, W, groups, cpg).swapaxes(3, 4).reshape(B, H, W, EX)
    out = bn(jnp.einsum('bhwe,ce->bhwc', dout, p['pconv2_w']),
             p['bn2_g'], p['bn2_b'], p['bn2_rm'], p['bn2_rv'])
    out = d1 + out
    return jnp.transpose(out, (0, 3, 1, 2))


# --------------------------------- main ---------------------------------------

if __name__ == "__main__":
    key = jax.random.PRNGKey(0)
    pkey, xkey = jax.random.split(key)

    B, C, H, W = 2, 16, 16, 16          # small EMCAM: in_channels = out_channels = 16
    params = init_emcam_params(pkey, C, C, expansion_factor=6)
    prepped = prepare_emcam_params(params, H, W)   # one-time prep, outside jit
    x = jax.random.normal(xkey, (B, C, H, W), jnp.float32)

    out = jax.jit(emcam_forward)(x, prepped)
    out = jax.block_until_ready(out)
    assert out.shape == (B, C, H, W) and out.dtype == jnp.float32

    ref = emcam_reference(x, params)
    max_err = float(jnp.max(jnp.abs(out - ref)))
    assert max_err < 1e-3, f"mismatch vs reference: max abs err = {max_err}"

    print("KERNEL_OK")
</pallas_src>

<mosaic_0001>
module attributes {stable_mosaic.version = 11 : i64} {
  func.func @kernel(%arg0: i32, %arg1: memref<1x16x256xf32, #tpu.memory_space<vmem>>, %arg2: memref<16x1xf32, #tpu.memory_space<vmem>>, %arg3: memref<16x1xf32, #tpu.memory_space<vmem>>, %arg4: memref<2x49xf32, #tpu.memory_space<smem>>, %arg5: memref<7x1x256xf32, #tpu.memory_space<vmem>>, %arg6: memref<3x32x16xf32, #tpu.memory_space<vmem>>, %arg7: memref<3x32x1xf32, #tpu.memory_space<vmem>>, %arg8: memref<3x32x1xf32, #tpu.memory_space<vmem>>, %arg9: memref<3x32x9xf32, #tpu.memory_space<vmem>>, %arg10: memref<3x32x25xf32, #tpu.memory_space<vmem>>, %arg11: memref<3x32x3xf32, #tpu.memory_space<vmem>>, %arg12: memref<3x16x32xf32, #tpu.memory_space<vmem>>, %arg13: memref<16x1xf32, #tpu.memory_space<vmem>>, %arg14: memref<1x16x256xf32, #tpu.memory_space<vmem>>, %arg15: memref<2x1x512xf32, #tpu.memory_space<vmem>>, %arg16: memref<32x512xf32, #tpu.memory_space<vmem>>) attributes {dimension_semantics = [#tpu.dimension_semantics<parallel>], iteration_bounds = array<i64: 2>, scalar_prefetch = 0 : i64, scratch_operands = 2 : i64, tpu.core_type = #tpu.core_type<tc>, window_params = [{transform_indices = @transform_0, window_bounds = array<i64: 1, 16, 256>}, {pipeline_mode = #tpu.pipeline_mode<synchronous>, transform_indices = @transform_1, window_bounds = array<i64: 16, 1>}, {pipeline_mode = #tpu.pipeline_mode<synchronous>, transform_indices = @transform_2, window_bounds = array<i64: 16, 1>}, {transform_indices = @transform_3, window_bounds = array<i64: 2, 49>}, {pipeline_mode = #tpu.pipeline_mode<synchronous>, transform_indices = @transform_4, window_bounds = array<i64: 7, 1, 256>}, {pipeline_mode = #tpu.pipeline_mode<synchronous>, transform_indices = @transform_5, window_bounds = array<i64: 3, 32, 16>}, {pipeline_mode = #tpu.pipeline_mode<synchronous>, transform_indices = @transform_6, window_bounds = array<i64: 3, 32, 1>}, {pipeline_mode = #tpu.pipeline_mode<synchronous>, transform_indices = @transform_7, window_bounds = array<i64: 3, 32, 1>}, {pipeline_mode = #tpu.pipeline_mode<synchronous>, transform_indices = @transform_8, window_bounds = array<i64: 3, 32, 9>}, {pipeline_mode = #tpu.pipeline_mode<synchronous>, transform_indices = @transform_9, window_bounds = array<i64: 3, 32, 25>}, {pipeline_mode = #tpu.pipeline_mode<synchronous>, transform_indices = @transform_10, window_bounds = array<i64: 3, 32, 3>}, {pipeline_mode = #tpu.pipeline_mode<synchronous>, transform_indices = @transform_11, window_bounds = array<i64: 3, 16, 32>}, {pipeline_mode = #tpu.pipeline_mode<synchronous>, transform_indices = @transform_12, window_bounds = array<i64: 16, 1>}, {transform_indices = @transform_13, window_bounds = array<i64: 1, 16, 256>}]} {
    %c0 = arith.constant 0 : index
    %c0_0 = arith.constant 0 : index
    %c0_1 = arith.constant 0 : index
    %0 = vector.load %arg1[%c0, %c0_0, %c0_1] : memref<1x16x256xf32, #tpu.memory_space<vmem>>, vector<1x16x256xf32>
    %1 = vector.shape_cast %0 : vector<1x16x256xf32> to vector<16x256xf32>
    %c0_2 = arith.constant 0 : index
    %c0_3 = arith.constant 0 : index
    %c0_4 = arith.constant 0 : index
    %2 = vector.load %arg5[%c0_2, %c0_3, %c0_4] : memref<7x1x256xf32, #tpu.memory_space<vmem>>, vector<1x1x256xf32>
    %3 = vector.shape_cast %2 : vector<1x1x256xf32> to vector<1x256xf32>
    %c1 = arith.constant 1 : index
    %c0_5 = arith.constant 0 : index
    %c0_6 = arith.constant 0 : index
    %4 = vector.load %arg5[%c1, %c0_5, %c0_6] : memref<7x1x256xf32, #tpu.memory_space<vmem>>, vector<1x1x256xf32>
    %5 = vector.shape_cast %4 : vector<1x1x256xf32> to vector<1x256xf32>
    %c2 = arith.constant 2 : index
    %c0_7 = arith.constant 0 : index
    %c0_8 = arith.constant 0 : index
    %6 = vector.load %arg5[%c2, %c0_7, %c0_8] : memref<7x1x256xf32, #tpu.memory_space<vmem>>, vector<1x1x256xf32>
    %7 = vector.shape_cast %6 : vector<1x1x256xf32> to vector<1x256xf32>
    %c4 = arith.constant 4 : index
    %c0_9 = arith.constant 0 : index
    %c0_10 = arith.constant 0 : index
    %8 = vector.load %arg5[%c4, %c0_9, %c0_10] : memref<7x1x256xf32, #tpu.memory_space<vmem>>, vector<1x1x256xf32>
    %9 = vector.shape_cast %8 : vector<1x1x256xf32> to vector<1x256xf32>
    %c5 = arith.constant 5 : index
    %c0_11 = arith.constant 0 : index
    %c0_12 = arith.constant 0 : index
    %10 = vector.load %arg5[%c5, %c0_11, %c0_12] : memref<7x1x256xf32, #tpu.memory_space<vmem>>, vector<1x1x256xf32>
    %11 = vector.shape_cast %10 : vector<1x1x256xf32> to vector<1x256xf32>
    %c6 = arith.constant 6 : index
    %c0_13 = arith.constant 0 : index
    %c0_14 = arith.constant 0 : index
    %12 = vector.load %arg5[%c6, %c0_13, %c0_14] : memref<7x1x256xf32, #tpu.memory_space<vmem>>, vector<1x1x256xf32>
    %13 = vector.shape_cast %12 : vector<1x1x256xf32> to vector<1x256xf32>
    %cst = arith.constant 0.000000e+00 : f32
    %14 = vector.broadcast %cst : f32 to vector<2x1x128xf32>
    %c0_15 = arith.constant 0 : index
    %c0_16 = arith.constant 0 : index
    %c0_17 = arith.constant 0 : index
    %15 = vector.load %arg15[%c0_15, %c0_16, %c0_17] : memref<2x1x512xf32, #tpu.memory_space<vmem>>, vector<2x1x128xf32>
    tpu.vector_store %arg15[%c0_15, %c0_16, %c0_17], %14 {strides = array<i32>} : memref<2x1x512xf32, #tpu.memory_space<vmem>>, vector<2x1x128xf32>,
    %cst_18 = arith.constant 0.000000e+00 : f32
    %16 = vector.broadcast %cst_18 : f32 to vector<2x1x128xf32>
    %c0_19 = arith.constant 0 : index
    %c0_20 = arith.constant 0 : index
    %c384 = arith.constant 384 : index
    %17 = vector.load %arg15[%c0_19, %c0_20, %c384] : memref<2x1x512xf32, #tpu.memory_space<vmem>>, vector<2x1x128xf32>
    tpu.vector_store %arg15[%c0_19, %c0_20, %c384], %16 {strides = array<i32>} : memref<2x1x512xf32, #tpu.memory_space<vmem>>, vector<2x1x128xf32>,
    %cst_21 = arith.constant 0.000000e+00 : f32
    %18 = vector.broadcast %cst_21 : f32 to vector<32x128xf32>
    %c0_22 = arith.constant 0 : index
    %c0_23 = arith.constant 0 : index
    %19 = vector.load %arg16[%c0_22, %c0_23] : memref<32x512xf32, #tpu.memory_space<vmem>>, vector<32x128xf32>
    tpu.vector_store %arg16[%c0_22, %c0_23], %18 {strides = array<i32>} : memref<32x512xf32, #tpu.memory_space<vmem>>, vector<32x128xf32>,
    %cst_24 = arith.constant 0.000000e+00 : f32
    %20 = vector.broadcast %cst_24 : f32 to vector<32x128xf32>
    %c0_25 = arith.constant 0 : index
    %c384_26 = arith.constant 384 : index
    %21 = vector.load %arg16[%c0_25, %c384_26] : memref<32x512xf32, #tpu.memory_space<vmem>>, vector<32x128xf32>
    tpu.vector_store %arg16[%c0_25, %c384_26], %20 {strides = array<i32>} : memref<32x512xf32, #tpu.memory_space<vmem>>, vector<32x128xf32>,
    %cst_27 = arith.constant dense<0.000000e+00> : vector<16xf32>
    %22 = vector.multi_reduction <add>, %1, %cst_27 [1] : vector<16x256xf32> to vector<16xf32>
    %23 = vector.shape_cast %22 : vector<16xf32> to vector<16x1xf32>
    %cst_28 = arith.constant 2.560000e+02 : f32
    %24 = vector.broadcast %cst_28 : f32 to vector<16x1xf32>
    %25 = arith.divf %23, %24 : vector<16x1xf32>
    %cst_29 = arith.constant dense<0xFF800000> : vector<16xf32>
    %26 = vector.multi_reduction <maximumf>, %1, %cst_29 [1] : vector<16x256xf32> to vector<16xf32>
    %27 = vector.shape_cast %26 : vector<16xf32> to vector<16x1xf32>
    %c0_30 = arith.constant 0 : index
    %c0_31 = arith.constant 0 : index
    %28 = vector.load %arg2[%c0_30, %c0_31] : memref<16x1xf32, #tpu.memory_space<vmem>>, vector<16x1xf32>
    %29 = arith.mulf %28, %25 : vector<16x1xf32>
    %cst_32 = arith.constant dense<0.000000e+00> : vector<1xf32>
    %30 = vector.multi_reduction <add>, %29, %cst_32 [0] : vector<16x1xf32> to vector<1xf32>
    %31 = vector.shape_cast %30 : vector<1xf32> to vector<1x1xf32>
    %cst_33 = arith.constant 0.000000e+00 : f32
    %32 = vector.broadcast %cst_33 : f32 to vector<1x1xf32>
    %33 = arith.maximumf %31, %32 : vector<1x1xf32>
    %c0_34 = arith.constant 0 : index
    %c0_35 = arith.constant 0 : index
    %34 = vector.load %arg3[%c0_34, %c0_35] : memref<16x1xf32, #tpu.memory_space<vmem>>, vector<16x1xf32>
    %35 = vector.broadcast %33 : vector<1x1xf32> to vector<16x1xf32>
    %36 = arith.mulf %34, %35 : vector<16x1xf32>
    %cst_36 = arith.constant dense<0.000000e+00> : vector<16xf32>
    %37 = vector.multi_reduction <add>, %36, %cst_36 [1] : vector<16x1xf32> to vector<16xf32>
    %38 = vector.shape_cast %37 : vector<16xf32> to vector<16x1xf32>
    %c0_37 = arith.constant 0 : index
    %c0_38 = arith.constant 0 : index
    %39 = vector.load %arg2[%c0_37, %c0_38] : memref<16x1xf32, #tpu.memory_space<vmem>>, vector<16x1xf32>
    %40 = arith.mulf %39, %27 : vector<16x1xf32>
    %cst_39 = arith.constant dense<0.000000e+00> : vector<1xf32>
    %41 = vector.multi_reduction <add>, %40, %cst_39 [0] : vector<16x1xf32> to vector<1xf32>
    %42 = vector.shape_cast %41 : vector<1xf32> to vector<1x1xf32>
    %cst_40 = arith.constant 0.000000e+00 : f32
    %43 = vector.broadcast %cst_40 : f32 to vector<1x1xf32>
    %44 = arith.maximumf %42, %43 : vector<1x1xf32>
    %c0_41 = arith.constant 0 : index
    %c0_42 = arith.constant 0 : index
    %45 = vector.load %arg3[%c0_41, %c0_42] : memref<16x1xf32, #tpu.memory_space<vmem>>, vector<16x1xf32>
    %46 = vector.broadcast %44 : vector<1x1xf32> to vector<16x1xf32>
    %47 = arith.mulf %45, %46 : vector<16x1xf32>
    %cst_43 = arith.constant dense<0.000000e+00> : vector<16xf32>
    %48 = vector.multi_reduction <add>, %47, %cst_43 [1] : vector<16x1xf32> to vector<16xf32>
    %49 = vector.shape_cast %48 : vector<16xf32> to vector<16x1xf32>
    %50 = arith.addf %38, %49 : vector<16x1xf32>
    %51 = arith.negf %50 : vector<16x1xf32>
    %52 = math.exp %51 : vector<16x1xf32>
    %cst_44 = arith.constant 1.000000e+00 : f32
    %53 = vector.broadcast %cst_44 : f32 to vector<16x1xf32>
    %54 = arith.addf %53, %52 : vector<16x1xf32>
    %55 = arith.divf %53, %54 : vector<16x1xf32>
    %56 = vector.broadcast %55 : vector<16x1xf32> to vector<16x256xf32>
    %57 = arith.mulf %1, %56 : vector<16x256xf32>
    %cst_45 = arith.constant dense<0.000000e+00> : vector<256xf32>
    %58 = vector.multi_reduction <add>, %57, %cst_45 [0] : vector<16x256xf32> to vector<256xf32>
    %59 = vector.shape_cast %58 : vector<256xf32> to vector<1x256xf32>
    %cst_46 = arith.constant 1.600000e+01 : f32
    %60 = vector.broadcast %cst_46 : f32 to vector<1x256xf32>
    %61 = arith.divf %59, %60 : vector<1x256xf32>
    %c0_47 = arith.constant 0 : index
    %c0_48 = arith.constant 0 : index
    %c128 = arith.constant 128 : index
    %62 = vector.load %arg15[%c0_47, %c0_48, %c128] : memref<2x1x512xf32, #tpu.memory_space<vmem>>, vector<1x1x256xf32>
    %63 = vector.shape_cast %62 : vector<1x1x256xf32> to vector<1x256xf32>
    %64 = vector.shape_cast %61 : vector<1x256xf32> to vector<1x1x256xf32>
    tpu.vector_store %arg15[%c0_47, %c0_48, %c128], %64 {strides = array<i32>} : memref<2x1x512xf32, #tpu.memory_space<vmem>>, vector<1x1x256xf32>,
    %cst_49 = arith.constant dense<0xFF800000> : vector<256xf32>
    %65 = vector.multi_reduction <maximumf>, %57, %cst_49 [0] : vector<16x256xf32> to vector<256xf32>
    %66 = vector.shape_cast %65 : vector<256xf32> to vector<1x256xf32>
    %c1_50 = arith.constant 1 : index
    %c0_51 = arith.constant 0 : index
    %c128_52 = arith.constant 128 : index
    %67 = vector.load %arg15[%c1_50, %c0_51, %c128_52] : memref<2x1x512xf32, #tpu.memory_space<vmem>>, vector<1x1x256xf32>
    %68 = vector.shape_cast %67 : vector<1x1x256xf32> to vector<1x256xf32>
    %69 = vector.shape_cast %66 : vector<1x256xf32> to vector<1x1x256xf32>
    tpu.vector_store %arg15[%c1_50, %c0_51, %c128_52], %69 {strides = array<i32>} : memref<2x1x512xf32, #tpu.memory_space<vmem>>, vector<1x1x256xf32>,
    %cst_53 = arith.constant 0.000000e+00 : f32
    %70 = vector.broadcast %cst_53 : f32 to vector<1x256xf32>
    %cst_54 = arith.constant 0.000000e+00 : f32
    %71 = vector.broadcast %cst_54 : f32 to vector<1x256xf32>
    %c0_55 = arith.constant 0 : index
    %c0_56 = arith.constant 0 : index
    %72 = memref.load %arg4[%c0_55, %c0_56] : memref<2x49xf32, #tpu.memory_space<smem>>
    %c0_57 = arith.constant 0 : index
    %c0_58 = arith.constant 0 : index
    %c77 = arith.constant 77 : index
    %73 = vector.load %arg15[%c0_57, %c0_58, %c77] : memref<2x1x512xf32, #tpu.memory_space<vmem>>, vector<1x1x256xf32>
    %74 = vector.shape_cast %73 : vector<1x1x256xf32> to vector<1x256xf32>
    %75 = vector.broadcast %72 : f32 to vector<1x256xf32>
    %76 = arith.mulf %75, %74 : vector<1x256xf32>
    %77 = arith.addf %71, %76 : vector<1x256xf32>
    %c1_59 = arith.constant 1 : index
    %c0_60 = arith.constant 0 : index
    %78 = memref.load %arg4[%c1_59, %c0_60] : memref<2x49xf32, #tpu.memory_space<smem>>
    %c1_61 = arith.constant 1 : index
    %c0_62 = arith.constant 0 : index
    %c77_63 = arith.constant 77 : index
    %79 = vector.load %arg15[%c1_61, %c0_62, %c77_63] : memref<2x1x512xf32, #tpu.memory_space<vmem>>, vector<1x1x256xf32>
    %80 = vector.shape_cast %79 : vector<1x1x256xf32> to vector<1x256xf32>
    %81 = vector.broadcast %78 : f32 to vector<1x256xf32>
    %82 = arith.mulf %81, %80 : vector<1x256xf32>
    %83 = arith.addf %77, %82 : vector<1x256xf32>
    %c0_64 = arith.constant 0 : index
    %c7 = arith.constant 7 : index
    %84 = memref.load %arg4[%c0_64, %c7] : memref<2x49xf32, #tpu.memory_space<smem>>
    %c0_65 = arith.constant 0 : index
    %c0_66 = arith.constant 0 : index
    %c93 = arith.constant 93 : index
    %85 = vector.load %arg15[%c0_65, %c0_66, %c93] : memref<2x1x512xf32, #tpu.memory_space<vmem>>, vector<1x1x256xf32>
    %86 = vector.shape_cast %85 : vector<1x1x256xf32> to vector<1x256xf32>
    %87 = vector.broadcast %84 : f32 to vector<1x256xf32>
    %88 = arith.mulf %87, %86 : vector<1x256xf32>
    %89 = arith.addf %83, %88 : vector<1x256xf32>
    %c1_67 = arith.constant 1 : index
    %c7_68 = arith.constant 7 : index
    %90 = memref.load %arg4[%c1_67, %c7_68] : memref<2x49xf32, #tpu.memory_space<smem>>
    %c1_69 = arith.constant 1 : index
    %c0_70 = arith.constant 0 : index
    %c93_71 = arith.constant 93 : index
    %91 = vector.load %arg15[%c1_69, %c0_70, %c93_71] : memref<2x1x512xf32, #tpu.memory_space<vmem>>, vector<1x1x256xf32>
    %92 = vector.shape_cast %91 : vector<1x1x256xf32> to vector<1x256xf32>
    %93 = vector.broadcast %90 : f32 to vector<1x256xf32>
    %94 = arith.mulf %93, %92 : vector<1x256xf32>
    %95 = arith.addf %89, %94 : vector<1x256xf32>
    %c0_72 = arith.constant 0 : index
    %c14 = arith.constant 14 : index
    %96 = memref.load %arg4[%c0_72, %c14] : memref<2x49xf32, #tpu.memory_space<smem>>
    %c0_73 = arith.constant 0 : index
    %c0_74 = arith.constant 0 : index
    %c109 = arith.constant 109 : index
    %97 = vector.load %arg15[%c0_73, %c0_74, %c109] : memref<2x1x512xf32, #tpu.memory_space<vmem>>, vector<1x1x256xf32>
    %98 = vector.shape_cast %97 : vector<1x1x256xf32> to vector<1x256xf32>
    %99 = vector.broadcast %96 : f32 to vector<1x256xf32>
    %100 = arith.mulf %99, %98 : vector<1x256xf32>
    %101 = arith.addf %95, %100 : vector<1x256xf32>
    %c1_75 = arith.constant 1 : index
    %c14_76 = arith.constant 14 : index
    %102 = memref.load %arg4[%c1_75, %c14_76] : memref<2x49xf32, #tpu.memory_space<smem>>
    %c1_77 = arith.constant 1 : index
    %c0_78 = arith.constant 0 : index
    %c109_79 = arith.constant 109 : index
    %103 = vector.load %arg15[%c1_77, %c0_78, %c109_79] : memref<2x1x512xf32, #tpu.memory_space<vmem>>, vector<1x1x256xf32>
    %104 = vector.shape_cast %103 : vector<1x1x256xf32> to vector<1x256xf32>
    %105 = vector.broadcast %102 : f32 to vector<1x256xf32>
    %106 = arith.mulf %105, %104 : vector<1x256xf32>
    %107 = arith.addf %101, %106 : vector<1x256xf32>
    %c0_80 = arith.constant 0 : index
    %c21 = arith.constant 21 : index
    %108 = memref.load %arg4[%c0_80, %c21] : memref<2x49xf32, #tpu.memory_space<smem>>
    %c0_81 = arith.constant 0 : index
    %c0_82 = arith.constant 0 : index
    %c125 = arith.constant 125 : index
    %109 = vector.load %arg15[%c0_81, %c0_82, %c125] : memref<2x1x512xf32, #tpu.memory_space<vmem>>, vector<1x1x256xf32>
    %110 = vector.shape_cast %109 : vector<1x1x256xf32> to vector<1x256xf32>
    %111 = vector.broadcast %108 : f32 to vector<1x256xf32>
    %112 = arith.mulf %111, %110 : vector<1x256xf32>
    %113 = arith.addf %107, %112 : vector<1x256xf32>
    %c1_83 = arith.constant 1 : index
    %c21_84 = arith.constant 21 : index
    %114 = memref.load %arg4[%c1_83, %c21_84] : memref<2x49xf32, #tpu.memory_space<smem>>
    %c1_85 = arith.constant 1 : index
    %c0_86 = arith.constant 0 : index
    %c125_87 = arith.constant 125 : index
    %115 = vector.load %arg15[%c1_85, %c0_86, %c125_87] : memref<2x1x512xf32, #tpu.memory_space<vmem>>, vector<1x1x256xf32>
    %116 = vector.shape_cast %115 : vector<1x1x256xf32> to vector<1x256xf32>
    %117 = vector.broadcast %114 : f32 to vector<1x256xf32>
    %118 = arith.mulf %117, %116 : vector<1x256xf32>
    %119 = arith.addf %113, %118 : vector<1x256xf32>
    %c0_88 = arith.constant 0 : index
    %c28 = arith.constant 28 : index
    %120 = memref.load %arg4[%c0_88, %c28] : memref<2x49xf32, #tpu.memory_space<smem>>
    %c0_89 = arith.constant 0 : index
    %c0_90 = arith.constant 0 : index
    %c141 = arith.constant 141 : index
    %121 = vector.load %arg15[%c0_89, %c0_90, %c141] : memref<2x1x512xf32, #tpu.memory_space<vmem>>, vector<1x1x256xf32>
    %122 = vector.shape_cast %121 : vector<1x1x256xf32> to vector<1x256xf32>
    %123 = vector.broadcast %120 : f32 to vector<1x256xf32>
    %124 = arith.mulf %123, %122 : vector<1x256xf32>
    %125 = arith.addf %119, %124 : vector<1x256xf32>
    %c1_91 = arith.constant 1 : index
    %c28_92 = arith.constant 28 : index
    %126 = memref.load %arg4[%c1_91, %c28_92] : memref<2x49xf32, #tpu.memory_space<smem>>
    %c1_93 = arith.constant 1 : index
    %c0_94 = arith.constant 0 : index
    %c141_95 = arith.constant 141 : index
    %127 = vector.load %arg15[%c1_93, %c0_94, %c141_95] : memref<2x1x512xf32, #tpu.memory_space<vmem>>, vector<1x1x256xf32>
    %128 = vector.shape_cast %127 : vector<1x1x256xf32> to vector<1x256xf32>
    %129 = vector.broadcast %126 : f32 to vector<1x256xf32>
    %130 = arith.mulf %129, %128 : vector<1x256xf32>
    %131 = arith.addf %125, %130 : vector<1x256xf32>
    %c0_96 = arith.constant 0 : index
    %c35 = arith.constant 35 : index
    %132 = memref.load %arg4[%c0_96, %c35] : memref<2x49xf32, #tpu.memory_space<smem>>
    %c0_97 = arith.constant 0 : index
    %c0_98 = arith.constant 0 : index
    %c157 = arith.constant 157 : index
    %133 = vector.load %arg15[%c0_97, %c0_98, %c157] : memref<2x1x512xf32, #tpu.memory_space<vmem>>, vector<1x1x256xf32>
    %134 = vector.shape_cast %133 : vector<1x1x256xf32> to vector<1x256xf32>
    %135 = vector.broadcast %132 : f32 to vector<1x256xf32>
    %136 = arith.mulf %135, %134 : vector<1x256xf32>
    %137 = arith.addf %131, %136 : vector<1x256xf32>
    %c1_99 = arith.constant 1 : index
    %c35_100 = arith.constant 35 : index
    %138 = memref.load %arg4[%c1_99, %c35_100] : memref<2x49xf32, #tpu.memory_space<smem>>
    %c1_101 = arith.constant 1 : index
    %c0_102 = arith.constant 0 : index
    %c157_103 = arith.constant 157 : index
    %139 = vector.load %arg15[%c1_101, %c0_102, %c157_103] : memref<2x1x512xf32, #tpu.memory_space<vmem>>, vector<1x1x256xf32>
    %140 = vector.shape_cast %139 : vector<1x1x256xf32> to vector<1x256xf32>
    %141 = vector.broadcast %138 : f32 to vector<1x256xf32>
    %142 = arith.mulf %141, %140 : vector<1x256xf32>
    %143 = arith.addf %137, %142 : vector<1x256xf32>
    %c0_104 = arith.constant 0 : index
    %c42 = arith.constant 42 : index
    %144 = memref.load %arg4[%c0_104, %c42] : memref<2x49xf32, #tpu.memory_space<smem>>
    %c0_105 = arith.constant 0 : index
    %c0_106 = arith.constant 0 : index
    %c173 = arith.constant 173 : index
    %145 = vector.load %arg15[%c0_105, %c0_106, %c173] : memref<2x1x512xf32, #tpu.memory_space<vmem>>, vector<1x1x256xf32>
    %146 = vector.shape_cast %145 : vector<1x1x256xf32> to vector<1x256xf32>
    %147 = vector.broadcast %144 : f32 to vector<1x256xf32>
    %148 = arith.mulf %147, %146 : vector<1x256xf32>
    %149 = arith.addf %143, %148 : vector<1x256xf32>
    %c1_107 = arith.constant 1 : index
    %c42_108 = arith.constant 42 : index
    %150 = memref.load %arg4[%c1_107, %c42_108] : memref<2x49xf32, #tpu.memory_space<smem>>
    %c1_109 = arith.constant 1 : index
    %c0_110 = arith.constant 0 : index
    %c173_111 = arith.constant 173 : index
    %151 = vector.load %arg15[%c1_109, %c0_110, %c173_111] : memref<2x1x512xf32, #tpu.memory_space<vmem>>, vector<1x1x256xf32>
    %152 = vector.shape_cast %151 : vector<1x1x256xf32> to vector<1x256xf32>
    %153 = vector.broadcast %150 : f32 to vector<1x256xf32>
    %154 = arith.mulf %153, %152 : vector<1x256xf32>
    %155 = arith.addf %149, %154 : vector<1x256xf32>
    %156 = arith.mulf %155, %3 : vector<1x256xf32>
    %157 = arith.addf %70, %156 : vector<1x256xf32>
    %cst_112 = arith.constant 0.000000e+00 : f32
    %158 = vector.broadcast %cst_112 : f32 to vector<1x256xf32>
    %c0_113 = arith.constant 0 : index
    %c1_114 = arith.constant 1 : index
    %159 = memref.load %arg4[%c0_113, %c1_114] : memref<2x49xf32, #tpu.memory_space<smem>>
    %c0_115 = arith.constant 0 : index
    %c0_116 = arith.constant 0 : index
    %c78 = arith.constant 78 : index
    %160 = vector.load %arg15[%c0_115, %c0_116, %c78] : memref<2x1x512xf32, #tpu.memory_space<vmem>>, vector<1x1x256xf32>
    %161 = vector.shape_cast %160 : vector<1x1x256xf32> to vector<1x256xf32>
    %162 = vector.broadcast %159 : f32 to vector<1x256xf32>
    %163 = arith.mulf %162, %161 : vector<1x256xf32>
    %164 = arith.addf %158, %163 : vector<1x256xf32>
    %c1_117 = arith.constant 1 : index
    %c1_118 = arith.constant 1 : index
    %165 = memref.load %arg4[%c1_117, %c1_118] : memref<2x49xf32, #tpu.memory_space<smem>>
    %c1_119 = arith.constant 1 : index
    %c0_120 = arith.constant 0 : index
    %c78_121 = arith.constant 78 : index
    %166 = vector.load %arg15[%c1_119, %c0_120, %c78_121] : memref<2x1x512xf32, #tpu.memory_space<vmem>>, vector<1x1x256xf32>
    %167 = vector.shape_cast %166 : vector<1x1x256xf32> to vector<1x256xf32>
    %168 = vector.broadcast %165 : f32 to vector<1x256xf32>
    %169 = arith.mulf %168, %167 : vector<1x256xf32>
    %170 = arith.addf %164, %169 : vector<1x256xf32>
    %c0_122 = arith.constant 0 : index
    %c8 = arith.constant 8 : index
    %171 = memref.load %arg4[%c0_122, %c8] : memref<2x49xf32, #tpu.memory_space<smem>>
    %c0_123 = arith.constant 0 : index
    %c0_124 = arith.constant 0 : index
    %c94 = arith.constant 94 : index
    %172 = vector.load %arg15[%c0_123, %c0_124, %c94] : memref<2x1x512xf32, #tpu.memory_space<vmem>>, vector<1x1x256xf32>
    %173 = vector.shape_cast %172 : vector<1x1x256xf32> to vector<1x256xf32>
    %174 = vector.broadcast %171 : f32 to vector<1x256xf32>
    %175 = arith.mulf %174, %173 : vector<1x256xf32>
    %176 = arith.addf %170, %175 : vector<1x256xf32>
    %c1_125 = arith.constant 1 : index
    %c8_126 = arith.constant 8 : index
    %177 = memref.load %arg4[%c1_125, %c8_126] : memref<2x49xf32, #tpu.memory_space<smem>>
    %c1_127 = arith.constant 1 : index
    %c0_128 = arith.constant 0 : index
    %c94_129 = arith.constant 94 : index
    %178 = vector.load %arg15[%c1_127, %c0_128, %c94_129] : memref<2x1x512xf32, #tpu.memory_space<vmem>>, vector<1x1x256xf32>
    %179 = vector.shape_cast %178 : vector<1x1x256xf32> to vector<1x256xf32>
    %180 = vector.broadcast %177 : f32 to vector<1x256xf32>
    %181 = arith.mulf %180, %179 : vector<1x256xf32>
    %182 = arith.addf %176, %181 : vector<1x256xf32>
    %c0_130 = arith.constant 0 : index
    %c15 = arith.constant 15 : index
    %183 = memref.load %arg4[%c0_130, %c15] : memref<2x49xf32, #tpu.memory_space<smem>>
    %c0_131 = arith.constant 0 : index
    %c0_132 = arith.constant 0 : index
    %c110 = arith.constant 110 : index
    %184 = vector.load %arg15[%c0_131, %c0_132, %c110] : memref<2x1x512xf32, #tpu.memory_space<vmem>>, vector<1x1x256xf32>
    %185 = vector.shape_cast %184 : vector<1x1x256xf32> to vector<1x256xf32>
    %186 = vector.broadcast %183 : f32 to vector<1x256xf32>
    %187 = arith.mulf %186, %185 : vector<1x256xf32>
    %188 = arith.addf %182, %187 : vector<1x256xf32>
    %c1_133 = arith.constant 1 : index
    %c15_134 = arith.constant 15 : index
    %189 = memref.load %arg4[%c1_133, %c15_134] : memref<2x49xf32, #tpu.memory_space<smem>>
    %c1_135 = arith.constant 1 : index
    %c0_136 = arith.constant 0 : index
    %c110_137 = arith.constant 110 : index
    %190 = vector.load %arg15[%c1_135, %c0_136, %c110_137] : memref<2x1x512xf32, #tpu.memory_space<vmem>>, vector<1x1x256xf32>
    %191 = vector.shape_cast %190 : vector<1x1x256xf32> to vector<1x256xf32>
    %192 = vector.broadcast %189 : f32 to vector<1x256xf32>
    %193 = arith.mulf %192, %191 : vector<1x256xf32>
    %194 = arith.addf %188, %193 : vector<1x256xf32>
    %c0_138 = arith.constant 0 : index
    %c22 = arith.constant 22 : index
    %195 = memref.load %arg4[%c0_138, %c22] : memref<2x49xf32, #tpu.memory_space<smem>>
    %c0_139 = arith.constant 0 : index
    %c0_140 = arith.constant 0 : index
    %c126 = arith.constant 126 : index
    %196 = vector.load %arg15[%c0_139, %c0_140, %c126] : memref<2x1x512xf32, #tpu.memory_space<vmem>>, vector<1x1x256xf32>
    %197 = vector.shape_cast %196 : vector<1x1x256xf32> to vector<1x256xf32>
    %198 = vector.broadcast %195 : f32 to vector<1x256xf32>
    %199 = arith.mulf %198, %197 : vector<1x256xf32>
    %200 = arith.addf %194, %199 : vector<1x256xf32>
    %c1_141 = arith.constant 1 : index
    %c22_142 = arith.constant 22 : index
    %201 = memref.load %arg4[%c1_141, %c22_142] : memref<2x49xf32, #tpu.memory_space<smem>>
    %c1_143 = arith.constant 1 : index
    %c0_144 = arith.constant 0 : index
    %c126_145 = arith.constant 126 : index
    %202 = vector.load %arg15[%c1_143, %c0_144, %c126_145] : memref<2x1x512xf32, #tpu.memory_space<vmem>>, vector<1x1x256xf32>
    %203 = vector.shape_cast %202 : vector<1x1x256xf32> to vector<1x256xf32>
    %204 = vector.broadcast %201 : f32 to vector<1x256xf32>
    %205 = arith.mulf %204, %203 : vector<1x256xf32>
    %206 = arith.addf %200, %205 : vector<1x256xf32>
    %c0_146 = arith.constant 0 : index
    %c29 = arith.constant 29 : index
    %207 = memref.load %arg4[%c0_146, %c29] : memref<2x49xf32, #tpu.memory_space<smem>>
    %c0_147 = arith.constant 0 : index
    %c0_148 = arith.constant 0 : index
    %c142 = arith.constant 142 : index
    %208 = vector.load %arg15[%c0_147, %c0_148, %c142] : memref<2x1x512xf32, #tpu.memory_space<vmem>>, vector<1x1x256xf32>
    %209 = vector.shape_cast %208 : vector<1x1x256xf32> to vector<1x256xf32>
    %210 = vector.broadcast %207 : f32 to vector<1x256xf32>
    %211 = arith.mulf %210, %209 : vector<1x256xf32>
    %212 = arith.addf %206, %211 : vector<1x256xf32>
    %c1_149 = arith.constant 1 : index
    %c29_150 = arith.constant 29 : index
    %213 = memref.load %arg4[%c1_149, %c29_150] : memref<2x49xf32, #tpu.memory_space<smem>>
    %c1_151 = arith.constant 1 : index
    %c0_152 = arith.constant 0 : index
    %c142_153 = arith.constant 142 : index
    %214 = vector.load %arg15[%c1_151, %c0_152, %c142_153] : memref<2x1x512xf32, #tpu.memory_space<vmem>>, vector<1x1x256xf32>
    %215 = vector.shape_cast %214 : vector<1x1x256xf32> to vector<1x256xf32>
    %216 = vector.broadcast %213 : f32 to vector<1x256xf32>
    %217 = arith.mulf %216, %215 : vector<1x256xf32>
    %218 = arith.addf %212, %217 : vector<1x256xf32>
    %c0_154 = arith.constant 0 : index
    %c36 = arith.constant 36 : index
    %219 = memref.load %arg4[%c0_154, %c36] : memref<2x49xf32, #tpu.memory_space<smem>>
    %c0_155 = arith.constant 0 : index
    %c0_156 = arith.constant 0 : index
    %c158 = arith.constant 158 : index
    %220 = vector.load %arg15[%c0_155, %c0_156, %c158] : memref<2x1x512xf32, #tpu.memory_space<vmem>>, vector<1x1x256xf32>
    %221 = vector.shape_cast %220 : vector<1x1x256xf32> to vector<1x256xf32>
    %222 = vector.broadcast %219 : f32 to vector<1x256xf32>
    %223 = arith.mulf %222, %221 : vector<1x256xf32>
    %224 = arith.addf %218, %223 : vector<1x256xf32>
    %c1_157 = arith.constant 1 : index
    %c36_158 = arith.constant 36 : index
    %225 = memref.load %arg4[%c1_157, %c36_158] : memref<2x49xf32, #tpu.memory_space<smem>>
    %c1_159 = arith.constant 1 : index
    %c0_160 = arith.constant 0 : index
    %c158_161 = arith.constant 158 : index
    %226 = vector.load %arg15[%c1_159, %c0_160, %c158_161] : memref<2x1x512xf32, #tpu.memory_space<vmem>>, vector<1x1x256xf32>
    %227 = vector.shape_cast %226 : vector<1x1x256xf32> to vector<1x256xf32>
    %228 = vector.broadcast %225 : f32 to vector<1x256xf32>
    %229 = arith.mulf %228, %227 : vector<1x256xf32>
    %230 = arith.addf %224, %229 : vector<1x256xf32>
    %c0_162 = arith.constant 0 : index
    %c43 = arith.constant 43 : index
    %231 = memref.load %arg4[%c0_162, %c43] : memref<2x49xf32, #tpu.memory_space<smem>>
    %c0_163 = arith.constant 0 : index
    %c0_164 = arith.constant 0 : index
    %c174 = arith.constant 174 : index
    %232 = vector.load %arg15[%c0_163, %c0_164, %c174] : memref<2x1x512xf32, #tpu.memory_space<vmem>>, vector<1x1x256xf32>
    %233 = vector.shape_cast %232 : vector<1x1x256xf32> to vector<1x256xf32>
    %234 = vector.broadcast %231 : f32 to vector<1x256xf32>
    %235 = arith.mulf %234, %233 : vector<1x256xf32>
    %236 = arith.addf %230, %235 : vector<1x256xf32>
    %c1_165 = arith.constant 1 : index
    %c43_166 = arith.constant 43 : index
    %237 = memref.load %arg4[%c1_165, %c43_166] : memref<2x49xf32, #tpu.memory_space<smem>>
    %c1_167 = arith.constant 1 : index
    %c0_168 = arith.constant 0 : index
    %c174_169 = arith.constant 174 : index
    %238 = vector.load %arg15[%c1_167, %c0_168, %c174_169] : memref<2x1x512xf32, #tpu.memory_space<vmem>>, vector<1x1x256xf32>
    %239 = vector.shape_cast %238 : vector<1x1x256xf32> to vector<1x256xf32>
    %240 = vector.broadcast %237 : f32 to vector<1x256xf32>
    %241 = arith.mulf %240, %239 : vector<1x256xf32>
    %242 = arith.addf %236, %241 : vector<1x256xf32>
    %243 = arith.mulf %242, %5 : vector<1x256xf32>
    %244 = arith.addf %157, %243 : vector<1x256xf32>
    %cst_170 = arith.constant 0.000000e+00 : f32
    %245 = vector.broadcast %cst_170 : f32 to vector<1x256xf32>
    %c0_171 = arith.constant 0 : index
    %c2_172 = arith.constant 2 : index
    %246 = memref.load %arg4[%c0_171, %c2_172] : memref<2x49xf32, #tpu.memory_space<smem>>
    %c0_173 = arith.constant 0 : index
    %c0_174 = arith.constant 0 : index
    %c79 = arith.constant 79 : index
    %247 = vector.load %arg15[%c0_173, %c0_174, %c79] : memref<2x1x512xf32, #tpu.memory_space<vmem>>, vector<1x1x256xf32>
    %248 = vector.shape_cast %247 : vector<1x1x256xf32> to vector<1x256xf32>
    %249 = vector.broadcast %246 : f32 to vector<1x256xf32>
    %250 = arith.mulf %249, %248 : vector<1x256xf32>
    %251 = arith.addf %245, %250 : vector<1x256xf32>
    %c1_175 = arith.constant 1 : index
    %c2_176 = arith.constant 2 : index
    %252 = memref.load %arg4[%c1_175, %c2_176] : memref<2x49xf32, #tpu.memory_space<smem>>
    %c1_177 = arith.constant 1 : index
    %c0_178 = arith.constant 0 : index
    %c79_179 = arith.constant 79 : index
    %253 = vector.load %arg15[%c1_177, %c0_178, %c79_179] : memref<2x1x512xf32, #tpu.memory_space<vmem>>, vector<1x1x256xf32>
    %254 = vector.shape_cast %253 : vector<1x1x256xf32> to vector<1x256xf32>
    %255 = vector.broadcast %252 : f32 to vector<1x256xf32>
    %256 = arith.mulf %255, %254 : vector<1x256xf32>
    %257 = arith.addf %251, %256 : vector<1x256xf32>
    %c0_180 = arith.constant 0 : index
    %c9 = arith.constant 9 : index
    %258 = memref.load %arg4[%c0_180, %c9] : memref<2x49xf32, #tpu.memory_space<smem>>
    %c0_181 = arith.constant 0 : index
    %c0_182 = arith.constant 0 : index
    %c95 = arith.constant 95 : index
    %259 = vector.load %arg15[%c0_181, %c0_182, %c95] : memref<2x1x512xf32, #tpu.memory_space<vmem>>, vector<1x1x256xf32>
    %260 = vector.shape_cast %259 : vector<1x1x256xf32> to vector<1x256xf32>
    %261 = vector.broadcast %258 : f32 to vector<1x256xf32>
    %262 = arith.mulf %261, %260 : vector<1x256xf32>
    %263 = arith.addf %257, %262 : vector<1x256xf32>
    %c1_183 = arith.constant 1 : index
    %c9_184 = arith.constant 9 : index
    %264 = memref.load %arg4[%c1_183, %c9_184] : memref<2x49xf32, #tpu.memory_space<smem>>
    %c1_185 = arith.constant 1 : index
    %c0_186 = arith.constant 0 : index
    %c95_187 = arith.constant 95 : index
    %265 = vector.load %arg15[%c1_185, %c0_186, %c95_187] : memref<2x1x512xf32, #tpu.memory_space<vmem>>, vector<1x1x256xf32>
    %266 = vector.shape_cast %265 : vector<1x1x256xf32> to vector<1x256xf32>
    %267 = vector.broadcast %264 : f32 to vector<1x256xf32>
    %268 = arith.mulf %267, %266 : vector<1x256xf32>
    %269 = arith.addf %263, %268 : vector<1x256xf32>
    %c0_188 = arith.constant 0 : index
    %c16 = arith.constant 16 : index
    %270 = memref.load %arg4[%c0_188, %c16] : memref<2x49xf32, #tpu.memory_space<smem>>
    %c0_189 = arith.constant 0 : index
    %c0_190 = arith.constant 0 : index
    %c111 = arith.constant 111 : index
    %271 = vector.load %arg15[%c0_189, %c0_190, %c111] : memref<2x1x512xf32, #tpu.memory_space<vmem>>, vector<1x1x256xf32>
    %272 = vector.shape_cast %271 : vector<1x1x256xf32> to vector<1x256xf32>
    %273 = vector.broadcast %270 : f32 to vector<1x256xf32>
    %274 = arith.mulf %273, %272 : vector<1x256xf32>
    %275 = arith.addf %269, %274 : vector<1x256xf32>
    %c1_191 = arith.constant 1 : index
    %c16_192 = arith.constant 16 : index
    %276 = memref.load %arg4[%c1_191, %c16_192] : memref<2x49xf32, #tpu.memory_space<smem>>
    %c1_193 = arith.constant 1 : index
    %c0_194 = arith.constant 0 : index
    %c111_195 = arith.constant 111 : index
    %277 = vector.load %arg15[%c1_193, %c0_194, %c111_195] : memref<2x1x512xf32, #tpu.memory_space<vmem>>, vector<1x1x256xf32>
    %278 = vector.shape_cast %277 : vector<1x1x256xf32> to vector<1x256xf32>
    %279 = vector.broadcast %276 : f32 to vector<1x256xf32>
    %280 = arith.mulf %279, %278 : vector<1x256xf32>
    %281 = arith.addf %275, %280 : vector<1x256xf32>
    %c0_196 = arith.constant 0 : index
    %c23 = arith.constant 23 : index
    %282 = memref.load %arg4[%c0_196, %c23] : memref<2x49xf32, #tpu.memory_space<smem>>
    %c0_197 = arith.constant 0 : index
    %c0_198 = arith.constant 0 : index
    %c127 = arith.constant 127 : index
    %283 = vector.load %arg15[%c0_197, %c0_198, %c127] : memref<2x1x512xf32, #tpu.memory_space<vmem>>, vector<1x1x256xf32>
    %284 = vector.shape_cast %283 : vector<1x1x256xf32> to vector<1x256xf32>
    %285 = vector.broadcast %282 : f32 to vector<1x256xf32>
    %286 = arith.mulf %285, %284 : vector<1x256xf32>
    %287 = arith.addf %281, %286 : vector<1x256xf32>
    %c1_199 = arith.constant 1 : index
    %c23_200 = arith.constant 23 : index
    %288 = memref.load %arg4[%c1_199, %c23_200] : memref<2x49xf32, #tpu.memory_space<smem>>
    %c1_201 = arith.constant 1 : index
    %c0_202 = arith.constant 0 : index
    %c127_203 = arith.constant 127 : index
    %289 = vector.load %arg15[%c1_201, %c0_202, %c127_203] : memref<2x1x512xf32, #tpu.memory_space<vmem>>, vector<1x1x256xf32>
    %290 = vector.shape_cast %289 : vector<1x1x256xf32> to vector<1x256xf32>
    %291 = vector.broadcast %288 : f32 to vector<1x256xf32>
    %292 = arith.mulf %291, %290 : vector<1x256xf32>
    %293 = arith.addf %287, %292 : vector<1x256xf32>
    %c0_204 = arith.constant 0 : index
    %c30 = arith.constant 30 : index
    %294 = memref.load %arg4[%c0_204, %c30] : memref<2x49xf32, #tpu.memory_space<smem>>
    %c0_205 = arith.constant 0 : index
    %c0_206 = arith.constant 0 : index
    %c143 = arith.constant 143 : index
    %295 = vector.load %arg15[%c0_205, %c0_206, %c143] : memref<2x1x512xf32, #tpu.memory_space<vmem>>, vector<1x1x256xf32>
    %296 = vector.shape_cast %295 : vector<1x1x256xf32> to vector<1x256xf32>
    %297 = vector.broadcast %294 : f32 to vector<1x256xf32>
    %298 = arith.mulf %297, %296 : vector<1x256xf32>
    %299 = arith.addf %293, %298 : vector<1x256xf32>
    %c1_207 = arith.constant 1 : index
    %c30_208 = arith.constant 30 : index
    %300 = memref.load %arg4[%c1_207, %c30_208] : memref<2x49xf32, #tpu.memory_space<smem>>
    %c1_209 = arith.constant 1 : index
    %c0_210 = arith.constant 0 : index
    %c143_211 = arith.constant 143 : index
    %301 = vector.load %arg15[%c1_209, %c0_210, %c143_211] : memref<2x1x512xf32, #tpu.memory_space<vmem>>, vector<1x1x256xf32>
    %302 = vector.shape_cast %301 : vector<1x1x256xf32> to vector<1x256xf32>
    %303 = vector.broadcast %300 : f32 to vector<1x256xf32>
    %304 = arith.mulf %303, %302 : vector<1x256xf32>
    %305 = arith.addf %299, %304 : vector<1x256xf32>
    %c0_212 = arith.constant 0 : index
    %c37 = arith.constant 37 : index
    %306 = memref.load %arg4[%c0_212, %c37] : memref<2x49xf32, #tpu.memory_space<smem>>
    %c0_213 = arith.constant 0 : index
    %c0_214 = arith.constant 0 : index
    %c159 = arith.constant 159 : index
    %307 = vector.load %arg15[%c0_213, %c0_214, %c159] : memref<2x1x512xf32, #tpu.memory_space<vmem>>, vector<1x1x256xf32>
    %308 = vector.shape_cast %307 : vector<1x1x256xf32> to vector<1x256xf32>
    %309 = vector.broadcast %306 : f32 to vector<1x256xf32>
    %310 = arith.mulf %309, %308 : vector<1x256xf32>
    %311 = arith.addf %305, %310 : vector<1x256xf32>
    %c1_215 = arith.constant 1 : index
    %c37_216 = arith.constant 37 : index
    %312 = memref.load %arg4[%c1_215, %c37_216] : memref<2x49xf32, #tpu.memory_space<smem>>
    %c1_217 = arith.constant 1 : index
    %c0_218 = arith.constant 0 : index
    %c159_219 = arith.constant 159 : index
    %313 = vector.load %arg15[%c1_217, %c0_218, %c159_219] : memref<2x1x512xf32, #tpu.memory_space<vmem>>, vector<1x1x256xf32>
    %314 = vector.shape_cast %313 : vector<1x1x256xf32> to vector<1x256xf32>
    %315 = vector.broadcast %312 : f32 to vector<1x256xf32>
    %316 = arith.mulf %315, %314 : vector<1x256xf32>
    %317 = arith.addf %311, %316 : vector<1x256xf32>
    %c0_220 = arith.constant 0 : index
    %c44 = arith.constant 44 : index
    %318 = memref.load %arg4[%c0_220, %c44] : memref<2x49xf32, #tpu.memory_space<smem>>
    %c0_221 = arith.constant 0 : index
    %c0_222 = arith.constant 0 : index
    %c175 = arith.constant 175 : index
    %319 = vector.load %arg15[%c0_221, %c0_222, %c175] : memref<2x1x512xf32, #tpu.memory_space<vmem>>, vector<1x1x256xf32>
    %320 = vector.shape_cast %319 : vector<1x1x256xf32> to vector<1x256xf32>
    %321 = vector.broadcast %318 : f32 to vector<1x256xf32>
    %322 = arith.mulf %321, %320 : vector<1x256xf32>
    %323 = arith.addf %317, %322 : vector<1x256xf32>
    %c1_223 = arith.constant 1 : index
    %c44_224 = arith.constant 44 : index
    %324 = memref.load %arg4[%c1_223, %c44_224] : memref<2x49xf32, #tpu.memory_space<smem>>
    %c1_225 = arith.constant 1 : index
    %c0_226 = arith.constant 0 : index
    %c175_227 = arith.constant 175 : index
    %325 = vector.load %arg15[%c1_225, %c0_226, %c175_227] : memref<2x1x512xf32, #tpu.memory_space<vmem>>, vector<1x1x256xf32>
    %326 = vector.shape_cast %325 : vector<1x1x256xf32> to vector<1x256xf32>
    %327 = vector.broadcast %324 : f32 to vector<1x256xf32>
    %328 = arith.mulf %327, %326 : vector<1x256xf32>
    %329 = arith.addf %323, %328 : vector<1x256xf32>
    %330 = arith.mulf %329, %7 : vector<1x256xf32>
    %331 = arith.addf %244, %330 : vector<1x256xf32>
    %cst_228 = arith.constant 0.000000e+00 : f32
    %332 = vector.broadcast %cst_228 : f32 to vector<1x256xf32>
    %c0_229 = arith.constant 0 : index
    %c3 = arith.constant 3 : index
    %333 = memref.load %arg4[%c0_229, %c3] : memref<2x49xf32, #tpu.memory_space<smem>>
    %c0_230 = arith.constant 0 : index
    %c0_231 = arith.constant 0 : index
    %c80 = arith.constant 80 : index
    %334 = vector.load %arg15[%c0_230, %c0_231, %c80] : memref<2x1x512xf32, #tpu.memory_space<vmem>>, vector<1x1x256xf32>
    %335 = vector.shape_cast %334 : vector<1x1x256xf32> to vector<1x256xf32>
    %336 = vector.broadcast %333 : f32 to vector<1x256xf32>
    %337 = arith.mulf %336, %335 : vector<1x256xf32>
    %338 = arith.addf %332, %337 : vector<1x256xf32>
    %c1_232 = arith.constant 1 : index
    %c3_233 = arith.constant 3 : index
    %339 = memref.load %arg4[%c1_232, %c3_233] : memref<2x49xf32, #tpu.memory_space<smem>>
    %c1_234 = arith.constant 1 : index
    %c0_235 = arith.constant 0 : index
    %c80_236 = arith.constant 80 : index
    %340 = vector.load %arg15[%c1_234, %c0_235, %c80_236] : memref<2x1x512xf32, #tpu.memory_space<vmem>>, vector<1x1x256xf32>
    %341 = vector.shape_cast %340 : vector<1x1x256xf32> to vector<1x256xf32>
    %342 = vector.broadcast %339 : f32 to vector<1x256xf32>
    %343 = arith.mulf %342, %341 : vector<1x256xf32>
    %344 = arith.addf %338, %343 : vector<1x256xf32>
    %c0_237 = arith.constant 0 : index
    %c10 = arith.constant 10 : index
    %345 = memref.load %arg4[%c0_237, %c10] : memref<2x49xf32, #tpu.memory_space<smem>>
    %c0_238 = arith.constant 0 : index
    %c0_239 = arith.constant 0 : index
    %c96 = arith.constant 96 : index
    %346 = vector.load %arg15[%c0_238, %c0_239, %c96] : memref<2x1x512xf32, #tpu.memory_space<vmem>>, vector<1x1x256xf32>
    %347 = vector.shape_cast %346 : vector<1x1x256xf32> to vector<1x256xf32>
    %348 = vector.broadcast %345 : f32 to vector<1x256xf32>
    %349 = arith.mulf %348, %347 : vector<1x256xf32>
    %350 = arith.addf %344, %349 : vector<1x256xf32>
    %c1_240 = arith.constant 1 : index
    %c10_241 = arith.constant 10 : index
    %351 = memref.load %arg4[%c1_240, %c10_241] : memref<2x49xf32, #tpu.memory_space<smem>>
    %c1_242 = arith.constant 1 : index
    %c0_243 = arith.constant 0 : index
    %c96_244 = arith.constant 96 : index
    %352 = vector.load %arg15[%c1_242, %c0_243, %c96_244] : memref<2x1x512xf32, #tpu.memory_space<vmem>>, vector<1x1x256xf32>
    %353 = vector.shape_cast %352 : vector<1x1x256xf32> to vector<1x256xf32>
    %354 = vector.broadcast %351 : f32 to vector<1x256xf32>
    %355 = arith.mulf %354, %353 : vector<1x256xf32>
    %356 = arith.addf %350, %355 : vector<1x256xf32>
    %c0_245 = arith.constant 0 : index
    %c17 = arith.constant 17 : index
    %357 = memref.load %arg4[%c0_245, %c17] : memref<2x49xf32, #tpu.memory_space<smem>>
    %c0_246 = arith.constant 0 : index
    %c0_247 = arith.constant 0 : index
    %c112 = arith.constant 112 : index
    %358 = vector.load %arg15[%c0_246, %c0_247, %c112] : memref<2x1x512xf32, #tpu.memory_space<vmem>>, vector<1x1x256xf32>
    %359 = vector.shape_cast %358 : vector<1x1x256xf32> to vector<1x256xf32>
    %360 = vector.broadcast %357 : f32 to vector<1x256xf32>
    %361 = arith.mulf %360, %359 : vector<1x256xf32>
    %362 = arith.addf %356, %361 : vector<1x256xf32>
    %c1_248 = arith.constant 1 : index
    %c17_249 = arith.constant 17 : index
    %363 = memref.load %arg4[%c1_248, %c17_249] : memref<2x49xf32, #tpu.memory_space<smem>>
    %c1_250 = arith.constant 1 : index
    %c0_251 = arith.constant 0 : index
    %c112_252 = arith.constant 112 : index
    %364 = vector.load %arg15[%c1_250, %c0_251, %c112_252] : memref<2x1x512xf32, #tpu.memory_space<vmem>>, vector<1x1x256xf32>
    %365 = vector.shape_cast %364 : vector<1x1x256xf32> to vector<1x256xf32>
    %366 = vector.broadcast %363 : f32 to vector<1x256xf32>
    %367 = arith.mulf %366, %365 : vector<1x256xf32>
    %368 = arith.addf %362, %367 : vector<1x256xf32>
    %c0_253 = arith.constant 0 : index
    %c24 = arith.constant 24 : index
    %369 = memref.load %arg4[%c0_253, %c24] : memref<2x49xf32, #tpu.memory_space<smem>>
    %c0_254 = arith.constant 0 : index
    %c0_255 = arith.constant 0 : index
    %c128_256 = arith.constant 128 : index
    %370 = vector.load %arg15[%c0_254, %c0_255, %c128_256] : memref<2x1x512xf32, #tpu.memory_space<vmem>>, vector<1x1x256xf32>
    %371 = vector.shape_cast %370 : vector<1x1x256xf32> to vector<1x256xf32>
    %372 = vector.broadcast %369 : f32 to vector<1x256xf32>
    %373 = arith.mulf %372, %371 : vector<1x256xf32>
    %374 = arith.addf %368, %373 : vector<1x256xf32>
    %c1_257 = arith.constant 1 : index
    %c24_258 = arith.constant 24 : index
    %375 = memref.load %arg4[%c1_257, %c24_258] : memref<2x49xf32, #tpu.memory_space<smem>>
    %c1_259 = arith.constant 1 : index
    %c0_260 = arith.constant 0 : index
    %c128_261 = arith.constant 128 : index
    %376 = vector.load %arg15[%c1_259, %c0_260, %c128_261] : memref<2x1x512xf32, #tpu.memory_space<vmem>>, vector<1x1x256xf32>
    %377 = vector.shape_cast %376 : vector<1x1x256xf32> to vector<1x256xf32>
    %378 = vector.broadcast %375 : f32 to vector<1x256xf32>
    %379 = arith.mulf %378, %377 : vector<1x256xf32>
    %380 = arith.addf %374, %379 : vector<1x256xf32>
    %c0_262 = arith.constant 0 : index
    %c31 = arith.constant 31 : index
    %381 = memref.load %arg4[%c0_262, %c31] : memref<2x49xf32, #tpu.memory_space<smem>>
    %c0_263 = arith.constant 0 : index
    %c0_264 = arith.constant 0 : index
    %c144 = arith.constant 144 : index
    %382 = vector.load %arg15[%c0_263, %c0_264, %c144] : memref<2x1x512xf32, #tpu.memory_space<vmem>>, vector<1x1x256xf32>
    %383 = vector.shape_cast %382 : vector<1x1x256xf32> to vector<1x256xf32>
    %384 = vector.broadcast %381 : f32 to vector<1x256xf32>
    %385 = arith.mulf %384, %383 : vector<1x256xf32>
    %386 = arith.addf %380, %385 : vector<1x256xf32>
    %c1_265 = arith.constant 1 : index
    %c31_266 = arith.constant 31 : index
    %387 = memref.load %arg4[%c1_265, %c31_266] : memref<2x49xf32, #tpu.memory_space<smem>>
    %c1_267 = arith.constant 1 : index
    %c0_268 = arith.constant 0 : index
    %c144_269 = arith.constant 144 : index
    %388 = vector.load %arg15[%c1_267, %c0_268, %c144_269] : memref<2x1x512xf32, #tpu.memory_space<vmem>>, vector<1x1x256xf32>
    %389 = vector.shape_cast %388 : vector<1x1x256xf32> to vector<1x256xf32>
    %390 = vector.broadcast %387 : f32 to vector<1x256xf32>
    %391 = arith.mulf %390, %389 : vector<1x256xf32>
    %392 = arith.addf %386, %391 : vector<1x256xf32>
    %c0_270 = arith.constant 0 : index
    %c38 = arith.constant 38 : index
    %393 = memref.load %arg4[%c0_270, %c38] : memref<2x49xf32, #tpu.memory_space<smem>>
    %c0_271 = arith.constant 0 : index
    %c0_272 = arith.constant 0 : index
    %c160 = arith.constant 160 : index
    %394 = vector.load %arg15[%c0_271, %c0_272, %c160] : memref<2x1x512xf32, #tpu.memory_space<vmem>>, vector<1x1x256xf32>
    %395 = vector.shape_cast %394 : vector<1x1x256xf32> to vector<1x256xf32>
    %396 = vector.broadcast %393 : f32 to vector<1x256xf32>
    %397 = arith.mulf %396, %395 : vector<1x256xf32>
    %398 = arith.addf %392, %397 : vector<1x256xf32>
    %c1_273 = arith.constant 1 : index
    %c38_274 = arith.constant 38 : index
    %399 = memref.load %arg4[%c1_273, %c38_274] : memref<2x49xf32, #tpu.memory_space<smem>>
    %c1_275 = arith.constant 1 : index
    %c0_276 = arith.constant 0 : index
    %c160_277 = arith.constant 160 : index
    %400 = vector.load %arg15[%c1_275, %c0_276, %c160_277] : memref<2x1x512xf32, #tpu.memory_space<vmem>>, vector<1x1x256xf32>
    %401 = vector.shape_cast %400 : vector<1x1x256xf32> to vector<1x256xf32>
    %402 = vector.broadcast %399 : f32 to vector<1x256xf32>
    %403 = arith.mulf %402, %401 : vector<1x256xf32>
    %404 = arith.addf %398, %403 : vector<1x256xf32>
    %c0_278 = arith.constant 0 : index
    %c45 = arith.constant 45 : index
    %405 = memref.load %arg4[%c0_278, %c45] : memref<2x49xf32, #tpu.memory_space<smem>>
    %c0_279 = arith.constant 0 : index
    %c0_280 = arith.constant 0 : index
    %c176 = arith.constant 176 : index
    %406 = vector.load %arg15[%c0_279, %c0_280, %c176] : memref<2x1x512xf32, #tpu.memory_space<vmem>>, vector<1x1x256xf32>
    %407 = vector.shape_cast %406 : vector<1x1x256xf32> to vector<1x256xf32>
    %408 = vector.broadcast %405 : f32 to vector<1x256xf32>
    %409 = arith.mulf %408, %407 : vector<1x256xf32>
    %410 = arith.addf %404, %409 : vector<1x256xf32>
    %c1_281 = arith.constant 1 : index
    %c45_282 = arith.constant 45 : index
    %411 = memref.load %arg4[%c1_281, %c45_282] : memref<2x49xf32, #tpu.memory_space<smem>>
    %c1_283 = arith.constant 1 : index
    %c0_284 = arith.constant 0 : index
    %c176_285 = arith.constant 176 : index
    %412 = vector.load %arg15[%c1_283, %c0_284, %c176_285] : memref<2x1x512xf32, #tpu.memory_space<vmem>>, vector<1x1x256xf32>
    %413 = vector.shape_cast %412 : vector<1x1x256xf32> to vector<1x256xf32>
    %414 = vector.broadcast %411 : f32 to vector<1x256xf32>
    %415 = arith.mulf %414, %413 : vector<1x256xf32>
    %416 = arith.addf %410, %415 : vector<1x256xf32>
    %417 = arith.addf %331, %416 : vector<1x256xf32>
    %cst_286 = arith.constant 0.000000e+00 : f32
    %418 = vector.broadcast %cst_286 : f32 to vector<1x256xf32>
    %c0_287 = arith.constant 0 : index
    %c4_288 = arith.constant 4 : index
    %419 = memref.load %arg4[%c0_287, %c4_288] : memref<2x49xf32, #tpu.memory_space<smem>>
    %c0_289 = arith.constant 0 : index
    %c0_290 = arith.constant 0 : index
    %c81 = arith.constant 81 : index
    %420 = vector.load %arg15[%c0_289, %c0_290, %c81] : memref<2x1x512xf32, #tpu.memory_space<vmem>>, vector<1x1x256xf32>
    %421 = vector.shape_cast %420 : vector<1x1x256xf32> to vector<1x256xf32>
    %422 = vector.broadcast %419 : f32 to vector<1x256xf32>
    %423 = arith.mulf %422, %421 : vector<1x256xf32>
    %424 = arith.addf %418, %423 : vector<1x256xf32>
    %c1_291 = arith.constant 1 : index
    %c4_292 = arith.constant 4 : index
    %425 = memref.load %arg4[%c1_291, %c4_292] : memref<2x49xf32, #tpu.memory_space<smem>>
    %c1_293 = arith.constant 1 : index
    %c0_294 = arith.constant 0 : index
    %c81_295 = arith.constant 81 : index
    %426 = vector.load %arg15[%c1_293, %c0_294, %c81_295] : memref<2x1x512xf32, #tpu.memory_space<vmem>>, vector<1x1x256xf32>
    %427 = vector.shape_cast %426 : vector<1x1x256xf32> to vector<1x256xf32>
    %428 = vector.broadcast %425 : f32 to vector<1x256xf32>
    %429 = arith.mulf %428, %427 : vector<1x256xf32>
    %430 = arith.addf %424, %429 : vector<1x256xf32>
    %c0_296 = arith.constant 0 : index
    %c11 = arith.constant 11 : index
    %431 = memref.load %arg4[%c0_296, %c11] : memref<2x49xf32, #tpu.memory_space<smem>>
    %c0_297 = arith.constant 0 : index
    %c0_298 = arith.constant 0 : index
    %c97 = arith.constant 97 : index
    %432 = vector.load %arg15[%c0_297, %c0_298, %c97] : memref<2x1x512xf32, #tpu.memory_space<vmem>>, vector<1x1x256xf32>
    %433 = vector.shape_cast %432 : vector<1x1x256xf32> to vector<1x256xf32>
    %434 = vector.broadcast %431 : f32 to vector<1x256xf32>
    %435 = arith.mulf %434, %433 : vector<1x256xf32>
    %436 = arith.addf %430, %435 : vector<1x256xf32>
    %c1_299 = arith.constant 1 : index
    %c11_300 = arith.constant 11 : index
    %437 = memref.load %arg4[%c1_299, %c11_300] : memref<2x49xf32, #tpu.memory_space<smem>>
    %c1_301 = arith.constant 1 : index
    %c0_302 = arith.constant 0 : index
    %c97_303 = arith.constant 97 : index
    %438 = vector.load %arg15[%c1_301, %c0_302, %c97_303] : memref<2x1x512xf32, #tpu.memory_space<vmem>>, vector<1x1x256xf32>
    %439 = vector.shape_cast %438 : vector<1x1x256xf32> to vector<1x256xf32>
    %440 = vector.broadcast %437 : f32 to vector<1x256xf32>
    %441 = arith.mulf %440, %439 : vector<1x256xf32>
    %442 = arith.addf %436, %441 : vector<1x256xf32>
    %c0_304 = arith.constant 0 : index
    %c18 = arith.constant 18 : index
    %443 = memref.load %arg4[%c0_304, %c18] : memref<2x49xf32, #tpu.memory_space<smem>>
    %c0_305 = arith.constant 0 : index
    %c0_306 = arith.constant 0 : index
    %c113 = arith.constant 113 : index
    %444 = vector.load %arg15[%c0_305, %c0_306, %c113] : memref<2x1x512xf32, #tpu.memory_space<vmem>>, vector<1x1x256xf32>
    %445 = vector.shape_cast %444 : vector<1x1x256xf32> to vector<1x256xf32>
    %446 = vector.broadcast %443 : f32 to vector<1x256xf32>
    %447 = arith.mulf %446, %445 : vector<1x256xf32>
    %448 = arith.addf %442, %447 : vector<1x256xf32>
    %c1_307 = arith.constant 1 : index
    %c18_308 = arith.constant 18 : index
    %449 = memref.load %arg4[%c1_307, %c18_308] : memref<2x49xf32, #tpu.memory_space<smem>>
    %c1_309 = arith.constant 1 : index
    %c0_310 = arith.constant 0 : index
    %c113_311 = arith.constant 113 : index
    %450 = vector.load %arg15[%c1_309, %c0_310, %c113_311] : memref<2x1x512xf32, #tpu.memory_space<vmem>>, vector<1x1x256xf32>
    %451 = vector.shape_cast %450 : vector<1x1x256xf32> to vector<1x256xf32>
    %452 = vector.broadcast %449 : f32 to vector<1x256xf32>
    %453 = arith.mulf %452, %451 : vector<1x256xf32>
    %454 = arith.addf %448, %453 : vector<1x256xf32>
    %c0_312 = arith.constant 0 : index
    %c25 = arith.constant 25 : index
    %455 = memref.load %arg4[%c0_312, %c25] : memref<2x49xf32, #tpu.memory_space<smem>>
    %c0_313 = arith.constant 0 : index
    %c0_314 = arith.constant 0 : index
    %c129 = arith.constant 129 : index
    %456 = vector.load %arg15[%c0_313, %c0_314, %c129] : memref<2x1x512xf32, #tpu.memory_space<vmem>>, vector<1x1x256xf32>
    %457 = vector.shape_cast %456 : vector<1x1x256xf32> to vector<1x256xf32>
    %458 = vector.broadcast %455 : f32 to vector<1x256xf32>
    %459 = arith.mulf %458, %457 : vector<1x256xf32>
    %460 = arith.addf %454, %459 : vector<1x256xf32>
    %c1_315 = arith.constant 1 : index
    %c25_316 = arith.constant 25 : index
    %461 = memref.load %arg4[%c1_315, %c25_316] : memref<2x49xf32, #tpu.memory_space<smem>>
    %c1_317 = arith.constant 1 : index
    %c0_318 = arith.constant 0 : index
    %c129_319 = arith.constant 129 : index
    %462 = vector.load %arg15[%c1_317, %c0_318, %c129_319] : memref<2x1x512xf32, #tpu.memory_space<vmem>>, vector<1x1x256xf32>
    %463 = vector.shape_cast %462 : vector<1x1x256xf32> to vector<1x256xf32>
    %464 = vector.broadcast %461 : f32 to vector<1x256xf32>
    %465 = arith.mulf %464, %463 : vector<1x256xf32>
    %466 = arith.addf %460, %465 : vector<1x256xf32>
    %c0_320 = arith.constant 0 : index
    %c32 = arith.constant 32 : index
    %467 = memref.load %arg4[%c0_320, %c32] : memref<2x49xf32, #tpu.memory_space<smem>>
    %c0_321 = arith.constant 0 : index
    %c0_322 = arith.constant 0 : index
    %c145 = arith.constant 145 : index
    %468 = vector.load %arg15[%c0_321, %c0_322, %c145] : memref<2x1x512xf32, #tpu.memory_space<vmem>>, vector<1x1x256xf32>
    %469 = vector.shape_cast %468 : vector<1x1x256xf32> to vector<1x256xf32>
    %470 = vector.broadcast %467 : f32 to vector<1x256xf32>
    %471 = arith.mulf %470, %469 : vector<1x256xf32>
    %472 = arith.addf %466, %471 : vector<1x256xf32>
    %c1_323 = arith.constant 1 : index
    %c32_324 = arith.constant 32 : index
    %473 = memref.load %arg4[%c1_323, %c32_324] : memref<2x49xf32, #tpu.memory_space<smem>>
    %c1_325 = arith.constant 1 : index
    %c0_326 = arith.constant 0 : index
    %c145_327 = arith.constant 145 : index
    %474 = vector.load %arg15[%c1_325, %c0_326, %c145_327] : memref<2x1x512xf32, #tpu.memory_space<vmem>>, vector<1x1x256xf32>
    %475 = vector.shape_cast %474 : vector<1x1x256xf32> to vector<1x256xf32>
    %476 = vector.broadcast %473 : f32 to vector<1x256xf32>
    %477 = arith.mulf %476, %475 : vector<1x256xf32>
    %478 = arith.addf %472, %477 : vector<1x256xf32>
    %c0_328 = arith.constant 0 : index
    %c39 = arith.constant 39 : index
    %479 = memref.load %arg4[%c0_328, %c39] : memref<2x49xf32, #tpu.memory_space<smem>>
    %c0_329 = arith.constant 0 : index
    %c0_330 = arith.constant 0 : index
    %c161 = arith.constant 161 : index
    %480 = vector.load %arg15[%c0_329, %c0_330, %c161] : memref<2x1x512xf32, #tpu.memory_space<vmem>>, vector<1x1x256xf32>
    %481 = vector.shape_cast %480 : vector<1x1x256xf32> to vector<1x256xf32>
    %482 = vector.broadcast %479 : f32 to vector<1x256xf32>
    %483 = arith.mulf %482, %481 : vector<1x256xf32>
    %484 = arith.addf %478, %483 : vector<1x256xf32>
    %c1_331 = arith.constant 1 : index
    %c39_332 = arith.constant 39 : index
    %485 = memref.load %arg4[%c1_331, %c39_332] : memref<2x49xf32, #tpu.memory_space<smem>>
    %c1_333 = arith.constant 1 : index
    %c0_334 = arith.constant 0 : index
    %c161_335 = arith.constant 161 : index
    %486 = vector.load %arg15[%c1_333, %c0_334, %c161_335] : memref<2x1x512xf32, #tpu.memory_space<vmem>>, vector<1x1x256xf32>
    %487 = vector.shape_cast %486 : vector<1x1x256xf32> to vector<1x256xf32>
    %488 = vector.broadcast %485 : f32 to vector<1x256xf32>
    %489 = arith.mulf %488, %487 : vector<1x256xf32>
    %490 = arith.addf %484, %489 : vector<1x256xf32>
    %c0_336 = arith.constant 0 : index
    %c46 = arith.constant 46 : index
    %491 = memref.load %arg4[%c0_336, %c46] : memref<2x49xf32, #tpu.memory_space<smem>>
    %c0_337 = arith.constant 0 : index
    %c0_338 = arith.constant 0 : index
    %c177 = arith.constant 177 : index
    %492 = vector.load %arg15[%c0_337, %c0_338, %c177] : memref<2x1x512xf32, #tpu.memory_space<vmem>>, vector<1x1x256xf32>
    %493 = vector.shape_cast %492 : vector<1x1x256xf32> to vector<1x256xf32>
    %494 = vector.broadcast %491 : f32 to vector<1x256xf32>
    %495 = arith.mulf %494, %493 : vector<1x256xf32>
    %496 = arith.addf %490, %495 : vector<1x256xf32>
    %c1_339 = arith.constant 1 : index
    %c46_340 = arith.constant 46 : index
    %497 = memref.load %arg4[%c1_339, %c46_340] : memref<2x49xf32, #tpu.memory_space<smem>>
    %c1_341 = arith.constant 1 : index
    %c0_342 = arith.constant 0 : index
    %c177_343 = arith.constant 177 : index
    %498 = vector.load %arg15[%c1_341, %c0_342, %c177_343] : memref<2x1x512xf32, #tpu.memory_space<vmem>>, vector<1x1x256xf32>
    %499 = vector.shape_cast %498 : vector<1x1x256xf32> to vector<1x256xf32>
    %500 = vector.broadcast %497 : f32 to vector<1x256xf32>
    %501 = arith.mulf %500, %499 : vector<1x256xf32>
    %502 = arith.addf %496, %501 : vector<1x256xf32>
    %503 = arith.mulf %502, %9 : vector<1x256xf32>
    %504 = arith.addf %417, %503 : vector<1x256xf32>
    %cst_344 = arith.constant 0.000000e+00 : f32
    %505 = vector.broadcast %cst_344 : f32 to vector<1x256xf32>
    %c0_345 = arith.constant 0 : index
    %c5_346 = arith.constant 5 : index
    %506 = memref.load %arg4[%c0_345, %c5_346] : memref<2x49xf32, #tpu.memory_space<smem>>
    %c0_347 = arith.constant 0 : index
    %c0_348 = arith.constant 0 : index
    %c82 = arith.constant 82 : index
    %507 = vector.load %arg15[%c0_347, %c0_348, %c82] : memref<2x1x512xf32, #tpu.memory_space<vmem>>, vector<1x1x256xf32>
    %508 = vector.shape_cast %507 : vector<1x1x256xf32> to vector<1x256xf32>
    %509 = vector.broadcast %506 : f32 to vector<1x256xf32>
    %510 = arith.mulf %509, %508 : vector<1x256xf32>
    %511 = arith.addf %505, %510 : vector<1x256xf32>
    %c1_349 = arith.constant 1 : index
    %c5_350 = arith.constant 5 : index
    %512 = memref.load %arg4[%c1_349, %c5_350] : memref<2x49xf32, #tpu.memory_space<smem>>
    %c1_351 = arith.constant 1 : index
    %c0_352 = arith.constant 0 : index
    %c82_353 = arith.constant 82 : index
    %513 = vector.load %arg15[%c1_351, %c0_352, %c82_353] : memref<2x1x512xf32, #tpu.memory_space<vmem>>, vector<1x1x256xf32>
    %514 = vector.shape_cast %513 : vector<1x1x256xf32> to vector<1x256xf32>
    %515 = vector.broadcast %512 : f32 to vector<1x256xf32>
    %516 = arith.mulf %515, %514 : vector<1x256xf32>
    %517 = arith.addf %511, %516 : vector<1x256xf32>
    %c0_354 = arith.constant 0 : index
    %c12 = arith.constant 12 : index
    %518 = memref.load %arg4[%c0_354, %c12] : memref<2x49xf32, #tpu.memory_space<smem>>
    %c0_355 = arith.constant 0 : index
    %c0_356 = arith.constant 0 : index
    %c98 = arith.constant 98 : index
    %519 = vector.load %arg15[%c0_355, %c0_356, %c98] : memref<2x1x512xf32, #tpu.memory_space<vmem>>, vector<1x1x256xf32>
    %520 = vector.shape_cast %519 : vector<1x1x256xf32> to vector<1x256xf32>
    %521 = vector.broadcast %518 : f32 to vector<1x256xf32>
    %522 = arith.mulf %521, %520 : vector<1x256xf32>
    %523 = arith.addf %517, %522 : vector<1x256xf32>
    %c1_357 = arith.constant 1 : index
    %c12_358 = arith.constant 12 : index
    %524 = memref.load %arg4[%c1_357, %c12_358] : memref<2x49xf32, #tpu.memory_space<smem>>
    %c1_359 = arith.constant 1 : index
    %c0_360 = arith.constant 0 : index
    %c98_361 = arith.constant 98 : index
    %525 = vector.load %arg15[%c1_359, %c0_360, %c98_361] : memref<2x1x512xf32, #tpu.memory_space<vmem>>, vector<1x1x256xf32>
    %526 = vector.shape_cast %525 : vector<1x1x256xf32> to vector<1x256xf32>
    %527 = vector.broadcast %524 : f32 to vector<1x256xf32>
    %528 = arith.mulf %527, %526 : vector<1x256xf32>
    %529 = arith.addf %523, %528 : vector<1x256xf32>
    %c0_362 = arith.constant 0 : index
    %c19 = arith.constant 19 : index
    %530 = memref.load %arg4[%c0_362, %c19] : memref<2x49xf32, #tpu.memory_space<smem>>
    %c0_363 = arith.constant 0 : index
    %c0_364 = arith.constant 0 : index
    %c114 = arith.constant 114 : index
    %531 = vector.load %arg15[%c0_363, %c0_364, %c114] : memref<2x1x512xf32, #tpu.memory_space<vmem>>, vector<1x1x256xf32>
    %532 = vector.shape_cast %531 : vector<1x1x256xf32> to vector<1x256xf32>
    %533 = vector.broadcast %530 : f32 to vector<1x256xf32>
    %534 = arith.mulf %533, %532 : vector<1x256xf32>
    %535 = arith.addf %529, %534 : vector<1x256xf32>
    %c1_365 = arith.constant 1 : index
    %c19_366 = arith.constant 19 : index
    %536 = memref.load %arg4[%c1_365, %c19_366] : memref<2x49xf32, #tpu.memory_space<smem>>
    %c1_367 = arith.constant 1 : index
    %c0_368 = arith.constant 0 : index
    %c114_369 = arith.constant 114 : index
    %537 = vector.load %arg15[%c1_367, %c0_368, %c114_369] : memref<2x1x512xf32, #tpu.memory_space<vmem>>, vector<1x1x256xf32>
    %538 = vector.shape_cast %537 : vector<1x1x256xf32> to vector<1x256xf32>
    %539 = vector.broadcast %536 : f32 to vector<1x256xf32>
    %540 = arith.mulf %539, %538 : vector<1x256xf32>
    %541 = arith.addf %535, %540 : vector<1x256xf32>
    %c0_370 = arith.constant 0 : index
    %c26 = arith.constant 26 : index
    %542 = memref.load %arg4[%c0_370, %c26] : memref<2x49xf32, #tpu.memory_space<smem>>
    %c0_371 = arith.constant 0 : index
    %c0_372 = arith.constant 0 : index
    %c130 = arith.constant 130 : index
    %543 = vector.load %arg15[%c0_371, %c0_372, %c130] : memref<2x1x512xf32, #tpu.memory_space<vmem>>, vector<1x1x256xf32>
    %544 = vector.shape_cast %543 : vector<1x1x256xf32> to vector<1x256xf32>
    %545 = vector.broadcast %542 : f32 to vector<1x256xf32>
    %546 = arith.mulf %545, %544 : vector<1x256xf32>
    %547 = arith.addf %541, %546 : vector<1x256xf32>
    %c1_373 = arith.constant 1 : index
    %c26_374 = arith.constant 26 : index
    %548 = memref.load %arg4[%c1_373, %c26_374] : memref<2x49xf32, #tpu.memory_space<smem>>
    %c1_375 = arith.constant 1 : index
    %c0_376 = arith.constant 0 : index
    %c130_377 = arith.constant 130 : index
    %549 = vector.load %arg15[%c1_375, %c0_376, %c130_377] : memref<2x1x512xf32, #tpu.memory_space<vmem>>, vector<1x1x256xf32>
    %550 = vector.shape_cast %549 : vector<1x1x256xf32> to vector<1x256xf32>
    %551 = vector.broadcast %548 : f32 to vector<1x256xf32>
    %552 = arith.mulf %551, %550 : vector<1x256xf32>
    %553 = arith.addf %547, %552 : vector<1x256xf32>
    %c0_378 = arith.constant 0 : index
    %c33 = arith.constant 33 : index
    %554 = memref.load %arg4[%c0_378, %c33] : memref<2x49xf32, #tpu.memory_space<smem>>
    %c0_379 = arith.constant 0 : index
    %c0_380 = arith.constant 0 : index
    %c146 = arith.constant 146 : index
    %555 = vector.load %arg15[%c0_379, %c0_380, %c146] : memref<2x1x512xf32, #tpu.memory_space<vmem>>, vector<1x1x256xf32>
    %556 = vector.shape_cast %555 : vector<1x1x256xf32> to vector<1x256xf32>
    %557 = vector.broadcast %554 : f32 to vector<1x256xf32>
    %558 = arith.mulf %557, %556 : vector<1x256xf32>
    %559 = arith.addf %553, %558 : vector<1x256xf32>
    %c1_381 = arith.constant 1 : index
    %c33_382 = arith.constant 33 : index
    %560 = memref.load %arg4[%c1_381, %c33_382] : memref<2x49xf32, #tpu.memory_space<smem>>
    %c1_383 = arith.constant 1 : index
    %c0_384 = arith.constant 0 : index
    %c146_385 = arith.constant 146 : index
    %561 = vector.load %arg15[%c1_383, %c0_384, %c146_385] : memref<2x1x512xf32, #tpu.memory_space<vmem>>, vector<1x1x256xf32>
    %562 = vector.shape_cast %561 : vector<1x1x256xf32> to vector<1x256xf32>
    %563 = vector.broadcast %560 : f32 to vector<1x256xf32>
    %564 = arith.mulf %563, %562 : vector<1x256xf32>
    %565 = arith.addf %559, %564 : vector<1x256xf32>
    %c0_386 = arith.constant 0 : index
    %c40 = arith.constant 40 : index
    %566 = memref.load %arg4[%c0_386, %c40] : memref<2x49xf32, #tpu.memory_space<smem>>
    %c0_387 = arith.constant 0 : index
    %c0_388 = arith.constant 0 : index
    %c162 = arith.constant 162 : index
    %567 = vector.load %arg15[%c0_387, %c0_388, %c162] : memref<2x1x512xf32, #tpu.memory_space<vmem>>, vector<1x1x256xf32>
    %568 = vector.shape_cast %567 : vector<1x1x256xf32> to vector<1x256xf32>
    %569 = vector.broadcast %566 : f32 to vector<1x256xf32>
    %570 = arith.mulf %569, %568 : vector<1x256xf32>
    %571 = arith.addf %565, %570 : vector<1x256xf32>
    %c1_389 = arith.constant 1 : index
    %c40_390 = arith.constant 40 : index
    %572 = memref.load %arg4[%c1_389, %c40_390] : memref<2x49xf32, #tpu.memory_space<smem>>
    %c1_391 = arith.constant 1 : index
    %c0_392 = arith.constant 0 : index
    %c162_393 = arith.constant 162 : index
    %573 = vector.load %arg15[%c1_391, %c0_392, %c162_393] : memref<2x1x512xf32, #tpu.memory_space<vmem>>, vector<1x1x256xf32>
    %574 = vector.shape_cast %573 : vector<1x1x256xf32> to vector<1x256xf32>
    %575 = vector.broadcast %572 : f32 to vector<1x256xf32>
    %576 = arith.mulf %575, %574 : vector<1x256xf32>
    %577 = arith.addf %571, %576 : vector<1x256xf32>
    %c0_394 = arith.constant 0 : index
    %c47 = arith.constant 47 : index
    %578 = memref.load %arg4[%c0_394, %c47] : memref<2x49xf32, #tpu.memory_space<smem>>
    %c0_395 = arith.constant 0 : index
    %c0_396 = arith.constant 0 : index
    %c178 = arith.constant 178 : index
    %579 = vector.load %arg15[%c0_395, %c0_396, %c178] : memref<2x1x512xf32, #tpu.memory_space<vmem>>, vector<1x1x256xf32>
    %580 = vector.shape_cast %579 : vector<1x1x256xf32> to vector<1x256xf32>
    %581 = vector.broadcast %578 : f32 to vector<1x256xf32>
    %582 = arith.mulf %581, %580 : vector<1x256xf32>
    %583 = arith.addf %577, %582 : vector<1x256xf32>
    %c1_397 = arith.constant 1 : index
    %c47_398 = arith.constant 47 : index
    %584 = memref.load %arg4[%c1_397, %c47_398] : memref<2x49xf32, #tpu.memory_space<smem>>
    %c1_399 = arith.constant 1 : index
    %c0_400 = arith.constant 0 : index
    %c178_401 = arith.constant 178 : index
    %585 = vector.load %arg15[%c1_399, %c0_400, %c178_401] : memref<2x1x512xf32, #tpu.memory_space<vmem>>, vector<1x1x256xf32>
    %586 = vector.shape_cast %585 : vector<1x1x256xf32> to vector<1x256xf32>
    %587 = vector.broadcast %584 : f32 to vector<1x256xf32>
    %588 = arith.mulf %587, %586 : vector<1x256xf32>
    %589 = arith.addf %583, %588 : vector<1x256xf32>
    %590 = arith.mulf %589, %11 : vector<1x256xf32>
    %591 = arith.addf %504, %590 : vector<1x256xf32>
    %cst_402 = arith.constant 0.000000e+00 : f32
    %592 = vector.broadcast %cst_402 : f32 to vector<1x256xf32>
    %c0_403 = arith.constant 0 : index
    %c6_404 = arith.constant 6 : index
    %593 = memref.load %arg4[%c0_403, %c6_404] : memref<2x49xf32, #tpu.memory_space<smem>>
    %c0_405 = arith.constant 0 : index
    %c0_406 = arith.constant 0 : index
    %c83 = arith.constant 83 : index
    %594 = vector.load %arg15[%c0_405, %c0_406, %c83] : memref<2x1x512xf32, #tpu.memory_space<vmem>>, vector<1x1x256xf32>
    %595 = vector.shape_cast %594 : vector<1x1x256xf32> to vector<1x256xf32>
    %596 = vector.broadcast %593 : f32 to vector<1x256xf32>
    %597 = arith.mulf %596, %595 : vector<1x256xf32>
    %598 = arith.addf %592, %597 : vector<1x256xf32>
    %c1_407 = arith.constant 1 : index
    %c6_408 = arith.constant 6 : index
    %599 = memref.load %arg4[%c1_407, %c6_408] : memref<2x49xf32, #tpu.memory_space<smem>>
    %c1_409 = arith.constant 1 : index
    %c0_410 = arith.constant 0 : index
    %c83_411 = arith.constant 83 : index
    %600 = vector.load %arg15[%c1_409, %c0_410, %c83_411] : memref<2x1x512xf32, #tpu.memory_space<vmem>>, vector<1x1x256xf32>
    %601 = vector.shape_cast %600 : vector<1x1x256xf32> to vector<1x256xf32>
    %602 = vector.broadcast %599 : f32 to vector<1x256xf32>
    %603 = arith.mulf %602, %601 : vector<1x256xf32>
    %604 = arith.addf %598, %603 : vector<1x256xf32>
    %c0_412 = arith.constant 0 : index
    %c13 = arith.constant 13 : index
    %605 = memref.load %arg4[%c0_412, %c13] : memref<2x49xf32, #tpu.memory_space<smem>>
    %c0_413 = arith.constant 0 : index
    %c0_414 = arith.constant 0 : index
    %c99 = arith.constant 99 : index
    %606 = vector.load %arg15[%c0_413, %c0_414, %c99] : memref<2x1x512xf32, #tpu.memory_space<vmem>>, vector<1x1x256xf32>
    %607 = vector.shape_cast %606 : vector<1x1x256xf32> to vector<1x256xf32>
    %608 = vector.broadcast %605 : f32 to vector<1x256xf32>
    %609 = arith.mulf %608, %607 : vector<1x256xf32>
    %610 = arith.addf %604, %609 : vector<1x256xf32>
    %c1_415 = arith.constant 1 : index
    %c13_416 = arith.constant 13 : index
    %611 = memref.load %arg4[%c1_415, %c13_416] : memref<2x49xf32, #tpu.memory_space<smem>>
    %c1_417 = arith.constant 1 : index
    %c0_418 = arith.constant 0 : index
    %c99_419 = arith.constant 99 : index
    %612 = vector.load %arg15[%c1_417, %c0_418, %c99_419] : memref<2x1x512xf32, #tpu.memory_space<vmem>>, vector<1x1x256xf32>
    %613 = vector.shape_cast %612 : vector<1x1x256xf32> to vector<1x256xf32>
    %614 = vector.broadcast %611 : f32 to vector<1x256xf32>
    %615 = arith.mulf %614, %613 : vector<1x256xf32>
    %616 = arith.addf %610, %615 : vector<1x256xf32>
    %c0_420 = arith.constant 0 : index
    %c20 = arith.constant 20 : index
    %617 = memref.load %arg4[%c0_420, %c20] : memref<2x49xf32, #tpu.memory_space<smem>>
    %c0_421 = arith.constant 0 : index
    %c0_422 = arith.constant 0 : index
    %c115 = arith.constant 115 : index
    %618 = vector.load %arg15[%c0_421, %c0_422, %c115] : memref<2x1x512xf32, #tpu.memory_space<vmem>>, vector<1x1x256xf32>
    %619 = vector.shape_cast %618 : vector<1x1x256xf32> to vector<1x256xf32>
    %620 = vector.broadcast %617 : f32 to vector<1x256xf32>
    %621 = arith.mulf %620, %619 : vector<1x256xf32>
    %622 = arith.addf %616, %621 : vector<1x256xf32>
    %c1_423 = arith.constant 1 : index
    %c20_424 = arith.constant 20 : index
    %623 = memref.load %arg4[%c1_423, %c20_424] : memref<2x49xf32, #tpu.memory_space<smem>>
    %c1_425 = arith.constant 1 : index
    %c0_426 = arith.constant 0 : index
    %c115_427 = arith.constant 115 : index
    %624 = vector.load %arg15[%c1_425, %c0_426, %c115_427] : memref<2x1x512xf32, #tpu.memory_space<vmem>>, vector<1x1x256xf32>
    %625 = vector.shape_cast %624 : vector<1x1x256xf32> to vector<1x256xf32>
    %626 = vector.broadcast %623 : f32 to vector<1x256xf32>
    %627 = arith.mulf %626, %625 : vector<1x256xf32>
    %628 = arith.addf %622, %627 : vector<1x256xf32>
    %c0_428 = arith.constant 0 : index
    %c27 = arith.constant 27 : index
    %629 = memref.load %arg4[%c0_428, %c27] : memref<2x49xf32, #tpu.memory_space<smem>>
    %c0_429 = arith.constant 0 : index
    %c0_430 = arith.constant 0 : index
    %c131 = arith.constant 131 : index
    %630 = vector.load %arg15[%c0_429, %c0_430, %c131] : memref<2x1x512xf32, #tpu.memory_space<vmem>>, vector<1x1x256xf32>
    %631 = vector.shape_cast %630 : vector<1x1x256xf32> to vector<1x256xf32>
    %632 = vector.broadcast %629 : f32 to vector<1x256xf32>
    %633 = arith.mulf %632, %631 : vector<1x256xf32>
    %634 = arith.addf %628, %633 : vector<1x256xf32>
    %c1_431 = arith.constant 1 : index
    %c27_432 = arith.constant 27 : index
    %635 = memref.load %arg4[%c1_431, %c27_432] : memref<2x49xf32, #tpu.memory_space<smem>>
    %c1_433 = arith.constant 1 : index
    %c0_434 = arith.constant 0 : index
    %c131_435 = arith.constant 131 : index
    %636 = vector.load %arg15[%c1_433, %c0_434, %c131_435] : memref<2x1x512xf32, #tpu.memory_space<vmem>>, vector<1x1x256xf32>
    %637 = vector.shape_cast %636 : vector<1x1x256xf32> to vector<1x256xf32>
    %638 = vector.broadcast %635 : f32 to vector<1x256xf32>
    %639 = arith.mulf %638, %637 : vector<1x256xf32>
    %640 = arith.addf %634, %639 : vector<1x256xf32>
    %c0_436 = arith.constant 0 : index
    %c34 = arith.constant 34 : index
    %641 = memref.load %arg4[%c0_436, %c34] : memref<2x49xf32, #tpu.memory_space<smem>>
    %c0_437 = arith.constant 0 : index
    %c0_438 = arith.constant 0 : index
    %c147 = arith.constant 147 : index
    %642 = vector.load %arg15[%c0_437, %c0_438, %c147] : memref<2x1x512xf32, #tpu.memory_space<vmem>>, vector<1x1x256xf32>
    %643 = vector.shape_cast %642 : vector<1x1x256xf32> to vector<1x256xf32>
    %644 = vector.broadcast %641 : f32 to vector<1x256xf32>
    %645 = arith.mulf %644, %643 : vector<1x256xf32>
    %646 = arith.addf %640, %645 : vector<1x256xf32>
    %c1_439 = arith.constant 1 : index
    %c34_440 = arith.constant 34 : index
    %647 = memref.load %arg4[%c1_439, %c34_440] : memref<2x49xf32, #tpu.memory_space<smem>>
    %c1_441 = arith.constant 1 : index
    %c0_442 = arith.constant 0 : index
    %c147_443 = arith.constant 147 : index
    %648 = vector.load %arg15[%c1_441, %c0_442, %c147_443] : memref<2x1x512xf32, #tpu.memory_space<vmem>>, vector<1x1x256xf32>
    %649 = vector.shape_cast %648 : vector<1x1x256xf32> to vector<1x256xf32>
    %650 = vector.broadcast %647 : f32 to vector<1x256xf32>
    %651 = arith.mulf %650, %649 : vector<1x256xf32>
    %652 = arith.addf %646, %651 : vector<1x256xf32>
    %c0_444 = arith.constant 0 : index
    %c41 = arith.constant 41 : index
    %653 = memref.load %arg4[%c0_444, %c41] : memref<2x49xf32, #tpu.memory_space<smem>>
    %c0_445 = arith.constant 0 : index
    %c0_446 = arith.constant 0 : index
    %c163 = arith.constant 163 : index
    %654 = vector.load %arg15[%c0_445, %c0_446, %c163] : memref<2x1x512xf32, #tpu.memory_space<vmem>>, vector<1x1x256xf32>
    %655 = vector.shape_cast %654 : vector<1x1x256xf32> to vector<1x256xf32>
    %656 = vector.broadcast %653 : f32 to vector<1x256xf32>
    %657 = arith.mulf %656, %655 : vector<1x256xf32>
    %658 = arith.addf %652, %657 : vector<1x256xf32>
    %c1_447 = arith.constant 1 : index
    %c41_448 = arith.constant 41 : index
    %659 = memref.load %arg4[%c1_447, %c41_448] : memref<2x49xf32, #tpu.memory_space<smem>>
    %c1_449 = arith.constant 1 : index
    %c0_450 = arith.constant 0 : index
    %c163_451 = arith.constant 163 : index
    %660 = vector.load %arg15[%c1_449, %c0_450, %c163_451] : memref<2x1x512xf32, #tpu.memory_space<vmem>>, vector<1x1x256xf32>
    %661 = vector.shape_cast %660 : vector<1x1x256xf32> to vector<1x256xf32>
    %662 = vector.broadcast %659 : f32 to vector<1x256xf32>
    %663 = arith.mulf %662, %661 : vector<1x256xf32>
    %664 = arith.addf %658, %663 : vector<1x256xf32>
    %c0_452 = arith.constant 0 : index
    %c48 = arith.constant 48 : index
    %665 = memref.load %arg4[%c0_452, %c48] : memref<2x49xf32, #tpu.memory_space<smem>>
    %c0_453 = arith.constant 0 : index
    %c0_454 = arith.constant 0 : index
    %c179 = arith.constant 179 : index
    %666 = vector.load %arg15[%c0_453, %c0_454, %c179] : memref<2x1x512xf32, #tpu.memory_space<vmem>>, vector<1x1x256xf32>
    %667 = vector.shape_cast %666 : vector<1x1x256xf32> to vector<1x256xf32>
    %668 = vector.broadcast %665 : f32 to vector<1x256xf32>
    %669 = arith.mulf %668, %667 : vector<1x256xf32>
    %670 = arith.addf %664, %669 : vector<1x256xf32>
    %c1_455 = arith.constant 1 : index
    %c48_456 = arith.constant 48 : index
    %671 = memref.load %arg4[%c1_455, %c48_456] : memref<2x49xf32, #tpu.memory_space<smem>>
    %c1_457 = arith.constant 1 : index
    %c0_458 = arith.constant 0 : index
    %c179_459 = arith.constant 179 : index
    %672 = vector.load %arg15[%c1_457, %c0_458, %c179_459] : memref<2x1x512xf32, #tpu.memory_space<vmem>>, vector<1x1x256xf32>
    %673 = vector.shape_cast %672 : vector<1x1x256xf32> to vector<1x256xf32>
    %674 = vector.broadcast %671 : f32 to vector<1x256xf32>
    %675 = arith.mulf %674, %673 : vector<1x256xf32>
    %676 = arith.addf %670, %675 : vector<1x256xf32>
    %677 = arith.mulf %676, %13 : vector<1x256xf32>
    %678 = arith.addf %591, %677 : vector<1x256xf32>
    %679 = arith.negf %678 : vector<1x256xf32>
    %680 = math.exp %679 : vector<1x256xf32>
    %cst_460 = arith.constant 1.000000e+00 : f32
    %681 = vector.broadcast %cst_460 : f32 to vector<1x256xf32>
    %682 = arith.addf %681, %680 : vector<1x256xf32>
    %683 = arith.divf %681, %682 : vector<1x256xf32>
    %684 = vector.broadcast %683 : vector<1x256xf32> to vector<16x256xf32>
    %685 = arith.mulf %57, %684 : vector<16x256xf32>
    %c0_461 = arith.constant 0 : index
    %c0_462 = arith.constant 0 : index
    %686 = vector.load %arg13[%c0_461, %c0_462] : memref<16x1xf32, #tpu.memory_space<vmem>>, vector<16x1xf32>
    %687 = vector.broadcast %686 : vector<16x1xf32> to vector<16x256xf32>
    %688 = arith.addf %685, %687 : vector<16x256xf32>
    %c0_463 = arith.constant 0 : index
    %c0_464 = arith.constant 0 : index
    %c0_465 = arith.constant 0 : index
    %689 = vector.load %arg14[%c0_463, %c0_464, %c0_465] : memref<1x16x256xf32, #tpu.memory_space<vmem>>, vector<1x16x256xf32>
    %690 = vector.shape_cast %689 : vector<1x16x256xf32> to vector<16x256xf32>
    %691 = vector.shape_cast %688 : vector<16x256xf32> to vector<1x16x256xf32>
    tpu.vector_store %arg14[%c0_463, %c0_464, %c0_465], %691 {strides = array<i32>} : memref<1x16x256xf32, #tpu.memory_space<vmem>>, vector<1x16x256xf32>,
    %c0_i32 = arith.constant 0 : i32
    %c3_i32 = arith.constant 3 : i32
    %692 = arith.addi %c0_i32, %c3_i32 : i32
    %c1_i32 = arith.constant 1 : i32
    scf.for %arg17 = %c0_i32 to %692 step %c1_i32  : i32 {
      %c1_i32_467 = arith.constant 1 : i32
      %693 = arith.muli %arg17, %c1_i32_467 : i32
      %c0_i32_468 = arith.constant 0 : i32
      %694 = arith.addi %c0_i32_468, %693 : i32
      %695 = arith.index_cast %694 : i32 to index
      %c0_469 = arith.constant 0 : index
      %c0_470 = arith.constant 0 : index
      %696 = vector.load %arg6[%695, %c0_469, %c0_470] : memref<3x32x16xf32, #tpu.memory_space<vmem>>, vector<1x32x16xf32>
      %697 = vector.shape_cast %696 : vector<1x32x16xf32> to vector<32x16xf32>
      %cst_471 = arith.constant dense<0.000000e+00> : vector<32x256xf32>
      %698 = tpu.matmul %697, %685, %cst_471 {dimension_numbers = #tpu.dot_dimension_numbers<[1], [0], [0], [1], [0, 0, 1, 1], [], []>} : vector<32x16xf32>, vector<16x256xf32>, vector<32x256xf32> -> vector<32x256xf32>
      %699 = arith.index_cast %694 : i32 to index
      %c0_472 = arith.constant 0 : index
      %c0_473 = arith.constant 0 : index
      %700 = vector.load %arg7[%699, %c0_472, %c0_473] : memref<3x32x1xf32, #tpu.memory_space<vmem>>, vector<1x32x1xf32>
      %701 = vector.shape_cast %700 : vector<1x32x1xf32> to vector<32x1xf32>
      %702 = vector.broadcast %701 : vector<32x1xf32> to vector<32x256xf32>
      %703 = arith.addf %698, %702 : vector<32x256xf32>
      %cst_474 = arith.constant 0.000000e+00 : f32
      %704 = vector.broadcast %cst_474 : f32 to vector<32x256xf32>
      %705 = arith.maximumf %703, %704 : vector<32x256xf32>
      %c0_475 = arith.constant 0 : index
      %c128_476 = arith.constant 128 : index
      %706 = vector.load %arg16[%c0_475, %c128_476] : memref<32x512xf32, #tpu.memory_space<vmem>>, vector<32x256xf32>
      tpu.vector_store %arg16[%c0_475, %c128_476], %705 {strides = array<i32>} : memref<32x512xf32, #tpu.memory_space<vmem>>, vector<32x256xf32>,
      %707 = arith.index_cast %694 : i32 to index
      %c0_477 = arith.constant 0 : index
      %c0_478 = arith.constant 0 : index
      %708 = vector.load %arg9[%707, %c0_477, %c0_478] : memref<3x32x9xf32, #tpu.memory_space<vmem>>, vector<1x32x9xf32>
      %709 = vector.shape_cast %708 : vector<1x32x9xf32> to vector<32x9xf32>
      %710 = arith.index_cast %694 : i32 to index
      %c0_479 = arith.constant 0 : index
      %c0_480 = arith.constant 0 : index
      %711 = vector.load %arg10[%710, %c0_479, %c0_480] : memref<3x32x25xf32, #tpu.memory_space<vmem>>, vector<1x32x25xf32>
      %712 = vector.shape_cast %711 : vector<1x32x25xf32> to vector<32x25xf32>
      %cst_481 = arith.constant 0.000000e+00 : f32
      %713 = vector.broadcast %cst_481 : f32 to vector<32x256xf32>
      %cst_482 = arith.constant 0.000000e+00 : f32
      %714 = vector.broadcast %cst_482 : f32 to vector<32x256xf32>
      %cst_483 = arith.constant 0.000000e+00 : f32
      %715 = vector.broadcast %cst_483 : f32 to vector<32x256xf32>
      %c0_484 = arith.constant 0 : index
      %c94_485 = arith.constant 94 : index
      %716 = vector.load %arg16[%c0_484, %c94_485] : memref<32x512xf32, #tpu.memory_space<vmem>>, vector<32x256xf32>
      %717 = vector.extract_strided_slice %712 {offsets = [0, 0], sizes = [32, 1], strides = [1, 1]} : vector<32x25xf32> to vector<32x1xf32>
      %718 = vector.broadcast %717 : vector<32x1xf32> to vector<32x256xf32>
      %719 = arith.mulf %718, %716 : vector<32x256xf32>
      %720 = arith.addf %715, %719 : vector<32x256xf32>
      %c0_486 = arith.constant 0 : index
      %c110_487 = arith.constant 110 : index
      %721 = vector.load %arg16[%c0_486, %c110_487] : memref<32x512xf32, #tpu.memory_space<vmem>>, vector<32x256xf32>
      %722 = vector.extract_strided_slice %712 {offsets = [0, 5], sizes = [32, 1], strides = [1, 1]} : vector<32x25xf32> to vector<32x1xf32>
      %723 = vector.broadcast %722 : vector<32x1xf32> to vector<32x256xf32>
      %724 = arith.mulf %723, %721 : vector<32x256xf32>
      %725 = arith.addf %720, %724 : vector<32x256xf32>
      %c0_488 = arith.constant 0 : index
      %c126_489 = arith.constant 126 : index
      %726 = vector.load %arg16[%c0_488, %c126_489] : memref<32x512xf32, #tpu.memory_space<vmem>>, vector<32x256xf32>
      %727 = vector.extract_strided_slice %712 {offsets = [0, 10], sizes = [32, 1], strides = [1, 1]} : vector<32x25xf32> to vector<32x1xf32>
      %728 = vector.broadcast %727 : vector<32x1xf32> to vector<32x256xf32>
      %729 = arith.mulf %728, %726 : vector<32x256xf32>
      %730 = arith.addf %725, %729 : vector<32x256xf32>
      %c0_490 = arith.constant 0 : index
      %c142_491 = arith.constant 142 : index
      %731 = vector.load %arg16[%c0_490, %c142_491] : memref<32x512xf32, #tpu.memory_space<vmem>>, vector<32x256xf32>
      %732 = vector.extract_strided_slice %712 {offsets = [0, 15], sizes = [32, 1], strides = [1, 1]} : vector<32x25xf32> to vector<32x1xf32>
      %733 = vector.broadcast %732 : vector<32x1xf32> to vector<32x256xf32>
      %734 = arith.mulf %733, %731 : vector<32x256xf32>
      %735 = arith.addf %730, %734 : vector<32x256xf32>
      %c0_492 = arith.constant 0 : index
      %c158_493 = arith.constant 158 : index
      %736 = vector.load %arg16[%c0_492, %c158_493] : memref<32x512xf32, #tpu.memory_space<vmem>>, vector<32x256xf32>
      %737 = vector.extract_strided_slice %712 {offsets = [0, 20], sizes = [32, 1], strides = [1, 1]} : vector<32x25xf32> to vector<32x1xf32>
      %738 = vector.broadcast %737 : vector<32x1xf32> to vector<32x256xf32>
      %739 = arith.mulf %738, %736 : vector<32x256xf32>
      %740 = arith.addf %735, %739 : vector<32x256xf32>
      %741 = vector.broadcast %5 : vector<1x256xf32> to vector<32x256xf32>
      %742 = arith.mulf %740, %741 : vector<32x256xf32>
      %743 = arith.addf %714, %742 : vector<32x256xf32>
      %cst_494 = arith.constant 0.000000e+00 : f32
      %744 = vector.broadcast %cst_494 : f32 to vector<32x256xf32>
      %cst_495 = arith.constant 0.000000e+00 : f32
      %745 = vector.broadcast %cst_495 : f32 to vector<32x256xf32>
      %c0_496 = arith.constant 0 : index
      %c95_497 = arith.constant 95 : index
      %746 = vector.load %arg16[%c0_496, %c95_497] : memref<32x512xf32, #tpu.memory_space<vmem>>, vector<32x256xf32>
      %747 = vector.extract_strided_slice %712 {offsets = [0, 1], sizes = [32, 1], strides = [1, 1]} : vector<32x25xf32> to vector<32x1xf32>
      %748 = vector.broadcast %747 : vector<32x1xf32> to vector<32x256xf32>
      %749 = arith.mulf %748, %746 : vector<32x256xf32>
      %750 = arith.addf %744, %749 : vector<32x256xf32>
      %c0_498 = arith.constant 0 : index
      %c111_499 = arith.constant 111 : index
      %751 = vector.load %arg16[%c0_498, %c111_499] : memref<32x512xf32, #tpu.memory_space<vmem>>, vector<32x256xf32>
      %752 = vector.extract_strided_slice %712 {offsets = [0, 6], sizes = [32, 1], strides = [1, 1]} : vector<32x25xf32> to vector<32x1xf32>
      %753 = vector.broadcast %752 : vector<32x1xf32> to vector<32x256xf32>
      %754 = arith.mulf %753, %751 : vector<32x256xf32>
      %755 = arith.addf %750, %754 : vector<32x256xf32>
      %756 = vector.extract_strided_slice %709 {offsets = [0, 0], sizes = [32, 1], strides = [1, 1]} : vector<32x9xf32> to vector<32x1xf32>
      %757 = vector.broadcast %756 : vector<32x1xf32> to vector<32x256xf32>
      %758 = arith.mulf %757, %751 : vector<32x256xf32>
      %759 = arith.addf %745, %758 : vector<32x256xf32>
      %c0_500 = arith.constant 0 : index
      %c127_501 = arith.constant 127 : index
      %760 = vector.load %arg16[%c0_500, %c127_501] : memref<32x512xf32, #tpu.memory_space<vmem>>, vector<32x256xf32>
      %761 = vector.extract_strided_slice %712 {offsets = [0, 11], sizes = [32, 1], strides = [1, 1]} : vector<32x25xf32> to vector<32x1xf32>
      %762 = vector.broadcast %761 : vector<32x1xf32> to vector<32x256xf32>
      %763 = arith.mulf %762, %760 : vector<32x256xf32>
      %764 = arith.addf %755, %763 : vector<32x256xf32>
      %765 = vector.extract_strided_slice %709 {offsets = [0, 3], sizes = [32, 1], strides = [1, 1]} : vector<32x9xf32> to vector<32x1xf32>
      %766 = vector.broadcast %765 : vector<32x1xf32> to vector<32x256xf32>
      %767 = arith.mulf %766, %760 : vector<32x256xf32>
      %768 = arith.addf %759, %767 : vector<32x256xf32>
      %c0_502 = arith.constant 0 : index
      %c143_503 = arith.constant 143 : index
      %769 = vector.load %arg16[%c0_502, %c143_503] : memref<32x512xf32, #tpu.memory_space<vmem>>, vector<32x256xf32>
      %770 = vector.extract_strided_slice %712 {offsets = [0, 16], sizes = [32, 1], strides = [1, 1]} : vector<32x25xf32> to vector<32x1xf32>
      %771 = vector.broadcast %770 : vector<32x1xf32> to vector<32x256xf32>
      %772 = arith.mulf %771, %769 : vector<32x256xf32>
      %773 = arith.addf %764, %772 : vector<32x256xf32>
      %774 = vector.extract_strided_slice %709 {offsets = [0, 6], sizes = [32, 1], strides = [1, 1]} : vector<32x9xf32> to vector<32x1xf32>
      %775 = vector.broadcast %774 : vector<32x1xf32> to vector<32x256xf32>
      %776 = arith.mulf %775, %769 : vector<32x256xf32>
      %777 = arith.addf %768, %776 : vector<32x256xf32>
      %c0_504 = arith.constant 0 : index
      %c159_505 = arith.constant 159 : index
      %778 = vector.load %arg16[%c0_504, %c159_505] : memref<32x512xf32, #tpu.memory_space<vmem>>, vector<32x256xf32>
      %779 = vector.extract_strided_slice %712 {offsets = [0, 21], sizes = [32, 1], strides = [1, 1]} : vector<32x25xf32> to vector<32x1xf32>
      %780 = vector.broadcast %779 : vector<32x1xf32> to vector<32x256xf32>
      %781 = arith.mulf %780, %778 : vector<32x256xf32>
      %782 = arith.addf %773, %781 : vector<32x256xf32>
      %783 = vector.broadcast %7 : vector<1x256xf32> to vector<32x256xf32>
      %784 = arith.mulf %782, %783 : vector<32x256xf32>
      %785 = vector.broadcast %7 : vector<1x256xf32> to vector<32x256xf32>
      %786 = arith.mulf %777, %785 : vector<32x256xf32>
      %787 = arith.addf %743, %784 : vector<32x256xf32>
      %788 = arith.addf %713, %786 : vector<32x256xf32>
      %cst_506 = arith.constant 0.000000e+00 : f32
      %789 = vector.broadcast %cst_506 : f32 to vector<32x256xf32>
      %cst_507 = arith.constant 0.000000e+00 : f32
      %790 = vector.broadcast %cst_507 : f32 to vector<32x256xf32>
      %c0_508 = arith.constant 0 : index
      %c96_509 = arith.constant 96 : index
      %791 = vector.load %arg16[%c0_508, %c96_509] : memref<32x512xf32, #tpu.memory_space<vmem>>, vector<32x256xf32>
      %792 = vector.extract_strided_slice %712 {offsets = [0, 2], sizes = [32, 1], strides = [1, 1]} : vector<32x25xf32> to vector<32x1xf32>
      %793 = vector.broadcast %792 : vector<32x1xf32> to vector<32x256xf32>
      %794 = arith.mulf %793, %791 : vector<32x256xf32>
      %795 = arith.addf %789, %794 : vector<32x256xf32>
      %c0_510 = arith.constant 0 : index
      %c112_511 = arith.constant 112 : index
      %796 = vector.load %arg16[%c0_510, %c112_511] : memref<32x512xf32, #tpu.memory_space<vmem>>, vector<32x256xf32>
      %797 = vector.extract_strided_slice %712 {offsets = [0, 7], sizes = [32, 1], strides = [1, 1]} : vector<32x25xf32> to vector<32x1xf32>
      %798 = vector.broadcast %797 : vector<32x1xf32> to vector<32x256xf32>
      %799 = arith.mulf %798, %796 : vector<32x256xf32>
      %800 = arith.addf %795, %799 : vector<32x256xf32>
      %801 = vector.extract_strided_slice %709 {offsets = [0, 1], sizes = [32, 1], strides = [1, 1]} : vector<32x9xf32> to vector<32x1xf32>
      %802 = vector.broadcast %801 : vector<32x1xf32> to vector<32x256xf32>
      %803 = arith.mulf %802, %796 : vector<32x256xf32>
      %804 = arith.addf %790, %803 : vector<32x256xf32>
      %c0_512 = arith.constant 0 : index
      %c128_513 = arith.constant 128 : index
      %805 = vector.load %arg16[%c0_512, %c128_513] : memref<32x512xf32, #tpu.memory_space<vmem>>, vector<32x256xf32>
      %806 = vector.extract_strided_slice %712 {offsets = [0, 12], sizes = [32, 1], strides = [1, 1]} : vector<32x25xf32> to vector<32x1xf32>
      %807 = vector.broadcast %806 : vector<32x1xf32> to vector<32x256xf32>
      %808 = arith.mulf %807, %805 : vector<32x256xf32>
      %809 = arith.addf %800, %808 : vector<32x256xf32>
      %810 = vector.extract_strided_slice %709 {offsets = [0, 4], sizes = [32, 1], strides = [1, 1]} : vector<32x9xf32> to vector<32x1xf32>
      %811 = vector.broadcast %810 : vector<32x1xf32> to vector<32x256xf32>
      %812 = arith.mulf %811, %805 : vector<32x256xf32>
      %813 = arith.addf %804, %812 : vector<32x256xf32>
      %c0_514 = arith.constant 0 : index
      %c144_515 = arith.constant 144 : index
      %814 = vector.load %arg16[%c0_514, %c144_515] : memref<32x512xf32, #tpu.memory_space<vmem>>, vector<32x256xf32>
      %815 = vector.extract_strided_slice %712 {offsets = [0, 17], sizes = [32, 1], strides = [1, 1]} : vector<32x25xf32> to vector<32x1xf32>
      %816 = vector.broadcast %815 : vector<32x1xf32> to vector<32x256xf32>
      %817 = arith.mulf %816, %814 : vector<32x256xf32>
      %818 = arith.addf %809, %817 : vector<32x256xf32>
      %819 = vector.extract_strided_slice %709 {offsets = [0, 7], sizes = [32, 1], strides = [1, 1]} : vector<32x9xf32> to vector<32x1xf32>
      %820 = vector.broadcast %819 : vector<32x1xf32> to vector<32x256xf32>
      %821 = arith.mulf %820, %814 : vector<32x256xf32>
      %822 = arith.addf %813, %821 : vector<32x256xf32>
      %c0_516 = arith.constant 0 : index
      %c160_517 = arith.constant 160 : index
      %823 = vector.load %arg16[%c0_516, %c160_517] : memref<32x512xf32, #tpu.memory_space<vmem>>, vector<32x256xf32>
      %824 = vector.extract_strided_slice %712 {offsets = [0, 22], sizes = [32, 1], strides = [1, 1]} : vector<32x25xf32> to vector<32x1xf32>
      %825 = vector.broadcast %824 : vector<32x1xf32> to vector<32x256xf32>
      %826 = arith.mulf %825, %823 : vector<32x256xf32>
      %827 = arith.addf %818, %826 : vector<32x256xf32>
      %828 = arith.addf %787, %827 : vector<32x256xf32>
      %829 = arith.addf %788, %822 : vector<32x256xf32>
      %cst_518 = arith.constant 0.000000e+00 : f32
      %830 = vector.broadcast %cst_518 : f32 to vector<32x256xf32>
      %cst_519 = arith.constant 0.000000e+00 : f32
      %831 = vector.broadcast %cst_519 : f32 to vector<32x256xf32>
      %c0_520 = arith.constant 0 : index
      %c97_521 = arith.constant 97 : index
      %832 = vector.load %arg16[%c0_520, %c97_521] : memref<32x512xf32, #tpu.memory_space<vmem>>, vector<32x256xf32>
      %833 = vector.extract_strided_slice %712 {offsets = [0, 3], sizes = [32, 1], strides = [1, 1]} : vector<32x25xf32> to vector<32x1xf32>
      %834 = vector.broadcast %833 : vector<32x1xf32> to vector<32x256xf32>
      %835 = arith.mulf %834, %832 : vector<32x256xf32>
      %836 = arith.addf %830, %835 : vector<32x256xf32>
      %c0_522 = arith.constant 0 : index
      %c113_523 = arith.constant 113 : index
      %837 = vector.load %arg16[%c0_522, %c113_523] : memref<32x512xf32, #tpu.memory_space<vmem>>, vector<32x256xf32>
      %838 = vector.extract_strided_slice %712 {offsets = [0, 8], sizes = [32, 1], strides = [1, 1]} : vector<32x25xf32> to vector<32x1xf32>
      %839 = vector.broadcast %838 : vector<32x1xf32> to vector<32x256xf32>
      %840 = arith.mulf %839, %837 : vector<32x256xf32>
      %841 = arith.addf %836, %840 : vector<32x256xf32>
      %842 = vector.extract_strided_slice %709 {offsets = [0, 2], sizes = [32, 1], strides = [1, 1]} : vector<32x9xf32> to vector<32x1xf32>
      %843 = vector.broadcast %842 : vector<32x1xf32> to vector<32x256xf32>
      %844 = arith.mulf %843, %837 : vector<32x256xf32>
      %845 = arith.addf %831, %844 : vector<32x256xf32>
      %c0_524 = arith.constant 0 : index
      %c129_525 = arith.constant 129 : index
      %846 = vector.load %arg16[%c0_524, %c129_525] : memref<32x512xf32, #tpu.memory_space<vmem>>, vector<32x256xf32>
      %847 = vector.extract_strided_slice %712 {offsets = [0, 13], sizes = [32, 1], strides = [1, 1]} : vector<32x25xf32> to vector<32x1xf32>
      %848 = vector.broadcast %847 : vector<32x1xf32> to vector<32x256xf32>
      %849 = arith.mulf %848, %846 : vector<32x256xf32>
      %850 = arith.addf %841, %849 : vector<32x256xf32>
      %851 = vector.extract_strided_slice %709 {offsets = [0, 5], sizes = [32, 1], strides = [1, 1]} : vector<32x9xf32> to vector<32x1xf32>
      %852 = vector.broadcast %851 : vector<32x1xf32> to vector<32x256xf32>
      %853 = arith.mulf %852, %846 : vector<32x256xf32>
      %854 = arith.addf %845, %853 : vector<32x256xf32>
      %c0_526 = arith.constant 0 : index
      %c145_527 = arith.constant 145 : index
      %855 = vector.load %arg16[%c0_526, %c145_527] : memref<32x512xf32, #tpu.memory_space<vmem>>, vector<32x256xf32>
      %856 = vector.extract_strided_slice %712 {offsets = [0, 18], sizes = [32, 1], strides = [1, 1]} : vector<32x25xf32> to vector<32x1xf32>
      %857 = vector.broadcast %856 : vector<32x1xf32> to vector<32x256xf32>
      %858 = arith.mulf %857, %855 : vector<32x256xf32>
      %859 = arith.addf %850, %858 : vector<32x256xf32>
      %860 = vector.extract_strided_slice %709 {offsets = [0, 8], sizes = [32, 1], strides = [1, 1]} : vector<32x9xf32> to vector<32x1xf32>
      %861 = vector.broadcast %860 : vector<32x1xf32> to vector<32x256xf32>
      %862 = arith.mulf %861, %855 : vector<32x256xf32>
      %863 = arith.addf %854, %862 : vector<32x256xf32>
      %c0_528 = arith.constant 0 : index
      %c161_529 = arith.constant 161 : index
      %864 = vector.load %arg16[%c0_528, %c161_529] : memref<32x512xf32, #tpu.memory_space<vmem>>, vector<32x256xf32>
      %865 = vector.extract_strided_slice %712 {offsets = [0, 23], sizes = [32, 1], strides = [1, 1]} : vector<32x25xf32> to vector<32x1xf32>
      %866 = vector.broadcast %865 : vector<32x1xf32> to vector<32x256xf32>
      %867 = arith.mulf %866, %864 : vector<32x256xf32>
      %868 = arith.addf %859, %867 : vector<32x256xf32>
      %869 = vector.broadcast %9 : vector<1x256xf32> to vector<32x256xf32>
      %870 = arith.mulf %868, %869 : vector<32x256xf32>
      %871 = vector.broadcast %9 : vector<1x256xf32> to vector<32x256xf32>
      %872 = arith.mulf %863, %871 : vector<32x256xf32>
      %873 = arith.addf %828, %870 : vector<32x256xf32>
      %874 = arith.addf %829, %872 : vector<32x256xf32>
      %cst_530 = arith.constant 0.000000e+00 : f32
      %875 = vector.broadcast %cst_530 : f32 to vector<32x256xf32>
      %c0_531 = arith.constant 0 : index
      %c98_532 = arith.constant 98 : index
      %876 = vector.load %arg16[%c0_531, %c98_532] : memref<32x512xf32, #tpu.memory_space<vmem>>, vector<32x256xf32>
      %877 = vector.extract_strided_slice %712 {offsets = [0, 4], sizes = [32, 1], strides = [1, 1]} : vector<32x25xf32> to vector<32x1xf32>
      %878 = vector.broadcast %877 : vector<32x1xf32> to vector<32x256xf32>
      %879 = arith.mulf %878, %876 : vector<32x256xf32>
      %880 = arith.addf %875, %879 : vector<32x256xf32>
      %c0_533 = arith.constant 0 : index
      %c114_534 = arith.constant 114 : index
      %881 = vector.load %arg16[%c0_533, %c114_534] : memref<32x512xf32, #tpu.memory_space<vmem>>, vector<32x256xf32>
      %882 = vector.extract_strided_slice %712 {offsets = [0, 9], sizes = [32, 1], strides = [1, 1]} : vector<32x25xf32> to vector<32x1xf32>
      %883 = vector.broadcast %882 : vector<32x1xf32> to vector<32x256xf32>
      %884 = arith.mulf %883, %881 : vector<32x256xf32>
      %885 = arith.addf %880, %884 : vector<32x256xf32>
      %c0_535 = arith.constant 0 : index
      %c130_536 = arith.constant 130 : index
      %886 = vector.load %arg16[%c0_535, %c130_536] : memref<32x512xf32, #tpu.memory_space<vmem>>, vector<32x256xf32>
      %887 = vector.extract_strided_slice %712 {offsets = [0, 14], sizes = [32, 1], strides = [1, 1]} : vector<32x25xf32> to vector<32x1xf32>
      %888 = vector.broadcast %887 : vector<32x1xf32> to vector<32x256xf32>
      %889 = arith.mulf %888, %886 : vector<32x256xf32>
      %890 = arith.addf %885, %889 : vector<32x256xf32>
      %c0_537 = arith.constant 0 : index
      %c146_538 = arith.constant 146 : index
      %891 = vector.load %arg16[%c0_537, %c146_538] : memref<32x512xf32, #tpu.memory_space<vmem>>, vector<32x256xf32>
      %892 = vector.extract_strided_slice %712 {offsets = [0, 19], sizes = [32, 1], strides = [1, 1]} : vector<32x25xf32> to vector<32x1xf32>
      %893 = vector.broadcast %892 : vector<32x1xf32> to vector<32x256xf32>
      %894 = arith.mulf %893, %891 : vector<32x256xf32>
      %895 = arith.addf %890, %894 : vector<32x256xf32>
      %c0_539 = arith.constant 0 : index
      %c162_540 = arith.constant 162 : index
      %896 = vector.load %arg16[%c0_539, %c162_540] : memref<32x512xf32, #tpu.memory_space<vmem>>, vector<32x256xf32>
      %897 = vector.extract_strided_slice %712 {offsets = [0, 24], sizes = [32, 1], strides = [1, 1]} : vector<32x25xf32> to vector<32x1xf32>
      %898 = vector.broadcast %897 : vector<32x1xf32> to vector<32x256xf32>
      %899 = arith.mulf %898, %896 : vector<32x256xf32>
      %900 = arith.addf %895, %899 : vector<32x256xf32>
      %901 = vector.broadcast %11 : vector<1x256xf32> to vector<32x256xf32>
      %902 = arith.mulf %900, %901 : vector<32x256xf32>
      %903 = arith.addf %873, %902 : vector<32x256xf32>
      %904 = arith.index_cast %694 : i32 to index
      %c0_541 = arith.constant 0 : index
      %c0_542 = arith.constant 0 : index
      %905 = vector.load %arg11[%904, %c0_541, %c0_542] : memref<3x32x3xf32, #tpu.memory_space<vmem>>, vector<1x32x3xf32>
      %906 = vector.shape_cast %905 : vector<1x32x3xf32> to vector<32x3xf32>
      %c0_543 = arith.constant 0 : index
      %c128_544 = arith.constant 128 : index
      %907 = vector.load %arg16[%c0_543, %c128_544] : memref<32x512xf32, #tpu.memory_space<vmem>>, vector<32x256xf32>
      %908 = arith.index_cast %694 : i32 to index
      %c0_545 = arith.constant 0 : index
      %c0_546 = arith.constant 0 : index
      %909 = vector.load %arg8[%908, %c0_545, %c0_546] : memref<3x32x1xf32, #tpu.memory_space<vmem>>, vector<1x32x1xf32>
      %910 = vector.shape_cast %909 : vector<1x32x1xf32> to vector<32x1xf32>
      %911 = vector.broadcast %910 : vector<32x1xf32> to vector<32x256xf32>
      %912 = arith.mulf %907, %911 : vector<32x256xf32>
      %913 = vector.extract_strided_slice %906 {offsets = [0, 0], sizes = [32, 1], strides = [1, 1]} : vector<32x3xf32> to vector<32x1xf32>
      %914 = vector.broadcast %913 : vector<32x1xf32> to vector<32x256xf32>
      %915 = arith.addf %912, %914 : vector<32x256xf32>
      %cst_547 = arith.constant 0.000000e+00 : f32
      %cst_548 = arith.constant 6.000000e+00 : f32
      %916 = vector.broadcast %cst_547 : f32 to vector<32x256xf32>
      %917 = arith.maximumf %916, %915 : vector<32x256xf32>
      %918 = vector.broadcast %cst_548 : f32 to vector<32x256xf32>
      %919 = arith.minimumf %918, %917 : vector<32x256xf32>
      %920 = vector.extract_strided_slice %906 {offsets = [0, 1], sizes = [32, 1], strides = [1, 1]} : vector<32x3xf32> to vector<32x1xf32>
      %921 = vector.broadcast %920 : vector<32x1xf32> to vector<32x256xf32>
      %922 = arith.addf %874, %921 : vector<32x256xf32>
      %cst_549 = arith.constant 0.000000e+00 : f32
      %cst_550 = arith.constant 6.000000e+00 : f32
      %923 = vector.broadcast %cst_549 : f32 to vector<32x256xf32>
      %924 = arith.maximumf %923, %922 : vector<32x256xf32>
      %925 = vector.broadcast %cst_550 : f32 to vector<32x256xf32>
      %926 = arith.minimumf %925, %924 : vector<32x256xf32>
      %927 = arith.addf %919, %926 : vector<32x256xf32>
      %928 = vector.extract_strided_slice %906 {offsets = [0, 2], sizes = [32, 1], strides = [1, 1]} : vector<32x3xf32> to vector<32x1xf32>
      %929 = vector.broadcast %928 : vector<32x1xf32> to vector<32x256xf32>
      %930 = arith.addf %903, %929 : vector<32x256xf32>
      %cst_551 = arith.constant 0.000000e+00 : f32
      %cst_552 = arith.constant 6.000000e+00 : f32
      %931 = vector.broadcast %cst_551 : f32 to vector<32x256xf32>
      %932 = arith.maximumf %931, %930 : vector<32x256xf32>
      %933 = vector.broadcast %cst_552 : f32 to vector<32x256xf32>
      %934 = arith.minimumf %933, %932 : vector<32x256xf32>
      %935 = arith.addf %927, %934 : vector<32x256xf32>
      %c0_553 = arith.constant 0 : index
      %c0_554 = arith.constant 0 : index
      %c0_555 = arith.constant 0 : index
      %936 = vector.load %arg14[%c0_553, %c0_554, %c0_555] : memref<1x16x256xf32, #tpu.memory_space<vmem>>, vector<1x16x256xf32>
      %937 = vector.shape_cast %936 : vector<1x16x256xf32> to vector<16x256xf32>
      %938 = arith.index_cast %694 : i32 to index
      %c0_556 = arith.constant 0 : index
      %c0_557 = arith.constant 0 : index
      %939 = vector.load %arg12[%938, %c0_556, %c0_557] : memref<3x16x32xf32, #tpu.memory_space<vmem>>, vector<1x16x32xf32>
      %940 = vector.shape_cast %939 : vector<1x16x32xf32> to vector<16x32xf32>
      %cst_558 = arith.constant dense<0.000000e+00> : vector<16x256xf32>
      %941 = tpu.matmul %940, %935, %cst_558 {dimension_numbers = #tpu.dot_dimension_numbers<[1], [0], [0], [1], [0, 0, 1, 1], [], []>} : vector<16x32xf32>, vector<32x256xf32>, vector<16x256xf32> -> vector<16x256xf32>
      %942 = arith.addf %937, %941 : vector<16x256xf32>
      %c0_559 = arith.constant 0 : index
      %c0_560 = arith.constant 0 : index
      %c0_561 = arith.constant 0 : index
      %943 = vector.load %arg14[%c0_559, %c0_560, %c0_561] : memref<1x16x256xf32, #tpu.memory_space<vmem>>, vector<1x16x256xf32>
      %944 = vector.shape_cast %943 : vector<1x16x256xf32> to vector<16x256xf32>
      %945 = vector.shape_cast %942 : vector<16x256xf32> to vector<1x16x256xf32>
      tpu.vector_store %arg14[%c0_559, %c0_560, %c0_561], %945 {strides = array<i32>} : memref<1x16x256xf32, #tpu.memory_space<vmem>>, vector<1x16x256xf32>,
    }
    %c3_i32_466 = arith.constant 3 : i32
    return
  }
  func.func @transform_0(%arg0: i32) -> (i32, i32, i32) {
    %c0_i32 = arith.constant 0 : i32
    %c0_i32_0 = arith.constant 0 : i32
    %c0_i32_1 = arith.constant 0 : i32
    return %arg0, %c0_i32, %c0_i32_0 : i32, i32, i32
  }
  func.func @transform_1(%arg0: i32) -> (i32, i32) {
    %c0_i32 = arith.constant 0 : i32
    %c0_i32_0 = arith.constant 0 : i32
    %c0_i32_1 = arith.constant 0 : i32
    return %c0_i32, %c0_i32_0 : i32, i32
  }
  func.func @transform_2(%arg0: i32) -> (i32, i32) {
    %c0_i32 = arith.constant 0 : i32
    %c0_i32_0 = arith.constant 0 : i32
    %c0_i32_1 = arith.constant 0 : i32
    return %c0_i32, %c0_i32_0 : i32, i32
  }
  func.func @transform_3(%arg0: i32) -> (i32, i32) {
    %c0_i32 = arith.constant 0 : i32
    %c0_i32_0 = arith.constant 0 : i32
    %c0_i32_1 = arith.constant 0 : i32
    return %c0_i32, %c0_i32_0 : i32, i32
  }
  func.func @transform_4(%arg0: i32) -> (i32, i32, i32) {
    %c0_i32 = arith.constant 0 : i32
    %c0_i32_0 = arith.constant 0 : i32
    %c0_i32_1 = arith.constant 0 : i32
    %c0_i32_2 = arith.constant 0 : i32
    return %c0_i32, %c0_i32_0, %c0_i32_1 : i32, i32, i32
  }
  func.func @transform_5(%arg0: i32) -> (i32, i32, i32) {
    %c0_i32 = arith.constant 0 : i32
    %c0_i32_0 = arith.constant 0 : i32
    %c0_i32_1 = arith.constant 0 : i32
    %c0_i32_2 = arith.constant 0 : i32
    return %c0_i32, %c0_i32_0, %c0_i32_1 : i32, i32, i32
  }
  func.func @transform_6(%arg0: i32) -> (i32, i32, i32) {
    %c0_i32 = arith.constant 0 : i32
    %c0_i32_0 = arith.constant 0 : i32
    %c0_i32_1 = arith.constant 0 : i32
    %c0_i32_2 = arith.constant 0 : i32
    return %c0_i32, %c0_i32_0, %c0_i32_1 : i32, i32, i32
  }
  func.func @transform_7(%arg0: i32) -> (i32, i32, i32) {
    %c0_i32 = arith.constant 0 : i32
    %c0_i32_0 = arith.constant 0 : i32
    %c0_i32_1 = arith.constant 0 : i32
    %c0_i32_2 = arith.constant 0 : i32
    return %c0_i32, %c0_i32_0, %c0_i32_1 : i32, i32, i32
  }
  func.func @transform_8(%arg0: i32) -> (i32, i32, i32) {
    %c0_i32 = arith.constant 0 : i32
    %c0_i32_0 = arith.constant 0 : i32
    %c0_i32_1 = arith.constant 0 : i32
    %c0_i32_2 = arith.constant 0 : i32
    return %c0_i32, %c0_i32_0, %c0_i32_1 : i32, i32, i32
  }
  func.func @transform_9(%arg0: i32) -> (i32, i32, i32) {
    %c0_i32 = arith.constant 0 : i32
    %c0_i32_0 = arith.constant 0 : i32
    %c0_i32_1 = arith.constant 0 : i32
    %c0_i32_2 = arith.constant 0 : i32
    return %c0_i32, %c0_i32_0, %c0_i32_1 : i32, i32, i32
  }
  func.func @transform_10(%arg0: i32) -> (i32, i32, i32) {
    %c0_i32 = arith.constant 0 : i32
    %c0_i32_0 = arith.constant 0 : i32
    %c0_i32_1 = arith.constant 0 : i32
    %c0_i32_2 = arith.constant 0 : i32
    return %c0_i32, %c0_i32_0, %c0_i32_1 : i32, i32, i32
  }
  func.func @transform_11(%arg0: i32) -> (i32, i32, i32) {
    %c0_i32 = arith.constant 0 : i32
    %c0_i32_0 = arith.constant 0 : i32
    %c0_i32_1 = arith.constant 0 : i32
    %c0_i32_2 = arith.constant 0 : i32
    return %c0_i32, %c0_i32_0, %c0_i32_1 : i32, i32, i32
  }
  func.func @transform_12(%arg0: i32) -> (i32, i32) {
    %c0_i32 = arith.constant 0 : i32
    %c0_i32_0 = arith.constant 0 : i32
    %c0_i32_1 = arith.constant 0 : i32
    return %c0_i32, %c0_i32_0 : i32, i32
  }
  func.func @transform_13(%arg0: i32) -> (i32, i32, i32) {
    %c0_i32 = arith.constant 0 : i32
    %c0_i32_0 = arith.constant 0 : i32
    %c0_i32_1 = arith.constant 0 : i32
    return %arg0, %c0_i32, %c0_i32_0 : i32, i32, i32
  }
}

</mosaic_0001>

<llo_original>
// kernel: emcam_forward.1
$region0: #{emcam_forward.1}
  #allocation0 [shape = 'u32[]', space=smem, size = 0x4, offset = 0x4, fixed_abs, tag = 'smem constant byte address 0x4 - core index']
  #allocation1 [shape = 'u32[144,128]{1,0:T(1,128)}', space=vmem, size = 0x12000, scoped, tag = 'internal scratch']
  #allocation2 [shape = 'f32[2,1,512]{2,1,0:T(1,128)}', space=vmem, size = 0x1000, scoped, tag = 'scratch operand']
  #allocation3 [shape = 'f32[32,512]{1,0:T(8,128)}', space=vmem, size = 0x10000, scoped, tag = 'scratch operand']
  %s0 = inlined_call_operand.vmem [shape: f32[2,16,256], index: 0, kind: input, shape index: {}]
  %s1 = inlined_call_operand.vmem [shape: f32[16,1], index: 1, kind: input, shape index: {}]
  %s2 = inlined_call_operand.vmem [shape: f32[16,1], index: 2, kind: input, shape index: {}]
  %s3 = inlined_call_operand.vmem [shape: f32[2,49], index: 3, kind: input, shape index: {}]
  %s4 = inlined_call_operand.vmem [shape: f32[7,1,256], index: 4, kind: input, shape index: {}]
  %s5 = inlined_call_operand.vmem [shape: f32[3,32,16], index: 5, kind: input, shape index: {}]
  %s6 = inlined_call_operand.vmem [shape: f32[3,32,1], index: 6, kind: input, shape index: {}]
  %s7 = inlined_call_operand.vmem [shape: f32[3,32,1], index: 7, kind: input, shape index: {}]
  %s8 = inlined_call_operand.vmem [shape: f32[3,32,9], index: 8, kind: input, shape index: {}]
  %s9 = inlined_call_operand.vmem [shape: f32[3,32,25], index: 9, kind: input, shape index: {}]
  %s10 = inlined_call_operand.vmem [shape: f32[3,32,3], index: 10, kind: input, shape index: {}]
  %s11 = inlined_call_operand.vmem [shape: f32[3,16,32], index: 11, kind: input, shape index: {}]
  %s12 = inlined_call_operand.vmem [shape: f32[16,1], index: 12, kind: input, shape index: {}]
  %s13 = inlined_call_operand.vmem [shape: f32[2,16,256], index: 13, kind: output, shape index: {}]
  %s14 = sld [smem:[#allocation0]]
  $region96: #{emcam_forward.1} parent=0
    _
  %s16 = ssub.s32 1, %s14
  %s17 = scalar_select 0, %s16, %s14
  $region1: #{emcam_forward.1} parent=0
    #allocation4 [shape = 'u8[1024]{0}', space=smem, size = 0x400, scoped, tag = 'input window, operand 3, single buffered']
    #allocation5 [shape = 's32[2]{0}', space=sflag, size = 0x8, scoped, tag = 'scoped memory for emcam_forward.1']
    %18 = vsyncpa [#allocation5], 0
    loop: start=0, step=1, limit=4
    $region2: #{emcam_forward.1} parent=1 // loop_pre_header
      _
    $region3: #{emcam_forward.1} parent=1 // loop_header
      %s20 = sphi 0, %s24
      %p21 = scmp.ge.s32.totalorder %s20, 4
      %s30 = sphi 0, %s32
      %s33 = sphi 0, %s30
      %s34 = sphi 0, %s33
      %s50 = sphi 0, %s34
      %s54 = sphi 0, %s54
      %s56 = sphi 0, %s54
      %s57 = sphi 0, %s56
      %s71 = sphi 0, %s57
      %s75 = sphi 0, %s75
      %s77 = sphi 0, %s75
      %s78 = sphi 0, %s77
      %s92 = sphi 0, %s78
      %s96 = sphi 0, %s96
      %s98 = sphi 0, %s96
      %s99 = sphi 0, %s98
      %s113 = sphi 0, %s99
      %s117 = sphi 0, %s117
      %s119 = sphi 0, %s117
      %s120 = sphi 0, %s119
      %s134 = sphi 0, %s120
      %s138 = sphi 0, %s138
      %s140 = sphi 0, %s138
      %s141 = sphi 0, %s140
      %s155 = sphi 0, %s141
      %s159 = sphi 0, %s159
      %s161 = sphi 0, %s159
      %s162 = sphi 0, %s161
      %s176 = sphi 0, %s162
      %s180 = sphi 0, %s180
      %s182 = sphi 0, %s180
      %s183 = sphi 0, %s182
      %s197 = sphi 0, %s183
      %s201 = sphi 0, %s201
      %s203 = sphi 0, %s201
      %s204 = sphi 0, %s203
      %s218 = sphi 0, %s204
      %s222 = sphi 0, %s222
      %s224 = sphi 0, %s222
      %s225 = sphi 0, %s224
      %s239 = sphi 0, %s225
      %s243 = sphi 0, %s243
      %s245 = sphi 0, %s243
      %s246 = sphi 0, %s245
      %s260 = sphi 0, %s246
      %s264 = sphi 0, %s264
      %s266 = sphi 0, %s264
      %s267 = sphi 0, %s266
      %s281 = sphi 0, %s267
      %s285 = sphi 0, %s285
      %s287 = sphi 0, %s285
      %s288 = sphi 0, %s287
      %s302 = sphi 0, %s288
      %s308 = sphi 0, %s310
      %s311 = sphi 0, %s308
      %s312 = sphi 0, %s311
      %s328 = sphi 0, %s312
    $region4: #{emcam_forward.1} parent=1 // loop_header_branch
      %23 = sbr.rel (%p21) target = $region8
    $region5: #{emcam_forward.1} parent=1 // loop_body
      %s25 = ssub.s32 %s20, 1
      %s26 = ssub.s32 %s20, 2
      %s27 = sadd.s32 %s20, 1
      %s28 = ssub.s32 %s20, %s27
      %p29 = scmp.eq.s32.totalorder %s28, 0
      %s31 = sadd.s32 %s30, 1
      %s32 = scalar_select %p29, %s30, %s31
      %p35 = pneg %p29
      %p36 = scmp.eq.s32.totalorder %s20, 1
      %p37 = por %p35, %p36
      %p38 = scmp.ne.s32.totalorder %s30, %s33
      %p39 = scmp.eq.s32.totalorder %s20, 0
      %p40 = por %p38, %p39
      %p41 = scmp.ne.s32.totalorder %s30, %s33
      %p42 = scmp.eq.s32.totalorder %s25, 1
      %p43 = por %p41, %p42
      %p44 = scmp.ne.s32.totalorder %s33, %s34
      %p45 = scmp.eq.s32.totalorder %s25, 0
      %p46 = por %p44, %p45
      %p47 = scmp.ne.s32.totalorder %s33, %s34
      %p48 = scmp.eq.s32.totalorder %s26, 1
      %p49 = por %p47, %p48
      %p51 = scmp.ne.s32.totalorder %s34, %s50
      %p52 = scmp.eq.s32.totalorder %s26, 0
      %p53 = por %p51, %p52
      %s55 = sadd.s32 %s54, 1
      %p58 = scmp.eq.s32.totalorder %s20, 1
      %p59 = scmp.ne.s32.totalorder %s54, %s56
      %p60 = scmp.eq.s32.totalorder %s20, 0
      %p61 = por %p59, %p60
      %p62 = scmp.ne.s32.totalorder %s54, %s56
      %p63 = scmp.eq.s32.totalorder %s25, 1
      %p64 = por %p62, %p63
      %p65 = scmp.ne.s32.totalorder %s56, %s57
      %p66 = scmp.eq.s32.totalorder %s25, 0
      %p67 = por %p65, %p66
      %p68 = scmp.ne.s32.totalorder %s56, %s57
      %p69 = scmp.eq.s32.totalorder %s26, 1
      %p70 = por %p68, %p69
      %p72 = scmp.ne.s32.totalorder %s57, %s71
      %p73 = scmp.eq.s32.totalorder %s26, 0
      %p74 = por %p72, %p73
      %s76 = sadd.s32 %s75, 1
      %p79 = scmp.eq.s32.totalorder %s20, 1
      %p80 = scmp.ne.s32.totalorder %s75, %s77
      %p81 = scmp.eq.s32.totalorder %s20, 0
      %p82 = por %p80, %p81
      %p83 = scmp.ne.s32.totalorder %s75, %s77
      %p84 = scmp.eq.s32.totalorder %s25, 1
      %p85 = por %p83, %p84
      %p86 = scmp.ne.s32.totalorder %s77, %s78
      %p87 = scmp.eq.s32.totalorder %s25, 0
      %p88 = por %p86, %p87
      %p89 = scmp.ne.s32.totalorder %s77, %s78
      %p90 = scmp.eq.s32.totalorder %s26, 1
      %p91 = por %p89, %p90
      %p93 = scmp.ne.s32.totalorder %s78, %s92
      %p94 = scmp.eq.s32.totalorder %s26, 0
      %p95 = por %p93, %p94
      %s97 = sadd.s32 %s96, 1
      %p100 = scmp.eq.s32.totalorder %s20, 1
      %p101 = scmp.ne.s32.totalorder %s96, %s98
      %p102 = scmp.eq.s32.totalorder %s20, 0
      %p103 = por %p101, %p102
      %p104 = scmp.ne.s32.totalorder %s96, %s98
      %p105 = scmp.eq.s32.totalorder %s25, 1
      %p106 = por %p104, %p105
      %p107 = scmp.ne.s32.totalorder %s98, %s99
      %p108 = scmp.eq.s32.totalorder %s25, 0
      %p109 = por %p107, %p108
      %p110 = scmp.ne.s32.totalorder %s98, %s99
      %p111 = scmp.eq.s32.totalorder %s26, 1
      %p112 = por %p110, %p111
      %p114 = scmp.ne.s32.totalorder %s99, %s113
      %p115 = scmp.eq.s32.totalorder %s26, 0
      %p116 = por %p114, %p115
      %s118 = sadd.s32 %s117, 1
      %p121 = scmp.eq.s32.totalorder %s20, 1
      %p122 = scmp.ne.s32.totalorder %s117, %s119
      %p123 = scmp.eq.s32.totalorder %s20, 0
      %p124 = por %p122, %p123
      %p125 = scmp.ne.s32.totalorder %s117, %s119
      %p126 = scmp.eq.s32.totalorder %s25, 1
      %p127 = por %p125, %p126
      %p128 = scmp.ne.s32.totalorder %s119, %s120
      %p129 = scmp.eq.s32.totalorder %s25, 0
      %p130 = por %p128, %p129
      %p131 = scmp.ne.s32.totalorder %s119, %s120
      %p132 = scmp.eq.s32.totalorder %s26, 1
      %p133 = por %p131, %p132
      %p135 = scmp.ne.s32.totalorder %s120, %s134
      %p136 = scmp.eq.s32.totalorder %s26, 0
      %p137 = por %p135, %p136
      %s139 = sadd.s32 %s138, 1
      %p142 = scmp.eq.s32.totalorder %s20, 1
      %p143 = scmp.ne.s32.totalorder %s138, %s140
      %p144 = scmp.eq.s32.totalorder %s20, 0
      %p145 = por %p143, %p144
      %p146 = scmp.ne.s32.totalorder %s138, %s140
      %p147 = scmp.eq.s32.totalorder %s25, 1
      %p148 = por %p146, %p147
      %p149 = scmp.ne.s32.totalorder %s140, %s141
      %p150 = scmp.eq.s32.totalorder %s25, 0
      %p151 = por %p149, %p150
      %p152 = scmp.ne.s32.totalorder %s140, %s141
      %p153 = scmp.eq.s32.totalorder %s26, 1
      %p154 = por %p152, %p153
      %p156 = scmp.ne.s32.totalorder %s141, %s155
      %p157 = scmp.eq.s32.totalorder %s26, 0
      %p158 = por %p156, %p157
      %s160 = sadd.s32 %s159, 1
      %p163 = scmp.eq.s32.totalorder %s20, 1
      %p164 = scmp.ne.s32.totalorder %s159, %s161
      %p165 = scmp.eq.s32.totalorder %s20, 0
      %p166 = por %p164, %p165
      %p167 = scmp.ne.s32.totalorder %s159, %s161
      %p168 = scmp.eq.s32.totalorder %s25, 1
      %p169 = por %p167, %p168
      %p170 = scmp.ne.s32.totalorder %s161, %s162
      %p171 = scmp.eq.s32.totalorder %s25, 0
      %p172 = por %p170, %p171
      %p173 = scmp.ne.s32.totalorder %s161, %s162
      %p174 = scmp.eq.s32.totalorder %s26, 1
      %p175 = por %p173, %p174
      %p177 = scmp.ne.s32.totalorder %s162, %s176
      %p178 = scmp.eq.s32.totalorder %s26, 0
      %p179 = por %p177, %p178
      %s181 = sadd.s32 %s180, 1
      %p184 = scmp.eq.s32.totalorder %s20, 1
      %p185 = scmp.ne.s32.totalorder %s180, %s182
      %p186 = scmp.eq.s32.totalorder %s20, 0
      %p187 = por %p185, %p186
      %p188 = scmp.ne.s32.totalorder %s180, %s182
      %p189 = scmp.eq.s32.totalorder %s25, 1
      %p190 = por %p188, %p189
      %p191 = scmp.ne.s32.totalorder %s182, %s183
      %p192 = scmp.eq.s32.totalorder %s25, 0
      %p193 = por %p191, %p192
      %p194 = scmp.ne.s32.totalorder %s182, %s183
      %p195 = scmp.eq.s32.totalorder %s26, 1
      %p196 = por %p194, %p195
      %p198 = scmp.ne.s32.totalorder %s183, %s197
      %p199 = scmp.eq.s32.totalorder %s26, 0
      %p200 = por %p198, %p199
      %s202 = sadd.s32 %s201, 1
      %p205 = scmp.eq.s32.totalorder %s20, 1
      %p206 = scmp.ne.s32.totalorder %s201, %s203
      %p207 = scmp.eq.s32.totalorder %s20, 0
      %p208 = por %p206, %p207
      %p209 = scmp.ne.s32.totalorder %s201, %s203
      %p210 = scmp.eq.s32.totalorder %s25, 1
      %p211 = por %p209, %p210
      %p212 = scmp.ne.s32.totalorder %s203, %s204
      %p213 = scmp.eq.s32.totalorder %s25, 0
      %p214 = por %p212, %p213
      %p215 = scmp.ne.s32.totalorder %s203, %s204
      %p216 = scmp.eq.s32.totalorder %s26, 1
      %p217 = por %p215, %p216
      %p219 = scmp.ne.s32.totalorder %s204, %s218
      %p220 = scmp.eq.s32.totalorder %s26, 0
      %p221 = por %p219, %p220
      %s223 = sadd.s32 %s222, 1
      %p226 = scmp.eq.s32.totalorder %s20, 1
      %p227 = scmp.ne.s32.totalorder %s222, %s224
      %p228 = scmp.eq.s32.totalorder %s20, 0
      %p229 = por %p227, %p228
      %p230 = scmp.ne.s32.totalorder %s222, %s224
      %p231 = scmp.eq.s32.totalorder %s25, 1
      %p232 = por %p230, %p231
      %p233 = scmp.ne.s32.totalorder %s224, %s225
      %p234 = scmp.eq.s32.totalorder %s25, 0
      %p235 = por %p233, %p234
      %p236 = scmp.ne.s32.totalorder %s224, %s225
      %p237 = scmp.eq.s32.totalorder %s26, 1
      %p238 = por %p236, %p237
      %p240 = scmp.ne.s32.totalorder %s225, %s239
      %p241 = scmp.eq.s32.totalorder %s26, 0
      %p242 = por %p240, %p241
      %s244 = sadd.s32 %s243, 1
      %p247 = scmp.eq.s32.totalorder %s20, 1
      %p248 = scmp.ne.s32.totalorder %s243, %s245
      %p249 = scmp.eq.s32.totalorder %s20, 0
      %p250 = por %p248, %p249
      %p251 = scmp.ne.s32.totalorder %s243, %s245
      %p252 = scmp.eq.s32.totalorder %s25, 1
      %p253 = por %p251, %p252
      %p254 = scmp.ne.s32.totalorder %s245, %s246
      %p255 = scmp.eq.s32.totalorder %s25, 0
      %p256 = por %p254, %p255
      %p257 = scmp.ne.s32.totalorder %s245, %s246
      %p258 = scmp.eq.s32.totalorder %s26, 1
      %p259 = por %p257, %p258
      %p261 = scmp.ne.s32.totalorder %s246, %s260
      %p262 = scmp.eq.s32.totalorder %s26, 0
      %p263 = por %p261, %p262
      %s265 = sadd.s32 %s264, 1
      %p268 = scmp.eq.s32.totalorder %s20, 1
      %p269 = scmp.ne.s32.totalorder %s264, %s266
      %p270 = scmp.eq.s32.totalorder %s20, 0
      %p271 = por %p269, %p270
      %p272 = scmp.ne.s32.totalorder %s264, %s266
      %p273 = scmp.eq.s32.totalorder %s25, 1
      %p274 = por %p272, %p273
      %p275 = scmp.ne.s32.totalorder %s266, %s267
      %p276 = scmp.eq.s32.totalorder %s25, 0
      %p277 = por %p275, %p276
      %p278 = scmp.ne.s32.totalorder %s266, %s267
      %p279 = scmp.eq.s32.totalorder %s26, 1
      %p280 = por %p278, %p279
      %p282 = scmp.ne.s32.totalorder %s267, %s281
      %p283 = scmp.eq.s32.totalorder %s26, 0
      %p284 = por %p282, %p283
      %s286 = sadd.s32 %s285, 1
      %p289 = scmp.eq.s32.totalorder %s20, 1
      %p290 = scmp.ne.s32.totalorder %s285, %s287
      %p291 = scmp.eq.s32.totalorder %s20, 0
      %p292 = por %p290, %p291
      %p293 = scmp.ne.s32.totalorder %s285, %s287
      %p294 = scmp.eq.s32.totalorder %s25, 1
      %p295 = por %p293, %p294
      %p296 = scmp.ne.s32.totalorder %s287, %s288
      %p297 = scmp.eq.s32.totalorder %s25, 0
      %p298 = por %p296, %p297
      %p299 = scmp.ne.s32.totalorder %s287, %s288
      %p300 = scmp.eq.s32.totalorder %s26, 1
      %p301 = por %p299, %p300
      %p303 = scmp.ne.s32.totalorder %s288, %s302
      %p304 = scmp.eq.s32.totalorder %s26, 0
      %p305 = por %p303, %p304
      %s306 = ssub.s32 %s20, %s27
      %p307 = scmp.eq.s32.totalorder %s306, 0
      %s309 = sadd.s32 %s308, 1
      %s310 = scalar_select %p307, %s308, %s309
      %p313 = pneg %p307
      %p314 = scmp.eq.s32.totalorder %s20, 1
      %p315 = por %p313, %p314
      %p316 = scmp.ne.s32.totalorder %s308, %s311
      %p317 = scmp.eq.s32.totalorder %s20, 0
      %p318 = por %p316, %p317
      %p319 = scmp.ne.s32.totalorder %s308, %s311
      %p320 = scmp.eq.s32.totalorder %s25, 1
      %p321 = por %p319, %p320
      %p322 = scmp.ne.s32.totalorder %s311, %s312
      %p323 = scmp.eq.s32.totalorder %s25, 0
      %p324 = por %p322, %p323
      %p325 = scmp.ne.s32.totalorder %s311, %s312
      %p326 = scmp.eq.s32.totalorder %s26, 1
      %p327 = por %p325, %p326
      %p329 = scmp.ne.s32.totalorder %s312, %s328
      %p330 = scmp.eq.s32.totalorder %s26, 0
      %p331 = por %p329, %p330
      %p332 = scmp.le.s32.totalorder 1, %s20
      %p333 = scmp.lt.s32.totalorder %s20, 3
      %p334 = pnand %p332, %p333
      %p335 = pneg %p334
      // Predicated region
      $region9: #{emcam_forward.1} parent=5 // pred_check
        _
      $region10: #{emcam_forward.1} parent=5 // pred_check_branch
        %337 = sbr.rel (%p334) target = $region12
      $region11: #{emcam_forward.1} parent=5 // pred_region
        %s338 = ssub.s32 %s20, 1
        // Predicated region
        $region13: #{emcam_forward.1} parent=11 // pred_check
          %p339 = pneg %p67
        $region14: #{emcam_forward.1} parent=11 // pred_check_branch
          %341 = sbr.rel (%p339) target = $region16
        $region15: #{emcam_forward.1} parent=11 // pred_region
          _
        $region16: #{emcam_forward.1} parent=11 // pred_fallthru
          _
        // Predicated region
        $region17: #{emcam_forward.1} parent=11 // pred_check
          %p342 = pneg %p88
        $region18: #{emcam_forward.1} parent=11 // pred_check_branch
          %344 = sbr.rel (%p342) target = $region20
        $region19: #{emcam_forward.1} parent=11 // pred_region
          _
        $region20: #{emcam_forward.1} parent=11 // pred_fallthru
          _
        // Predicated region
        $region21: #{emcam_forward.1} parent=11 // pred_check
          %p345 = pneg %p109
        $region22: #{emcam_forward.1} parent=11 // pred_check_branch
          %347 = sbr.rel (%p345) target = $region24
        $region23: #{emcam_forward.1} parent=11 // pred_region
          %s349 = ssub.s32 32, 32
          %350 = vsyncadd [#allocation5], %s349
          %s352 = sshll.u32 %s3, 4
          %s353 = int_to_ptr.vmem [resolvable:$true] %s352
          %355 = dma.vmem_to_smem %s353, 32, [#allocation4], [#allocation5]
        $region24: #{emcam_forward.1} parent=11 // pred_fallthru
          _
        // Predicated region
        $region25: #{emcam_forward.1} parent=11 // pred_check
          %p356 = pneg %p130
        $region26: #{emcam_forward.1} parent=11 // pred_check_branch
          %358 = sbr.rel (%p356) target = $region28
        $region27: #{emcam_forward.1} parent=11 // pred_region
          _
        $region28: #{emcam_forward.1} parent=11 // pred_fallthru
          _
        // Predicated region
        $region29: #{emcam_forward.1} parent=11 // pred_check
          %p359 = pneg %p151
        $region30: #{emcam_forward.1} parent=11 // pred_check_branch
          %361 = sbr.rel (%p359) target = $region32
        $region31: #{emcam_forward.1} parent=11 // pred_region
          _
        $region32: #{emcam_forward.1} parent=11 // pred_fallthru
          _
        // Predicated region
        $region33: #{emcam_forward.1} parent=11 // pred_check
          %p362 = pneg %p172
        $region34: #{emcam_forward.1} parent=11 // pred_check_branch
          %364 = sbr.rel (%p362) target = $region36
        $region35: #{emcam_forward.1} parent=11 // pred_region
          _
        $region36: #{emcam_forward.1} parent=11 // pred_fallthru
          _
        // Predicated region
        $region37: #{emcam_forward.1} parent=11 // pred_check
          %p365 = pneg %p193
        $region38: #{emcam_forward.1} parent=11 // pred_check_branch
          %367 = sbr.rel (%p365) target = $region40
        $region39: #{emcam_forward.1} parent=11 // pred_region
          _
        $region40: #{emcam_forward.1} parent=11 // pred_fallthru
          _
        // Predicated region
        $region41: #{emcam_forward.1} parent=11 // pred_check
          %p368 = pneg %p214
        $region42: #{emcam_forward.1} parent=11 // pred_check_branch
          %370 = sbr.rel (%p368) target = $region44
        $region43: #{emcam_forward.1} parent=11 // pred_region
          _
        $region44: #{emcam_forward.1} parent=11 // pred_fallthru
          _
        // Predicated region
        $region45: #{emcam_forward.1} parent=11 // pred_check
          %p371 = pneg %p235
        $region46: #{emcam_forward.1} parent=11 // pred_check_branch
          %373 = sbr.rel (%p371) target = $region48
        $region47: #{emcam_forward.1} parent=11 // pred_region
          _
        $region48: #{emcam_forward.1} parent=11 // pred_fallthru
          _
        // Predicated region
        $region49: #{emcam_forward.1} parent=11 // pred_check
          %p374 = pneg %p256
        $region50: #{emcam_forward.1} parent=11 // pred_check_branch
          %376 = sbr.rel (%p374) target = $region52
        $region51: #{emcam_forward.1} parent=11 // pred_region
          _
        $region52: #{emcam_forward.1} parent=11 // pred_fallthru
          _
        // Predicated region
        $region53: #{emcam_forward.1} parent=11 // pred_check
          %p377 = pneg %p277
        $region54: #{emcam_forward.1} parent=11 // pred_check_branch
          %379 = sbr.rel (%p377) target = $region56
        $region55: #{emcam_forward.1} parent=11 // pred_region
          _
        $region56: #{emcam_forward.1} parent=11 // pred_fallthru
          _
        // Predicated region
        $region57: #{emcam_forward.1} parent=11 // pred_check
          %p380 = pneg %p298
        $region58: #{emcam_forward.1} parent=11 // pred_check_branch
          %382 = sbr.rel (%p380) target = $region60
        $region59: #{emcam_forward.1} parent=11 // pred_region
          _
        $region60: #{emcam_forward.1} parent=11 // pred_fallthru
          _
      $region12: #{emcam_forward.1} parent=5 // pred_fallthru
        _
      %p383 = scmp.lt.s32.totalorder %s20, 2
      // Predicated region
      $region61: #{emcam_forward.1} parent=5 // pred_check
        %p384 = pneg %p383
      $region62: #{emcam_forward.1} parent=5 // pred_check_branch
        %386 = sbr.rel (%p384) target = $region64
      $region63: #{emcam_forward.1} parent=5 // pred_region
        // Predicated region
        $region65: #{emcam_forward.1} parent=63 // pred_check
          %p387 = pneg %p40
        $region66: #{emcam_forward.1} parent=63 // pred_check_branch
          %389 = sbr.rel (%p387) target = $region68
        $region67: #{emcam_forward.1} parent=63 // pred_region
          %p390 = scmp.lt.s32.totalorder %s20, 1
          %s391 = scalar_select %p390, %s20, 1
          %s392 = smul.addr %s391, 4
          %s393 = smul.addr %s392, 8
          %s394 = scalar_lea.vmem %s0, %s393
        $region68: #{emcam_forward.1} parent=63 // pred_fallthru
          _
      $region64: #{emcam_forward.1} parent=5 // pred_fallthru
        _
      %p395 = scmp.le.s32.totalorder 1, %s20
      %p396 = scmp.lt.s32.totalorder %s20, 3
      %p397 = pnand %p395, %p396
      %p398 = pneg %p397
      // Predicated region
      $region69: #{emcam_forward.1} parent=5 // pred_check
        _
      $region70: #{emcam_forward.1} parent=5 // pred_check_branch
        %400 = sbr.rel (%p397) target = $region72
      $region71: #{emcam_forward.1} parent=5 // pred_region
        %s401 = ssub.s32 %s20, 1
        // Predicated region
        $region73: #{emcam_forward.1} parent=71 // pred_check
          %p402 = pneg %p109
        $region74: #{emcam_forward.1} parent=71 // pred_check_branch
          %404 = sbr.rel (%p402) target = $region76
        $region75: #{emcam_forward.1} parent=71 // pred_region
          %405 = dma.done [#allocation5], 32
        $region76: #{emcam_forward.1} parent=71 // pred_fallthru
          _
        %406 = sfence
        %p407 = scmp.lt.s32.totalorder %s25, 1
        %s408 = scalar_select %p407, %s25, 1
        %s409 = smul.addr %s408, 4
        %s410 = smul.addr %s409, 8
        %s411 = scalar_lea.vmem %s0, %s410
        %p412 = pneg %p46
        %p413 = pneg %p43
        %p414 = pneg %p67
        %p415 = pneg %p64
        %p416 = pneg %p88
        %p417 = pneg %p85
        %p418 = pneg %p109
        %p419 = pneg %p106
        %p420 = pneg %p130
        %p421 = pneg %p127
        %p422 = pneg %p151
        %p423 = pneg %p148
        %p424 = pneg %p172
        %p425 = pneg %p169
        %p426 = pneg %p193
        %p427 = pneg %p190
        %p428 = pneg %p214
        %p429 = pneg %p211
        %p430 = pneg %p235
        %p431 = pneg %p232
        %p432 = pneg %p256
        %p433 = pneg %p253
        %p434 = pneg %p277
        %p435 = pneg %p274
        %p436 = pneg %p298
        %p437 = pneg %p295
        %p438 = pneg %p324
        %p439 = pneg %p321
        %p440 = scmp.lt.s32.totalorder %s25, 1
        %s441 = scalar_select %p440, %s25, 1
        %s442 = smul.addr %s441, 4
        %s443 = smul.addr %s442, 8
        %s444 = scalar_lea.vmem %s13, %s443
        %p445 = scmp.lt.s32.totalorder %s25, 1
        %s446 = scalar_select %p445, %s25, 1
        %s447 = smul.addr %s446, 4
        %s448 = smul.addr %s447, 8
        %s449 = scalar_lea.vmem %s0, %s448
        %p450 = scmp.lt.s32.totalorder %s25, 1
        %s451 = scalar_select %p450, %s25, 1
        %s452 = smul.addr %s451, 4
        %s453 = smul.addr %s452, 8
        %s454 = scalar_lea.vmem %s13, %s453
        %v455 = vld [vmem:[%s449] sm:$0xff]
        %v456 = vld [vmem:[%s449 + $0x8] sm:$0xff]
        %v457 = vld [vmem:[%s449 + $0x10] sm:$0xff]
        %v458 = vld [vmem:[%s449 + $0x18] sm:$0xff]
        %v459 = vld [vmem:[%s4] sm:$0x3]
        %s460 = scalar_lea.vmem %s4, 2
        %v461 = vld [vmem:[%s460] sm:$0x3]
        %s462 = scalar_lea.vmem %s4, 4
        %v463 = vld [vmem:[%s462] sm:$0x3]
        %s464 = scalar_lea.vmem %s4, 8
        %v465 = vld [vmem:[%s464] sm:$0x3]
        %s466 = scalar_lea.vmem %s4, 10
        %v467 = vld [vmem:[%s466] sm:$0x3]
        %s468 = scalar_lea.vmem %s4, 12
        %v469 = vld [vmem:[%s468] sm:$0x3]
        %v470 = vlaneseq
        %vm471 = vcmp.ge.s32.totalorder %v470, 0
        %vm472 = vcmp.lt.s32.totalorder %v470, 128
        %vm473 = vmand %vm471, %vm472
        %474 = vst.msk [vmem:[#allocation2] sm:$0x1] %vm473, 0.0
        %475 = vst.msk [vmem:[#allocation2 + $0x4] sm:$0x1] %vm473, 0.0
        %476 = vst.msk [vmem:[#allocation2 + $0x3] sm:$0x1] %vm473, 0.0
        %477 = vst.msk [vmem:[#allocation2 + $0x7] sm:$0x1] %vm473, 0.0
        %478 = vst [vmem:[#allocation3] sm:$0xff] 0.0
        %479 = vst [vmem:[#allocation3 + $0x20] sm:$0xff] 0.0
        %480 = vst [vmem:[#allocation3 + $0x40] sm:$0xff] 0.0
        %481 = vst [vmem:[#allocation3 + $0x60] sm:$0xff] 0.0
        %482 = vst [vmem:[#allocation3 + $0x18] sm:$0xff] 0.0
        %483 = vst [vmem:[#allocation3 + $0x38] sm:$0xff] 0.0
        %484 = vst [vmem:[#allocation3 + $0x58] sm:$0xff] 0.0
        %485 = vst [vmem:[#allocation3 + $0x78] sm:$0xff] 0.0
        %v486 = vadd.f32 %v455, %v456
        %487 = vadd.xlane.f32.xlu0 %v486
        %v488 = vpop.xlane.xlu0 %487
        %v489 = vadd.f32 %v457, %v458
        %490 = vadd.xlane.f32.xlu0 %v489
        %v491 = vpop.xlane.xlu0 %490
        %v492 = vrcp.pop 256.0
        %v493 = vmul.f32 %v488, %v492
        %v494 = vmul.f32 %v491, %v492
        %v495 = vmax.f32 %v455, %v456
        %496 = vmax.xlane.f32.xlu0 %v495
        %v497 = vpop.xlane.xlu0 %496
        %v498 = vmax.f32 %v457, %v458
        %499 = vmax.xlane.f32.xlu0 %v498
        %v500 = vpop.xlane.xlu0 %499
        %v501 = vld [vmem:[%s1] sm:$0xff]
        %v502 = vld [vmem:[%s1 + $0x8] sm:$0xff]
        %v503 = vmul.f32 %v501, %v493
        %v504 = vmul.f32 %v502, %v494
        %vm505 = vcmask 7168
        %v506 = vsel %vm505, %v503, 0.0
        %v507 = vsel %vm505, %v504, 0.0
        %v508 = vadd.f32 %v506, %v507
        %v509 = vrot.slane %v508, 4
        %v510 = vadd.f32 %v508, %v509
        %v511 = vrot.slane %v510, 2
        %v512 = vadd.f32 %v510, %v511
        %v513 = vrot.slane %v512, 1
        %v514 = vadd.f32 %v512, %v513
        %v515 = vmax.f32 %v514, 0.0
        %v516 = vld [vmem:[%s2] sm:$0xff]
        %v517 = vld [vmem:[%s2 + $0x8] sm:$0xff]
        %v518 = vmul.f32 %v516, %v515
        %v519 = vmul.f32 %v517, %v515
        %v520 = vadd.f32 %v518, 0.0
        %v521 = vadd.f32 %v519, 0.0
        %v522 = vmul.f32 %v501, %v497
        %v523 = vmul.f32 %v502, %v500
        %v524 = vsel %vm505, %v522, 0.0
        %v525 = vsel %vm505, %v523, 0.0
        %v526 = vadd.f32 %v524, %v525
        %v527 = vrot.slane %v526, 4
        %v528 = vadd.f32 %v526, %v527
        %v529 = vrot.slane %v528, 2
        %v530 = vadd.f32 %v528, %v529
        %v531 = vrot.slane %v530, 1
        %v532 = vadd.f32 %v530, %v531
        %v533 = vmax.f32 %v532, 0.0
        %v534 = vmul.f32 %v516, %v533
        %v535 = vmul.f32 %v517, %v533
        %v536 = vadd.f32 %v534, 0.0
        %v537 = vadd.f32 %v535, 0.0
        %v538 = vadd.f32 %v520, %v536
        %v539 = vadd.f32 %v521, %v537
        %v540 = vxor.u32 %v538, 2147483648
        %v541 = vxor.u32 %v539, 2147483648
        %v542 = vmul.f32 %v540, 1.442695
        %v543 = vpow.pop %v542
        %v544 = vmul.f32 %v541, 1.442695
        %v545 = vpow.pop %v544
        %v546 = vadd.f32 %v543, 1.0
        %v547 = vadd.f32 %v545, 1.0
        %v548 = vrcp.pop %v546
        %v549 = vmul.f32 1.0, %v548
        %v550 = vrcp.pop %v547
        %v551 = vmul.f32 1.0, %v550
        %553 = vset.pattern.permute.xlu0 0
        %554 = vperm.xlu0 %553, %v549
        %v555 = vpop.permute.xlu0 %554
        %558 = vset.pattern.permute.xlu0 0
        %559 = vperm.xlu0 %558, %v551
        %v560 = vpop.permute.xlu0 %559
        %v562 = vmul.f32 %v455, %v555
        %v563 = vmul.f32 %v456, %v555
        %v564 = vmul.f32 %v457, %v560
        %v565 = vmul.f32 %v458, %v560
        %v566 = vadd.f32 %v562, %v564
        %v567 = vrot.slane %v566, 4
        %v568 = vadd.f32 %v566, %v567
        %v569 = vrot.slane %v568, 2
        %v570 = vadd.f32 %v568, %v569
        %v571 = vrot.slane %v570, 1
        %v572 = vadd.f32 %v570, %v571
        %v573 = vadd.f32 %v563, %v565
        %v574 = vrot.slane %v573, 4
        %v575 = vadd.f32 %v573, %v574
        %v576 = vrot.slane %v575, 2
        %v577 = vadd.f32 %v575, %v576
        %v578 = vrot.slane %v577, 1
        %v579 = vadd.f32 %v577, %v578
        %v580 = vrcp.pop 16.0
        %v581 = vmul.f32 %v572, %v580
        %v582 = vmul.f32 %v579, %v580
        %v585 = vcombine.low %v581, %v582
        %v587 = vunpack.c.l.s4 1966171168
        %v588 = vunpack.c.0.s8 %v587
        %v589 = vlaneseq
        %v590 = vshrl.u32 %v589, 7
        %v591 = vsub.s32 %v588, %v590
        %v592 = vrot.slane %v585, %v591
        %v594 = vunpack.c.l.s4 1966171168
        %v595 = vunpack.c.0.s8 %v594
        %v596 = vlaneseq
        %v597 = vshrl.u32 %v596, 7
        %v598 = vsub.s32 %v595, %v597
        %v599 = vrot.slane %v592, %v598
        %vm601 = vcmp.lt.s32.totalorder %v470, 256
        %vm602 = vmand %vm471, %vm601
        %603 = vst.msk [vmem:[#allocation2 + $0x1] sm:$0x3] %vm602, %v599
        %v604 = vmax.f32 %v562, %v564
        %v605 = vrot.slane %v604, 4
        %v606 = vmax.f32 %v604, %v605
        %v607 = vrot.slane %v606, 2
        %v608 = vmax.f32 %v606, %v607
        %v609 = vrot.slane %v608, 1
        %v610 = vmax.f32 %v608, %v609
        %v611 = vmax.f32 %v563, %v565
        %v612 = vrot.slane %v611, 4
        %v613 = vmax.f32 %v611, %v612
        %v614 = vrot.slane %v613, 2
        %v615 = vmax.f32 %v613, %v614
        %v616 = vrot.slane %v615, 1
        %v617 = vmax.f32 %v615, %v616
        %v620 = vcombine.low %v610, %v617
        %v622 = vunpack.c.l.s4 1966171168
        %v623 = vunpack.c.0.s8 %v622
        %v624 = vlaneseq
        %v625 = vshrl.u32 %v624, 7
        %v626 = vsub.s32 %v623, %v625
        %v627 = vrot.slane %v620, %v626
        %v629 = vunpack.c.l.s4 1966171168
        %v630 = vunpack.c.0.s8 %v629
        %v631 = vlaneseq
        %v632 = vshrl.u32 %v631, 7
        %v633 = vsub.s32 %v630, %v632
        %v634 = vrot.slane %v627, %v633
        %s636 = scalar_lea.vmem [#allocation2], 4
        %637 = vst.msk [vmem:[%s636 + $0x1] sm:$0x3] %vm602, %v634
        %s638 = sld [smem:[#allocation4]]
        %v639 = vld [vmem:[#allocation2] sm:$0x7]
        %v640 = vstv %s638
        %v641 = vmul.f32 %v640, %v639
        %v642 = vadd.f32 %v641, 0.0
        %s643 = sld [smem:[#allocation4 + $0x80]]
        %v644 = vld [vmem:[%s636] sm:$0x7]
        %v645 = vstv %s643
        %v646 = vmul.f32 %v645, %v644
        %v647 = vadd.f32 %v642, %v646
        %s648 = sld [smem:[#allocation4 + $0x7]]
        %v649 = vstv %s648
        %v650 = vmul.f32 %v649, %v639
        %652 = vrot.lane.b32.xlu0 %v650, 112
        %v653 = vpop.permute.xlu0 %652
        %v654 = vrot.slane %v653, 1
        %vm655 = vcmask 916480
        %v656 = vsel %vm655, %v653, %v654
        %v658 = vadd.f32 %v647, %v656
        %s659 = sld [smem:[#allocation4 + $0x87]]
        %v660 = vstv %s659
        %v661 = vmul.f32 %v660, %v644
        %663 = vrot.lane.b32.xlu0 %v661, 112
        %v664 = vpop.permute.xlu0 %663
        %v665 = vrot.slane %v664, 1
        %v666 = vsel %vm655, %v664, %v665
        %v668 = vadd.f32 %v658, %v666
        %s669 = sld [smem:[#allocation4 + $0xe]]
        %v670 = vstv %s669
        %v671 = vmul.f32 %v670, %v639
        %673 = vrot.lane.b32.xlu0 %v671, 96
        %v674 = vpop.permute.xlu0 %673
        %v675 = vrot.slane %v674, 1
        %vm676 = vcmask 785408
        %v677 = vsel %vm676, %v674, %v675
        %v679 = vadd.f32 %v668, %v677
        %s680 = sld [smem:[#allocation4 + $0x8e]]
        %v681 = vstv %s680
        %v682 = vmul.f32 %v681, %v644
        %684 = vrot.lane.b32.xlu0 %v682, 96
        %v685 = vpop.permute.xlu0 %684
        %v686 = vrot.slane %v685, 1
        %v687 = vsel %vm676, %v685, %v686
        %v689 = vadd.f32 %v679, %v687
        %s690 = sld [smem:[#allocation4 + $0x15]]
        %v691 = vstv %s690
        %v692 = vmul.f32 %v691, %v639
        %694 = vrot.lane.b32.xlu0 %v692, 80
        %v695 = vpop.permute.xlu0 %694
        %v696 = vrot.slane %v695, 1
        %vm697 = vcmask 654336
        %v698 = vsel %vm697, %v695, %v696
        %v700 = vadd.f32 %v689, %v698
        %s701 = sld [smem:[#allocation4 + $0x95]]
        %v702 = vstv %s701
        %v703 = vmul.f32 %v702, %v644
        %705 = vrot.lane.b32.xlu0 %v703, 80
        %v706 = vpop.permute.xlu0 %705
        %v707 = vrot.slane %v706, 1
        %v708 = vsel %vm697, %v706, %v707
        %v710 = vadd.f32 %v700, %v708
        %s711 = sld [smem:[#allocation4 + $0x1c]]
        %v712 = vld [vmem:[#allocation2 + $0x1] sm:$0x7]
        %v713 = vstv %s711
        %v714 = vmul.f32 %v713, %v712
        %716 = vrot.lane.b32.xlu0 %v714, 64
        %v717 = vpop.permute.xlu0 %716
        %v718 = vrot.slane %v717, 7
        %vm719 = vcmask 523264
        %v720 = vsel %vm719, %v718, %v717
        %v722 = vadd.f32 %v710, %v720
        %s723 = sld [smem:[#allocation4 + $0x9c]]
        %v724 = vld [vmem:[%s636 + $0x1] sm:$0x7]
        %v725 = vstv %s723
        %v726 = vmul.f32 %v725, %v724
        %728 = vrot.lane.b32.xlu0 %v726, 64
        %v729 = vpop.permute.xlu0 %728
        %v730 = vrot.slane %v729, 7
        %v731 = vsel %vm719, %v730, %v729
        %v733 = vadd.f32 %v722, %v731
        %s734 = sld [smem:[#allocation4 + $0x23]]
        %v735 = vstv %s734
        %v736 = vmul.f32 %v735, %v712
        %738 = vrot.lane.b32.xlu0 %v736, 48
        %v739 = vpop.permute.xlu0 %738
        %v740 = vrot.slane %v739, 7
        %vm741 = vcmask 392192
        %v742 = vsel %vm741, %v740, %v739
        %v744 = vadd.f32 %v733, %v742
        %s745 = sld [smem:[#allocation4 + $0xa3]]
        %v746 = vstv %s745
        %v747 = vmul.f32 %v746, %v724
        %749 = vrot.lane.b32.xlu0 %v747, 48
        %v750 = vpop.permute.xlu0 %749
        %v751 = vrot.slane %v750, 7
        %v752 = vsel %vm741, %v751, %v750
        %v754 = vadd.f32 %v744, %v752
        %s755 = sld [smem:[#allocation4 + $0x2a]]
        %v756 = vstv %s755
        %v757 = vmul.f32 %v756, %v712
        %759 = vrot.lane.b32.xlu0 %v757, 32
        %v760 = vpop.permute.xlu0 %759
        %v761 = vrot.slane %v760, 7
        %vm762 = vcmask 261120
        %v763 = vsel %vm762, %v761, %v760
        %v765 = vadd.f32 %v754, %v763
        %s766 = sld [smem:[#allocation4 + $0xaa]]
        %v767 = vstv %s766
        %v768 = vmul.f32 %v767, %v724
        %770 = vrot.lane.b32.xlu0 %v768, 32
        %v771 = vpop.permute.xlu0 %770
        %v772 = vrot.slane %v771, 7
        %v773 = vsel %vm762, %v772, %v771
        %v775 = vadd.f32 %v765, %v773
        %777 = vrot.lane.b32.xlu0 %v459, 77
        %v778 = vpop.permute.xlu0 %777
        %v779 = vrot.slane %v778, 7
        %vm780 = vcmask 629760
        %v781 = vsel %vm780, %v779, %v778
        %v783 = vmul.f32 %v775, %v781
        %v784 = vadd.f32 %v783, 0.0
        %s785 = sld [smem:[#allocation4 + $0x1]]
        %v786 = vstv %s785
        %v787 = vmul.f32 %v786, %v639
        %v788 = vadd.f32 %v787, 0.0
        %s789 = sld [smem:[#allocation4 + $0x81]]
        %v790 = vstv %s789
        %v791 = vmul.f32 %v790, %v644
        %v792 = vadd.f32 %v788, %v791
        %s793 = sld [smem:[#allocation4 + $0x8]]
        %v794 = vstv %s793
        %v795 = vmul.f32 %v794, %v639
        %797 = vrot.lane.b32.xlu0 %v795, 112
        %v798 = vpop.permute.xlu0 %797
        %v799 = vrot.slane %v798, 1
        %v800 = vsel %vm655, %v798, %v799
        %v802 = vadd.f32 %v792, %v800
        %s803 = sld [smem:[#allocation4 + $0x88]]
        %v804 = vstv %s803
        %v805 = vmul.f32 %v804, %v644
        %807 = vrot.lane.b32.xlu0 %v805, 112
        %v808 = vpop.permute.xlu0 %807
        %v809 = vrot.slane %v808, 1
        %v810 = vsel %vm655, %v808, %v809
        %v812 = vadd.f32 %v802, %v810
        %s813 = sld [smem:[#allocation4 + $0xf]]
        %v814 = vstv %s813
        %v815 = vmul.f32 %v814, %v639
        %817 = vrot.lane.b32.xlu0 %v815, 96
        %v818 = vpop.permute.xlu0 %817
        %v819 = vrot.slane %v818, 1
        %v820 = vsel %vm676, %v818, %v819
        %v822 = vadd.f32 %v812, %v820
        %s823 = sld [smem:[#allocation4 + $0x8f]]
        %v824 = vstv %s823
        %v825 = vmul.f32 %v824, %v644
        %827 = vrot.lane.b32.xlu0 %v825, 96
        %v828 = vpop.permute.xlu0 %827
        %v829 = vrot.slane %v828, 1
        %v830 = vsel %vm676, %v828, %v829
        %v832 = vadd.f32 %v822, %v830
        %s833 = sld [smem:[#allocation4 + $0x16]]
        %v834 = vstv %s833
        %v835 = vmul.f32 %v834, %v639
        %837 = vrot.lane.b32.xlu0 %v835, 80
        %v838 = vpop.permute.xlu0 %837
        %v839 = vrot.slane %v838, 1
        %v840 = vsel %vm697, %v838, %v839
        %v842 = vadd.f32 %v832, %v840
        %s843 = sld [smem:[#allocation4 + $0x96]]
        %v844 = vstv %s843
        %v845 = vmul.f32 %v844, %v644
        %847 = vrot.lane.b32.xlu0 %v845, 80
        %v848 = vpop.permute.xlu0 %847
        %v849 = vrot.slane %v848, 1
        %v850 = vsel %vm697, %v848, %v849
        %v852 = vadd.f32 %v842, %v850
        %s853 = sld [smem:[#allocation4 + $0x1d]]
        %v854 = vstv %s853
        %v855 = vmul.f32 %v854, %v712
        %857 = vrot.lane.b32.xlu0 %v855, 64
        %v858 = vpop.permute.xlu0 %857
        %v859 = vrot.slane %v858, 7
        %v860 = vsel %vm719, %v859, %v858
        %v862 = vadd.f32 %v852, %v860
        %s863 = sld [smem:[#allocation4 + $0x9d]]
        %v864 = vstv %s863
        %v865 = vmul.f32 %v864, %v724
        %867 = vrot.lane.b32.xlu0 %v865, 64
        %v868 = vpop.permute.xlu0 %867
        %v869 = vrot.slane %v868, 7
        %v870 = vsel %vm719, %v869, %v868
        %v872 = vadd.f32 %v862, %v870
        %s873 = sld [smem:[#allocation4 + $0x24]]
        %v874 = vstv %s873
        %v875 = vmul.f32 %v874, %v712
        %877 = vrot.lane.b32.xlu0 %v875, 48
        %v878 = vpop.permute.xlu0 %877
        %v879 = vrot.slane %v878, 7
        %v880 = vsel %vm741, %v879, %v878
        %v882 = vadd.f32 %v872, %v880
        %s883 = sld [smem:[#allocation4 + $0xa4]]
        %v884 = vstv %s883
        %v885 = vmul.f32 %v884, %v724
        %887 = vrot.lane.b32.xlu0 %v885, 48
        %v888 = vpop.permute.xlu0 %887
        %v889 = vrot.slane %v888, 7
        %v890 = vsel %vm741, %v889, %v888
        %v892 = vadd.f32 %v882, %v890
        %s893 = sld [smem:[#allocation4 + $0x2b]]
        %v894 = vstv %s893
        %v895 = vmul.f32 %v894, %v712
        %897 = vrot.lane.b32.xlu0 %v895, 32
        %v898 = vpop.permute.xlu0 %897
        %v899 = vrot.slane %v898, 7
        %v900 = vsel %vm762, %v899, %v898
        %v902 = vadd.f32 %v892, %v900
        %s903 = sld [smem:[#allocation4 + $0xab]]
        %v904 = vstv %s903
        %v905 = vmul.f32 %v904, %v724
        %907 = vrot.lane.b32.xlu0 %v905, 32
        %v908 = vpop.permute.xlu0 %907
        %v909 = vrot.slane %v908, 7
        %v910 = vsel %vm762, %v909, %v908
        %v912 = vadd.f32 %v902, %v910
        %914 = vrot.lane.b32.xlu0 %v461, 78
        %v915 = vpop.permute.xlu0 %914
        %v916 = vrot.slane %v915, 7
        %vm917 = vcmask 637952
        %v918 = vsel %vm917, %v916, %v915
        %v920 = vmul.f32 %v912, %v918
        %922 = vrot.lane.b32.xlu0 %v920, 127
        %v923 = vpop.permute.xlu0 %922
        %v924 = vrot.slane %v923, 1
        %vm925 = vcmask 1039360
        %v926 = vsel %vm925, %v923, %v924
        %v928 = vadd.f32 %v784, %v926
        %s929 = sld [smem:[#allocation4 + $0x2]]
        %v930 = vstv %s929
        %v931 = vmul.f32 %v930, %v639
        %v932 = vadd.f32 %v931, 0.0
        %s933 = sld [smem:[#allocation4 + $0x82]]
        %v934 = vstv %s933
        %v935 = vmul.f32 %v934, %v644
        %v936 = vadd.f32 %v932, %v935
        %s937 = sld [smem:[#allocation4 + $0x9]]
        %v938 = vstv %s937
        %v939 = vmul.f32 %v938, %v639
        %941 = vrot.lane.b32.xlu0 %v939, 112
        %v942 = vpop.permute.xlu0 %941
        %v943 = vrot.slane %v942, 1
        %v944 = vsel %vm655, %v942, %v943
        %v946 = vadd.f32 %v936, %v944
        %s947 = sld [smem:[#allocation4 + $0x89]]
        %v948 = vstv %s947
        %v949 = vmul.f32 %v948, %v644
        %951 = vrot.lane.b32.xlu0 %v949, 112
        %v952 = vpop.permute.xlu0 %951
        %v953 = vrot.slane %v952, 1
        %v954 = vsel %vm655, %v952, %v953
        %v956 = vadd.f32 %v946, %v954
        %s957 = sld [smem:[#allocation4 + $0x10]]
        %v958 = vstv %s957
        %v959 = vmul.f32 %v958, %v639
        %961 = vrot.lane.b32.xlu0 %v959, 96
        %v962 = vpop.permute.xlu0 %961
        %v963 = vrot.slane %v962, 1
        %v964 = vsel %vm676, %v962, %v963
        %v966 = vadd.f32 %v956, %v964
        %s967 = sld [smem:[#allocation4 + $0x90]]
        %v968 = vstv %s967
        %v969 = vmul.f32 %v968, %v644
        %971 = vrot.lane.b32.xlu0 %v969, 96
        %v972 = vpop.permute.xlu0 %971
        %v973 = vrot.slane %v972, 1
        %v974 = vsel %vm676, %v972, %v973
        %v976 = vadd.f32 %v966, %v974
        %s977 = sld [smem:[#allocation4 + $0x17]]
        %v978 = vstv %s977
        %v979 = vmul.f32 %v978, %v639
        %981 = vrot.lane.b32.xlu0 %v979, 80
        %v982 = vpop.permute.xlu0 %981
        %v983 = vrot.slane %v982, 1
        %v984 = vsel %vm697, %v982, %v983
        %v986 = vadd.f32 %v976, %v984
        %s987 = sld [smem:[#allocation4 + $0x97]]
        %v988 = vstv %s987
        %v989 = vmul.f32 %v988, %v644
        %991 = vrot.lane.b32.xlu0 %v989, 80
        %v992 = vpop.permute.xlu0 %991
        %v993 = vrot.slane %v992, 1
        %v994 = vsel %vm697, %v992, %v993
        %v996 = vadd.f32 %v986, %v994
        %s997 = sld [smem:[#allocation4 + $0x1e]]
        %v998 = vstv %s997
        %v999 = vmul.f32 %v998, %v712
        %1001 = vrot.lane.b32.xlu0 %v999, 64
        %v1002 = vpop.permute.xlu0 %1001
        %v1003 = vrot.slane %v1002, 7
        %v1004 = vsel %vm719, %v1003, %v1002
        %v1006 = vadd.f32 %v996, %v1004
        %s1007 = sld [smem:[#allocation4 + $0x9e]]
        %v1008 = vstv %s1007
        %v1009 = vmul.f32 %v1008, %v724
        %1011 = vrot.lane.b32.xlu0 %v1009, 64
        %v1012 = vpop.permute.xlu0 %1011
        %v1013 = vrot.slane %v1012, 7
        %v1014 = vsel %vm719, %v1013, %v1012
        %v1016 = vadd.f32 %v1006, %v1014
        %s1017 = sld [smem:[#allocation4 + $0x25]]
        %v1018 = vstv %s1017
        %v1019 = vmul.f32 %v1018, %v712
        %1021 = vrot.lane.b32.xlu0 %v1019, 48
        %v1022 = vpop.permute.xlu0 %1021
        %v1023 = vrot.slane %v1022, 7
        %v1024 = vsel %vm741, %v1023, %v1022
        %v1026 = vadd.f32 %v1016, %v1024
        %s1027 = sld [smem:[#allocation4 + $0xa5]]
        %v1028 = vstv %s1027
        %v1029 = vmul.f32 %v1028, %v724
        %1031 = vrot.lane.b32.xlu0 %v1029, 48
        %v1032 = vpop.permute.xlu0 %1031
        %v1033 = vrot.slane %v1032, 7
        %v1034 = vsel %vm741, %v1033, %v1032
        %v1036 = vadd.f32 %v1026, %v1034
        %s1037 = sld [smem:[#allocation4 + $0x2c]]
        %v1038 = vstv %s1037
        %v1039 = vmul.f32 %v1038, %v712
        %1041 = vrot.lane.b32.xlu0 %v1039, 32
        %v1042 = vpop.permute.xlu0 %1041
        %v1043 = vrot.slane %v1042, 7
        %v1044 = vsel %vm762, %v1043, %v1042
        %v1046 = vadd.f32 %v1036, %v1044
        %s1047 = sld [smem:[#allocation4 + $0xac]]
        %v1048 = vstv %s1047
        %v1049 = vmul.f32 %v1048, %v724
        %1051 = vrot.lane.b32.xlu0 %v1049, 32
        %v1052 = vpop.permute.xlu0 %1051
        %v1053 = vrot.slane %v1052, 7
        %v1054 = vsel %vm762, %v1053, %v1052
        %v1056 = vadd.f32 %v1046, %v1054
        %1058 = vrot.lane.b32.xlu0 %v463, 79
        %v1059 = vpop.permute.xlu0 %1058
        %v1060 = vrot.slane %v1059, 7
        %vm1061 = vcmask 646144
        %v1062 = vsel %vm1061, %v1060, %v1059
        %v1064 = vmul.f32 %v1056, %v1062
        %1066 = vrot.lane.b32.xlu0 %v1064, 126
        %v1067 = vpop.permute.xlu0 %1066
        %v1068 = vrot.slane %v1067, 1
        %vm1069 = vcmask 1031168
        %v1070 = vsel %vm1069, %v1067, %v1068
        %v1072 = vadd.f32 %v928, %v1070
        %s1073 = sld [smem:[#allocation4 + $0x3]]
        %v1074 = vstv %s1073
        %v1075 = vmul.f32 %v1074, %v639
        %v1076 = vadd.f32 %v1075, 0.0
        %s1077 = sld [smem:[#allocation4 + $0x83]]
        %v1078 = vstv %s1077
        %v1079 = vmul.f32 %v1078, %v644
        %v1080 = vadd.f32 %v1076, %v1079
        %s1081 = sld [smem:[#allocation4 + $0xa]]
        %v1082 = vstv %s1081
        %v1083 = vmul.f32 %v1082, %v639
        %1085 = vrot.lane.b32.xlu0 %v1083, 112
        %v1086 = vpop.permute.xlu0 %1085
        %v1087 = vrot.slane %v1086, 1
        %v1088 = vsel %vm655, %v1086, %v1087
        %v1090 = vadd.f32 %v1080, %v1088
        %s1091 = sld [smem:[#allocation4 + $0x8a]]
        %v1092 = vstv %s1091
        %v1093 = vmul.f32 %v1092, %v644
        %1095 = vrot.lane.b32.xlu0 %v1093, 112
        %v1096 = vpop.permute.xlu0 %1095
        %v1097 = vrot.slane %v1096, 1
        %v1098 = vsel %vm655, %v1096, %v1097
        %v1100 = vadd.f32 %v1090, %v1098
        %s1101 = sld [smem:[#allocation4 + $0x11]]
        %v1102 = vstv %s1101
        %v1103 = vmul.f32 %v1102, %v639
        %1105 = vrot.lane.b32.xlu0 %v1103, 96
        %v1106 = vpop.permute.xlu0 %1105
        %v1107 = vrot.slane %v1106, 1
        %v1108 = vsel %vm676, %v1106, %v1107
        %v1110 = vadd.f32 %v1100, %v1108
        %s1111 = sld [smem:[#allocation4 + $0x91]]
        %v1112 = vstv %s1111
        %v1113 = vmul.f32 %v1112, %v644
        %1115 = vrot.lane.b32.xlu0 %v1113, 96
        %v1116 = vpop.permute.xlu0 %1115
        %v1117 = vrot.slane %v1116, 1
        %v1118 = vsel %vm676, %v1116, %v1117
        %v1120 = vadd.f32 %v1110, %v1118
        %s1121 = sld [smem:[#allocation4 + $0x18]]
        %v1122 = vld [vmem:[#allocation2 + $0x1] sm:$0x3]
        %v1123 = vstv %s1121
        %v1124 = vmul.f32 %v1123, %v1122
        %1126 = vrot.lane.b32.xlu0 %v1124, 80
        %v1127 = vpop.permute.xlu0 %1126
        %v1128 = vrot.slane %v1127, 7
        %v1129 = vsel %vm697, %v1128, %v1127
        %v1131 = vadd.f32 %v1120, %v1129
        %s1132 = sld [smem:[#allocation4 + $0x98]]
        %v1133 = vld [vmem:[%s636 + $0x1] sm:$0x3]
        %v1134 = vstv %s1132
        %v1135 = vmul.f32 %v1134, %v1133
        %1137 = vrot.lane.b32.xlu0 %v1135, 80
        %v1138 = vpop.permute.xlu0 %1137
        %v1139 = vrot.slane %v1138, 7
        %v1140 = vsel %vm697, %v1139, %v1138
        %v1142 = vadd.f32 %v1131, %v1140
        %s1143 = sld [smem:[#allocation4 + $0x1f]]
        %v1144 = vstv %s1143
        %v1145 = vmul.f32 %v1144, %v712
        %1147 = vrot.lane.b32.xlu0 %v1145, 64
        %v1148 = vpop.permute.xlu0 %1147
        %v1149 = vrot.slane %v1148, 7
        %v1150 = vsel %vm719, %v1149, %v1148
        %v1152 = vadd.f32 %v1142, %v1150
        %s1153 = sld [smem:[#allocation4 + $0x9f]]
        %v1154 = vstv %s1153
        %v1155 = vmul.f32 %v1154, %v724
        %1157 = vrot.lane.b32.xlu0 %v1155, 64
        %v1158 = vpop.permute.xlu0 %1157
        %v1159 = vrot.slane %v1158, 7
        %v1160 = vsel %vm719, %v1159, %v1158
        %v1162 = vadd.f32 %v1152, %v1160
        %s1163 = sld [smem:[#allocation4 + $0x26]]
        %v1164 = vstv %s1163
        %v1165 = vmul.f32 %v1164, %v712
        %1167 = vrot.lane.b32.xlu0 %v1165, 48
        %v1168 = vpop.permute.xlu0 %1167
        %v1169 = vrot.slane %v1168, 7
        %v1170 = vsel %vm741, %v1169, %v1168
        %v1172 = vadd.f32 %v1162, %v1170
        %s1173 = sld [smem:[#allocation4 + $0xa6]]
        %v1174 = vstv %s1173
        %v1175 = vmul.f32 %v1174, %v724
        %1177 = vrot.lane.b32.xlu0 %v1175, 48
        %v1178 = vpop.permute.xlu0 %1177
        %v1179 = vrot.slane %v1178, 7
        %v1180 = vsel %vm741, %v1179, %v1178
        %v1182 = vadd.f32 %v1172, %v1180
        %s1183 = sld [smem:[#allocation4 + $0x2d]]
        %v1184 = vstv %s1183
        %v1185 = vmul.f32 %v1184, %v712
        %1187 = vrot.lane.b32.xlu0 %v1185, 32
        %v1188 = vpop.permute.xlu0 %1187
        %v1189 = vrot.slane %v1188, 7
        %v1190 = vsel %vm762, %v1189, %v1188
        %v1192 = vadd.f32 %v1182, %v1190
        %s1193 = sld [smem:[#allocation4 + $0xad]]
        %v1194 = vstv %s1193
        %v1195 = vmul.f32 %v1194, %v724
        %1197 = vrot.lane.b32.xlu0 %v1195, 32
        %v1198 = vpop.permute.xlu0 %1197
        %v1199 = vrot.slane %v1198, 7
        %v1200 = vsel %vm762, %v1199, %v1198
        %v1202 = vadd.f32 %v1192, %v1200
        %1204 = vrot.lane.b32.xlu0 %v1202, 125
        %v1205 = vpop.permute.xlu0 %1204
        %v1206 = vrot.slane %v1205, 1
        %vm1207 = vcmask 1022976
        %v1208 = vsel %vm1207, %v1205, %v1206
        %v1210 = vadd.f32 %v1072, %v1208
        %s1211 = sld [smem:[#allocation4 + $0x4]]
        %v1212 = vstv %s1211
        %v1213 = vmul.f32 %v1212, %v639
        %v1214 = vadd.f32 %v1213, 0.0
        %s1215 = sld [smem:[#allocation4 + $0x84]]
        %v1216 = vstv %s1215
        %v1217 = vmul.f32 %v1216, %v644
        %v1218 = vadd.f32 %v1214, %v1217
        %s1219 = sld [smem:[#allocation4 + $0xb]]
        %v1220 = vstv %s1219
        %v1221 = vmul.f32 %v1220, %v639
        %1223 = vrot.lane.b32.xlu0 %v1221, 112
        %v1224 = vpop.permute.xlu0 %1223
        %v1225 = vrot.slane %v1224, 1
        %v1226 = vsel %vm655, %v1224, %v1225
        %v1228 = vadd.f32 %v1218, %v1226
        %s1229 = sld [smem:[#allocation4 + $0x8b]]
        %v1230 = vstv %s1229
        %v1231 = vmul.f32 %v1230, %v644
        %1233 = vrot.lane.b32.xlu0 %v1231, 112
        %v1234 = vpop.permute.xlu0 %1233
        %v1235 = vrot.slane %v1234, 1
        %v1236 = vsel %vm655, %v1234, %v1235
        %v1238 = vadd.f32 %v1228, %v1236
        %s1239 = sld [smem:[#allocation4 + $0x12]]
        %v1240 = vstv %s1239
        %v1241 = vmul.f32 %v1240, %v639
        %1243 = vrot.lane.b32.xlu0 %v1241, 96
        %v1244 = vpop.permute.xlu0 %1243
        %v1245 = vrot.slane %v1244, 1
        %v1246 = vsel %vm676, %v1244, %v1245
        %v1248 = vadd.f32 %v1238, %v1246
        %s1249 = sld [smem:[#allocation4 + $0x92]]
        %v1250 = vstv %s1249
        %v1251 = vmul.f32 %v1250, %v644
        %1253 = vrot.lane.b32.xlu0 %v1251, 96
        %v1254 = vpop.permute.xlu0 %1253
        %v1255 = vrot.slane %v1254, 1
        %v1256 = vsel %vm676, %v1254, %v1255
        %v1258 = vadd.f32 %v1248, %v1256
        %s1259 = sld [smem:[#allocation4 + $0x19]]
        %v1260 = vstv %s1259
        %v1261 = vmul.f32 %v1260, %v712
        %1263 = vrot.lane.b32.xlu0 %v1261, 80
        %v1264 = vpop.permute.xlu0 %1263
        %v1265 = vrot.slane %v1264, 7
        %v1266 = vsel %vm697, %v1265, %v1264
        %v1268 = vadd.f32 %v1258, %v1266
        %s1269 = sld [smem:[#allocation4 + $0x99]]
        %v1270 = vstv %s1269
        %v1271 = vmul.f32 %v1270, %v724
        %1273 = vrot.lane.b32.xlu0 %v1271, 80
        %v1274 = vpop.permute.xlu0 %1273
        %v1275 = vrot.slane %v1274, 7
        %v1276 = vsel %vm697, %v1275, %v1274
        %v1278 = vadd.f32 %v1268, %v1276
        %s1279 = sld [smem:[#allocation4 + $0x20]]
        %v1280 = vstv %s1279
        %v1281 = vmul.f32 %v1280, %v712
        %1283 = vrot.lane.b32.xlu0 %v1281, 64
        %v1284 = vpop.permute.xlu0 %1283
        %v1285 = vrot.slane %v1284, 7
        %v1286 = vsel %vm719, %v1285, %v1284
        %v1288 = vadd.f32 %v1278, %v1286
        %s1289 = sld [smem:[#allocation4 + $0xa0]]
        %v1290 = vstv %s1289
        %v1291 = vmul.f32 %v1290, %v724
        %1293 = vrot.lane.b32.xlu0 %v1291, 64
        %v1294 = vpop.permute.xlu0 %1293
        %v1295 = vrot.slane %v1294, 7
        %v1296 = vsel %vm719, %v1295, %v1294
        %v1298 = vadd.f32 %v1288, %v1296
        %s1299 = sld [smem:[#allocation4 + $0x27]]
        %v1300 = vstv %s1299
        %v1301 = vmul.f32 %v1300, %v712
        %1303 = vrot.lane.b32.xlu0 %v1301, 48
        %v1304 = vpop.permute.xlu0 %1303
        %v1305 = vrot.slane %v1304, 7
        %v1306 = vsel %vm741, %v1305, %v1304
        %v1308 = vadd.f32 %v1298, %v1306
        %s1309 = sld [smem:[#allocation4 + $0xa7]]
        %v1310 = vstv %s1309
        %v1311 = vmul.f32 %v1310, %v724
        %1313 = vrot.lane.b32.xlu0 %v1311, 48
        %v1314 = vpop.permute.xlu0 %1313
        %v1315 = vrot.slane %v1314, 7
        %v1316 = vsel %vm741, %v1315, %v1314
        %v1318 = vadd.f32 %v1308, %v1316
        %s1319 = sld [smem:[#allocation4 + $0x2e]]
        %v1320 = vstv %s1319
        %v1321 = vmul.f32 %v1320, %v712
        %1323 = vrot.lane.b32.xlu0 %v1321, 32
        %v1324 = vpop.permute.xlu0 %1323
        %v1325 = vrot.slane %v1324, 7
        %v1326 = vsel %vm762, %v1325, %v1324
        %v1328 = vadd.f32 %v1318, %v1326
        %s1329 = sld [smem:[#allocation4 + $0xae]]
        %v1330 = vstv %s1329
        %v1331 = vmul.f32 %v1330, %v724
        %1333 = vrot.lane.b32.xlu0 %v1331, 32
        %v1334 = vpop.permute.xlu0 %1333
        %v1335 = vrot.slane %v1334, 7
        %v1336 = vsel %vm762, %v1335, %v1334
        %v1338 = vadd.f32 %v1328, %v1336
        %1340 = vrot.lane.b32.xlu0 %v465, 81
        %v1341 = vpop.permute.xlu0 %1340
        %v1342 = vrot.slane %v1341, 7
        %vm1343 = vcmask 662528
        %v1344 = vsel %vm1343, %v1342, %v1341
        %v1346 = vmul.f32 %v1338, %v1344
        %1348 = vrot.lane.b32.xlu0 %v1346, 124
        %v1349 = vpop.permute.xlu0 %1348
        %v1350 = vrot.slane %v1349, 1
        %vm1351 = vcmask 1014784
        %v1352 = vsel %vm1351, %v1349, %v1350
        %v1354 = vadd.f32 %v1210, %v1352
        %s1355 = sld [smem:[#allocation4 + $0x5]]
        %v1356 = vstv %s1355
        %v1357 = vmul.f32 %v1356, %v639
        %v1358 = vadd.f32 %v1357, 0.0
        %s1359 = sld [smem:[#allocation4 + $0x85]]
        %v1360 = vstv %s1359
        %v1361 = vmul.f32 %v1360, %v644
        %v1362 = vadd.f32 %v1358, %v1361
        %s1363 = sld [smem:[#allocation4 + $0xc]]
        %v1364 = vstv %s1363
        %v1365 = vmul.f32 %v1364, %v639
        %1367 = vrot.lane.b32.xlu0 %v1365, 112
        %v1368 = vpop.permute.xlu0 %1367
        %v1369 = vrot.slane %v1368, 1
        %v1370 = vsel %vm655, %v1368, %v1369
        %v1372 = vadd.f32 %v1362, %v1370
        %s1373 = sld [smem:[#allocation4 + $0x8c]]
        %v1374 = vstv %s1373
        %v1375 = vmul.f32 %v1374, %v644
        %1377 = vrot.lane.b32.xlu0 %v1375, 112
        %v1378 = vpop.permute.xlu0 %1377
        %v1379 = vrot.slane %v1378, 1
        %v1380 = vsel %vm655, %v1378, %v1379
        %v1382 = vadd.f32 %v1372, %v1380
        %s1383 = sld [smem:[#allocation4 + $0x13]]
        %v1384 = vstv %s1383
        %v1385 = vmul.f32 %v1384, %v639
        %1387 = vrot.lane.b32.xlu0 %v1385, 96
        %v1388 = vpop.permute.xlu0 %1387
        %v1389 = vrot.slane %v1388, 1
        %v1390 = vsel %vm676, %v1388, %v1389
        %v1392 = vadd.f32 %v1382, %v1390
        %s1393 = sld [smem:[#allocation4 + $0x93]]
        %v1394 = vstv %s1393
        %v1395 = vmul.f32 %v1394, %v644
        %1397 = vrot.lane.b32.xlu0 %v1395, 96
        %v1398 = vpop.permute.xlu0 %1397
        %v1399 = vrot.slane %v1398, 1
        %v1400 = vsel %vm676, %v1398, %v1399
        %v1402 = vadd.f32 %v1392, %v1400
        %s1403 = sld [smem:[#allocation4 + $0x1a]]
        %v1404 = vstv %s1403
        %v1405 = vmul.f32 %v1404, %v712
        %1407 = vrot.lane.b32.xlu0 %v1405, 80
        %v1408 = vpop.permute.xlu0 %1407
        %v1409 = vrot.slane %v1408, 7
        %v1410 = vsel %vm697, %v1409, %v1408
        %v1412 = vadd.f32 %v1402, %v1410
        %s1413 = sld [smem:[#allocation4 + $0x9a]]
        %v1414 = vstv %s1413
        %v1415 = vmul.f32 %v1414, %v724
        %1417 = vrot.lane.b32.xlu0 %v1415, 80
        %v1418 = vpop.permute.xlu0 %1417
        %v1419 = vrot.slane %v1418, 7
        %v1420 = vsel %vm697, %v1419, %v1418
        %v1422 = vadd.f32 %v1412, %v1420
        %s1423 = sld [smem:[#allocation4 + $0x21]]
        %v1424 = vstv %s1423
        %v1425 = vmul.f32 %v1424, %v712
        %1427 = vrot.lane.b32.xlu0 %v1425, 64
        %v1428 = vpop.permute.xlu0 %1427
        %v1429 = vrot.slane %v1428, 7
        %v1430 = vsel %vm719, %v1429, %v1428
        %v1432 = vadd.f32 %v1422, %v1430
        %s1433 = sld [smem:[#allocation4 + $0xa1]]
        %v1434 = vstv %s1433
        %v1435 = vmul.f32 %v1434, %v724
        %1437 = vrot.lane.b32.xlu0 %v1435, 64
        %v1438 = vpop.permute.xlu0 %1437
        %v1439 = vrot.slane %v1438, 7
        %v1440 = vsel %vm719, %v1439, %v1438
        %v1442 = vadd.f32 %v1432, %v1440
        %s1443 = sld [smem:[#allocation4 + $0x28]]
        %v1444 = vstv %s1443
        %v1445 = vmul.f32 %v1444, %v712
        %1447 = vrot.lane.b32.xlu0 %v1445, 48
        %v1448 = vpop.permute.xlu0 %1447
        %v1449 = vrot.slane %v1448, 7
        %v1450 = vsel %vm741, %v1449, %v1448
        %v1452 = vadd.f32 %v1442, %v1450
        %s1453 = sld [smem:[#allocation4 + $0xa8]]
        %v1454 = vstv %s1453
        %v1455 = vmul.f32 %v1454, %v724
        %1457 = vrot.lane.b32.xlu0 %v1455, 48
        %v1458 = vpop.permute.xlu0 %1457
        %v1459 = vrot.slane %v1458, 7
        %v1460 = vsel %vm741, %v1459, %v1458
        %v1462 = vadd.f32 %v1452, %v1460
        %s1463 = sld [smem:[#allocation4 + $0x2f]]
        %v1464 = vstv %s1463
        %v1465 = vmul.f32 %v1464, %v712
        %1467 = vrot.lane.b32.xlu0 %v1465, 32
        %v1468 = vpop.permute.xlu0 %1467
        %v1469 = vrot.slane %v1468, 7
        %v1470 = vsel %vm762, %v1469, %v1468
        %v1472 = vadd.f32 %v1462, %v1470
        %s1473 = sld [smem:[#allocation4 + $0xaf]]
        %v1474 = vstv %s1473
        %v1475 = vmul.f32 %v1474, %v724
        %1477 = vrot.lane.b32.xlu0 %v1475, 32
        %v1478 = vpop.permute.xlu0 %1477
        %v1479 = vrot.slane %v1478, 7
        %v1480 = vsel %vm762, %v1479, %v1478
        %v1482 = vadd.f32 %v1472, %v1480
        %1484 = vrot.lane.b32.xlu0 %v467, 82
        %v1485 = vpop.permute.xlu0 %1484
        %v1486 = vrot.slane %v1485, 7
        %vm1487 = vcmask 670720
        %v1488 = vsel %vm1487, %v1486, %v1485
        %v1490 = vmul.f32 %v1482, %v1488
        %1492 = vrot.lane.b32.xlu0 %v1490, 123
        %v1493 = vpop.permute.xlu0 %1492
        %v1494 = vrot.slane %v1493, 1
        %vm1495 = vcmask 1006592
        %v1496 = vsel %vm1495, %v1493, %v1494
        %v1498 = vadd.f32 %v1354, %v1496
        %s1499 = sld [smem:[#allocation4 + $0x6]]
        %v1500 = vstv %s1499
        %v1501 = vmul.f32 %v1500, %v639
        %v1502 = vadd.f32 %v1501, 0.0
        %s1503 = sld [smem:[#allocation4 + $0x86]]
        %v1504 = vstv %s1503
        %v1505 = vmul.f32 %v1504, %v644
        %v1506 = vadd.f32 %v1502, %v1505
        %s1507 = sld [smem:[#allocation4 + $0xd]]
        %v1508 = vstv %s1507
        %v1509 = vmul.f32 %v1508, %v639
        %1511 = vrot.lane.b32.xlu0 %v1509, 112
        %v1512 = vpop.permute.xlu0 %1511
        %v1513 = vrot.slane %v1512, 1
        %v1514 = vsel %vm655, %v1512, %v1513
        %v1516 = vadd.f32 %v1506, %v1514
        %s1517 = sld [smem:[#allocation4 + $0x8d]]
        %v1518 = vstv %s1517
        %v1519 = vmul.f32 %v1518, %v644
        %1521 = vrot.lane.b32.xlu0 %v1519, 112
        %v1522 = vpop.permute.xlu0 %1521
        %v1523 = vrot.slane %v1522, 1
        %v1524 = vsel %vm655, %v1522, %v1523
        %v1526 = vadd.f32 %v1516, %v1524
        %s1527 = sld [smem:[#allocation4 + $0x14]]
        %v1528 = vstv %s1527
        %v1529 = vmul.f32 %v1528, %v639
        %1531 = vrot.lane.b32.xlu0 %v1529, 96
        %v1532 = vpop.permute.xlu0 %1531
        %v1533 = vrot.slane %v1532, 1
        %v1534 = vsel %vm676, %v1532, %v1533
        %v1536 = vadd.f32 %v1526, %v1534
        %s1537 = sld [smem:[#allocation4 + $0x94]]
        %v1538 = vstv %s1537
        %v1539 = vmul.f32 %v1538, %v644
        %1541 = vrot.lane.b32.xlu0 %v1539, 96
        %v1542 = vpop.permute.xlu0 %1541
        %v1543 = vrot.slane %v1542, 1
        %v1544 = vsel %vm676, %v1542, %v1543
        %v1546 = vadd.f32 %v1536, %v1544
        %s1547 = sld [smem:[#allocation4 + $0x1b]]
        %v1548 = vstv %s1547
        %v1549 = vmul.f32 %v1548, %v712
        %1551 = vrot.lane.b32.xlu0 %v1549, 80
        %v1552 = vpop.permute.xlu0 %1551
        %v1553 = vrot.slane %v1552, 7
        %v1554 = vsel %vm697, %v1553, %v1552
        %v1556 = vadd.f32 %v1546, %v1554
        %s1557 = sld [smem:[#allocation4 + $0x9b]]
        %v1558 = vstv %s1557
        %v1559 = vmul.f32 %v1558, %v724
        %1561 = vrot.lane.b32.xlu0 %v1559, 80
        %v1562 = vpop.permute.xlu0 %1561
        %v1563 = vrot.slane %v1562, 7
        %v1564 = vsel %vm697, %v1563, %v1562
        %v1566 = vadd.f32 %v1556, %v1564
        %s1567 = sld [smem:[#allocation4 + $0x22]]
        %v1568 = vstv %s1567
        %v1569 = vmul.f32 %v1568, %v712
        %1571 = vrot.lane.b32.xlu0 %v1569, 64
        %v1572 = vpop.permute.xlu0 %1571
        %v1573 = vrot.slane %v1572, 7
        %v1574 = vsel %vm719, %v1573, %v1572
        %v1576 = vadd.f32 %v1566, %v1574
        %s1577 = sld [smem:[#allocation4 + $0xa2]]
        %v1578 = vstv %s1577
        %v1579 = vmul.f32 %v1578, %v724
        %1581 = vrot.lane.b32.xlu0 %v1579, 64
        %v1582 = vpop.permute.xlu0 %1581
        %v1583 = vrot.slane %v1582, 7
        %v1584 = vsel %vm719, %v1583, %v1582
        %v1586 = vadd.f32 %v1576, %v1584
        %s1587 = sld [smem:[#allocation4 + $0x29]]
        %v1588 = vstv %s1587
        %v1589 = vmul.f32 %v1588, %v712
        %1591 = vrot.lane.b32.xlu0 %v1589, 48
        %v1592 = vpop.permute.xlu0 %1591
        %v1593 = vrot.slane %v1592, 7
        %v1594 = vsel %vm741, %v1593, %v1592
        %v1596 = vadd.f32 %v1586, %v1594
        %s1597 = sld [smem:[#allocation4 + $0xa9]]
        %v1598 = vstv %s1597
        %v1599 = vmul.f32 %v1598, %v724
        %1601 = vrot.lane.b32.xlu0 %v1599, 48
        %v1602 = vpop.permute.xlu0 %1601
        %v1603 = vrot.slane %v1602, 7
        %v1604 = vsel %vm741, %v1603, %v1602
        %v1606 = vadd.f32 %v1596, %v1604
        %s1607 = sld [smem:[#allocation4 + $0x30]]
        %v1608 = vstv %s1607
        %v1609 = vmul.f32 %v1608, %v712
        %1611 = vrot.lane.b32.xlu0 %v1609, 32
        %v1612 = vpop.permute.xlu0 %1611
        %v1613 = vrot.slane %v1612, 7
        %v1614 = vsel %vm762, %v1613, %v1612
        %v1616 = vadd.f32 %v1606, %v1614
        %s1617 = sld [smem:[#allocation4 + $0xb0]]
        %v1618 = vstv %s1617
        %v1619 = vmul.f32 %v1618, %v724
        %1621 = vrot.lane.b32.xlu0 %v1619, 32
        %v1622 = vpop.permute.xlu0 %1621
        %v1623 = vrot.slane %v1622, 7
        %v1624 = vsel %vm762, %v1623, %v1622
        %v1626 = vadd.f32 %v1616, %v1624
        %1628 = vrot.lane.b32.xlu0 %v469, 83
        %v1629 = vpop.permute.xlu0 %1628
        %v1630 = vrot.slane %v1629, 7
        %vm1631 = vcmask 678912
        %v1632 = vsel %vm1631, %v1630, %v1629
        %v1634 = vmul.f32 %v1626, %v1632
        %1636 = vrot.lane.b32.xlu0 %v1634, 122
        %v1637 = vpop.permute.xlu0 %1636
        %v1638 = vrot.slane %v1637, 1
        %vm1639 = vcmask 998400
        %v1640 = vsel %vm1639, %v1637, %v1638
        %v1642 = vadd.f32 %v1498, %v1640
        %v1643 = vxor.u32 %v1642, 2147483648
        %v1644 = vmul.f32 %v1643, 1.442695
        %v1645 = vpow.pop %v1644
        %v1646 = vadd.f32 %v1645, 1.0
        %v1647 = vrcp.pop %v1646
        %v1648 = vmul.f32 1.0, %v1647
        %v1650 = vlaneseq
        %v1651 = vshrl.u32 %v1650, 7
        %v1652 = vsub.s32 0, %v1651
        %v1653 = vrot.slane %v1648, %v1652
        %v1654 = vlaneseq
        %v1655 = vshrl.u32 %v1654, 7
        %v1656 = vsub.s32 1, %v1655
        %v1657 = vrot.slane %v1648, %v1656
        %v1658 = vlaneseq
        %v1659 = vshrl.u32 %v1658, 7
        %v1660 = vsub.s32 2, %v1659
        %v1661 = vrot.slane %v1648, %v1660
        %1662 = vrot.lane.b32.xlu0 %v1653, 51
        %v1663 = vpop.permute.xlu0 %1662
        %1664 = vrot.lane.b32.xlu0 %v1657, 51
        %v1665 = vpop.permute.xlu0 %1664
        %1666 = vrot.lane.b32.xlu0 %v1661, 51
        %v1667 = vpop.permute.xlu0 %1666
        %vm1668 = vcmask 416768
        %v1669 = vsel %vm1668, %v1663, %v1665
        %v1670 = vsel %vm1668, %v1665, %v1667
        %v1673 = vmul.f32 %v562, %v1669
        %v1674 = vmul.f32 %v563, %v1670
        %v1675 = vmul.f32 %v564, %v1669
        %v1676 = vmul.f32 %v565, %v1670
        %v1677 = vld [vmem:[%s12] sm:$0xff]
        %v1678 = vld [vmem:[%s12 + $0x8] sm:$0xff]
        %1680 = vset.pattern.permute.xlu0 0
        %1681 = vperm.xlu0 %1680, %v1677
        %v1682 = vpop.permute.xlu0 %1681
        %1685 = vset.pattern.permute.xlu0 0
        %1686 = vperm.xlu0 %1685, %v1678
        %v1687 = vpop.permute.xlu0 %1686
        %v1689 = vadd.f32 %v1673, %v1682
        %v1690 = vadd.f32 %v1674, %v1682
        %v1691 = vadd.f32 %v1675, %v1687
        %v1692 = vadd.f32 %v1676, %v1687
        %1693 = vst [vmem:[%s454] sm:$0xff] %v1689
        %1694 = vst [vmem:[%s454 + $0x8] sm:$0xff] %v1690
        %1695 = vst [vmem:[%s454 + $0x10] sm:$0xff] %v1691
        %1696 = vst [vmem:[%s454 + $0x18] sm:$0xff] %v1692
        loop: start=0, step=1, limit=3
        $region77: #{emcam_forward.1} parent=71 // loop_pre_header
          _
        $region78: #{emcam_forward.1} parent=71 // loop_header
          %s1698 = sphi 0, %s1702
          %p1699 = scmp.ge.s32.totalorder %s1698, 3
        $region79: #{emcam_forward.1} parent=71 // loop_header_branch
          %1701 = sbr.rel (%p1699) target = $region83
        $region80: #{emcam_forward.1} parent=71 // loop_body
          %s1703 = smul.u32 %s1698, 32
          %s1704 = scalar_lea.vmem %s5, %s1703
          %v1705 = vld [vmem:[%s1704] sm:$0xff]
          %v1706 = vld [vmem:[%s1704 + $0x8] sm:$0xff]
          %v1707 = vld [vmem:[%s1704 + $0x10] sm:$0xff]
          %v1708 = vld [vmem:[%s1704 + $0x18] sm:$0xff]
          %s1709 = scalar_lea.vmem %s6, %s1703
          %v1710 = vld [vmem:[%s1709] sm:$0xff]
          %v1711 = vld [vmem:[%s1709 + $0x8] sm:$0xff]
          %v1712 = vld [vmem:[%s1709 + $0x10] sm:$0xff]
          %v1713 = vld [vmem:[%s1709 + $0x18] sm:$0xff]
          %1715 = vset.pattern.permute.xlu0 0
          %1716 = vperm.xlu0 %1715, %v1710
          %v1717 = vpop.permute.xlu0 %1716
          %1720 = vset.pattern.permute.xlu0 0
          %1721 = vperm.xlu0 %1720, %v1711
          %v1722 = vpop.permute.xlu0 %1721
          %1725 = vset.pattern.permute.xlu0 0
          %1726 = vperm.xlu0 %1725, %v1712
          %v1727 = vpop.permute.xlu0 %1726
          %1730 = vset.pattern.permute.xlu0 0
          %1731 = vperm.xlu0 %1730, %v1713
          %v1732 = vpop.permute.xlu0 %1731
          %vm1734 = vcmask 130048
          %v1736 = vsel %vm1734, %v1705, 0
          %v1739 = vsel %vm1734, %v1706, 0
          %v1742 = vsel %vm1734, %v1707, 0
          %v1745 = vsel %vm1734, %v1708, 0
          %1747 = vmatprep.subr.mxu0 0.0
          %1748 = vmatpush1.msra.mxu0 0.0
          %1749 = vmatprep.subr.mxu0 0.0
          %1750 = vmatpush1.msra.mxu0 0.0
          %1751 = vmatprep.subr.mxu0 0.0
          %1752 = vmatpush1.msra.mxu0 0.0
          %1753 = vmatprep.subr.mxu0 0.0
          %1754 = vmatpush1.msra.mxu0 0.0
          %1755 = vmatprep.subr.mxu0 0.0
          %1756 = vmatpush1.msra.mxu0 0.0
          %1757 = vmatprep.subr.mxu0 0.0
          %1758 = vmatpush1.msra.mxu0 0.0
          %1759 = vmatprep.subr.mxu0 0.0
          %1760 = vmatpush1.msra.mxu0 0.0
          %1761 = vmatprep.subr.mxu0 0.0
          %1762 = vmatpush1.msra.mxu0 0.0
          %1763 = vmatprep.subr.mxu0 0.0
          %1764 = vmatpush1.msra.mxu0 0.0
          %1765 = vmatprep.subr.mxu0 0.0
          %1766 = vmatpush1.msra.mxu0 0.0
          %1767 = vmatprep.subr.mxu0 0.0
          %1768 = vmatpush1.msra.mxu0 0.0
          %1769 = vmatprep.subr.mxu0 0.0
          %1770 = vmatpush1.msra.mxu0 0.0
          %1771 = vmatprep.subr.mxu0 0.0
          %1772 = vmatpush1.msra.mxu0 0.0
          %1773 = vmatprep.subr.mxu0 0.0
          %1774 = vmatpush1.msra.mxu0 0.0
          %1775 = vmatprep.subr.mxu0 %v1676
          %1776 = vmatpush1.msra.mxu0 %v1675
          %1777 = vmatprep.subr.mxu0 %v1674
          %1778 = vmatpush1.msra.mxu0 %v1673
          %1779 = vmatprep.subr.mxu0 0.0
          %1780 = vmatpush2.msra.mxu0 0.0
          %1781 = vmatprep.subr.mxu0 0.0
          %1782 = vmatpush2.msra.mxu0 0.0
          %1783 = vmatprep.subr.mxu0 0.0
          %1784 = vmatpush2.msra.mxu0 0.0
          %1785 = vmatprep.subr.mxu0 0.0
          %1786 = vmatpush2.msra.mxu0 0.0
          %1787 = vmatprep.subr.mxu0 0.0
          %1788 = vmatpush2.msra.mxu0 0.0
          %1789 = vmatprep.subr.mxu0 0.0
          %1790 = vmatpush2.msra.mxu0 0.0
          %1791 = vmatprep.subr.mxu0 0.0
          %1792 = vmatpush2.msra.mxu0 0.0
          %1793 = vmatprep.subr.mxu0 0.0
          %1794 = vmatpush2.msra.mxu0 0.0
          %1795 = vmatprep.subr.mxu0 0.0
          %1796 = vmatpush2.msra.mxu0 0.0
          %1797 = vmatprep.subr.mxu0 0.0
          %1798 = vmatpush2.msra.mxu0 0.0
          %1799 = vmatprep.subr.mxu0 0.0
          %1800 = vmatpush2.msra.mxu0 0.0
          %1801 = vmatprep.subr.mxu0 0.0
          %1802 = vmatpush2.msra.mxu0 0.0
          %1803 = vmatprep.subr.mxu0 0.0
          %1804 = vmatpush2.msra.mxu0 0.0
          %1805 = vmatprep.subr.mxu0 0.0
          %1806 = vmatpush2.msra.mxu0 0.0
          %1807 = vmatprep.subr.mxu0 0.0
          %1808 = vmatpush2.msra.mxu0 0.0
          %1809 = vmatprep.subr.mxu0 0.0
          %1810 = vmatpush2.msra.mxu0 0.0
          %1811 = vmatprep.mubr.f32.mxu0 0.0
          %1812 = vmatmul.mubr.f32.gmra.mxu0 %v1736
          %v1813 = vpop.f32.mrf.mxu0
          %v1814 = vadd.f32 %v1717, %v1813
          %v1815 = vpop.f32.mrf.mxu0
          %v1816 = vadd.f32 %v1717, %v1815
          %1817 = vmatprep.mubr.f32.mxu0 0.0
          %1818 = vmatmul.mubr.f32.gmra.mxu0 %v1739
          %v1819 = vpop.f32.mrf.mxu0
          %v1820 = vadd.f32 %v1722, %v1819
          %v1821 = vpop.f32.mrf.mxu0
          %v1822 = vadd.f32 %v1722, %v1821
          %1823 = vmatprep.mubr.f32.mxu0 0.0
          %1824 = vmatmul.mubr.f32.gmra.mxu0 %v1742
          %v1825 = vpop.f32.mrf.mxu0
          %v1826 = vadd.f32 %v1727, %v1825
          %v1827 = vpop.f32.mrf.mxu0
          %v1828 = vadd.f32 %v1727, %v1827
          %1829 = vmatprep.mubr.f32.mxu0 0.0
          %1830 = vmatmul.mubr.f32.gmra.mxu0 %v1745
          %v1831 = vpop.f32.mrf.mxu0
          %v1832 = vadd.f32 %v1732, %v1831
          %v1833 = vpop.f32.mrf.mxu0
          %v1834 = vadd.f32 %v1732, %v1833
          %1835 = vdwg.mxu0
          %v1836 = vmax.f32 %v1814, 0.0
          %v1837 = vmax.f32 %v1816, 0.0
          %v1838 = vmax.f32 %v1820, 0.0
          %v1839 = vmax.f32 %v1822, 0.0
          %v1840 = vmax.f32 %v1826, 0.0
          %v1841 = vmax.f32 %v1828, 0.0
          %v1842 = vmax.f32 %v1832, 0.0
          %v1843 = vmax.f32 %v1834, 0.0
          %1844 = vst [vmem:[#allocation3 + $0x8] sm:$0xff] %v1836
          %1845 = vst [vmem:[#allocation3 + $0x10] sm:$0xff] %v1837
          %1846 = vst [vmem:[#allocation3 + $0x28] sm:$0xff] %v1838
          %1847 = vst [vmem:[#allocation3 + $0x30] sm:$0xff] %v1839
          %1848 = vst [vmem:[#allocation3 + $0x48] sm:$0xff] %v1840
          %1849 = vst [vmem:[#allocation3 + $0x50] sm:$0xff] %v1841
          %1850 = vst [vmem:[#allocation3 + $0x68] sm:$0xff] %v1842
          %1851 = vst [vmem:[#allocation3 + $0x70] sm:$0xff] %v1843
          %s1852 = scalar_lea.vmem %s8, %s1703
          %v1853 = vld [vmem:[%s1852] sm:$0xff]
          %v1854 = vld [vmem:[%s1852 + $0x8] sm:$0xff]
          %v1855 = vld [vmem:[%s1852 + $0x10] sm:$0xff]
          %v1856 = vld [vmem:[%s1852 + $0x18] sm:$0xff]
          %s1857 = scalar_lea.vmem %s9, %s1703
          %v1858 = vld [vmem:[%s1857] sm:$0xff]
          %v1859 = vld [vmem:[%s1857 + $0x8] sm:$0xff]
          %v1860 = vld [vmem:[%s1857 + $0x10] sm:$0xff]
          %v1861 = vld [vmem:[%s1857 + $0x18] sm:$0xff]
          %v1862 = vld [vmem:[#allocation3] sm:$0xff]
          %v1863 = vld [vmem:[#allocation3 + $0x8] sm:$0xff]
          %v1864 = vld [vmem:[#allocation3 + $0x10] sm:$0xff]
          %v1865 = vld [vmem:[#allocation3 + $0x20] sm:$0xff]
          %v1866 = vld [vmem:[#allocation3 + $0x28] sm:$0xff]
          %v1867 = vld [vmem:[#allocation3 + $0x30] sm:$0xff]
          %v1868 = vld [vmem:[#allocation3 + $0x40] sm:$0xff]
          %v1869 = vld [vmem:[#allocation3 + $0x48] sm:$0xff]
          %v1870 = vld [vmem:[#allocation3 + $0x50] sm:$0xff]
          %v1871 = vld [vmem:[#allocation3 + $0x60] sm:$0xff]
          %v1872 = vld [vmem:[#allocation3 + $0x68] sm:$0xff]
          %v1873 = vld [vmem:[#allocation3 + $0x70] sm:$0xff]
          %1875 = vset.pattern.permute.xlu0 0
          %1876 = vperm.xlu0 %1875, %v1858
          %v1877 = vpop.permute.xlu0 %1876
          %1880 = vset.pattern.permute.xlu0 0
          %1881 = vperm.xlu0 %1880, %v1859
          %v1882 = vpop.permute.xlu0 %1881
          %1885 = vset.pattern.permute.xlu0 0
          %1886 = vperm.xlu0 %1885, %v1860
          %v1887 = vpop.permute.xlu0 %1886
          %1890 = vset.pattern.permute.xlu0 0
          %1891 = vperm.xlu0 %1890, %v1861
          %v1892 = vpop.permute.xlu0 %1891
          %v1894 = vmul.f32 %v1877, %v1862
          %v1895 = vmul.f32 %v1877, %v1863
          %v1896 = vmul.f32 %v1877, %v1864
          %v1897 = vmul.f32 %v1882, %v1865
          %v1898 = vmul.f32 %v1882, %v1866
          %v1899 = vmul.f32 %v1882, %v1867
          %v1900 = vmul.f32 %v1887, %v1868
          %v1901 = vmul.f32 %v1887, %v1869
          %v1902 = vmul.f32 %v1887, %v1870
          %v1903 = vmul.f32 %v1892, %v1871
          %v1904 = vmul.f32 %v1892, %v1872
          %v1905 = vmul.f32 %v1892, %v1873
          %v1906 = vadd.f32 %v1894, 0.0
          %v1907 = vadd.f32 %v1895, 0.0
          %v1908 = vadd.f32 %v1896, 0.0
          %v1909 = vadd.f32 %v1897, 0.0
          %v1910 = vadd.f32 %v1898, 0.0
          %v1911 = vadd.f32 %v1899, 0.0
          %v1912 = vadd.f32 %v1900, 0.0
          %v1913 = vadd.f32 %v1901, 0.0
          %v1914 = vadd.f32 %v1902, 0.0
          %v1915 = vadd.f32 %v1903, 0.0
          %v1916 = vadd.f32 %v1904, 0.0
          %v1917 = vadd.f32 %v1905, 0.0
          %1918 = vset.pattern.permute.xlu0 5
          %1919 = vperm.xlu0 %1918, %v1858
          %v1920 = vpop.permute.xlu0 %1919
          %1922 = vset.pattern.permute.xlu0 5
          %1923 = vperm.xlu0 %1922, %v1859
          %v1924 = vpop.permute.xlu0 %1923
          %1926 = vset.pattern.permute.xlu0 5
          %1927 = vperm.xlu0 %1926, %v1860
          %v1928 = vpop.permute.xlu0 %1927
          %1930 = vset.pattern.permute.xlu0 5
          %1931 = vperm.xlu0 %1930, %v1861
          %v1932 = vpop.permute.xlu0 %1931
          %v1934 = vmul.f32 %v1920, %v1862
          %v1935 = vmul.f32 %v1920, %v1863
          %v1936 = vmul.f32 %v1920, %v1864
          %v1937 = vmul.f32 %v1924, %v1865
          %v1938 = vmul.f32 %v1924, %v1866
          %v1939 = vmul.f32 %v1924, %v1867
          %v1940 = vmul.f32 %v1928, %v1868
          %v1941 = vmul.f32 %v1928, %v1869
          %v1942 = vmul.f32 %v1928, %v1870
          %v1943 = vmul.f32 %v1932, %v1871
          %v1944 = vmul.f32 %v1932, %v1872
          %v1945 = vmul.f32 %v1932, %v1873
          %1958 = vrot.lane.b32.xlu0 %v1934, 112
          %v1959 = vpop.permute.xlu0 %1958
          %1960 = vrot.lane.b32.xlu0 %v1935, 112
          %v1961 = vpop.permute.xlu0 %1960
          %1962 = vrot.lane.b32.xlu0 %v1936, 112
          %v1963 = vpop.permute.xlu0 %1962
          %1964 = vrot.lane.b32.xlu0 %v1937, 112
          %v1965 = vpop.permute.xlu0 %1964
          %1966 = vrot.lane.b32.xlu0 %v1938, 112
          %v1967 = vpop.permute.xlu0 %1966
          %1968 = vrot.lane.b32.xlu0 %v1939, 112
          %v1969 = vpop.permute.xlu0 %1968
          %1970 = vrot.lane.b32.xlu0 %v1940, 112
          %v1971 = vpop.permute.xlu0 %1970
          %1972 = vrot.lane.b32.xlu0 %v1941, 112
          %v1973 = vpop.permute.xlu0 %1972
          %1974 = vrot.lane.b32.xlu0 %v1942, 112
          %v1975 = vpop.permute.xlu0 %1974
          %1976 = vrot.lane.b32.xlu0 %v1943, 112
          %v1977 = vpop.permute.xlu0 %1976
          %1978 = vrot.lane.b32.xlu0 %v1944, 112
          %v1979 = vpop.permute.xlu0 %1978
          %1980 = vrot.lane.b32.xlu0 %v1945, 112
          %v1981 = vpop.permute.xlu0 %1980
          %v1982 = vsel %vm655, %v1959, %v1961
          %v1983 = vsel %vm655, %v1961, %v1963
          %v1984 = vsel %vm655, %v1965, %v1967
          %v1985 = vsel %vm655, %v1967, %v1969
          %v1986 = vsel %vm655, %v1971, %v1973
          %v1987 = vsel %vm655, %v1973, %v1975
          %v1988 = vsel %vm655, %v1977, %v1979
          %v1989 = vsel %vm655, %v1979, %v1981
          %v2002 = vadd.f32 %v1906, %v1982
          %v2003 = vadd.f32 %v1907, %v1983
          %v2004 = vadd.f32 %v1908, %v1963
          %v2005 = vadd.f32 %v1909, %v1984
          %v2006 = vadd.f32 %v1910, %v1985
          %v2007 = vadd.f32 %v1911, %v1969
          %v2008 = vadd.f32 %v1912, %v1986
          %v2009 = vadd.f32 %v1913, %v1987
          %v2010 = vadd.f32 %v1914, %v1975
          %v2011 = vadd.f32 %v1915, %v1988
          %v2012 = vadd.f32 %v1916, %v1989
          %v2013 = vadd.f32 %v1917, %v1981
          %2014 = vset.pattern.permute.xlu0 10
          %2015 = vperm.xlu0 %2014, %v1858
          %v2016 = vpop.permute.xlu0 %2015
          %2018 = vset.pattern.permute.xlu0 10
          %2019 = vperm.xlu0 %2018, %v1859
          %v2020 = vpop.permute.xlu0 %2019
          %2022 = vset.pattern.permute.xlu0 10
          %2023 = vperm.xlu0 %2022, %v1860
          %v2024 = vpop.permute.xlu0 %2023
          %2026 = vset.pattern.permute.xlu0 10
          %2027 = vperm.xlu0 %2026, %v1861
          %v2028 = vpop.permute.xlu0 %2027
          %v2030 = vmul.f32 %v2016, %v1862
          %v2031 = vmul.f32 %v2016, %v1863
          %v2032 = vmul.f32 %v2016, %v1864
          %v2033 = vmul.f32 %v2020, %v1865
          %v2034 = vmul.f32 %v2020, %v1866
          %v2035 = vmul.f32 %v2020, %v1867
          %v2036 = vmul.f32 %v2024, %v1868
          %v2037 = vmul.f32 %v2024, %v1869
          %v2038 = vmul.f32 %v2024, %v1870
          %v2039 = vmul.f32 %v2028, %v1871
          %v2040 = vmul.f32 %v2028, %v1872
          %v2041 = vmul.f32 %v2028, %v1873
          %2054 = vrot.lane.b32.xlu0 %v2030, 96
          %v2055 = vpop.permute.xlu0 %2054
          %2056 = vrot.lane.b32.xlu0 %v2031, 96
          %v2057 = vpop.permute.xlu0 %2056
          %2058 = vrot.lane.b32.xlu0 %v2032, 96
          %v2059 = vpop.permute.xlu0 %2058
          %2060 = vrot.lane.b32.xlu0 %v2033, 96
          %v2061 = vpop.permute.xlu0 %2060
          %2062 = vrot.lane.b32.xlu0 %v2034, 96
          %v2063 = vpop.permute.xlu0 %2062
          %2064 = vrot.lane.b32.xlu0 %v2035, 96
          %v2065 = vpop.permute.xlu0 %2064
          %2066 = vrot.lane.b32.xlu0 %v2036, 96
          %v2067 = vpop.permute.xlu0 %2066
          %2068 = vrot.lane.b32.xlu0 %v2037, 96
          %v2069 = vpop.permute.xlu0 %2068
          %2070 = vrot.lane.b32.xlu0 %v2038, 96
          %v2071 = vpop.permute.xlu0 %2070
          %2072 = vrot.lane.b32.xlu0 %v2039, 96
          %v2073 = vpop.permute.xlu0 %2072
          %2074 = vrot.lane.b32.xlu0 %v2040, 96
          %v2075 = vpop.permute.xlu0 %2074
          %2076 = vrot.lane.b32.xlu0 %v2041, 96
          %v2077 = vpop.permute.xlu0 %2076
          %v2078 = vsel %vm676, %v2055, %v2057
          %v2079 = vsel %vm676, %v2057, %v2059
          %v2080 = vsel %vm676, %v2061, %v2063
          %v2081 = vsel %vm676, %v2063, %v2065
          %v2082 = vsel %vm676, %v2067, %v2069
          %v2083 = vsel %vm676, %v2069, %v2071
          %v2084 = vsel %vm676, %v2073, %v2075
          %v2085 = vsel %vm676, %v2075, %v2077
          %v2098 = vadd.f32 %v2002, %v2078
          %v2099 = vadd.f32 %v2003, %v2079
          %v2100 = vadd.f32 %v2004, %v2059
          %v2101 = vadd.f32 %v2005, %v2080
          %v2102 = vadd.f32 %v2006, %v2081
          %v2103 = vadd.f32 %v2007, %v2065
          %v2104 = vadd.f32 %v2008, %v2082
          %v2105 = vadd.f32 %v2009, %v2083
          %v2106 = vadd.f32 %v2010, %v2071
          %v2107 = vadd.f32 %v2011, %v2084
          %v2108 = vadd.f32 %v2012, %v2085
          %v2109 = vadd.f32 %v2013, %v2077
          %v2110 = vld [vmem:[#allocation3 + $0x8] sm:$0xff]
          %v2111 = vld [vmem:[#allocation3 + $0x10] sm:$0xff]
          %v2112 = vld [vmem:[#allocation3 + $0x18] sm:$0xff]
          %v2113 = vld [vmem:[#allocation3 + $0x28] sm:$0xff]
          %v2114 = vld [vmem:[#allocation3 + $0x30] sm:$0xff]
          %v2115 = vld [vmem:[#allocation3 + $0x38] sm:$0xff]
          %v2116 = vld [vmem:[#allocation3 + $0x48] sm:$0xff]
          %v2117 = vld [vmem:[#allocation3 + $0x50] sm:$0xff]
          %v2118 = vld [vmem:[#allocation3 + $0x58] sm:$0xff]
          %v2119 = vld [vmem:[#allocation3 + $0x68] sm:$0xff]
          %v2120 = vld [vmem:[#allocation3 + $0x70] sm:$0xff]
          %v2121 = vld [vmem:[#allocation3 + $0x78] sm:$0xff]
          %2122 = vset.pattern.permute.xlu0 15
          %2123 = vperm.xlu0 %2122, %v1858
          %v2124 = vpop.permute.xlu0 %2123
          %2126 = vset.pattern.permute.xlu0 15
          %2127 = vperm.xlu0 %2126, %v1859
          %v2128 = vpop.permute.xlu0 %2127
          %2130 = vset.pattern.permute.xlu0 15
          %2131 = vperm.xlu0 %2130, %v1860
          %v2132 = vpop.permute.xlu0 %2131
          %2134 = vset.pattern.permute.xlu0 15
          %2135 = vperm.xlu0 %2134, %v1861
          %v2136 = vpop.permute.xlu0 %2135
          %v2138 = vmul.f32 %v2124, %v2110
          %v2139 = vmul.f32 %v2124, %v2111
          %v2140 = vmul.f32 %v2124, %v2112
          %v2141 = vmul.f32 %v2128, %v2113
          %v2142 = vmul.f32 %v2128, %v2114
          %v2143 = vmul.f32 %v2128, %v2115
          %v2144 = vmul.f32 %v2132, %v2116
          %v2145 = vmul.f32 %v2132, %v2117
          %v2146 = vmul.f32 %v2132, %v2118
          %v2147 = vmul.f32 %v2136, %v2119
          %v2148 = vmul.f32 %v2136, %v2120
          %v2149 = vmul.f32 %v2136, %v2121
          %2162 = vrot.lane.b32.xlu0 %v2138, 80
          %v2163 = vpop.permute.xlu0 %2162
          %2164 = vrot.lane.b32.xlu0 %v2139, 80
          %v2165 = vpop.permute.xlu0 %2164
          %2166 = vrot.lane.b32.xlu0 %v2140, 80
          %v2167 = vpop.permute.xlu0 %2166
          %2168 = vrot.lane.b32.xlu0 %v2141, 80
          %v2169 = vpop.permute.xlu0 %2168
          %2170 = vrot.lane.b32.xlu0 %v2142, 80
          %v2171 = vpop.permute.xlu0 %2170
          %2172 = vrot.lane.b32.xlu0 %v2143, 80
          %v2173 = vpop.permute.xlu0 %2172
          %2174 = vrot.lane.b32.xlu0 %v2144, 80
          %v2175 = vpop.permute.xlu0 %2174
          %2176 = vrot.lane.b32.xlu0 %v2145, 80
          %v2177 = vpop.permute.xlu0 %2176
          %2178 = vrot.lane.b32.xlu0 %v2146, 80
          %v2179 = vpop.permute.xlu0 %2178
          %2180 = vrot.lane.b32.xlu0 %v2147, 80
          %v2181 = vpop.permute.xlu0 %2180
          %2182 = vrot.lane.b32.xlu0 %v2148, 80
          %v2183 = vpop.permute.xlu0 %2182
          %2184 = vrot.lane.b32.xlu0 %v2149, 80
          %v2185 = vpop.permute.xlu0 %2184
          %v2186 = vsel %vm697, %v2163, %v2165
          %v2187 = vsel %vm697, %v2165, %v2167
          %v2188 = vsel %vm697, %v2169, %v2171
          %v2189 = vsel %vm697, %v2171, %v2173
          %v2190 = vsel %vm697, %v2175, %v2177
          %v2191 = vsel %vm697, %v2177, %v2179
          %v2192 = vsel %vm697, %v2181, %v2183
          %v2193 = vsel %vm697, %v2183, %v2185
          %v2206 = vadd.f32 %v2098, %v2163
          %v2207 = vadd.f32 %v2099, %v2186
          %v2208 = vadd.f32 %v2100, %v2187
          %v2209 = vadd.f32 %v2101, %v2169
          %v2210 = vadd.f32 %v2102, %v2188
          %v2211 = vadd.f32 %v2103, %v2189
          %v2212 = vadd.f32 %v2104, %v2175
          %v2213 = vadd.f32 %v2105, %v2190
          %v2214 = vadd.f32 %v2106, %v2191
          %v2215 = vadd.f32 %v2107, %v2181
          %v2216 = vadd.f32 %v2108, %v2192
          %v2217 = vadd.f32 %v2109, %v2193
          %2218 = vset.pattern.permute.xlu0 20
          %2219 = vperm.xlu0 %2218, %v1858
          %v2220 = vpop.permute.xlu0 %2219
          %2222 = vset.pattern.permute.xlu0 20
          %2223 = vperm.xlu0 %2222, %v1859
          %v2224 = vpop.permute.xlu0 %2223
          %2226 = vset.pattern.permute.xlu0 20
          %2227 = vperm.xlu0 %2226, %v1860
          %v2228 = vpop.permute.xlu0 %2227
          %2230 = vset.pattern.permute.xlu0 20
          %2231 = vperm.xlu0 %2230, %v1861
          %v2232 = vpop.permute.xlu0 %2231
          %v2234 = vmul.f32 %v2220, %v2110
          %v2235 = vmul.f32 %v2220, %v2111
          %v2236 = vmul.f32 %v2220, %v2112
          %v2237 = vmul.f32 %v2224, %v2113
          %v2238 = vmul.f32 %v2224, %v2114
          %v2239 = vmul.f32 %v2224, %v2115
          %v2240 = vmul.f32 %v2228, %v2116
          %v2241 = vmul.f32 %v2228, %v2117
          %v2242 = vmul.f32 %v2228, %v2118
          %v2243 = vmul.f32 %v2232, %v2119
          %v2244 = vmul.f32 %v2232, %v2120
          %v2245 = vmul.f32 %v2232, %v2121
          %2258 = vrot.lane.b32.xlu0 %v2234, 64
          %v2259 = vpop.permute.xlu0 %2258
          %2260 = vrot.lane.b32.xlu0 %v2235, 64
          %v2261 = vpop.permute.xlu0 %2260
          %2262 = vrot.lane.b32.xlu0 %v2236, 64
          %v2263 = vpop.permute.xlu0 %2262
          %2264 = vrot.lane.b32.xlu0 %v2237, 64
          %v2265 = vpop.permute.xlu0 %2264
          %2266 = vrot.lane.b32.xlu0 %v2238, 64
          %v2267 = vpop.permute.xlu0 %2266
          %2268 = vrot.lane.b32.xlu0 %v2239, 64
          %v2269 = vpop.permute.xlu0 %2268
          %2270 = vrot.lane.b32.xlu0 %v2240, 64
          %v2271 = vpop.permute.xlu0 %2270
          %2272 = vrot.lane.b32.xlu0 %v2241, 64
          %v2273 = vpop.permute.xlu0 %2272
          %2274 = vrot.lane.b32.xlu0 %v2242, 64
          %v2275 = vpop.permute.xlu0 %2274
          %2276 = vrot.lane.b32.xlu0 %v2243, 64
          %v2277 = vpop.permute.xlu0 %2276
          %2278 = vrot.lane.b32.xlu0 %v2244, 64
          %v2279 = vpop.permute.xlu0 %2278
          %2280 = vrot.lane.b32.xlu0 %v2245, 64
          %v2281 = vpop.permute.xlu0 %2280
          %v2282 = vsel %vm719, %v2259, %v2261
          %v2283 = vsel %vm719, %v2261, %v2263
          %v2284 = vsel %vm719, %v2265, %v2267
          %v2285 = vsel %vm719, %v2267, %v2269
          %v2286 = vsel %vm719, %v2271, %v2273
          %v2287 = vsel %vm719, %v2273, %v2275
          %v2288 = vsel %vm719, %v2277, %v2279
          %v2289 = vsel %vm719, %v2279, %v2281
          %v2302 = vadd.f32 %v2206, %v2259
          %v2303 = vadd.f32 %v2207, %v2282
          %v2304 = vadd.f32 %v2208, %v2283
          %v2305 = vadd.f32 %v2209, %v2265
          %v2306 = vadd.f32 %v2210, %v2284
          %v2307 = vadd.f32 %v2211, %v2285
          %v2308 = vadd.f32 %v2212, %v2271
          %v2309 = vadd.f32 %v2213, %v2286
          %v2310 = vadd.f32 %v2214, %v2287
          %v2311 = vadd.f32 %v2215, %v2277
          %v2312 = vadd.f32 %v2216, %v2288
          %v2313 = vadd.f32 %v2217, %v2289
          %v2314 = vlaneseq
          %v2315 = vshrl.u32 %v2314, 7
          %v2316 = vsub.s32 0, %v2315
          %v2317 = vrot.slane %v461, %v2316
          %v2318 = vlaneseq
          %v2319 = vshrl.u32 %v2318, 7
          %v2320 = vsub.s32 1, %v2319
          %v2321 = vrot.slane %v461, %v2320
          %2322 = vrot.lane.b32.xlu0 %v2317, 94
          %v2323 = vpop.permute.xlu0 %2322
          %2324 = vrot.lane.b32.xlu0 %v2321, 94
          %v2325 = vpop.permute.xlu0 %2324
          %vm2326 = vcmask 769024
          %v2327 = vsel %vm2326, %v2323, %v2325
          %v2331 = vmul.f32 %v2302, %v2323
          %v2332 = vmul.f32 %v2303, %v2327
          %v2333 = vmul.f32 %v2304, %v2325
          %v2334 = vmul.f32 %v2305, %v2323
          %v2335 = vmul.f32 %v2306, %v2327
          %v2336 = vmul.f32 %v2307, %v2325
          %v2337 = vmul.f32 %v2308, %v2323
          %v2338 = vmul.f32 %v2309, %v2327
          %v2339 = vmul.f32 %v2310, %v2325
          %v2340 = vmul.f32 %v2311, %v2323
          %v2341 = vmul.f32 %v2312, %v2327
          %v2342 = vmul.f32 %v2313, %v2325
          %v2343 = vadd.f32 %v2331, 0.0
          %v2344 = vadd.f32 %v2332, 0.0
          %v2345 = vadd.f32 %v2333, 0.0
          %v2346 = vadd.f32 %v2334, 0.0
          %v2347 = vadd.f32 %v2335, 0.0
          %v2348 = vadd.f32 %v2336, 0.0
          %v2349 = vadd.f32 %v2337, 0.0
          %v2350 = vadd.f32 %v2338, 0.0
          %v2351 = vadd.f32 %v2339, 0.0
          %v2352 = vadd.f32 %v2340, 0.0
          %v2353 = vadd.f32 %v2341, 0.0
          %v2354 = vadd.f32 %v2342, 0.0
          %2355 = vset.pattern.permute.xlu0 1
          %2356 = vperm.xlu0 %2355, %v1858
          %v2357 = vpop.permute.xlu0 %2356
          %2359 = vset.pattern.permute.xlu0 1
          %2360 = vperm.xlu0 %2359, %v1859
          %v2361 = vpop.permute.xlu0 %2360
          %2363 = vset.pattern.permute.xlu0 1
          %2364 = vperm.xlu0 %2363, %v1860
          %v2365 = vpop.permute.xlu0 %2364
          %2367 = vset.pattern.permute.xlu0 1
          %2368 = vperm.xlu0 %2367, %v1861
          %v2369 = vpop.permute.xlu0 %2368
          %v2371 = vmul.f32 %v2357, %v1862
          %v2372 = vmul.f32 %v2357, %v1863
          %v2373 = vmul.f32 %v2357, %v1864
          %v2374 = vmul.f32 %v2361, %v1865
          %v2375 = vmul.f32 %v2361, %v1866
          %v2376 = vmul.f32 %v2361, %v1867
          %v2377 = vmul.f32 %v2365, %v1868
          %v2378 = vmul.f32 %v2365, %v1869
          %v2379 = vmul.f32 %v2365, %v1870
          %v2380 = vmul.f32 %v2369, %v1871
          %v2381 = vmul.f32 %v2369, %v1872
          %v2382 = vmul.f32 %v2369, %v1873
          %v2383 = vadd.f32 %v2371, 0.0
          %v2384 = vadd.f32 %v2372, 0.0
          %v2385 = vadd.f32 %v2373, 0.0
          %v2386 = vadd.f32 %v2374, 0.0
          %v2387 = vadd.f32 %v2375, 0.0
          %v2388 = vadd.f32 %v2376, 0.0
          %v2389 = vadd.f32 %v2377, 0.0
          %v2390 = vadd.f32 %v2378, 0.0
          %v2391 = vadd.f32 %v2379, 0.0
          %v2392 = vadd.f32 %v2380, 0.0
          %v2393 = vadd.f32 %v2381, 0.0
          %v2394 = vadd.f32 %v2382, 0.0
          %2395 = vset.pattern.permute.xlu0 6
          %2396 = vperm.xlu0 %2395, %v1858
          %v2397 = vpop.permute.xlu0 %2396
          %2399 = vset.pattern.permute.xlu0 6
          %2400 = vperm.xlu0 %2399, %v1859
          %v2401 = vpop.permute.xlu0 %2400
          %2403 = vset.pattern.permute.xlu0 6
          %2404 = vperm.xlu0 %2403, %v1860
          %v2405 = vpop.permute.xlu0 %2404
          %2407 = vset.pattern.permute.xlu0 6
          %2408 = vperm.xlu0 %2407, %v1861
          %v2409 = vpop.permute.xlu0 %2408
          %v2411 = vmul.f32 %v2397, %v1862
          %v2412 = vmul.f32 %v2397, %v1863
          %v2413 = vmul.f32 %v2397, %v1864
          %v2414 = vmul.f32 %v2401, %v1865
          %v2415 = vmul.f32 %v2401, %v1866
          %v2416 = vmul.f32 %v2401, %v1867
          %v2417 = vmul.f32 %v2405, %v1868
          %v2418 = vmul.f32 %v2405, %v1869
          %v2419 = vmul.f32 %v2405, %v1870
          %v2420 = vmul.f32 %v2409, %v1871
          %v2421 = vmul.f32 %v2409, %v1872
          %v2422 = vmul.f32 %v2409, %v1873
          %2435 = vrot.lane.b32.xlu0 %v2411, 112
          %v2436 = vpop.permute.xlu0 %2435
          %2437 = vrot.lane.b32.xlu0 %v2412, 112
          %v2438 = vpop.permute.xlu0 %2437
          %2439 = vrot.lane.b32.xlu0 %v2413, 112
          %v2440 = vpop.permute.xlu0 %2439
          %2441 = vrot.lane.b32.xlu0 %v2414, 112
          %v2442 = vpop.permute.xlu0 %2441
          %2443 = vrot.lane.b32.xlu0 %v2415, 112
          %v2444 = vpop.permute.xlu0 %2443
          %2445 = vrot.lane.b32.xlu0 %v2416, 112
          %v2446 = vpop.permute.xlu0 %2445
          %2447 = vrot.lane.b32.xlu0 %v2417, 112
          %v2448 = vpop.permute.xlu0 %2447
          %2449 = vrot.lane.b32.xlu0 %v2418, 112
          %v2450 = vpop.permute.xlu0 %2449
          %2451 = vrot.lane.b32.xlu0 %v2419, 112
          %v2452 = vpop.permute.xlu0 %2451
          %2453 = vrot.lane.b32.xlu0 %v2420, 112
          %v2454 = vpop.permute.xlu0 %2453
          %2455 = vrot.lane.b32.xlu0 %v2421, 112
          %v2456 = vpop.permute.xlu0 %2455
          %2457 = vrot.lane.b32.xlu0 %v2422, 112
          %v2458 = vpop.permute.xlu0 %2457
          %v2459 = vsel %vm655, %v2436, %v2438
          %v2460 = vsel %vm655, %v2438, %v2440
          %v2461 = vsel %vm655, %v2442, %v2444
          %v2462 = vsel %vm655, %v2444, %v2446
          %v2463 = vsel %vm655, %v2448, %v2450
          %v2464 = vsel %vm655, %v2450, %v2452
          %v2465 = vsel %vm655, %v2454, %v2456
          %v2466 = vsel %vm655, %v2456, %v2458
          %v2479 = vadd.f32 %v2383, %v2459
          %v2480 = vadd.f32 %v2384, %v2460
          %v2481 = vadd.f32 %v2385, %v2440
          %v2482 = vadd.f32 %v2386, %v2461
          %v2483 = vadd.f32 %v2387, %v2462
          %v2484 = vadd.f32 %v2388, %v2446
          %v2485 = vadd.f32 %v2389, %v2463
          %v2486 = vadd.f32 %v2390, %v2464
          %v2487 = vadd.f32 %v2391, %v2452
          %v2488 = vadd.f32 %v2392, %v2465
          %v2489 = vadd.f32 %v2393, %v2466
          %v2490 = vadd.f32 %v2394, %v2458
          %2492 = vset.pattern.permute.xlu0 0
          %2493 = vperm.xlu0 %2492, %v1853
          %v2494 = vpop.permute.xlu0 %2493
          %2497 = vset.pattern.permute.xlu0 0
          %2498 = vperm.xlu0 %2497, %v1854
          %v2499 = vpop.permute.xlu0 %2498
          %2502 = vset.pattern.permute.xlu0 0
          %2503 = vperm.xlu0 %2502, %v1855
          %v2504 = vpop.permute.xlu0 %2503
          %2507 = vset.pattern.permute.xlu0 0
          %2508 = vperm.xlu0 %2507, %v1856
          %v2509 = vpop.permute.xlu0 %2508
          %v2511 = vmul.f32 %v2494, %v1862
          %v2512 = vmul.f32 %v2494, %v1863
          %v2513 = vmul.f32 %v2494, %v1864
          %v2514 = vmul.f32 %v2499, %v1865
          %v2515 = vmul.f32 %v2499, %v1866
          %v2516 = vmul.f32 %v2499, %v1867
          %v2517 = vmul.f32 %v2504, %v1868
          %v2518 = vmul.f32 %v2504, %v1869
          %v2519 = vmul.f32 %v2504, %v1870
          %v2520 = vmul.f32 %v2509, %v1871
          %v2521 = vmul.f32 %v2509, %v1872
          %v2522 = vmul.f32 %v2509, %v1873
          %v2523 = vadd.f32 %v2511, 0.0
          %v2524 = vadd.f32 %v2512, 0.0
          %v2525 = vadd.f32 %v2513, 0.0
          %v2526 = vadd.f32 %v2514, 0.0
          %v2527 = vadd.f32 %v2515, 0.0
          %v2528 = vadd.f32 %v2516, 0.0
          %v2529 = vadd.f32 %v2517, 0.0
          %v2530 = vadd.f32 %v2518, 0.0
          %v2531 = vadd.f32 %v2519, 0.0
          %v2532 = vadd.f32 %v2520, 0.0
          %v2533 = vadd.f32 %v2521, 0.0
          %v2534 = vadd.f32 %v2522, 0.0
          %2535 = vset.pattern.permute.xlu0 11
          %2536 = vperm.xlu0 %2535, %v1858
          %v2537 = vpop.permute.xlu0 %2536
          %2539 = vset.pattern.permute.xlu0 11
          %2540 = vperm.xlu0 %2539, %v1859
          %v2541 = vpop.permute.xlu0 %2540
          %2543 = vset.pattern.permute.xlu0 11
          %2544 = vperm.xlu0 %2543, %v1860
          %v2545 = vpop.permute.xlu0 %2544
          %2547 = vset.pattern.permute.xlu0 11
          %2548 = vperm.xlu0 %2547, %v1861
          %v2549 = vpop.permute.xlu0 %2548
          %v2551 = vmul.f32 %v2537, %v1862
          %v2552 = vmul.f32 %v2537, %v1863
          %v2553 = vmul.f32 %v2537, %v1864
          %v2554 = vmul.f32 %v2541, %v1865
          %v2555 = vmul.f32 %v2541, %v1866
          %v2556 = vmul.f32 %v2541, %v1867
          %v2557 = vmul.f32 %v2545, %v1868
          %v2558 = vmul.f32 %v2545, %v1869
          %v2559 = vmul.f32 %v2545, %v1870
          %v2560 = vmul.f32 %v2549, %v1871
          %v2561 = vmul.f32 %v2549, %v1872
          %v2562 = vmul.f32 %v2549, %v1873
          %2575 = vrot.lane.b32.xlu0 %v2551, 96
          %v2576 = vpop.permute.xlu0 %2575
          %2577 = vrot.lane.b32.xlu0 %v2552, 96
          %v2578 = vpop.permute.xlu0 %2577
          %2579 = vrot.lane.b32.xlu0 %v2553, 96
          %v2580 = vpop.permute.xlu0 %2579
          %2581 = vrot.lane.b32.xlu0 %v2554, 96
          %v2582 = vpop.permute.xlu0 %2581
          %2583 = vrot.lane.b32.xlu0 %v2555, 96
          %v2584 = vpop.permute.xlu0 %2583
          %2585 = vrot.lane.b32.xlu0 %v2556, 96
          %v2586 = vpop.permute.xlu0 %2585
          %2587 = vrot.lane.b32.xlu0 %v2557, 96
          %v2588 = vpop.permute.xlu0 %2587
          %2589 = vrot.lane.b32.xlu0 %v2558, 96
          %v2590 = vpop.permute.xlu0 %2589
          %2591 = vrot.lane.b32.xlu0 %v2559, 96
          %v2592 = vpop.permute.xlu0 %2591
          %2593 = vrot.lane.b32.xlu0 %v2560, 96
          %v2594 = vpop.permute.xlu0 %2593
          %2595 = vrot.lane.b32.xlu0 %v2561, 96
          %v2596 = vpop.permute.xlu0 %2595
          %2597 = vrot.lane.b32.xlu0 %v2562, 96
          %v2598 = vpop.permute.xlu0 %2597
          %v2599 = vsel %vm676, %v2576, %v2578
          %v2600 = vsel %vm676, %v2578, %v2580
          %v2601 = vsel %vm676, %v2582, %v2584
          %v2602 = vsel %vm676, %v2584, %v2586
          %v2603 = vsel %vm676, %v2588, %v2590
          %v2604 = vsel %vm676, %v2590, %v2592
          %v2605 = vsel %vm676, %v2594, %v2596
          %v2606 = vsel %vm676, %v2596, %v2598
          %v2619 = vadd.f32 %v2479, %v2599
          %v2620 = vadd.f32 %v2480, %v2600
          %v2621 = vadd.f32 %v2481, %v2580
          %v2622 = vadd.f32 %v2482, %v2601
          %v2623 = vadd.f32 %v2483, %v2602
          %v2624 = vadd.f32 %v2484, %v2586
          %v2625 = vadd.f32 %v2485, %v2603
          %v2626 = vadd.f32 %v2486, %v2604
          %v2627 = vadd.f32 %v2487, %v2592
          %v2628 = vadd.f32 %v2488, %v2605
          %v2629 = vadd.f32 %v2489, %v2606
          %v2630 = vadd.f32 %v2490, %v2598
          %2631 = vset.pattern.permute.xlu0 3
          %2632 = vperm.xlu0 %2631, %v1853
          %v2633 = vpop.permute.xlu0 %2632
          %2635 = vset.pattern.permute.xlu0 3
          %2636 = vperm.xlu0 %2635, %v1854
          %v2637 = vpop.permute.xlu0 %2636
          %2639 = vset.pattern.permute.xlu0 3
          %2640 = vperm.xlu0 %2639, %v1855
          %v2641 = vpop.permute.xlu0 %2640
          %2643 = vset.pattern.permute.xlu0 3
          %2644 = vperm.xlu0 %2643, %v1856
          %v2645 = vpop.permute.xlu0 %2644
          %v2647 = vmul.f32 %v2633, %v1862
          %v2648 = vmul.f32 %v2633, %v1863
          %v2649 = vmul.f32 %v2633, %v1864
          %v2650 = vmul.f32 %v2637, %v1865
          %v2651 = vmul.f32 %v2637, %v1866
          %v2652 = vmul.f32 %v2637, %v1867
          %v2653 = vmul.f32 %v2641, %v1868
          %v2654 = vmul.f32 %v2641, %v1869
          %v2655 = vmul.f32 %v2641, %v1870
          %v2656 = vmul.f32 %v2645, %v1871
          %v2657 = vmul.f32 %v2645, %v1872
          %v2658 = vmul.f32 %v2645, %v1873
          %2671 = vrot.lane.b32.xlu0 %v2647, 112
          %v2672 = vpop.permute.xlu0 %2671
          %2673 = vrot.lane.b32.xlu0 %v2648, 112
          %v2674 = vpop.permute.xlu0 %2673
          %2675 = vrot.lane.b32.xlu0 %v2649, 112
          %v2676 = vpop.permute.xlu0 %2675
          %2677 = vrot.lane.b32.xlu0 %v2650, 112
          %v2678 = vpop.permute.xlu0 %2677
          %2679 = vrot.lane.b32.xlu0 %v2651, 112
          %v2680 = vpop.permute.xlu0 %2679
          %2681 = vrot.lane.b32.xlu0 %v2652, 112
          %v2682 = vpop.permute.xlu0 %2681
          %2683 = vrot.lane.b32.xlu0 %v2653, 112
          %v2684 = vpop.permute.xlu0 %2683
          %2685 = vrot.lane.b32.xlu0 %v2654, 112
          %v2686 = vpop.permute.xlu0 %2685
          %2687 = vrot.lane.b32.xlu0 %v2655, 112
          %v2688 = vpop.permute.xlu0 %2687
          %2689 = vrot.lane.b32.xlu0 %v2656, 112
          %v2690 = vpop.permute.xlu0 %2689
          %2691 = vrot.lane.b32.xlu0 %v2657, 112
          %v2692 = vpop.permute.xlu0 %2691
          %2693 = vrot.lane.b32.xlu0 %v2658, 112
          %v2694 = vpop.permute.xlu0 %2693
          %v2695 = vsel %vm655, %v2672, %v2674
          %v2696 = vsel %vm655, %v2674, %v2676
          %v2697 = vsel %vm655, %v2678, %v2680
          %v2698 = vsel %vm655, %v2680, %v2682
          %v2699 = vsel %vm655, %v2684, %v2686
          %v2700 = vsel %vm655, %v2686, %v2688
          %v2701 = vsel %vm655, %v2690, %v2692
          %v2702 = vsel %vm655, %v2692, %v2694
          %v2715 = vadd.f32 %v2523, %v2695
          %v2716 = vadd.f32 %v2524, %v2696
          %v2717 = vadd.f32 %v2525, %v2676
          %v2718 = vadd.f32 %v2526, %v2697
          %v2719 = vadd.f32 %v2527, %v2698
          %v2720 = vadd.f32 %v2528, %v2682
          %v2721 = vadd.f32 %v2529, %v2699
          %v2722 = vadd.f32 %v2530, %v2700
          %v2723 = vadd.f32 %v2531, %v2688
          %v2724 = vadd.f32 %v2532, %v2701
          %v2725 = vadd.f32 %v2533, %v2702
          %v2726 = vadd.f32 %v2534, %v2694
          %2727 = vset.pattern.permute.xlu0 16
          %2728 = vperm.xlu0 %2727, %v1858
          %v2729 = vpop.permute.xlu0 %2728
          %2731 = vset.pattern.permute.xlu0 16
          %2732 = vperm.xlu0 %2731, %v1859
          %v2733 = vpop.permute.xlu0 %2732
          %2735 = vset.pattern.permute.xlu0 16
          %2736 = vperm.xlu0 %2735, %v1860
          %v2737 = vpop.permute.xlu0 %2736
          %2739 = vset.pattern.permute.xlu0 16
          %2740 = vperm.xlu0 %2739, %v1861
          %v2741 = vpop.permute.xlu0 %2740
          %v2743 = vmul.f32 %v2729, %v2110
          %v2744 = vmul.f32 %v2729, %v2111
          %v2745 = vmul.f32 %v2729, %v2112
          %v2746 = vmul.f32 %v2733, %v2113
          %v2747 = vmul.f32 %v2733, %v2114
          %v2748 = vmul.f32 %v2733, %v2115
          %v2749 = vmul.f32 %v2737, %v2116
          %v2750 = vmul.f32 %v2737, %v2117
          %v2751 = vmul.f32 %v2737, %v2118
          %v2752 = vmul.f32 %v2741, %v2119
          %v2753 = vmul.f32 %v2741, %v2120
          %v2754 = vmul.f32 %v2741, %v2121
          %2767 = vrot.lane.b32.xlu0 %v2743, 80
          %v2768 = vpop.permute.xlu0 %2767
          %2769 = vrot.lane.b32.xlu0 %v2744, 80
          %v2770 = vpop.permute.xlu0 %2769
          %2771 = vrot.lane.b32.xlu0 %v2745, 80
          %v2772 = vpop.permute.xlu0 %2771
          %2773 = vrot.lane.b32.xlu0 %v2746, 80
          %v2774 = vpop.permute.xlu0 %2773
          %2775 = vrot.lane.b32.xlu0 %v2747, 80
          %v2776 = vpop.permute.xlu0 %2775
          %2777 = vrot.lane.b32.xlu0 %v2748, 80
          %v2778 = vpop.permute.xlu0 %2777
          %2779 = vrot.lane.b32.xlu0 %v2749, 80
          %v2780 = vpop.permute.xlu0 %2779
          %2781 = vrot.lane.b32.xlu0 %v2750, 80
          %v2782 = vpop.permute.xlu0 %2781
          %2783 = vrot.lane.b32.xlu0 %v2751, 80
          %v2784 = vpop.permute.xlu0 %2783
          %2785 = vrot.lane.b32.xlu0 %v2752, 80
          %v2786 = vpop.permute.xlu0 %2785
          %2787 = vrot.lane.b32.xlu0 %v2753, 80
          %v2788 = vpop.permute.xlu0 %2787
          %2789 = vrot.lane.b32.xlu0 %v2754, 80
          %v2790 = vpop.permute.xlu0 %2789
          %v2791 = vsel %vm697, %v2768, %v2770
          %v2792 = vsel %vm697, %v2770, %v2772
          %v2793 = vsel %vm697, %v2774, %v2776
          %v2794 = vsel %vm697, %v2776, %v2778
          %v2795 = vsel %vm697, %v2780, %v2782
          %v2796 = vsel %vm697, %v2782, %v2784
          %v2797 = vsel %vm697, %v2786, %v2788
          %v2798 = vsel %vm697, %v2788, %v2790
          %v2811 = vadd.f32 %v2619, %v2768
          %v2812 = vadd.f32 %v2620, %v2791
          %v2813 = vadd.f32 %v2621, %v2792
          %v2814 = vadd.f32 %v2622, %v2774
          %v2815 = vadd.f32 %v2623, %v2793
          %v2816 = vadd.f32 %v2624, %v2794
          %v2817 = vadd.f32 %v2625, %v2780
          %v2818 = vadd.f32 %v2626, %v2795
          %v2819 = vadd.f32 %v2627, %v2796
          %v2820 = vadd.f32 %v2628, %v2786
          %v2821 = vadd.f32 %v2629, %v2797
          %v2822 = vadd.f32 %v2630, %v2798
          %2823 = vset.pattern.permute.xlu0 6
          %2824 = vperm.xlu0 %2823, %v1853
          %v2825 = vpop.permute.xlu0 %2824
          %2827 = vset.pattern.permute.xlu0 6
          %2828 = vperm.xlu0 %2827, %v1854
          %v2829 = vpop.permute.xlu0 %2828
          %2831 = vset.pattern.permute.xlu0 6
          %2832 = vperm.xlu0 %2831, %v1855
          %v2833 = vpop.permute.xlu0 %2832
          %2835 = vset.pattern.permute.xlu0 6
          %2836 = vperm.xlu0 %2835, %v1856
          %v2837 = vpop.permute.xlu0 %2836
          %v2839 = vmul.f32 %v2825, %v2110
          %v2840 = vmul.f32 %v2825, %v2111
          %v2841 = vmul.f32 %v2825, %v2112
          %v2842 = vmul.f32 %v2829, %v2113
          %v2843 = vmul.f32 %v2829, %v2114
          %v2844 = vmul.f32 %v2829, %v2115
          %v2845 = vmul.f32 %v2833, %v2116
          %v2846 = vmul.f32 %v2833, %v2117
          %v2847 = vmul.f32 %v2833, %v2118
          %v2848 = vmul.f32 %v2837, %v2119
          %v2849 = vmul.f32 %v2837, %v2120
          %v2850 = vmul.f32 %v2837, %v2121
          %2863 = vrot.lane.b32.xlu0 %v2839, 96
          %v2864 = vpop.permute.xlu0 %2863
          %2865 = vrot.lane.b32.xlu0 %v2840, 96
          %v2866 = vpop.permute.xlu0 %2865
          %2867 = vrot.lane.b32.xlu0 %v2841, 96
          %v2868 = vpop.permute.xlu0 %2867
          %2869 = vrot.lane.b32.xlu0 %v2842, 96
          %v2870 = vpop.permute.xlu0 %2869
          %2871 = vrot.lane.b32.xlu0 %v2843, 96
          %v2872 = vpop.permute.xlu0 %2871
          %2873 = vrot.lane.b32.xlu0 %v2844, 96
          %v2874 = vpop.permute.xlu0 %2873
          %2875 = vrot.lane.b32.xlu0 %v2845, 96
          %v2876 = vpop.permute.xlu0 %2875
          %2877 = vrot.lane.b32.xlu0 %v2846, 96
          %v2878 = vpop.permute.xlu0 %2877
          %2879 = vrot.lane.b32.xlu0 %v2847, 96
          %v2880 = vpop.permute.xlu0 %2879
          %2881 = vrot.lane.b32.xlu0 %v2848, 96
          %v2882 = vpop.permute.xlu0 %2881
          %2883 = vrot.lane.b32.xlu0 %v2849, 96
          %v2884 = vpop.permute.xlu0 %2883
          %2885 = vrot.lane.b32.xlu0 %v2850, 96
          %v2886 = vpop.permute.xlu0 %2885
          %v2887 = vsel %vm676, %v2864, %v2866
          %v2888 = vsel %vm676, %v2866, %v2868
          %v2889 = vsel %vm676, %v2870, %v2872
          %v2890 = vsel %vm676, %v2872, %v2874
          %v2891 = vsel %vm676, %v2876, %v2878
          %v2892 = vsel %vm676, %v2878, %v2880
          %v2893 = vsel %vm676, %v2882, %v2884
          %v2894 = vsel %vm676, %v2884, %v2886
          %v2907 = vadd.f32 %v2715, %v2864
          %v2908 = vadd.f32 %v2716, %v2887
          %v2909 = vadd.f32 %v2717, %v2888
          %v2910 = vadd.f32 %v2718, %v2870
          %v2911 = vadd.f32 %v2719, %v2889
          %v2912 = vadd.f32 %v2720, %v2890
          %v2913 = vadd.f32 %v2721, %v2876
          %v2914 = vadd.f32 %v2722, %v2891
          %v2915 = vadd.f32 %v2723, %v2892
          %v2916 = vadd.f32 %v2724, %v2882
          %v2917 = vadd.f32 %v2725, %v2893
          %v2918 = vadd.f32 %v2726, %v2894
          %2919 = vset.pattern.permute.xlu0 21
          %2920 = vperm.xlu0 %2919, %v1858
          %v2921 = vpop.permute.xlu0 %2920
          %2923 = vset.pattern.permute.xlu0 21
          %2924 = vperm.xlu0 %2923, %v1859
          %v2925 = vpop.permute.xlu0 %2924
          %2927 = vset.pattern.permute.xlu0 21
          %2928 = vperm.xlu0 %2927, %v1860
          %v2929 = vpop.permute.xlu0 %2928
          %2931 = vset.pattern.permute.xlu0 21
          %2932 = vperm.xlu0 %2931, %v1861
          %v2933 = vpop.permute.xlu0 %2932
          %v2935 = vmul.f32 %v2921, %v2110
          %v2936 = vmul.f32 %v2921, %v2111
          %v2937 = vmul.f32 %v2921, %v2112
          %v2938 = vmul.f32 %v2925, %v2113
          %v2939 = vmul.f32 %v2925, %v2114
          %v2940 = vmul.f32 %v2925, %v2115
          %v2941 = vmul.f32 %v2929, %v2116
          %v2942 = vmul.f32 %v2929, %v2117
          %v2943 = vmul.f32 %v2929, %v2118
          %v2944 = vmul.f32 %v2933, %v2119
          %v2945 = vmul.f32 %v2933, %v2120
          %v2946 = vmul.f32 %v2933, %v2121
          %2959 = vrot.lane.b32.xlu0 %v2935, 64
          %v2960 = vpop.permute.xlu0 %2959
          %2961 = vrot.lane.b32.xlu0 %v2936, 64
          %v2962 = vpop.permute.xlu0 %2961
          %2963 = vrot.lane.b32.xlu0 %v2937, 64
          %v2964 = vpop.permute.xlu0 %2963
          %2965 = vrot.lane.b32.xlu0 %v2938, 64
          %v2966 = vpop.permute.xlu0 %2965
          %2967 = vrot.lane.b32.xlu0 %v2939, 64
          %v2968 = vpop.permute.xlu0 %2967
          %2969 = vrot.lane.b32.xlu0 %v2940, 64
          %v2970 = vpop.permute.xlu0 %2969
          %2971 = vrot.lane.b32.xlu0 %v2941, 64
          %v2972 = vpop.permute.xlu0 %2971
          %2973 = vrot.lane.b32.xlu0 %v2942, 64
          %v2974 = vpop.permute.xlu0 %2973
          %2975 = vrot.lane.b32.xlu0 %v2943, 64
          %v2976 = vpop.permute.xlu0 %2975
          %2977 = vrot.lane.b32.xlu0 %v2944, 64
          %v2978 = vpop.permute.xlu0 %2977
          %2979 = vrot.lane.b32.xlu0 %v2945, 64
          %v2980 = vpop.permute.xlu0 %2979
          %2981 = vrot.lane.b32.xlu0 %v2946, 64
          %v2982 = vpop.permute.xlu0 %2981
          %v2983 = vsel %vm719, %v2960, %v2962
          %v2984 = vsel %vm719, %v2962, %v2964
          %v2985 = vsel %vm719, %v2966, %v2968
          %v2986 = vsel %vm719, %v2968, %v2970
          %v2987 = vsel %vm719, %v2972, %v2974
          %v2988 = vsel %vm719, %v2974, %v2976
          %v2989 = vsel %vm719, %v2978, %v2980
          %v2990 = vsel %vm719, %v2980, %v2982
          %v3003 = vadd.f32 %v2811, %v2960
          %v3004 = vadd.f32 %v2812, %v2983
          %v3005 = vadd.f32 %v2813, %v2984
          %v3006 = vadd.f32 %v2814, %v2966
          %v3007 = vadd.f32 %v2815, %v2985
          %v3008 = vadd.f32 %v2816, %v2986
          %v3009 = vadd.f32 %v2817, %v2972
          %v3010 = vadd.f32 %v2818, %v2987
          %v3011 = vadd.f32 %v2819, %v2988
          %v3012 = vadd.f32 %v2820, %v2978
          %v3013 = vadd.f32 %v2821, %v2989
          %v3014 = vadd.f32 %v2822, %v2990
          %v3015 = vlaneseq
          %v3016 = vshrl.u32 %v3015, 7
          %v3017 = vsub.s32 0, %v3016
          %v3018 = vrot.slane %v463, %v3017
          %v3019 = vlaneseq
          %v3020 = vshrl.u32 %v3019, 7
          %v3021 = vsub.s32 1, %v3020
          %v3022 = vrot.slane %v463, %v3021
          %3023 = vrot.lane.b32.xlu0 %v3018, 95
          %v3024 = vpop.permute.xlu0 %3023
          %3025 = vrot.lane.b32.xlu0 %v3022, 95
          %v3026 = vpop.permute.xlu0 %3025
          %vm3027 = vcmask 777216
          %v3028 = vsel %vm3027, %v3024, %v3026
          %v3032 = vmul.f32 %v3003, %v3024
          %v3033 = vmul.f32 %v3004, %v3028
          %v3034 = vmul.f32 %v3005, %v3026
          %v3035 = vmul.f32 %v3006, %v3024
          %v3036 = vmul.f32 %v3007, %v3028
          %v3037 = vmul.f32 %v3008, %v3026
          %v3038 = vmul.f32 %v3009, %v3024
          %v3039 = vmul.f32 %v3010, %v3028
          %v3040 = vmul.f32 %v3011, %v3026
          %v3041 = vmul.f32 %v3012, %v3024
          %v3042 = vmul.f32 %v3013, %v3028
          %v3043 = vmul.f32 %v3014, %v3026
          %3044 = vrot.lane.b32.xlu0 %v3018, 111
          %v3045 = vpop.permute.xlu0 %3044
          %3046 = vrot.lane.b32.xlu0 %v3022, 111
          %v3047 = vpop.permute.xlu0 %3046
          %vm3048 = vcmask 908288
          %v3049 = vsel %vm3048, %v3045, %v3047
          %v3053 = vmul.f32 %v2907, %v3045
          %v3054 = vmul.f32 %v2908, %v3049
          %v3055 = vmul.f32 %v2909, %v3047
          %v3056 = vmul.f32 %v2910, %v3045
          %v3057 = vmul.f32 %v2911, %v3049
          %v3058 = vmul.f32 %v2912, %v3047
          %v3059 = vmul.f32 %v2913, %v3045
          %v3060 = vmul.f32 %v2914, %v3049
          %v3061 = vmul.f32 %v2915, %v3047
          %v3062 = vmul.f32 %v2916, %v3045
          %v3063 = vmul.f32 %v2917, %v3049
          %v3064 = vmul.f32 %v2918, %v3047
          %3077 = vrot.lane.b32.xlu0 %v3032, 127
          %v3078 = vpop.permute.xlu0 %3077
          %3079 = vrot.lane.b32.xlu0 %v3033, 127
          %v3080 = vpop.permute.xlu0 %3079
          %3081 = vrot.lane.b32.xlu0 %v3034, 127
          %v3082 = vpop.permute.xlu0 %3081
          %3083 = vrot.lane.b32.xlu0 %v3035, 127
          %v3084 = vpop.permute.xlu0 %3083
          %3085 = vrot.lane.b32.xlu0 %v3036, 127
          %v3086 = vpop.permute.xlu0 %3085
          %3087 = vrot.lane.b32.xlu0 %v3037, 127
          %v3088 = vpop.permute.xlu0 %3087
          %3089 = vrot.lane.b32.xlu0 %v3038, 127
          %v3090 = vpop.permute.xlu0 %3089
          %3091 = vrot.lane.b32.xlu0 %v3039, 127
          %v3092 = vpop.permute.xlu0 %3091
          %3093 = vrot.lane.b32.xlu0 %v3040, 127
          %v3094 = vpop.permute.xlu0 %3093
          %3095 = vrot.lane.b32.xlu0 %v3041, 127
          %v3096 = vpop.permute.xlu0 %3095
          %3097 = vrot.lane.b32.xlu0 %v3042, 127
          %v3098 = vpop.permute.xlu0 %3097
          %3099 = vrot.lane.b32.xlu0 %v3043, 127
          %v3100 = vpop.permute.xlu0 %3099
          %v3101 = vsel %vm925, %v3078, %v3080
          %v3102 = vsel %vm925, %v3080, %v3082
          %v3103 = vsel %vm925, %v3084, %v3086
          %v3104 = vsel %vm925, %v3086, %v3088
          %v3105 = vsel %vm925, %v3090, %v3092
          %v3106 = vsel %vm925, %v3092, %v3094
          %v3107 = vsel %vm925, %v3096, %v3098
          %v3108 = vsel %vm925, %v3098, %v3100
          %v3121 = vadd.f32 %v2343, %v3101
          %v3122 = vadd.f32 %v2344, %v3102
          %v3123 = vadd.f32 %v2345, %v3082
          %v3124 = vadd.f32 %v2346, %v3103
          %v3125 = vadd.f32 %v2347, %v3104
          %v3126 = vadd.f32 %v2348, %v3088
          %v3127 = vadd.f32 %v2349, %v3105
          %v3128 = vadd.f32 %v2350, %v3106
          %v3129 = vadd.f32 %v2351, %v3094
          %v3130 = vadd.f32 %v2352, %v3107
          %v3131 = vadd.f32 %v2353, %v3108
          %v3132 = vadd.f32 %v2354, %v3100
          %v3133 = vadd.f32 %v3053, 0.0
          %v3134 = vadd.f32 %v3054, 0.0
          %v3135 = vadd.f32 %v3055, 0.0
          %v3136 = vadd.f32 %v3056, 0.0
          %v3137 = vadd.f32 %v3057, 0.0
          %v3138 = vadd.f32 %v3058, 0.0
          %v3139 = vadd.f32 %v3059, 0.0
          %v3140 = vadd.f32 %v3060, 0.0
          %v3141 = vadd.f32 %v3061, 0.0
          %v3142 = vadd.f32 %v3062, 0.0
          %v3143 = vadd.f32 %v3063, 0.0
          %v3144 = vadd.f32 %v3064, 0.0
          %3145 = vset.pattern.permute.xlu0 2
          %3146 = vperm.xlu0 %3145, %v1858
          %v3147 = vpop.permute.xlu0 %3146
          %3149 = vset.pattern.permute.xlu0 2
          %3150 = vperm.xlu0 %3149, %v1859
          %v3151 = vpop.permute.xlu0 %3150
          %3153 = vset.pattern.permute.xlu0 2
          %3154 = vperm.xlu0 %3153, %v1860
          %v3155 = vpop.permute.xlu0 %3154
          %3157 = vset.pattern.permute.xlu0 2
          %3158 = vperm.xlu0 %3157, %v1861
          %v3159 = vpop.permute.xlu0 %3158
          %v3161 = vmul.f32 %v3147, %v1862
          %v3162 = vmul.f32 %v3147, %v1863
          %v3163 = vmul.f32 %v3147, %v1864
          %v3164 = vmul.f32 %v3151, %v1865
          %v3165 = vmul.f32 %v3151, %v1866
          %v3166 = vmul.f32 %v3151, %v1867
          %v3167 = vmul.f32 %v3155, %v1868
          %v3168 = vmul.f32 %v3155, %v1869
          %v3169 = vmul.f32 %v3155, %v1870
          %v3170 = vmul.f32 %v3159, %v1871
          %v3171 = vmul.f32 %v3159, %v1872
          %v3172 = vmul.f32 %v3159, %v1873
          %v3173 = vadd.f32 %v3161, 0.0
          %v3174 = vadd.f32 %v3162, 0.0
          %v3175 = vadd.f32 %v3163, 0.0
          %v3176 = vadd.f32 %v3164, 0.0
          %v3177 = vadd.f32 %v3165, 0.0
          %v3178 = vadd.f32 %v3166, 0.0
          %v3179 = vadd.f32 %v3167, 0.0
          %v3180 = vadd.f32 %v3168, 0.0
          %v3181 = vadd.f32 %v3169, 0.0
          %v3182 = vadd.f32 %v3170, 0.0
          %v3183 = vadd.f32 %v3171, 0.0
          %v3184 = vadd.f32 %v3172, 0.0
          %3185 = vset.pattern.permute.xlu0 7
          %3186 = vperm.xlu0 %3185, %v1858
          %v3187 = vpop.permute.xlu0 %3186
          %3189 = vset.pattern.permute.xlu0 7
          %3190 = vperm.xlu0 %3189, %v1859
          %v3191 = vpop.permute.xlu0 %3190
          %3193 = vset.pattern.permute.xlu0 7
          %3194 = vperm.xlu0 %3193, %v1860
          %v3195 = vpop.permute.xlu0 %3194
          %3197 = vset.pattern.permute.xlu0 7
          %3198 = vperm.xlu0 %3197, %v1861
          %v3199 = vpop.permute.xlu0 %3198
          %v3201 = vmul.f32 %v3187, %v1862
          %v3202 = vmul.f32 %v3187, %v1863
          %v3203 = vmul.f32 %v3187, %v1864
          %v3204 = vmul.f32 %v3191, %v1865
          %v3205 = vmul.f32 %v3191, %v1866
          %v3206 = vmul.f32 %v3191, %v1867
          %v3207 = vmul.f32 %v3195, %v1868
          %v3208 = vmul.f32 %v3195, %v1869
          %v3209 = vmul.f32 %v3195, %v1870
          %v3210 = vmul.f32 %v3199, %v1871
          %v3211 = vmul.f32 %v3199, %v1872
          %v3212 = vmul.f32 %v3199, %v1873
          %3225 = vrot.lane.b32.xlu0 %v3201, 112
          %v3226 = vpop.permute.xlu0 %3225
          %3227 = vrot.lane.b32.xlu0 %v3202, 112
          %v3228 = vpop.permute.xlu0 %3227
          %3229 = vrot.lane.b32.xlu0 %v3203, 112
          %v3230 = vpop.permute.xlu0 %3229
          %3231 = vrot.lane.b32.xlu0 %v3204, 112
          %v3232 = vpop.permute.xlu0 %3231
          %3233 = vrot.lane.b32.xlu0 %v3205, 112
          %v3234 = vpop.permute.xlu0 %3233
          %3235 = vrot.lane.b32.xlu0 %v3206, 112
          %v3236 = vpop.permute.xlu0 %3235
          %3237 = vrot.lane.b32.xlu0 %v3207, 112
          %v3238 = vpop.permute.xlu0 %3237
          %3239 = vrot.lane.b32.xlu0 %v3208, 112
          %v3240 = vpop.permute.xlu0 %3239
          %3241 = vrot.lane.b32.xlu0 %v3209, 112
          %v3242 = vpop.permute.xlu0 %3241
          %3243 = vrot.lane.b32.xlu0 %v3210, 112
          %v3244 = vpop.permute.xlu0 %3243
          %3245 = vrot.lane.b32.xlu0 %v3211, 112
          %v3246 = vpop.permute.xlu0 %3245
          %3247 = vrot.lane.b32.xlu0 %v3212, 112
          %v3248 = vpop.permute.xlu0 %3247
          %v3249 = vsel %vm655, %v3226, %v3228
          %v3250 = vsel %vm655, %v3228, %v3230
          %v3251 = vsel %vm655, %v3232, %v3234
          %v3252 = vsel %vm655, %v3234, %v3236
          %v3253 = vsel %vm655, %v3238, %v3240
          %v3254 = vsel %vm655, %v3240, %v3242
          %v3255 = vsel %vm655, %v3244, %v3246
          %v3256 = vsel %vm655, %v3246, %v3248
          %v3269 = vadd.f32 %v3173, %v3249
          %v3270 = vadd.f32 %v3174, %v3250
          %v3271 = vadd.f32 %v3175, %v3230
          %v3272 = vadd.f32 %v3176, %v3251
          %v3273 = vadd.f32 %v3177, %v3252
          %v3274 = vadd.f32 %v3178, %v3236
          %v3275 = vadd.f32 %v3179, %v3253
          %v3276 = vadd.f32 %v3180, %v3254
          %v3277 = vadd.f32 %v3181, %v3242
          %v3278 = vadd.f32 %v3182, %v3255
          %v3279 = vadd.f32 %v3183, %v3256
          %v3280 = vadd.f32 %v3184, %v3248
          %3281 = vset.pattern.permute.xlu0 1
          %3282 = vperm.xlu0 %3281, %v1853
          %v3283 = vpop.permute.xlu0 %3282
          %3285 = vset.pattern.permute.xlu0 1
          %3286 = vperm.xlu0 %3285, %v1854
          %v3287 = vpop.permute.xlu0 %3286
          %3289 = vset.pattern.permute.xlu0 1
          %3290 = vperm.xlu0 %3289, %v1855
          %v3291 = vpop.permute.xlu0 %3290
          %3293 = vset.pattern.permute.xlu0 1
          %3294 = vperm.xlu0 %3293, %v1856
          %v3295 = vpop.permute.xlu0 %3294
          %v3297 = vmul.f32 %v3283, %v1862
          %v3298 = vmul.f32 %v3283, %v1863
          %v3299 = vmul.f32 %v3283, %v1864
          %v3300 = vmul.f32 %v3287, %v1865
          %v3301 = vmul.f32 %v3287, %v1866
          %v3302 = vmul.f32 %v3287, %v1867
          %v3303 = vmul.f32 %v3291, %v1868
          %v3304 = vmul.f32 %v3291, %v1869
          %v3305 = vmul.f32 %v3291, %v1870
          %v3306 = vmul.f32 %v3295, %v1871
          %v3307 = vmul.f32 %v3295, %v1872
          %v3308 = vmul.f32 %v3295, %v1873
          %v3309 = vadd.f32 %v3297, 0.0
          %v3310 = vadd.f32 %v3298, 0.0
          %v3311 = vadd.f32 %v3299, 0.0
          %v3312 = vadd.f32 %v3300, 0.0
          %v3313 = vadd.f32 %v3301, 0.0
          %v3314 = vadd.f32 %v3302, 0.0
          %v3315 = vadd.f32 %v3303, 0.0
          %v3316 = vadd.f32 %v3304, 0.0
          %v3317 = vadd.f32 %v3305, 0.0
          %v3318 = vadd.f32 %v3306, 0.0
          %v3319 = vadd.f32 %v3307, 0.0
          %v3320 = vadd.f32 %v3308, 0.0
          %3321 = vset.pattern.permute.xlu0 12
          %3322 = vperm.xlu0 %3321, %v1858
          %v3323 = vpop.permute.xlu0 %3322
          %3325 = vset.pattern.permute.xlu0 12
          %3326 = vperm.xlu0 %3325, %v1859
          %v3327 = vpop.permute.xlu0 %3326
          %3329 = vset.pattern.permute.xlu0 12
          %3330 = vperm.xlu0 %3329, %v1860
          %v3331 = vpop.permute.xlu0 %3330
          %3333 = vset.pattern.permute.xlu0 12
          %3334 = vperm.xlu0 %3333, %v1861
          %v3335 = vpop.permute.xlu0 %3334
          %v3337 = vmul.f32 %v3323, %v1863
          %v3338 = vmul.f32 %v3323, %v1864
          %v3339 = vmul.f32 %v3327, %v1866
          %v3340 = vmul.f32 %v3327, %v1867
          %v3341 = vmul.f32 %v3331, %v1869
          %v3342 = vmul.f32 %v3331, %v1870
          %v3343 = vmul.f32 %v3335, %v1872
          %v3344 = vmul.f32 %v3335, %v1873
          %3353 = vrot.lane.b32.xlu0 %v3337, 96
          %v3354 = vpop.permute.xlu0 %3353
          %3355 = vrot.lane.b32.xlu0 %v3338, 96
          %v3356 = vpop.permute.xlu0 %3355
          %3357 = vrot.lane.b32.xlu0 %v3339, 96
          %v3358 = vpop.permute.xlu0 %3357
          %3359 = vrot.lane.b32.xlu0 %v3340, 96
          %v3360 = vpop.permute.xlu0 %3359
          %3361 = vrot.lane.b32.xlu0 %v3341, 96
          %v3362 = vpop.permute.xlu0 %3361
          %3363 = vrot.lane.b32.xlu0 %v3342, 96
          %v3364 = vpop.permute.xlu0 %3363
          %3365 = vrot.lane.b32.xlu0 %v3343, 96
          %v3366 = vpop.permute.xlu0 %3365
          %3367 = vrot.lane.b32.xlu0 %v3344, 96
          %v3368 = vpop.permute.xlu0 %3367
          %v3369 = vsel %vm676, %v3354, %v3356
          %v3370 = vsel %vm676, %v3358, %v3360
          %v3371 = vsel %vm676, %v3362, %v3364
          %v3372 = vsel %vm676, %v3366, %v3368
          %v3385 = vadd.f32 %v3269, %v3354
          %v3386 = vadd.f32 %v3270, %v3369
          %v3387 = vadd.f32 %v3271, %v3356
          %v3388 = vadd.f32 %v3272, %v3358
          %v3389 = vadd.f32 %v3273, %v3370
          %v3390 = vadd.f32 %v3274, %v3360
          %v3391 = vadd.f32 %v3275, %v3362
          %v3392 = vadd.f32 %v3276, %v3371
          %v3393 = vadd.f32 %v3277, %v3364
          %v3394 = vadd.f32 %v3278, %v3366
          %v3395 = vadd.f32 %v3279, %v3372
          %v3396 = vadd.f32 %v3280, %v3368
          %3397 = vset.pattern.permute.xlu0 4
          %3398 = vperm.xlu0 %3397, %v1853
          %v3399 = vpop.permute.xlu0 %3398
          %3401 = vset.pattern.permute.xlu0 4
          %3402 = vperm.xlu0 %3401, %v1854
          %v3403 = vpop.permute.xlu0 %3402
          %3405 = vset.pattern.permute.xlu0 4
          %3406 = vperm.xlu0 %3405, %v1855
          %v3407 = vpop.permute.xlu0 %3406
          %3409 = vset.pattern.permute.xlu0 4
          %3410 = vperm.xlu0 %3409, %v1856
          %v3411 = vpop.permute.xlu0 %3410
          %v3413 = vmul.f32 %v3399, %v1863
          %v3414 = vmul.f32 %v3399, %v1864
          %v3415 = vmul.f32 %v3403, %v1866
          %v3416 = vmul.f32 %v3403, %v1867
          %v3417 = vmul.f32 %v3407, %v1869
          %v3418 = vmul.f32 %v3407, %v1870
          %v3419 = vmul.f32 %v3411, %v1872
          %v3420 = vmul.f32 %v3411, %v1873
          %3429 = vrot.lane.b32.xlu0 %v3413, 112
          %v3430 = vpop.permute.xlu0 %3429
          %3431 = vrot.lane.b32.xlu0 %v3414, 112
          %v3432 = vpop.permute.xlu0 %3431
          %3433 = vrot.lane.b32.xlu0 %v3415, 112
          %v3434 = vpop.permute.xlu0 %3433
          %3435 = vrot.lane.b32.xlu0 %v3416, 112
          %v3436 = vpop.permute.xlu0 %3435
          %3437 = vrot.lane.b32.xlu0 %v3417, 112
          %v3438 = vpop.permute.xlu0 %3437
          %3439 = vrot.lane.b32.xlu0 %v3418, 112
          %v3440 = vpop.permute.xlu0 %3439
          %3441 = vrot.lane.b32.xlu0 %v3419, 112
          %v3442 = vpop.permute.xlu0 %3441
          %3443 = vrot.lane.b32.xlu0 %v3420, 112
          %v3444 = vpop.permute.xlu0 %3443
          %v3445 = vsel %vm655, %v3430, %v3432
          %v3446 = vsel %vm655, %v3434, %v3436
          %v3447 = vsel %vm655, %v3438, %v3440
          %v3448 = vsel %vm655, %v3442, %v3444
          %v3461 = vadd.f32 %v3309, %v3430
          %v3462 = vadd.f32 %v3310, %v3445
          %v3463 = vadd.f32 %v3311, %v3432
          %v3464 = vadd.f32 %v3312, %v3434
          %v3465 = vadd.f32 %v3313, %v3446
          %v3466 = vadd.f32 %v3314, %v3436
          %v3467 = vadd.f32 %v3315, %v3438
          %v3468 = vadd.f32 %v3316, %v3447
          %v3469 = vadd.f32 %v3317, %v3440
          %v3470 = vadd.f32 %v3318, %v3442
          %v3471 = vadd.f32 %v3319, %v3448
          %v3472 = vadd.f32 %v3320, %v3444
          %3473 = vset.pattern.permute.xlu0 17
          %3474 = vperm.xlu0 %3473, %v1858
          %v3475 = vpop.permute.xlu0 %3474
          %3477 = vset.pattern.permute.xlu0 17
          %3478 = vperm.xlu0 %3477, %v1859
          %v3479 = vpop.permute.xlu0 %3478
          %3481 = vset.pattern.permute.xlu0 17
          %3482 = vperm.xlu0 %3481, %v1860
          %v3483 = vpop.permute.xlu0 %3482
          %3485 = vset.pattern.permute.xlu0 17
          %3486 = vperm.xlu0 %3485, %v1861
          %v3487 = vpop.permute.xlu0 %3486
          %v3489 = vmul.f32 %v3475, %v2110
          %v3490 = vmul.f32 %v3475, %v2111
          %v3491 = vmul.f32 %v3475, %v2112
          %v3492 = vmul.f32 %v3479, %v2113
          %v3493 = vmul.f32 %v3479, %v2114
          %v3494 = vmul.f32 %v3479, %v2115
          %v3495 = vmul.f32 %v3483, %v2116
          %v3496 = vmul.f32 %v3483, %v2117
          %v3497 = vmul.f32 %v3483, %v2118
          %v3498 = vmul.f32 %v3487, %v2119
          %v3499 = vmul.f32 %v3487, %v2120
          %v3500 = vmul.f32 %v3487, %v2121
          %3513 = vrot.lane.b32.xlu0 %v3489, 80
          %v3514 = vpop.permute.xlu0 %3513
          %3515 = vrot.lane.b32.xlu0 %v3490, 80
          %v3516 = vpop.permute.xlu0 %3515
          %3517 = vrot.lane.b32.xlu0 %v3491, 80
          %v3518 = vpop.permute.xlu0 %3517
          %3519 = vrot.lane.b32.xlu0 %v3492, 80
          %v3520 = vpop.permute.xlu0 %3519
          %3521 = vrot.lane.b32.xlu0 %v3493, 80
          %v3522 = vpop.permute.xlu0 %3521
          %3523 = vrot.lane.b32.xlu0 %v3494, 80
          %v3524 = vpop.permute.xlu0 %3523
          %3525 = vrot.lane.b32.xlu0 %v3495, 80
          %v3526 = vpop.permute.xlu0 %3525
          %3527 = vrot.lane.b32.xlu0 %v3496, 80
          %v3528 = vpop.permute.xlu0 %3527
          %3529 = vrot.lane.b32.xlu0 %v3497, 80
          %v3530 = vpop.permute.xlu0 %3529
          %3531 = vrot.lane.b32.xlu0 %v3498, 80
          %v3532 = vpop.permute.xlu0 %3531
          %3533 = vrot.lane.b32.xlu0 %v3499, 80
          %v3534 = vpop.permute.xlu0 %3533
          %3535 = vrot.lane.b32.xlu0 %v3500, 80
          %v3536 = vpop.permute.xlu0 %3535
          %v3537 = vsel %vm697, %v3514, %v3516
          %v3538 = vsel %vm697, %v3516, %v3518
          %v3539 = vsel %vm697, %v3520, %v3522
          %v3540 = vsel %vm697, %v3522, %v3524
          %v3541 = vsel %vm697, %v3526, %v3528
          %v3542 = vsel %vm697, %v3528, %v3530
          %v3543 = vsel %vm697, %v3532, %v3534
          %v3544 = vsel %vm697, %v3534, %v3536
          %v3557 = vadd.f32 %v3385, %v3514
          %v3558 = vadd.f32 %v3386, %v3537
          %v3559 = vadd.f32 %v3387, %v3538
          %v3560 = vadd.f32 %v3388, %v3520
          %v3561 = vadd.f32 %v3389, %v3539
          %v3562 = vadd.f32 %v3390, %v3540
          %v3563 = vadd.f32 %v3391, %v3526
          %v3564 = vadd.f32 %v3392, %v3541
          %v3565 = vadd.f32 %v3393, %v3542
          %v3566 = vadd.f32 %v3394, %v3532
          %v3567 = vadd.f32 %v3395, %v3543
          %v3568 = vadd.f32 %v3396, %v3544
          %3569 = vset.pattern.permute.xlu0 7
          %3570 = vperm.xlu0 %3569, %v1853
          %v3571 = vpop.permute.xlu0 %3570
          %3573 = vset.pattern.permute.xlu0 7
          %3574 = vperm.xlu0 %3573, %v1854
          %v3575 = vpop.permute.xlu0 %3574
          %3577 = vset.pattern.permute.xlu0 7
          %3578 = vperm.xlu0 %3577, %v1855
          %v3579 = vpop.permute.xlu0 %3578
          %3581 = vset.pattern.permute.xlu0 7
          %3582 = vperm.xlu0 %3581, %v1856
          %v3583 = vpop.permute.xlu0 %3582
          %v3585 = vmul.f32 %v3571, %v2110
          %v3586 = vmul.f32 %v3571, %v2111
          %v3587 = vmul.f32 %v3571, %v2112
          %v3588 = vmul.f32 %v3575, %v2113
          %v3589 = vmul.f32 %v3575, %v2114
          %v3590 = vmul.f32 %v3575, %v2115
          %v3591 = vmul.f32 %v3579, %v2116
          %v3592 = vmul.f32 %v3579, %v2117
          %v3593 = vmul.f32 %v3579, %v2118
          %v3594 = vmul.f32 %v3583, %v2119
          %v3595 = vmul.f32 %v3583, %v2120
          %v3596 = vmul.f32 %v3583, %v2121
          %3609 = vrot.lane.b32.xlu0 %v3585, 96
          %v3610 = vpop.permute.xlu0 %3609
          %3611 = vrot.lane.b32.xlu0 %v3586, 96
          %v3612 = vpop.permute.xlu0 %3611
          %3613 = vrot.lane.b32.xlu0 %v3587, 96
          %v3614 = vpop.permute.xlu0 %3613
          %3615 = vrot.lane.b32.xlu0 %v3588, 96
          %v3616 = vpop.permute.xlu0 %3615
          %3617 = vrot.lane.b32.xlu0 %v3589, 96
          %v3618 = vpop.permute.xlu0 %3617
          %3619 = vrot.lane.b32.xlu0 %v3590, 96
          %v3620 = vpop.permute.xlu0 %3619
          %3621 = vrot.lane.b32.xlu0 %v3591, 96
          %v3622 = vpop.permute.xlu0 %3621
          %3623 = vrot.lane.b32.xlu0 %v3592, 96
          %v3624 = vpop.permute.xlu0 %3623
          %3625 = vrot.lane.b32.xlu0 %v3593, 96
          %v3626 = vpop.permute.xlu0 %3625
          %3627 = vrot.lane.b32.xlu0 %v3594, 96
          %v3628 = vpop.permute.xlu0 %3627
          %3629 = vrot.lane.b32.xlu0 %v3595, 96
          %v3630 = vpop.permute.xlu0 %3629
          %3631 = vrot.lane.b32.xlu0 %v3596, 96
          %v3632 = vpop.permute.xlu0 %3631
          %v3633 = vsel %vm676, %v3610, %v3612
          %v3634 = vsel %vm676, %v3612, %v3614
          %v3635 = vsel %vm676, %v3616, %v3618
          %v3636 = vsel %vm676, %v3618, %v3620
          %v3637 = vsel %vm676, %v3622, %v3624
          %v3638 = vsel %vm676, %v3624, %v3626
          %v3639 = vsel %vm676, %v3628, %v3630
          %v3640 = vsel %vm676, %v3630, %v3632
          %v3653 = vadd.f32 %v3461, %v3610
          %v3654 = vadd.f32 %v3462, %v3633
          %v3655 = vadd.f32 %v3463, %v3634
          %v3656 = vadd.f32 %v3464, %v3616
          %v3657 = vadd.f32 %v3465, %v3635
          %v3658 = vadd.f32 %v3466, %v3636
          %v3659 = vadd.f32 %v3467, %v3622
          %v3660 = vadd.f32 %v3468, %v3637
          %v3661 = vadd.f32 %v3469, %v3638
          %v3662 = vadd.f32 %v3470, %v3628
          %v3663 = vadd.f32 %v3471, %v3639
          %v3664 = vadd.f32 %v3472, %v3640
          %3665 = vset.pattern.permute.xlu0 22
          %3666 = vperm.xlu0 %3665, %v1858
          %v3667 = vpop.permute.xlu0 %3666
          %3669 = vset.pattern.permute.xlu0 22
          %3670 = vperm.xlu0 %3669, %v1859
          %v3671 = vpop.permute.xlu0 %3670
          %3673 = vset.pattern.permute.xlu0 22
          %3674 = vperm.xlu0 %3673, %v1860
          %v3675 = vpop.permute.xlu0 %3674
          %3677 = vset.pattern.permute.xlu0 22
          %3678 = vperm.xlu0 %3677, %v1861
          %v3679 = vpop.permute.xlu0 %3678
          %v3681 = vmul.f32 %v3667, %v2110
          %v3682 = vmul.f32 %v3667, %v2111
          %v3683 = vmul.f32 %v3667, %v2112
          %v3684 = vmul.f32 %v3671, %v2113
          %v3685 = vmul.f32 %v3671, %v2114
          %v3686 = vmul.f32 %v3671, %v2115
          %v3687 = vmul.f32 %v3675, %v2116
          %v3688 = vmul.f32 %v3675, %v2117
          %v3689 = vmul.f32 %v3675, %v2118
          %v3690 = vmul.f32 %v3679, %v2119
          %v3691 = vmul.f32 %v3679, %v2120
          %v3692 = vmul.f32 %v3679, %v2121
          %3705 = vrot.lane.b32.xlu0 %v3681, 64
          %v3706 = vpop.permute.xlu0 %3705
          %3707 = vrot.lane.b32.xlu0 %v3682, 64
          %v3708 = vpop.permute.xlu0 %3707
          %3709 = vrot.lane.b32.xlu0 %v3683, 64
          %v3710 = vpop.permute.xlu0 %3709
          %3711 = vrot.lane.b32.xlu0 %v3684, 64
          %v3712 = vpop.permute.xlu0 %3711
          %3713 = vrot.lane.b32.xlu0 %v3685, 64
          %v3714 = vpop.permute.xlu0 %3713
          %3715 = vrot.lane.b32.xlu0 %v3686, 64
          %v3716 = vpop.permute.xlu0 %3715
          %3717 = vrot.lane.b32.xlu0 %v3687, 64
          %v3718 = vpop.permute.xlu0 %3717
          %3719 = vrot.lane.b32.xlu0 %v3688, 64
          %v3720 = vpop.permute.xlu0 %3719
          %3721 = vrot.lane.b32.xlu0 %v3689, 64
          %v3722 = vpop.permute.xlu0 %3721
          %3723 = vrot.lane.b32.xlu0 %v3690, 64
          %v3724 = vpop.permute.xlu0 %3723
          %3725 = vrot.lane.b32.xlu0 %v3691, 64
          %v3726 = vpop.permute.xlu0 %3725
          %3727 = vrot.lane.b32.xlu0 %v3692, 64
          %v3728 = vpop.permute.xlu0 %3727
          %v3729 = vsel %vm719, %v3706, %v3708
          %v3730 = vsel %vm719, %v3708, %v3710
          %v3731 = vsel %vm719, %v3712, %v3714
          %v3732 = vsel %vm719, %v3714, %v3716
          %v3733 = vsel %vm719, %v3718, %v3720
          %v3734 = vsel %vm719, %v3720, %v3722
          %v3735 = vsel %vm719, %v3724, %v3726
          %v3736 = vsel %vm719, %v3726, %v3728
          %v3749 = vadd.f32 %v3557, %v3706
          %v3750 = vadd.f32 %v3558, %v3729
          %v3751 = vadd.f32 %v3559, %v3730
          %v3752 = vadd.f32 %v3560, %v3712
          %v3753 = vadd.f32 %v3561, %v3731
          %v3754 = vadd.f32 %v3562, %v3732
          %v3755 = vadd.f32 %v3563, %v3718
          %v3756 = vadd.f32 %v3564, %v3733
          %v3757 = vadd.f32 %v3565, %v3734
          %v3758 = vadd.f32 %v3566, %v3724
          %v3759 = vadd.f32 %v3567, %v3735
          %v3760 = vadd.f32 %v3568, %v3736
          %3773 = vrot.lane.b32.xlu0 %v3749, 126
          %v3774 = vpop.permute.xlu0 %3773
          %3775 = vrot.lane.b32.xlu0 %v3750, 126
          %v3776 = vpop.permute.xlu0 %3775
          %3777 = vrot.lane.b32.xlu0 %v3751, 126
          %v3778 = vpop.permute.xlu0 %3777
          %3779 = vrot.lane.b32.xlu0 %v3752, 126
          %v3780 = vpop.permute.xlu0 %3779
          %3781 = vrot.lane.b32.xlu0 %v3753, 126
          %v3782 = vpop.permute.xlu0 %3781
          %3783 = vrot.lane.b32.xlu0 %v3754, 126
          %v3784 = vpop.permute.xlu0 %3783
          %3785 = vrot.lane.b32.xlu0 %v3755, 126
          %v3786 = vpop.permute.xlu0 %3785
          %3787 = vrot.lane.b32.xlu0 %v3756, 126
          %v3788 = vpop.permute.xlu0 %3787
          %3789 = vrot.lane.b32.xlu0 %v3757, 126
          %v3790 = vpop.permute.xlu0 %3789
          %3791 = vrot.lane.b32.xlu0 %v3758, 126
          %v3792 = vpop.permute.xlu0 %3791
          %3793 = vrot.lane.b32.xlu0 %v3759, 126
          %v3794 = vpop.permute.xlu0 %3793
          %3795 = vrot.lane.b32.xlu0 %v3760, 126
          %v3796 = vpop.permute.xlu0 %3795
          %v3797 = vsel %vm1069, %v3774, %v3776
          %v3798 = vsel %vm1069, %v3776, %v3778
          %v3799 = vsel %vm1069, %v3780, %v3782
          %v3800 = vsel %vm1069, %v3782, %v3784
          %v3801 = vsel %vm1069, %v3786, %v3788
          %v3802 = vsel %vm1069, %v3788, %v3790
          %v3803 = vsel %vm1069, %v3792, %v3794
          %v3804 = vsel %vm1069, %v3794, %v3796
          %v3817 = vadd.f32 %v3121, %v3797
          %v3818 = vadd.f32 %v3122, %v3798
          %v3819 = vadd.f32 %v3123, %v3778
          %v3820 = vadd.f32 %v3124, %v3799
          %v3821 = vadd.f32 %v3125, %v3800
          %v3822 = vadd.f32 %v3126, %v3784
          %v3823 = vadd.f32 %v3127, %v3801
          %v3824 = vadd.f32 %v3128, %v3802
          %v3825 = vadd.f32 %v3129, %v3790
          %v3826 = vadd.f32 %v3130, %v3803
          %v3827 = vadd.f32 %v3131, %v3804
          %v3828 = vadd.f32 %v3132, %v3796
          %3841 = vrot.lane.b32.xlu0 %v3653, 127
          %v3842 = vpop.permute.xlu0 %3841
          %3843 = vrot.lane.b32.xlu0 %v3654, 127
          %v3844 = vpop.permute.xlu0 %3843
          %3845 = vrot.lane.b32.xlu0 %v3655, 127
          %v3846 = vpop.permute.xlu0 %3845
          %3847 = vrot.lane.b32.xlu0 %v3656, 127
          %v3848 = vpop.permute.xlu0 %3847
          %3849 = vrot.lane.b32.xlu0 %v3657, 127
          %v3850 = vpop.permute.xlu0 %3849
          %3851 = vrot.lane.b32.xlu0 %v3658, 127
          %v3852 = vpop.permute.xlu0 %3851
          %3853 = vrot.lane.b32.xlu0 %v3659, 127
          %v3854 = vpop.permute.xlu0 %3853
          %3855 = vrot.lane.b32.xlu0 %v3660, 127
          %v3856 = vpop.permute.xlu0 %3855
          %3857 = vrot.lane.b32.xlu0 %v3661, 127
          %v3858 = vpop.permute.xlu0 %3857
          %3859 = vrot.lane.b32.xlu0 %v3662, 127
          %v3860 = vpop.permute.xlu0 %3859
          %3861 = vrot.lane.b32.xlu0 %v3663, 127
          %v3862 = vpop.permute.xlu0 %3861
          %3863 = vrot.lane.b32.xlu0 %v3664, 127
          %v3864 = vpop.permute.xlu0 %3863
          %v3865 = vsel %vm925, %v3842, %v3844
          %v3866 = vsel %vm925, %v3844, %v3846
          %v3867 = vsel %vm925, %v3848, %v3850
          %v3868 = vsel %vm925, %v3850, %v3852
          %v3869 = vsel %vm925, %v3854, %v3856
          %v3870 = vsel %vm925, %v3856, %v3858
          %v3871 = vsel %vm925, %v3860, %v3862
          %v3872 = vsel %vm925, %v3862, %v3864
          %v3885 = vadd.f32 %v3133, %v3865
          %v3886 = vadd.f32 %v3134, %v3866
          %v3887 = vadd.f32 %v3135, %v3846
          %v3888 = vadd.f32 %v3136, %v3867
          %v3889 = vadd.f32 %v3137, %v3868
          %v3890 = vadd.f32 %v3138, %v3852
          %v3891 = vadd.f32 %v3139, %v3869
          %v3892 = vadd.f32 %v3140, %v3870
          %v3893 = vadd.f32 %v3141, %v3858
          %v3894 = vadd.f32 %v3142, %v3871
          %v3895 = vadd.f32 %v3143, %v3872
          %v3896 = vadd.f32 %v3144, %v3864
          %3897 = vset.pattern.permute.xlu0 3
          %3898 = vperm.xlu0 %3897, %v1858
          %v3899 = vpop.permute.xlu0 %3898
          %3901 = vset.pattern.permute.xlu0 3
          %3902 = vperm.xlu0 %3901, %v1859
          %v3903 = vpop.permute.xlu0 %3902
          %3905 = vset.pattern.permute.xlu0 3
          %3906 = vperm.xlu0 %3905, %v1860
          %v3907 = vpop.permute.xlu0 %3906
          %3909 = vset.pattern.permute.xlu0 3
          %3910 = vperm.xlu0 %3909, %v1861
          %v3911 = vpop.permute.xlu0 %3910
          %v3913 = vmul.f32 %v3899, %v1862
          %v3914 = vmul.f32 %v3899, %v1863
          %v3915 = vmul.f32 %v3899, %v1864
          %v3916 = vmul.f32 %v3903, %v1865
          %v3917 = vmul.f32 %v3903, %v1866
          %v3918 = vmul.f32 %v3903, %v1867
          %v3919 = vmul.f32 %v3907, %v1868
          %v3920 = vmul.f32 %v3907, %v1869
          %v3921 = vmul.f32 %v3907, %v1870
          %v3922 = vmul.f32 %v3911, %v1871
          %v3923 = vmul.f32 %v3911, %v1872
          %v3924 = vmul.f32 %v3911, %v1873
          %v3925 = vadd.f32 %v3913, 0.0
          %v3926 = vadd.f32 %v3914, 0.0
          %v3927 = vadd.f32 %v3915, 0.0
          %v3928 = vadd.f32 %v3916, 0.0
          %v3929 = vadd.f32 %v3917, 0.0
          %v3930 = vadd.f32 %v3918, 0.0
          %v3931 = vadd.f32 %v3919, 0.0
          %v3932 = vadd.f32 %v3920, 0.0
          %v3933 = vadd.f32 %v3921, 0.0
          %v3934 = vadd.f32 %v3922, 0.0
          %v3935 = vadd.f32 %v3923, 0.0
          %v3936 = vadd.f32 %v3924, 0.0
          %3937 = vset.pattern.permute.xlu0 8
          %3938 = vperm.xlu0 %3937, %v1858
          %v3939 = vpop.permute.xlu0 %3938
          %3941 = vset.pattern.permute.xlu0 8
          %3942 = vperm.xlu0 %3941, %v1859
          %v3943 = vpop.permute.xlu0 %3942
          %3945 = vset.pattern.permute.xlu0 8
          %3946 = vperm.xlu0 %3945, %v1860
          %v3947 = vpop.permute.xlu0 %3946
          %3949 = vset.pattern.permute.xlu0 8
          %3950 = vperm.xlu0 %3949, %v1861
          %v3951 = vpop.permute.xlu0 %3950
          %v3953 = vmul.f32 %v3939, %v1862
          %v3954 = vmul.f32 %v3939, %v1863
          %v3955 = vmul.f32 %v3939, %v1864
          %v3956 = vmul.f32 %v3943, %v1865
          %v3957 = vmul.f32 %v3943, %v1866
          %v3958 = vmul.f32 %v3943, %v1867
          %v3959 = vmul.f32 %v3947, %v1868
          %v3960 = vmul.f32 %v3947, %v1869
          %v3961 = vmul.f32 %v3947, %v1870
          %v3962 = vmul.f32 %v3951, %v1871
          %v3963 = vmul.f32 %v3951, %v1872
          %v3964 = vmul.f32 %v3951, %v1873
          %3977 = vrot.lane.b32.xlu0 %v3953, 112
          %v3978 = vpop.permute.xlu0 %3977
          %3979 = vrot.lane.b32.xlu0 %v3954, 112
          %v3980 = vpop.permute.xlu0 %3979
          %3981 = vrot.lane.b32.xlu0 %v3955, 112
          %v3982 = vpop.permute.xlu0 %3981
          %3983 = vrot.lane.b32.xlu0 %v3956, 112
          %v3984 = vpop.permute.xlu0 %3983
          %3985 = vrot.lane.b32.xlu0 %v3957, 112
          %v3986 = vpop.permute.xlu0 %3985
          %3987 = vrot.lane.b32.xlu0 %v3958, 112
          %v3988 = vpop.permute.xlu0 %3987
          %3989 = vrot.lane.b32.xlu0 %v3959, 112
          %v3990 = vpop.permute.xlu0 %3989
          %3991 = vrot.lane.b32.xlu0 %v3960, 112
          %v3992 = vpop.permute.xlu0 %3991
          %3993 = vrot.lane.b32.xlu0 %v3961, 112
          %v3994 = vpop.permute.xlu0 %3993
          %3995 = vrot.lane.b32.xlu0 %v3962, 112
          %v3996 = vpop.permute.xlu0 %3995
          %3997 = vrot.lane.b32.xlu0 %v3963, 112
          %v3998 = vpop.permute.xlu0 %3997
          %3999 = vrot.lane.b32.xlu0 %v3964, 112
          %v4000 = vpop.permute.xlu0 %3999
          %v4001 = vsel %vm655, %v3978, %v3980
          %v4002 = vsel %vm655, %v3980, %v3982
          %v4003 = vsel %vm655, %v3984, %v3986
          %v4004 = vsel %vm655, %v3986, %v3988
          %v4005 = vsel %vm655, %v3990, %v3992
          %v4006 = vsel %vm655, %v3992, %v3994
          %v4007 = vsel %vm655, %v3996, %v3998
          %v4008 = vsel %vm655, %v3998, %v4000
          %v4021 = vadd.f32 %v3925, %v4001
          %v4022 = vadd.f32 %v3926, %v4002
          %v4023 = vadd.f32 %v3927, %v3982
          %v4024 = vadd.f32 %v3928, %v4003
          %v4025 = vadd.f32 %v3929, %v4004
          %v4026 = vadd.f32 %v3930, %v3988
          %v4027 = vadd.f32 %v3931, %v4005
          %v4028 = vadd.f32 %v3932, %v4006
          %v4029 = vadd.f32 %v3933, %v3994
          %v4030 = vadd.f32 %v3934, %v4007
          %v4031 = vadd.f32 %v3935, %v4008
          %v4032 = vadd.f32 %v3936, %v4000
          %4033 = vset.pattern.permute.xlu0 2
          %4034 = vperm.xlu0 %4033, %v1853
          %v4035 = vpop.permute.xlu0 %4034
          %4037 = vset.pattern.permute.xlu0 2
          %4038 = vperm.xlu0 %4037, %v1854
          %v4039 = vpop.permute.xlu0 %4038
          %4041 = vset.pattern.permute.xlu0 2
          %4042 = vperm.xlu0 %4041, %v1855
          %v4043 = vpop.permute.xlu0 %4042
          %4045 = vset.pattern.permute.xlu0 2
          %4046 = vperm.xlu0 %4045, %v1856
          %v4047 = vpop.permute.xlu0 %4046
          %v4049 = vmul.f32 %v4035, %v1862
          %v4050 = vmul.f32 %v4035, %v1863
          %v4051 = vmul.f32 %v4035, %v1864
          %v4052 = vmul.f32 %v4039, %v1865
          %v4053 = vmul.f32 %v4039, %v1866
          %v4054 = vmul.f32 %v4039, %v1867
          %v4055 = vmul.f32 %v4043, %v1868
          %v4056 = vmul.f32 %v4043, %v1869
          %v4057 = vmul.f32 %v4043, %v1870
          %v4058 = vmul.f32 %v4047, %v1871
          %v4059 = vmul.f32 %v4047, %v1872
          %v4060 = vmul.f32 %v4047, %v1873
          %v4061 = vadd.f32 %v4049, 0.0
          %v4062 = vadd.f32 %v4050, 0.0
          %v4063 = vadd.f32 %v4051, 0.0
          %v4064 = vadd.f32 %v4052, 0.0
          %v4065 = vadd.f32 %v4053, 0.0
          %v4066 = vadd.f32 %v4054, 0.0
          %v4067 = vadd.f32 %v4055, 0.0
          %v4068 = vadd.f32 %v4056, 0.0
          %v4069 = vadd.f32 %v4057, 0.0
          %v4070 = vadd.f32 %v4058, 0.0
          %v4071 = vadd.f32 %v4059, 0.0
          %v4072 = vadd.f32 %v4060, 0.0
          %4073 = vset.pattern.permute.xlu0 13
          %4074 = vperm.xlu0 %4073, %v1858
          %v4075 = vpop.permute.xlu0 %4074
          %4077 = vset.pattern.permute.xlu0 13
          %4078 = vperm.xlu0 %4077, %v1859
          %v4079 = vpop.permute.xlu0 %4078
          %4081 = vset.pattern.permute.xlu0 13
          %4082 = vperm.xlu0 %4081, %v1860
          %v4083 = vpop.permute.xlu0 %4082
          %4085 = vset.pattern.permute.xlu0 13
          %4086 = vperm.xlu0 %4085, %v1861
          %v4087 = vpop.permute.xlu0 %4086
          %v4089 = vmul.f32 %v4075, %v2110
          %v4090 = vmul.f32 %v4075, %v2111
          %v4091 = vmul.f32 %v4075, %v2112
          %v4092 = vmul.f32 %v4079, %v2113
          %v4093 = vmul.f32 %v4079, %v2114
          %v4094 = vmul.f32 %v4079, %v2115
          %v4095 = vmul.f32 %v4083, %v2116
          %v4096 = vmul.f32 %v4083, %v2117
          %v4097 = vmul.f32 %v4083, %v2118
          %v4098 = vmul.f32 %v4087, %v2119
          %v4099 = vmul.f32 %v4087, %v2120
          %v4100 = vmul.f32 %v4087, %v2121
          %4113 = vrot.lane.b32.xlu0 %v4089, 96
          %v4114 = vpop.permute.xlu0 %4113
          %4115 = vrot.lane.b32.xlu0 %v4090, 96
          %v4116 = vpop.permute.xlu0 %4115
          %4117 = vrot.lane.b32.xlu0 %v4091, 96
          %v4118 = vpop.permute.xlu0 %4117
          %4119 = vrot.lane.b32.xlu0 %v4092, 96
          %v4120 = vpop.permute.xlu0 %4119
          %4121 = vrot.lane.b32.xlu0 %v4093, 96
          %v4122 = vpop.permute.xlu0 %4121
          %4123 = vrot.lane.b32.xlu0 %v4094, 96
          %v4124 = vpop.permute.xlu0 %4123
          %4125 = vrot.lane.b32.xlu0 %v4095, 96
          %v4126 = vpop.permute.xlu0 %4125
          %4127 = vrot.lane.b32.xlu0 %v4096, 96
          %v4128 = vpop.permute.xlu0 %4127
          %4129 = vrot.lane.b32.xlu0 %v4097, 96
          %v4130 = vpop.permute.xlu0 %4129
          %4131 = vrot.lane.b32.xlu0 %v4098, 96
          %v4132 = vpop.permute.xlu0 %4131
          %4133 = vrot.lane.b32.xlu0 %v4099, 96
          %v4134 = vpop.permute.xlu0 %4133
          %4135 = vrot.lane.b32.xlu0 %v4100, 96
          %v4136 = vpop.permute.xlu0 %4135
          %v4137 = vsel %vm676, %v4114, %v4116
          %v4138 = vsel %vm676, %v4116, %v4118
          %v4139 = vsel %vm676, %v4120, %v4122
          %v4140 = vsel %vm676, %v4122, %v4124
          %v4141 = vsel %vm676, %v4126, %v4128
          %v4142 = vsel %vm676, %v4128, %v4130
          %v4143 = vsel %vm676, %v4132, %v4134
          %v4144 = vsel %vm676, %v4134, %v4136
          %v4157 = vadd.f32 %v4021, %v4114
          %v4158 = vadd.f32 %v4022, %v4137
          %v4159 = vadd.f32 %v4023, %v4138
          %v4160 = vadd.f32 %v4024, %v4120
          %v4161 = vadd.f32 %v4025, %v4139
          %v4162 = vadd.f32 %v4026, %v4140
          %v4163 = vadd.f32 %v4027, %v4126
          %v4164 = vadd.f32 %v4028, %v4141
          %v4165 = vadd.f32 %v4029, %v4142
          %v4166 = vadd.f32 %v4030, %v4132
          %v4167 = vadd.f32 %v4031, %v4143
          %v4168 = vadd.f32 %v4032, %v4144
          %4169 = vset.pattern.permute.xlu0 5
          %4170 = vperm.xlu0 %4169, %v1853
          %v4171 = vpop.permute.xlu0 %4170
          %4173 = vset.pattern.permute.xlu0 5
          %4174 = vperm.xlu0 %4173, %v1854
          %v4175 = vpop.permute.xlu0 %4174
          %4177 = vset.pattern.permute.xlu0 5
          %4178 = vperm.xlu0 %4177, %v1855
          %v4179 = vpop.permute.xlu0 %4178
          %4181 = vset.pattern.permute.xlu0 5
          %4182 = vperm.xlu0 %4181, %v1856
          %v4183 = vpop.permute.xlu0 %4182
          %v4185 = vmul.f32 %v4171, %v2110
          %v4186 = vmul.f32 %v4171, %v2111
          %v4187 = vmul.f32 %v4171, %v2112
          %v4188 = vmul.f32 %v4175, %v2113
          %v4189 = vmul.f32 %v4175, %v2114
          %v4190 = vmul.f32 %v4175, %v2115
          %v4191 = vmul.f32 %v4179, %v2116
          %v4192 = vmul.f32 %v4179, %v2117
          %v4193 = vmul.f32 %v4179, %v2118
          %v4194 = vmul.f32 %v4183, %v2119
          %v4195 = vmul.f32 %v4183, %v2120
          %v4196 = vmul.f32 %v4183, %v2121
          %4209 = vrot.lane.b32.xlu0 %v4185, 112
          %v4210 = vpop.permute.xlu0 %4209
          %4211 = vrot.lane.b32.xlu0 %v4186, 112
          %v4212 = vpop.permute.xlu0 %4211
          %4213 = vrot.lane.b32.xlu0 %v4187, 112
          %v4214 = vpop.permute.xlu0 %4213
          %4215 = vrot.lane.b32.xlu0 %v4188, 112
          %v4216 = vpop.permute.xlu0 %4215
          %4217 = vrot.lane.b32.xlu0 %v4189, 112
          %v4218 = vpop.permute.xlu0 %4217
          %4219 = vrot.lane.b32.xlu0 %v4190, 112
          %v4220 = vpop.permute.xlu0 %4219
          %4221 = vrot.lane.b32.xlu0 %v4191, 112
          %v4222 = vpop.permute.xlu0 %4221
          %4223 = vrot.lane.b32.xlu0 %v4192, 112
          %v4224 = vpop.permute.xlu0 %4223
          %4225 = vrot.lane.b32.xlu0 %v4193, 112
          %v4226 = vpop.permute.xlu0 %4225
          %4227 = vrot.lane.b32.xlu0 %v4194, 112
          %v4228 = vpop.permute.xlu0 %4227
          %4229 = vrot.lane.b32.xlu0 %v4195, 112
          %v4230 = vpop.permute.xlu0 %4229
          %4231 = vrot.lane.b32.xlu0 %v4196, 112
          %v4232 = vpop.permute.xlu0 %4231
          %v4233 = vsel %vm655, %v4210, %v4212
          %v4234 = vsel %vm655, %v4212, %v4214
          %v4235 = vsel %vm655, %v4216, %v4218
          %v4236 = vsel %vm655, %v4218, %v4220
          %v4237 = vsel %vm655, %v4222, %v4224
          %v4238 = vsel %vm655, %v4224, %v4226
          %v4239 = vsel %vm655, %v4228, %v4230
          %v4240 = vsel %vm655, %v4230, %v4232
          %v4253 = vadd.f32 %v4061, %v4210
          %v4254 = vadd.f32 %v4062, %v4233
          %v4255 = vadd.f32 %v4063, %v4234
          %v4256 = vadd.f32 %v4064, %v4216
          %v4257 = vadd.f32 %v4065, %v4235
          %v4258 = vadd.f32 %v4066, %v4236
          %v4259 = vadd.f32 %v4067, %v4222
          %v4260 = vadd.f32 %v4068, %v4237
          %v4261 = vadd.f32 %v4069, %v4238
          %v4262 = vadd.f32 %v4070, %v4228
          %v4263 = vadd.f32 %v4071, %v4239
          %v4264 = vadd.f32 %v4072, %v4240
          %4265 = vset.pattern.permute.xlu0 18
          %4266 = vperm.xlu0 %4265, %v1858
          %v4267 = vpop.permute.xlu0 %4266
          %4269 = vset.pattern.permute.xlu0 18
          %4270 = vperm.xlu0 %4269, %v1859
          %v4271 = vpop.permute.xlu0 %4270
          %4273 = vset.pattern.permute.xlu0 18
          %4274 = vperm.xlu0 %4273, %v1860
          %v4275 = vpop.permute.xlu0 %4274
          %4277 = vset.pattern.permute.xlu0 18
          %4278 = vperm.xlu0 %4277, %v1861
          %v4279 = vpop.permute.xlu0 %4278
          %v4281 = vmul.f32 %v4267, %v2110
          %v4282 = vmul.f32 %v4267, %v2111
          %v4283 = vmul.f32 %v4267, %v2112
          %v4284 = vmul.f32 %v4271, %v2113
          %v4285 = vmul.f32 %v4271, %v2114
          %v4286 = vmul.f32 %v4271, %v2115
          %v4287 = vmul.f32 %v4275, %v2116
          %v4288 = vmul.f32 %v4275, %v2117
          %v4289 = vmul.f32 %v4275, %v2118
          %v4290 = vmul.f32 %v4279, %v2119
          %v4291 = vmul.f32 %v4279, %v2120
          %v4292 = vmul.f32 %v4279, %v2121
          %4305 = vrot.lane.b32.xlu0 %v4281, 80
          %v4306 = vpop.permute.xlu0 %4305
          %4307 = vrot.lane.b32.xlu0 %v4282, 80
          %v4308 = vpop.permute.xlu0 %4307
          %4309 = vrot.lane.b32.xlu0 %v4283, 80
          %v4310 = vpop.permute.xlu0 %4309
          %4311 = vrot.lane.b32.xlu0 %v4284, 80
          %v4312 = vpop.permute.xlu0 %4311
          %4313 = vrot.lane.b32.xlu0 %v4285, 80
          %v4314 = vpop.permute.xlu0 %4313
          %4315 = vrot.lane.b32.xlu0 %v4286, 80
          %v4316 = vpop.permute.xlu0 %4315
          %4317 = vrot.lane.b32.xlu0 %v4287, 80
          %v4318 = vpop.permute.xlu0 %4317
          %4319 = vrot.lane.b32.xlu0 %v4288, 80
          %v4320 = vpop.permute.xlu0 %4319
          %4321 = vrot.lane.b32.xlu0 %v4289, 80
          %v4322 = vpop.permute.xlu0 %4321
          %4323 = vrot.lane.b32.xlu0 %v4290, 80
          %v4324 = vpop.permute.xlu0 %4323
          %4325 = vrot.lane.b32.xlu0 %v4291, 80
          %v4326 = vpop.permute.xlu0 %4325
          %4327 = vrot.lane.b32.xlu0 %v4292, 80
          %v4328 = vpop.permute.xlu0 %4327
          %v4329 = vsel %vm697, %v4306, %v4308
          %v4330 = vsel %vm697, %v4308, %v4310
          %v4331 = vsel %vm697, %v4312, %v4314
          %v4332 = vsel %vm697, %v4314, %v4316
          %v4333 = vsel %vm697, %v4318, %v4320
          %v4334 = vsel %vm697, %v4320, %v4322
          %v4335 = vsel %vm697, %v4324, %v4326
          %v4336 = vsel %vm697, %v4326, %v4328
          %v4349 = vadd.f32 %v4157, %v4306
          %v4350 = vadd.f32 %v4158, %v4329
          %v4351 = vadd.f32 %v4159, %v4330
          %v4352 = vadd.f32 %v4160, %v4312
          %v4353 = vadd.f32 %v4161, %v4331
          %v4354 = vadd.f32 %v4162, %v4332
          %v4355 = vadd.f32 %v4163, %v4318
          %v4356 = vadd.f32 %v4164, %v4333
          %v4357 = vadd.f32 %v4165, %v4334
          %v4358 = vadd.f32 %v4166, %v4324
          %v4359 = vadd.f32 %v4167, %v4335
          %v4360 = vadd.f32 %v4168, %v4336
          %4361 = vset.pattern.permute.xlu0 8
          %4362 = vperm.xlu0 %4361, %v1853
          %v4363 = vpop.permute.xlu0 %4362
          %4365 = vset.pattern.permute.xlu0 8
          %4366 = vperm.xlu0 %4365, %v1854
          %v4367 = vpop.permute.xlu0 %4366
          %4369 = vset.pattern.permute.xlu0 8
          %4370 = vperm.xlu0 %4369, %v1855
          %v4371 = vpop.permute.xlu0 %4370
          %4373 = vset.pattern.permute.xlu0 8
          %4374 = vperm.xlu0 %4373, %v1856
          %v4375 = vpop.permute.xlu0 %4374
          %v4377 = vmul.f32 %v4363, %v2110
          %v4378 = vmul.f32 %v4363, %v2111
          %v4379 = vmul.f32 %v4363, %v2112
          %v4380 = vmul.f32 %v4367, %v2113
          %v4381 = vmul.f32 %v4367, %v2114
          %v4382 = vmul.f32 %v4367, %v2115
          %v4383 = vmul.f32 %v4371, %v2116
          %v4384 = vmul.f32 %v4371, %v2117
          %v4385 = vmul.f32 %v4371, %v2118
          %v4386 = vmul.f32 %v4375, %v2119
          %v4387 = vmul.f32 %v4375, %v2120
          %v4388 = vmul.f32 %v4375, %v2121
          %4401 = vrot.lane.b32.xlu0 %v4377, 96
          %v4402 = vpop.permute.xlu0 %4401
          %4403 = vrot.lane.b32.xlu0 %v4378, 96
          %v4404 = vpop.permute.xlu0 %4403
          %4405 = vrot.lane.b32.xlu0 %v4379, 96
          %v4406 = vpop.permute.xlu0 %4405
          %4407 = vrot.lane.b32.xlu0 %v4380, 96
          %v4408 = vpop.permute.xlu0 %4407
          %4409 = vrot.lane.b32.xlu0 %v4381, 96
          %v4410 = vpop.permute.xlu0 %4409
          %4411 = vrot.lane.b32.xlu0 %v4382, 96
          %v4412 = vpop.permute.xlu0 %4411
          %4413 = vrot.lane.b32.xlu0 %v4383, 96
          %v4414 = vpop.permute.xlu0 %4413
          %4415 = vrot.lane.b32.xlu0 %v4384, 96
          %v4416 = vpop.permute.xlu0 %4415
          %4417 = vrot.lane.b32.xlu0 %v4385, 96
          %v4418 = vpop.permute.xlu0 %4417
          %4419 = vrot.lane.b32.xlu0 %v4386, 96
          %v4420 = vpop.permute.xlu0 %4419
          %4421 = vrot.lane.b32.xlu0 %v4387, 96
          %v4422 = vpop.permute.xlu0 %4421
          %4423 = vrot.lane.b32.xlu0 %v4388, 96
          %v4424 = vpop.permute.xlu0 %4423
          %v4425 = vsel %vm676, %v4402, %v4404
          %v4426 = vsel %vm676, %v4404, %v4406
          %v4427 = vsel %vm676, %v4408, %v4410
          %v4428 = vsel %vm676, %v4410, %v4412
          %v4429 = vsel %vm676, %v4414, %v4416
          %v4430 = vsel %vm676, %v4416, %v4418
          %v4431 = vsel %vm676, %v4420, %v4422
          %v4432 = vsel %vm676, %v4422, %v4424
          %v4445 = vadd.f32 %v4253, %v4402
          %v4446 = vadd.f32 %v4254, %v4425
          %v4447 = vadd.f32 %v4255, %v4426
          %v4448 = vadd.f32 %v4256, %v4408
          %v4449 = vadd.f32 %v4257, %v4427
          %v4450 = vadd.f32 %v4258, %v4428
          %v4451 = vadd.f32 %v4259, %v4414
          %v4452 = vadd.f32 %v4260, %v4429
          %v4453 = vadd.f32 %v4261, %v4430
          %v4454 = vadd.f32 %v4262, %v4420
          %v4455 = vadd.f32 %v4263, %v4431
          %v4456 = vadd.f32 %v4264, %v4432
          %4457 = vset.pattern.permute.xlu0 23
          %4458 = vperm.xlu0 %4457, %v1858
          %v4459 = vpop.permute.xlu0 %4458
          %4461 = vset.pattern.permute.xlu0 23
          %4462 = vperm.xlu0 %4461, %v1859
          %v4463 = vpop.permute.xlu0 %4462
          %4465 = vset.pattern.permute.xlu0 23
          %4466 = vperm.xlu0 %4465, %v1860
          %v4467 = vpop.permute.xlu0 %4466
          %4469 = vset.pattern.permute.xlu0 23
          %4470 = vperm.xlu0 %4469, %v1861
          %v4471 = vpop.permute.xlu0 %4470
          %v4473 = vmul.f32 %v4459, %v2110
          %v4474 = vmul.f32 %v4459, %v2111
          %v4475 = vmul.f32 %v4459, %v2112
          %v4476 = vmul.f32 %v4463, %v2113
          %v4477 = vmul.f32 %v4463, %v2114
          %v4478 = vmul.f32 %v4463, %v2115
          %v4479 = vmul.f32 %v4467, %v2116
          %v4480 = vmul.f32 %v4467, %v2117
          %v4481 = vmul.f32 %v4467, %v2118
          %v4482 = vmul.f32 %v4471, %v2119
          %v4483 = vmul.f32 %v4471, %v2120
          %v4484 = vmul.f32 %v4471, %v2121
          %4497 = vrot.lane.b32.xlu0 %v4473, 64
          %v4498 = vpop.permute.xlu0 %4497
          %4499 = vrot.lane.b32.xlu0 %v4474, 64
          %v4500 = vpop.permute.xlu0 %4499
          %4501 = vrot.lane.b32.xlu0 %v4475, 64
          %v4502 = vpop.permute.xlu0 %4501
          %4503 = vrot.lane.b32.xlu0 %v4476, 64
          %v4504 = vpop.permute.xlu0 %4503
          %4505 = vrot.lane.b32.xlu0 %v4477, 64
          %v4506 = vpop.permute.xlu0 %4505
          %4507 = vrot.lane.b32.xlu0 %v4478, 64
          %v4508 = vpop.permute.xlu0 %4507
          %4509 = vrot.lane.b32.xlu0 %v4479, 64
          %v4510 = vpop.permute.xlu0 %4509
          %4511 = vrot.lane.b32.xlu0 %v4480, 64
          %v4512 = vpop.permute.xlu0 %4511
          %4513 = vrot.lane.b32.xlu0 %v4481, 64
          %v4514 = vpop.permute.xlu0 %4513
          %4515 = vrot.lane.b32.xlu0 %v4482, 64
          %v4516 = vpop.permute.xlu0 %4515
          %4517 = vrot.lane.b32.xlu0 %v4483, 64
          %v4518 = vpop.permute.xlu0 %4517
          %4519 = vrot.lane.b32.xlu0 %v4484, 64
          %v4520 = vpop.permute.xlu0 %4519
          %v4521 = vsel %vm719, %v4498, %v4500
          %v4522 = vsel %vm719, %v4500, %v4502
          %v4523 = vsel %vm719, %v4504, %v4506
          %v4524 = vsel %vm719, %v4506, %v4508
          %v4525 = vsel %vm719, %v4510, %v4512
          %v4526 = vsel %vm719, %v4512, %v4514
          %v4527 = vsel %vm719, %v4516, %v4518
          %v4528 = vsel %vm719, %v4518, %v4520
          %v4541 = vadd.f32 %v4349, %v4498
          %v4542 = vadd.f32 %v4350, %v4521
          %v4543 = vadd.f32 %v4351, %v4522
          %v4544 = vadd.f32 %v4352, %v4504
          %v4545 = vadd.f32 %v4353, %v4523
          %v4546 = vadd.f32 %v4354, %v4524
          %v4547 = vadd.f32 %v4355, %v4510
          %v4548 = vadd.f32 %v4356, %v4525
          %v4549 = vadd.f32 %v4357, %v4526
          %v4550 = vadd.f32 %v4358, %v4516
          %v4551 = vadd.f32 %v4359, %v4527
          %v4552 = vadd.f32 %v4360, %v4528
          %v4553 = vlaneseq
          %v4554 = vshrl.u32 %v4553, 7
          %v4555 = vsub.s32 0, %v4554
          %v4556 = vrot.slane %v465, %v4555
          %v4557 = vlaneseq
          %v4558 = vshrl.u32 %v4557, 7
          %v4559 = vsub.s32 1, %v4558
          %v4560 = vrot.slane %v465, %v4559
          %4561 = vrot.lane.b32.xlu0 %v4556, 97
          %v4562 = vpop.permute.xlu0 %4561
          %4563 = vrot.lane.b32.xlu0 %v4560, 97
          %v4564 = vpop.permute.xlu0 %4563
          %vm4565 = vcmask 793600
          %v4566 = vsel %vm4565, %v4562, %v4564
          %v4570 = vmul.f32 %v4541, %v4562
          %v4571 = vmul.f32 %v4542, %v4566
          %v4572 = vmul.f32 %v4543, %v4564
          %v4573 = vmul.f32 %v4544, %v4562
          %v4574 = vmul.f32 %v4545, %v4566
          %v4575 = vmul.f32 %v4546, %v4564
          %v4576 = vmul.f32 %v4547, %v4562
          %v4577 = vmul.f32 %v4548, %v4566
          %v4578 = vmul.f32 %v4549, %v4564
          %v4579 = vmul.f32 %v4550, %v4562
          %v4580 = vmul.f32 %v4551, %v4566
          %v4581 = vmul.f32 %v4552, %v4564
          %4582 = vrot.lane.b32.xlu0 %v4556, 113
          %v4583 = vpop.permute.xlu0 %4582
          %4584 = vrot.lane.b32.xlu0 %v4560, 113
          %v4585 = vpop.permute.xlu0 %4584
          %vm4586 = vcmask 924672
          %v4587 = vsel %vm4586, %v4583, %v4585
          %v4591 = vmul.f32 %v4445, %v4583
          %v4592 = vmul.f32 %v4446, %v4587
          %v4593 = vmul.f32 %v4447, %v4585
          %v4594 = vmul.f32 %v4448, %v4583
          %v4595 = vmul.f32 %v4449, %v4587
          %v4596 = vmul.f32 %v4450, %v4585
          %v4597 = vmul.f32 %v4451, %v4583
          %v4598 = vmul.f32 %v4452, %v4587
          %v4599 = vmul.f32 %v4453, %v4585
          %v4600 = vmul.f32 %v4454, %v4583
          %v4601 = vmul.f32 %v4455, %v4587
          %v4602 = vmul.f32 %v4456, %v4585
          %4615 = vrot.lane.b32.xlu0 %v4570, 125
          %v4616 = vpop.permute.xlu0 %4615
          %4617 = vrot.lane.b32.xlu0 %v4571, 125
          %v4618 = vpop.permute.xlu0 %4617
          %4619 = vrot.lane.b32.xlu0 %v4572, 125
          %v4620 = vpop.permute.xlu0 %4619
          %4621 = vrot.lane.b32.xlu0 %v4573, 125
          %v4622 = vpop.permute.xlu0 %4621
          %4623 = vrot.lane.b32.xlu0 %v4574, 125
          %v4624 = vpop.permute.xlu0 %4623
          %4625 = vrot.lane.b32.xlu0 %v4575, 125
          %v4626 = vpop.permute.xlu0 %4625
          %4627 = vrot.lane.b32.xlu0 %v4576, 125
          %v4628 = vpop.permute.xlu0 %4627
          %4629 = vrot.lane.b32.xlu0 %v4577, 125
          %v4630 = vpop.permute.xlu0 %4629
          %4631 = vrot.lane.b32.xlu0 %v4578, 125
          %v4632 = vpop.permute.xlu0 %4631
          %4633 = vrot.lane.b32.xlu0 %v4579, 125
          %v4634 = vpop.permute.xlu0 %4633
          %4635 = vrot.lane.b32.xlu0 %v4580, 125
          %v4636 = vpop.permute.xlu0 %4635
          %4637 = vrot.lane.b32.xlu0 %v4581, 125
          %v4638 = vpop.permute.xlu0 %4637
          %v4639 = vsel %vm1207, %v4616, %v4618
          %v4640 = vsel %vm1207, %v4618, %v4620
          %v4641 = vsel %vm1207, %v4622, %v4624
          %v4642 = vsel %vm1207, %v4624, %v4626
          %v4643 = vsel %vm1207, %v4628, %v4630
          %v4644 = vsel %vm1207, %v4630, %v4632
          %v4645 = vsel %vm1207, %v4634, %v4636
          %v4646 = vsel %vm1207, %v4636, %v4638
          %v4659 = vadd.f32 %v3817, %v4639
          %v4660 = vadd.f32 %v3818, %v4640
          %v4661 = vadd.f32 %v3819, %v4620
          %v4662 = vadd.f32 %v3820, %v4641
          %v4663 = vadd.f32 %v3821, %v4642
          %v4664 = vadd.f32 %v3822, %v4626
          %v4665 = vadd.f32 %v3823, %v4643
          %v4666 = vadd.f32 %v3824, %v4644
          %v4667 = vadd.f32 %v3825, %v4632
          %v4668 = vadd.f32 %v3826, %v4645
          %v4669 = vadd.f32 %v3827, %v4646
          %v4670 = vadd.f32 %v3828, %v4638
          %4683 = vrot.lane.b32.xlu0 %v4591, 126
          %v4684 = vpop.permute.xlu0 %4683
          %4685 = vrot.lane.b32.xlu0 %v4592, 126
          %v4686 = vpop.permute.xlu0 %4685
          %4687 = vrot.lane.b32.xlu0 %v4593, 126
          %v4688 = vpop.permute.xlu0 %4687
          %4689 = vrot.lane.b32.xlu0 %v4594, 126
          %v4690 = vpop.permute.xlu0 %4689
          %4691 = vrot.lane.b32.xlu0 %v4595, 126
          %v4692 = vpop.permute.xlu0 %4691
          %4693 = vrot.lane.b32.xlu0 %v4596, 126
          %v4694 = vpop.permute.xlu0 %4693
          %4695 = vrot.lane.b32.xlu0 %v4597, 126
          %v4696 = vpop.permute.xlu0 %4695
          %4697 = vrot.lane.b32.xlu0 %v4598, 126
          %v4698 = vpop.permute.xlu0 %4697
          %4699 = vrot.lane.b32.xlu0 %v4599, 126
          %v4700 = vpop.permute.xlu0 %4699
          %4701 = vrot.lane.b32.xlu0 %v4600, 126
          %v4702 = vpop.permute.xlu0 %4701
          %4703 = vrot.lane.b32.xlu0 %v4601, 126
          %v4704 = vpop.permute.xlu0 %4703
          %4705 = vrot.lane.b32.xlu0 %v4602, 126
          %v4706 = vpop.permute.xlu0 %4705
          %v4707 = vsel %vm1069, %v4684, %v4686
          %v4708 = vsel %vm1069, %v4686, %v4688
          %v4709 = vsel %vm1069, %v4690, %v4692
          %v4710 = vsel %vm1069, %v4692, %v4694
          %v4711 = vsel %vm1069, %v4696, %v4698
          %v4712 = vsel %vm1069, %v4698, %v4700
          %v4713 = vsel %vm1069, %v4702, %v4704
          %v4714 = vsel %vm1069, %v4704, %v4706
          %v4727 = vadd.f32 %v3885, %v4707
          %v4728 = vadd.f32 %v3886, %v4708
          %v4729 = vadd.f32 %v3887, %v4688
          %v4730 = vadd.f32 %v3888, %v4709
          %v4731 = vadd.f32 %v3889, %v4710
          %v4732 = vadd.f32 %v3890, %v4694
          %v4733 = vadd.f32 %v3891, %v4711
          %v4734 = vadd.f32 %v3892, %v4712
          %v4735 = vadd.f32 %v3893, %v4700
          %v4736 = vadd.f32 %v3894, %v4713
          %v4737 = vadd.f32 %v3895, %v4714
          %v4738 = vadd.f32 %v3896, %v4706
          %4739 = vset.pattern.permute.xlu0 4
          %4740 = vperm.xlu0 %4739, %v1858
          %v4741 = vpop.permute.xlu0 %4740
          %4743 = vset.pattern.permute.xlu0 4
          %4744 = vperm.xlu0 %4743, %v1859
          %v4745 = vpop.permute.xlu0 %4744
          %4747 = vset.pattern.permute.xlu0 4
          %4748 = vperm.xlu0 %4747, %v1860
          %v4749 = vpop.permute.xlu0 %4748
          %4751 = vset.pattern.permute.xlu0 4
          %4752 = vperm.xlu0 %4751, %v1861
          %v4753 = vpop.permute.xlu0 %4752
          %v4755 = vmul.f32 %v4741, %v1862
          %v4756 = vmul.f32 %v4741, %v1863
          %v4757 = vmul.f32 %v4741, %v1864
          %v4758 = vmul.f32 %v4745, %v1865
          %v4759 = vmul.f32 %v4745, %v1866
          %v4760 = vmul.f32 %v4745, %v1867
          %v4761 = vmul.f32 %v4749, %v1868
          %v4762 = vmul.f32 %v4749, %v1869
          %v4763 = vmul.f32 %v4749, %v1870
          %v4764 = vmul.f32 %v4753, %v1871
          %v4765 = vmul.f32 %v4753, %v1872
          %v4766 = vmul.f32 %v4753, %v1873
          %v4767 = vadd.f32 %v4755, 0.0
          %v4768 = vadd.f32 %v4756, 0.0
          %v4769 = vadd.f32 %v4757, 0.0
          %v4770 = vadd.f32 %v4758, 0.0
          %v4771 = vadd.f32 %v4759, 0.0
          %v4772 = vadd.f32 %v4760, 0.0
          %v4773 = vadd.f32 %v4761, 0.0
          %v4774 = vadd.f32 %v4762, 0.0
          %v4775 = vadd.f32 %v4763, 0.0
          %v4776 = vadd.f32 %v4764, 0.0
          %v4777 = vadd.f32 %v4765, 0.0
          %v4778 = vadd.f32 %v4766, 0.0
          %4779 = vset.pattern.permute.xlu0 9
          %4780 = vperm.xlu0 %4779, %v1858
          %v4781 = vpop.permute.xlu0 %4780
          %4783 = vset.pattern.permute.xlu0 9
          %4784 = vperm.xlu0 %4783, %v1859
          %v4785 = vpop.permute.xlu0 %4784
          %4787 = vset.pattern.permute.xlu0 9
          %4788 = vperm.xlu0 %4787, %v1860
          %v4789 = vpop.permute.xlu0 %4788
          %4791 = vset.pattern.permute.xlu0 9
          %4792 = vperm.xlu0 %4791, %v1861
          %v4793 = vpop.permute.xlu0 %4792
          %v4795 = vmul.f32 %v4781, %v1862
          %v4796 = vmul.f32 %v4781, %v1863
          %v4797 = vmul.f32 %v4781, %v1864
          %v4798 = vmul.f32 %v4785, %v1865
          %v4799 = vmul.f32 %v4785, %v1866
          %v4800 = vmul.f32 %v4785, %v1867
          %v4801 = vmul.f32 %v4789, %v1868
          %v4802 = vmul.f32 %v4789, %v1869
          %v4803 = vmul.f32 %v4789, %v1870
          %v4804 = vmul.f32 %v4793, %v1871
          %v4805 = vmul.f32 %v4793, %v1872
          %v4806 = vmul.f32 %v4793, %v1873
          %4819 = vrot.lane.b32.xlu0 %v4795, 112
          %v4820 = vpop.permute.xlu0 %4819
          %4821 = vrot.lane.b32.xlu0 %v4796, 112
          %v4822 = vpop.permute.xlu0 %4821
          %4823 = vrot.lane.b32.xlu0 %v4797, 112
          %v4824 = vpop.permute.xlu0 %4823
          %4825 = vrot.lane.b32.xlu0 %v4798, 112
          %v4826 = vpop.permute.xlu0 %4825
          %4827 = vrot.lane.b32.xlu0 %v4799, 112
          %v4828 = vpop.permute.xlu0 %4827
          %4829 = vrot.lane.b32.xlu0 %v4800, 112
          %v4830 = vpop.permute.xlu0 %4829
          %4831 = vrot.lane.b32.xlu0 %v4801, 112
          %v4832 = vpop.permute.xlu0 %4831
          %4833 = vrot.lane.b32.xlu0 %v4802, 112
          %v4834 = vpop.permute.xlu0 %4833
          %4835 = vrot.lane.b32.xlu0 %v4803, 112
          %v4836 = vpop.permute.xlu0 %4835
          %4837 = vrot.lane.b32.xlu0 %v4804, 112
          %v4838 = vpop.permute.xlu0 %4837
          %4839 = vrot.lane.b32.xlu0 %v4805, 112
          %v4840 = vpop.permute.xlu0 %4839
          %4841 = vrot.lane.b32.xlu0 %v4806, 112
          %v4842 = vpop.permute.xlu0 %4841
          %v4843 = vsel %vm655, %v4820, %v4822
          %v4844 = vsel %vm655, %v4822, %v4824
          %v4845 = vsel %vm655, %v4826, %v4828
          %v4846 = vsel %vm655, %v4828, %v4830
          %v4847 = vsel %vm655, %v4832, %v4834
          %v4848 = vsel %vm655, %v4834, %v4836
          %v4849 = vsel %vm655, %v4838, %v4840
          %v4850 = vsel %vm655, %v4840, %v4842
          %v4863 = vadd.f32 %v4767, %v4843
          %v4864 = vadd.f32 %v4768, %v4844
          %v4865 = vadd.f32 %v4769, %v4824
          %v4866 = vadd.f32 %v4770, %v4845
          %v4867 = vadd.f32 %v4771, %v4846
          %v4868 = vadd.f32 %v4772, %v4830
          %v4869 = vadd.f32 %v4773, %v4847
          %v4870 = vadd.f32 %v4774, %v4848
          %v4871 = vadd.f32 %v4775, %v4836
          %v4872 = vadd.f32 %v4776, %v4849
          %v4873 = vadd.f32 %v4777, %v4850
          %v4874 = vadd.f32 %v4778, %v4842
          %4875 = vset.pattern.permute.xlu0 14
          %4876 = vperm.xlu0 %4875, %v1858
          %v4877 = vpop.permute.xlu0 %4876
          %4879 = vset.pattern.permute.xlu0 14
          %4880 = vperm.xlu0 %4879, %v1859
          %v4881 = vpop.permute.xlu0 %4880
          %4883 = vset.pattern.permute.xlu0 14
          %4884 = vperm.xlu0 %4883, %v1860
          %v4885 = vpop.permute.xlu0 %4884
          %4887 = vset.pattern.permute.xlu0 14
          %4888 = vperm.xlu0 %4887, %v1861
          %v4889 = vpop.permute.xlu0 %4888
          %v4891 = vmul.f32 %v4877, %v2110
          %v4892 = vmul.f32 %v4877, %v2111
          %v4893 = vmul.f32 %v4877, %v2112
          %v4894 = vmul.f32 %v4881, %v2113
          %v4895 = vmul.f32 %v4881, %v2114
          %v4896 = vmul.f32 %v4881, %v2115
          %v4897 = vmul.f32 %v4885, %v2116
          %v4898 = vmul.f32 %v4885, %v2117
          %v4899 = vmul.f32 %v4885, %v2118
          %v4900 = vmul.f32 %v4889, %v2119
          %v4901 = vmul.f32 %v4889, %v2120
          %v4902 = vmul.f32 %v4889, %v2121
          %4915 = vrot.lane.b32.xlu0 %v4891, 96
          %v4916 = vpop.permute.xlu0 %4915
          %4917 = vrot.lane.b32.xlu0 %v4892, 96
          %v4918 = vpop.permute.xlu0 %4917
          %4919 = vrot.lane.b32.xlu0 %v4893, 96
          %v4920 = vpop.permute.xlu0 %4919
          %4921 = vrot.lane.b32.xlu0 %v4894, 96
          %v4922 = vpop.permute.xlu0 %4921
          %4923 = vrot.lane.b32.xlu0 %v4895, 96
          %v4924 = vpop.permute.xlu0 %4923
          %4925 = vrot.lane.b32.xlu0 %v4896, 96
          %v4926 = vpop.permute.xlu0 %4925
          %4927 = vrot.lane.b32.xlu0 %v4897, 96
          %v4928 = vpop.permute.xlu0 %4927
          %4929 = vrot.lane.b32.xlu0 %v4898, 96
          %v4930 = vpop.permute.xlu0 %4929
          %4931 = vrot.lane.b32.xlu0 %v4899, 96
          %v4932 = vpop.permute.xlu0 %4931
          %4933 = vrot.lane.b32.xlu0 %v4900, 96
          %v4934 = vpop.permute.xlu0 %4933
          %4935 = vrot.lane.b32.xlu0 %v4901, 96
          %v4936 = vpop.permute.xlu0 %4935
          %4937 = vrot.lane.b32.xlu0 %v4902, 96
          %v4938 = vpop.permute.xlu0 %4937
          %v4939 = vsel %vm676, %v4916, %v4918
          %v4940 = vsel %vm676, %v4918, %v4920
          %v4941 = vsel %vm676, %v4922, %v4924
          %v4942 = vsel %vm676, %v4924, %v4926
          %v4943 = vsel %vm676, %v4928, %v4930
          %v4944 = vsel %vm676, %v4930, %v4932
          %v4945 = vsel %vm676, %v4934, %v4936
          %v4946 = vsel %vm676, %v4936, %v4938
          %v4959 = vadd.f32 %v4863, %v4916
          %v4960 = vadd.f32 %v4864, %v4939
          %v4961 = vadd.f32 %v4865, %v4940
          %v4962 = vadd.f32 %v4866, %v4922
          %v4963 = vadd.f32 %v4867, %v4941
          %v4964 = vadd.f32 %v4868, %v4942
          %v4965 = vadd.f32 %v4869, %v4928
          %v4966 = vadd.f32 %v4870, %v4943
          %v4967 = vadd.f32 %v4871, %v4944
          %v4968 = vadd.f32 %v4872, %v4934
          %v4969 = vadd.f32 %v4873, %v4945
          %v4970 = vadd.f32 %v4874, %v4946
          %4971 = vset.pattern.permute.xlu0 19
          %4972 = vperm.xlu0 %4971, %v1858
          %v4973 = vpop.permute.xlu0 %4972
          %4975 = vset.pattern.permute.xlu0 19
          %4976 = vperm.xlu0 %4975, %v1859
          %v4977 = vpop.permute.xlu0 %4976
          %4979 = vset.pattern.permute.xlu0 19
          %4980 = vperm.xlu0 %4979, %v1860
          %v4981 = vpop.permute.xlu0 %4980
          %4983 = vset.pattern.permute.xlu0 19
          %4984 = vperm.xlu0 %4983, %v1861
          %v4985 = vpop.permute.xlu0 %4984
          %v4987 = vmul.f32 %v4973, %v2110
          %v4988 = vmul.f32 %v4973, %v2111
          %v4989 = vmul.f32 %v4973, %v2112
          %v4990 = vmul.f32 %v4977, %v2113
          %v4991 = vmul.f32 %v4977, %v2114
          %v4992 = vmul.f32 %v4977, %v2115
          %v4993 = vmul.f32 %v4981, %v2116
          %v4994 = vmul.f32 %v4981, %v2117
          %v4995 = vmul.f32 %v4981, %v2118
          %v4996 = vmul.f32 %v4985, %v2119
          %v4997 = vmul.f32 %v4985, %v2120
          %v4998 = vmul.f32 %v4985, %v2121
          %5011 = vrot.lane.b32.xlu0 %v4987, 80
          %v5012 = vpop.permute.xlu0 %5011
          %5013 = vrot.lane.b32.xlu0 %v4988, 80
          %v5014 = vpop.permute.xlu0 %5013
          %5015 = vrot.lane.b32.xlu0 %v4989, 80
          %v5016 = vpop.permute.xlu0 %5015
          %5017 = vrot.lane.b32.xlu0 %v4990, 80
          %v5018 = vpop.permute.xlu0 %5017
          %5019 = vrot.lane.b32.xlu0 %v4991, 80
          %v5020 = vpop.permute.xlu0 %5019
          %5021 = vrot.lane.b32.xlu0 %v4992, 80
          %v5022 = vpop.permute.xlu0 %5021
          %5023 = vrot.lane.b32.xlu0 %v4993, 80
          %v5024 = vpop.permute.xlu0 %5023
          %5025 = vrot.lane.b32.xlu0 %v4994, 80
          %v5026 = vpop.permute.xlu0 %5025
          %5027 = vrot.lane.b32.xlu0 %v4995, 80
          %v5028 = vpop.permute.xlu0 %5027
          %5029 = vrot.lane.b32.xlu0 %v4996, 80
          %v5030 = vpop.permute.xlu0 %5029
          %5031 = vrot.lane.b32.xlu0 %v4997, 80
          %v5032 = vpop.permute.xlu0 %5031
          %5033 = vrot.lane.b32.xlu0 %v4998, 80
          %v5034 = vpop.permute.xlu0 %5033
          %v5035 = vsel %vm697, %v5012, %v5014
          %v5036 = vsel %vm697, %v5014, %v5016
          %v5037 = vsel %vm697, %v5018, %v5020
          %v5038 = vsel %vm697, %v5020, %v5022
          %v5039 = vsel %vm697, %v5024, %v5026
          %v5040 = vsel %vm697, %v5026, %v5028
          %v5041 = vsel %vm697, %v5030, %v5032
          %v5042 = vsel %vm697, %v5032, %v5034
          %v5055 = vadd.f32 %v4959, %v5012
          %v5056 = vadd.f32 %v4960, %v5035
          %v5057 = vadd.f32 %v4961, %v5036
          %v5058 = vadd.f32 %v4962, %v5018
          %v5059 = vadd.f32 %v4963, %v5037
          %v5060 = vadd.f32 %v4964, %v5038
          %v5061 = vadd.f32 %v4965, %v5024
          %v5062 = vadd.f32 %v4966, %v5039
          %v5063 = vadd.f32 %v4967, %v5040
          %v5064 = vadd.f32 %v4968, %v5030
          %v5065 = vadd.f32 %v4969, %v5041
          %v5066 = vadd.f32 %v4970, %v5042
          %5067 = vset.pattern.permute.xlu0 24
          %5068 = vperm.xlu0 %5067, %v1858
          %v5069 = vpop.permute.xlu0 %5068
          %5071 = vset.pattern.permute.xlu0 24
          %5072 = vperm.xlu0 %5071, %v1859
          %v5073 = vpop.permute.xlu0 %5072
          %5075 = vset.pattern.permute.xlu0 24
          %5076 = vperm.xlu0 %5075, %v1860
          %v5077 = vpop.permute.xlu0 %5076
          %5079 = vset.pattern.permute.xlu0 24
          %5080 = vperm.xlu0 %5079, %v1861
          %v5081 = vpop.permute.xlu0 %5080
          %v5083 = vmul.f32 %v5069, %v2110
          %v5084 = vmul.f32 %v5069, %v2111
          %v5085 = vmul.f32 %v5069, %v2112
          %v5086 = vmul.f32 %v5073, %v2113
          %v5087 = vmul.f32 %v5073, %v2114
          %v5088 = vmul.f32 %v5073, %v2115
          %v5089 = vmul.f32 %v5077, %v2116
          %v5090 = vmul.f32 %v5077, %v2117
          %v5091 = vmul.f32 %v5077, %v2118
          %v5092 = vmul.f32 %v5081, %v2119
          %v5093 = vmul.f32 %v5081, %v2120
          %v5094 = vmul.f32 %v5081, %v2121
          %5107 = vrot.lane.b32.xlu0 %v5083, 64
          %v5108 = vpop.permute.xlu0 %5107
          %5109 = vrot.lane.b32.xlu0 %v5084, 64
          %v5110 = vpop.permute.xlu0 %5109
          %5111 = vrot.lane.b32.xlu0 %v5085, 64
          %v5112 = vpop.permute.xlu0 %5111
          %5113 = vrot.lane.b32.xlu0 %v5086, 64
          %v5114 = vpop.permute.xlu0 %5113
          %5115 = vrot.lane.b32.xlu0 %v5087, 64
          %v5116 = vpop.permute.xlu0 %5115
          %5117 = vrot.lane.b32.xlu0 %v5088, 64
          %v5118 = vpop.permute.xlu0 %5117
          %5119 = vrot.lane.b32.xlu0 %v5089, 64
          %v5120 = vpop.permute.xlu0 %5119
          %5121 = vrot.lane.b32.xlu0 %v5090, 64
          %v5122 = vpop.permute.xlu0 %5121
          %5123 = vrot.lane.b32.xlu0 %v5091, 64
          %v5124 = vpop.permute.xlu0 %5123
          %5125 = vrot.lane.b32.xlu0 %v5092, 64
          %v5126 = vpop.permute.xlu0 %5125
          %5127 = vrot.lane.b32.xlu0 %v5093, 64
          %v5128 = vpop.permute.xlu0 %5127
          %5129 = vrot.lane.b32.xlu0 %v5094, 64
          %v5130 = vpop.permute.xlu0 %5129
          %v5131 = vsel %vm719, %v5108, %v5110
          %v5132 = vsel %vm719, %v5110, %v5112
          %v5133 = vsel %vm719, %v5114, %v5116
          %v5134 = vsel %vm719, %v5116, %v5118
          %v5135 = vsel %vm719, %v5120, %v5122
          %v5136 = vsel %vm719, %v5122, %v5124
          %v5137 = vsel %vm719, %v5126, %v5128
          %v5138 = vsel %vm719, %v5128, %v5130
          %v5151 = vadd.f32 %v5055, %v5108
          %v5152 = vadd.f32 %v5056, %v5131
          %v5153 = vadd.f32 %v5057, %v5132
          %v5154 = vadd.f32 %v5058, %v5114
          %v5155 = vadd.f32 %v5059, %v5133
          %v5156 = vadd.f32 %v5060, %v5134
          %v5157 = vadd.f32 %v5061, %v5120
          %v5158 = vadd.f32 %v5062, %v5135
          %v5159 = vadd.f32 %v5063, %v5136
          %v5160 = vadd.f32 %v5064, %v5126
          %v5161 = vadd.f32 %v5065, %v5137
          %v5162 = vadd.f32 %v5066, %v5138
          %v5163 = vlaneseq
          %v5164 = vshrl.u32 %v5163, 7
          %v5165 = vsub.s32 0, %v5164
          %v5166 = vrot.slane %v467, %v5165
          %v5167 = vlaneseq
          %v5168 = vshrl.u32 %v5167, 7
          %v5169 = vsub.s32 1, %v5168
          %v5170 = vrot.slane %v467, %v5169
          %5171 = vrot.lane.b32.xlu0 %v5166, 98
          %v5172 = vpop.permute.xlu0 %5171
          %5173 = vrot.lane.b32.xlu0 %v5170, 98
          %v5174 = vpop.permute.xlu0 %5173
          %vm5175 = vcmask 801792
          %v5176 = vsel %vm5175, %v5172, %v5174
          %v5180 = vmul.f32 %v5151, %v5172
          %v5181 = vmul.f32 %v5152, %v5176
          %v5182 = vmul.f32 %v5153, %v5174
          %v5183 = vmul.f32 %v5154, %v5172
          %v5184 = vmul.f32 %v5155, %v5176
          %v5185 = vmul.f32 %v5156, %v5174
          %v5186 = vmul.f32 %v5157, %v5172
          %v5187 = vmul.f32 %v5158, %v5176
          %v5188 = vmul.f32 %v5159, %v5174
          %v5189 = vmul.f32 %v5160, %v5172
          %v5190 = vmul.f32 %v5161, %v5176
          %v5191 = vmul.f32 %v5162, %v5174
          %5204 = vrot.lane.b32.xlu0 %v5180, 124
          %v5205 = vpop.permute.xlu0 %5204
          %5206 = vrot.lane.b32.xlu0 %v5181, 124
          %v5207 = vpop.permute.xlu0 %5206
          %5208 = vrot.lane.b32.xlu0 %v5182, 124
          %v5209 = vpop.permute.xlu0 %5208
          %5210 = vrot.lane.b32.xlu0 %v5183, 124
          %v5211 = vpop.permute.xlu0 %5210
          %5212 = vrot.lane.b32.xlu0 %v5184, 124
          %v5213 = vpop.permute.xlu0 %5212
          %5214 = vrot.lane.b32.xlu0 %v5185, 124
          %v5215 = vpop.permute.xlu0 %5214
          %5216 = vrot.lane.b32.xlu0 %v5186, 124
          %v5217 = vpop.permute.xlu0 %5216
          %5218 = vrot.lane.b32.xlu0 %v5187, 124
          %v5219 = vpop.permute.xlu0 %5218
          %5220 = vrot.lane.b32.xlu0 %v5188, 124
          %v5221 = vpop.permute.xlu0 %5220
          %5222 = vrot.lane.b32.xlu0 %v5189, 124
          %v5223 = vpop.permute.xlu0 %5222
          %5224 = vrot.lane.b32.xlu0 %v5190, 124
          %v5225 = vpop.permute.xlu0 %5224
          %5226 = vrot.lane.b32.xlu0 %v5191, 124
          %v5227 = vpop.permute.xlu0 %5226
          %v5228 = vsel %vm1351, %v5205, %v5207
          %v5229 = vsel %vm1351, %v5207, %v5209
          %v5230 = vsel %vm1351, %v5211, %v5213
          %v5231 = vsel %vm1351, %v5213, %v5215
          %v5232 = vsel %vm1351, %v5217, %v5219
          %v5233 = vsel %vm1351, %v5219, %v5221
          %v5234 = vsel %vm1351, %v5223, %v5225
          %v5235 = vsel %vm1351, %v5225, %v5227
          %v5248 = vadd.f32 %v4659, %v5228
          %v5249 = vadd.f32 %v4660, %v5229
          %v5250 = vadd.f32 %v4661, %v5209
          %v5251 = vadd.f32 %v4662, %v5230
          %v5252 = vadd.f32 %v4663, %v5231
          %v5253 = vadd.f32 %v4664, %v5215
          %v5254 = vadd.f32 %v4665, %v5232
          %v5255 = vadd.f32 %v4666, %v5233
          %v5256 = vadd.f32 %v4667, %v5221
          %v5257 = vadd.f32 %v4668, %v5234
          %v5258 = vadd.f32 %v4669, %v5235
          %v5259 = vadd.f32 %v4670, %v5227
          %s5260 = scalar_lea.vmem %s10, %s1703
          %v5261 = vld [vmem:[%s5260] sm:$0xff]
          %v5262 = vld [vmem:[%s5260 + $0x8] sm:$0xff]
          %v5263 = vld [vmem:[%s5260 + $0x10] sm:$0xff]
          %v5264 = vld [vmem:[%s5260 + $0x18] sm:$0xff]
          %s5265 = scalar_lea.vmem %s7, %s1703
          %v5266 = vld [vmem:[%s5265] sm:$0xff]
          %v5267 = vld [vmem:[%s5265 + $0x8] sm:$0xff]
          %v5268 = vld [vmem:[%s5265 + $0x10] sm:$0xff]
          %v5269 = vld [vmem:[%s5265 + $0x18] sm:$0xff]
          %5271 = vset.pattern.permute.xlu0 0
          %5272 = vperm.xlu0 %5271, %v5266
          %v5273 = vpop.permute.xlu0 %5272
          %5276 = vset.pattern.permute.xlu0 0
          %5277 = vperm.xlu0 %5276, %v5267
          %v5278 = vpop.permute.xlu0 %5277
          %5281 = vset.pattern.permute.xlu0 0
          %5282 = vperm.xlu0 %5281, %v5268
          %v5283 = vpop.permute.xlu0 %5282
          %5286 = vset.pattern.permute.xlu0 0
          %5287 = vperm.xlu0 %5286, %v5269
          %v5288 = vpop.permute.xlu0 %5287
          %v5290 = vmul.f32 %v1863, %v5273
          %v5291 = vmul.f32 %v1864, %v5273
          %v5292 = vmul.f32 %v1866, %v5278
          %v5293 = vmul.f32 %v1867, %v5278
          %v5294 = vmul.f32 %v1869, %v5283
          %v5295 = vmul.f32 %v1870, %v5283
          %v5296 = vmul.f32 %v1872, %v5288
          %v5297 = vmul.f32 %v1873, %v5288
          %5299 = vset.pattern.permute.xlu0 0
          %5300 = vperm.xlu0 %5299, %v5261
          %v5301 = vpop.permute.xlu0 %5300
          %5304 = vset.pattern.permute.xlu0 0
          %5305 = vperm.xlu0 %5304, %v5262
          %v5306 = vpop.permute.xlu0 %5305
          %5309 = vset.pattern.permute.xlu0 0
          %5310 = vperm.xlu0 %5309, %v5263
          %v5311 = vpop.permute.xlu0 %5310
          %5314 = vset.pattern.permute.xlu0 0
          %5315 = vperm.xlu0 %5314, %v5264
          %v5316 = vpop.permute.xlu0 %5315
          %v5318 = vadd.f32 %v5290, %v5301
          %v5319 = vadd.f32 %v5291, %v5301
          %v5320 = vadd.f32 %v5292, %v5306
          %v5321 = vadd.f32 %v5293, %v5306
          %v5322 = vadd.f32 %v5294, %v5311
          %v5323 = vadd.f32 %v5295, %v5311
          %v5324 = vadd.f32 %v5296, %v5316
          %v5325 = vadd.f32 %v5297, %v5316
          %v5326 = vmax.f32 %v5318, 0.0
          %v5327 = vmax.f32 %v5319, 0.0
          %v5328 = vmax.f32 %v5320, 0.0
          %v5329 = vmax.f32 %v5321, 0.0
          %v5330 = vmax.f32 %v5322, 0.0
          %v5331 = vmax.f32 %v5323, 0.0
          %v5332 = vmax.f32 %v5324, 0.0
          %v5333 = vmax.f32 %v5325, 0.0
          %v5334 = vmin.f32 %v5326, 6.0
          %v5335 = vmin.f32 %v5327, 6.0
          %v5336 = vmin.f32 %v5328, 6.0
          %v5337 = vmin.f32 %v5329, 6.0
          %v5338 = vmin.f32 %v5330, 6.0
          %v5339 = vmin.f32 %v5331, 6.0
          %v5340 = vmin.f32 %v5332, 6.0
          %v5341 = vmin.f32 %v5333, 6.0
          %5342 = vset.pattern.permute.xlu0 1
          %5343 = vperm.xlu0 %5342, %v5261
          %v5344 = vpop.permute.xlu0 %5343
          %5346 = vset.pattern.permute.xlu0 1
          %5347 = vperm.xlu0 %5346, %v5262
          %v5348 = vpop.permute.xlu0 %5347
          %5350 = vset.pattern.permute.xlu0 1
          %5351 = vperm.xlu0 %5350, %v5263
          %v5352 = vpop.permute.xlu0 %5351
          %5354 = vset.pattern.permute.xlu0 1
          %5355 = vperm.xlu0 %5354, %v5264
          %v5356 = vpop.permute.xlu0 %5355
          %v5358 = vadd.f32 %v4727, %v5344
          %v5359 = vadd.f32 %v4728, %v5344
          %v5360 = vadd.f32 %v4729, %v5344
          %v5361 = vadd.f32 %v4730, %v5348
          %v5362 = vadd.f32 %v4731, %v5348
          %v5363 = vadd.f32 %v4732, %v5348
          %v5364 = vadd.f32 %v4733, %v5352
          %v5365 = vadd.f32 %v4734, %v5352
          %v5366 = vadd.f32 %v4735, %v5352
          %v5367 = vadd.f32 %v4736, %v5356
          %v5368 = vadd.f32 %v4737, %v5356
          %v5369 = vadd.f32 %v4738, %v5356
          %v5370 = vmax.f32 %v5358, 0.0
          %v5371 = vmax.f32 %v5359, 0.0
          %v5372 = vmax.f32 %v5360, 0.0
          %v5373 = vmax.f32 %v5361, 0.0
          %v5374 = vmax.f32 %v5362, 0.0
          %v5375 = vmax.f32 %v5363, 0.0
          %v5376 = vmax.f32 %v5364, 0.0
          %v5377 = vmax.f32 %v5365, 0.0
          %v5378 = vmax.f32 %v5366, 0.0
          %v5379 = vmax.f32 %v5367, 0.0
          %v5380 = vmax.f32 %v5368, 0.0
          %v5381 = vmax.f32 %v5369, 0.0
          %v5382 = vmin.f32 %v5370, 6.0
          %v5383 = vmin.f32 %v5371, 6.0
          %v5384 = vmin.f32 %v5372, 6.0
          %v5385 = vmin.f32 %v5373, 6.0
          %v5386 = vmin.f32 %v5374, 6.0
          %v5387 = vmin.f32 %v5375, 6.0
          %v5388 = vmin.f32 %v5376, 6.0
          %v5389 = vmin.f32 %v5377, 6.0
          %v5390 = vmin.f32 %v5378, 6.0
          %v5391 = vmin.f32 %v5379, 6.0
          %v5392 = vmin.f32 %v5380, 6.0
          %v5393 = vmin.f32 %v5381, 6.0
          %5406 = vrot.lane.b32.xlu0 %v5382, 17
          %v5407 = vpop.permute.xlu0 %5406
          %5408 = vrot.lane.b32.xlu0 %v5383, 17
          %v5409 = vpop.permute.xlu0 %5408
          %5410 = vrot.lane.b32.xlu0 %v5384, 17
          %v5411 = vpop.permute.xlu0 %5410
          %5412 = vrot.lane.b32.xlu0 %v5385, 17
          %v5413 = vpop.permute.xlu0 %5412
          %5414 = vrot.lane.b32.xlu0 %v5386, 17
          %v5415 = vpop.permute.xlu0 %5414
          %5416 = vrot.lane.b32.xlu0 %v5387, 17
          %v5417 = vpop.permute.xlu0 %5416
          %5418 = vrot.lane.b32.xlu0 %v5388, 17
          %v5419 = vpop.permute.xlu0 %5418
          %5420 = vrot.lane.b32.xlu0 %v5389, 17
          %v5421 = vpop.permute.xlu0 %5420
          %5422 = vrot.lane.b32.xlu0 %v5390, 17
          %v5423 = vpop.permute.xlu0 %5422
          %5424 = vrot.lane.b32.xlu0 %v5391, 17
          %v5425 = vpop.permute.xlu0 %5424
          %5426 = vrot.lane.b32.xlu0 %v5392, 17
          %v5427 = vpop.permute.xlu0 %5426
          %5428 = vrot.lane.b32.xlu0 %v5393, 17
          %v5429 = vpop.permute.xlu0 %5428
          %vm5430 = vcmask 138240
          %v5431 = vsel %vm5430, %v5407, %v5409
          %v5432 = vsel %vm5430, %v5409, %v5411
          %v5433 = vsel %vm5430, %v5413, %v5415
          %v5434 = vsel %vm5430, %v5415, %v5417
          %v5435 = vsel %vm5430, %v5419, %v5421
          %v5436 = vsel %vm5430, %v5421, %v5423
          %v5437 = vsel %vm5430, %v5425, %v5427
          %v5438 = vsel %vm5430, %v5427, %v5429
          %v5447 = vadd.f32 %v5334, %v5431
          %v5448 = vadd.f32 %v5335, %v5432
          %v5449 = vadd.f32 %v5336, %v5433
          %v5450 = vadd.f32 %v5337, %v5434
          %v5451 = vadd.f32 %v5338, %v5435
          %v5452 = vadd.f32 %v5339, %v5436
          %v5453 = vadd.f32 %v5340, %v5437
          %v5454 = vadd.f32 %v5341, %v5438
          %5455 = vset.pattern.permute.xlu0 2
          %5456 = vperm.xlu0 %5455, %v5261
          %v5457 = vpop.permute.xlu0 %5456
          %5459 = vset.pattern.permute.xlu0 2
          %5460 = vperm.xlu0 %5459, %v5262
          %v5461 = vpop.permute.xlu0 %5460
          %5463 = vset.pattern.permute.xlu0 2
          %5464 = vperm.xlu0 %5463, %v5263
          %v5465 = vpop.permute.xlu0 %5464
          %5467 = vset.pattern.permute.xlu0 2
          %5468 = vperm.xlu0 %5467, %v5264
          %v5469 = vpop.permute.xlu0 %5468
          %v5471 = vadd.f32 %v5248, %v5457
          %v5472 = vadd.f32 %v5249, %v5457
          %v5473 = vadd.f32 %v5250, %v5457
          %v5474 = vadd.f32 %v5251, %v5461
          %v5475 = vadd.f32 %v5252, %v5461
          %v5476 = vadd.f32 %v5253, %v5461
          %v5477 = vadd.f32 %v5254, %v5465
          %v5478 = vadd.f32 %v5255, %v5465
          %v5479 = vadd.f32 %v5256, %v5465
          %v5480 = vadd.f32 %v5257, %v5469
          %v5481 = vadd.f32 %v5258, %v5469
          %v5482 = vadd.f32 %v5259, %v5469
          %v5483 = vmax.f32 %v5471, 0.0
          %v5484 = vmax.f32 %v5472, 0.0
          %v5485 = vmax.f32 %v5473, 0.0
          %v5486 = vmax.f32 %v5474, 0.0
          %v5487 = vmax.f32 %v5475, 0.0
          %v5488 = vmax.f32 %v5476, 0.0
          %v5489 = vmax.f32 %v5477, 0.0
          %v5490 = vmax.f32 %v5478, 0.0
          %v5491 = vmax.f32 %v5479, 0.0
          %v5492 = vmax.f32 %v5480, 0.0
          %v5493 = vmax.f32 %v5481, 0.0
          %v5494 = vmax.f32 %v5482, 0.0
          %v5495 = vmin.f32 %v5483, 6.0
          %v5496 = vmin.f32 %v5484, 6.0
          %v5497 = vmin.f32 %v5485, 6.0
          %v5498 = vmin.f32 %v5486, 6.0
          %v5499 = vmin.f32 %v5487, 6.0
          %v5500 = vmin.f32 %v5488, 6.0
          %v5501 = vmin.f32 %v5489, 6.0
          %v5502 = vmin.f32 %v5490, 6.0
          %v5503 = vmin.f32 %v5491, 6.0
          %v5504 = vmin.f32 %v5492, 6.0
          %v5505 = vmin.f32 %v5493, 6.0
          %v5506 = vmin.f32 %v5494, 6.0
          %5519 = vrot.lane.b32.xlu0 %v5495, 34
          %v5520 = vpop.permute.xlu0 %5519
          %5521 = vrot.lane.b32.xlu0 %v5496, 34
          %v5522 = vpop.permute.xlu0 %5521
          %5523 = vrot.lane.b32.xlu0 %v5497, 34
          %v5524 = vpop.permute.xlu0 %5523
          %5525 = vrot.lane.b32.xlu0 %v5498, 34
          %v5526 = vpop.permute.xlu0 %5525
          %5527 = vrot.lane.b32.xlu0 %v5499, 34
          %v5528 = vpop.permute.xlu0 %5527
          %5529 = vrot.lane.b32.xlu0 %v5500, 34
          %v5530 = vpop.permute.xlu0 %5529
          %5531 = vrot.lane.b32.xlu0 %v5501, 34
          %v5532 = vpop.permute.xlu0 %5531
          %5533 = vrot.lane.b32.xlu0 %v5502, 34
          %v5534 = vpop.permute.xlu0 %5533
          %5535 = vrot.lane.b32.xlu0 %v5503, 34
          %v5536 = vpop.permute.xlu0 %5535
          %5537 = vrot.lane.b32.xlu0 %v5504, 34
          %v5538 = vpop.permute.xlu0 %5537
          %5539 = vrot.lane.b32.xlu0 %v5505, 34
          %v5540 = vpop.permute.xlu0 %5539
          %5541 = vrot.lane.b32.xlu0 %v5506, 34
          %v5542 = vpop.permute.xlu0 %5541
          %vm5543 = vcmask 277504
          %v5544 = vsel %vm5543, %v5520, %v5522
          %v5545 = vsel %vm5543, %v5522, %v5524
          %v5546 = vsel %vm5543, %v5526, %v5528
          %v5547 = vsel %vm5543, %v5528, %v5530
          %v5548 = vsel %vm5543, %v5532, %v5534
          %v5549 = vsel %vm5543, %v5534, %v5536
          %v5550 = vsel %vm5543, %v5538, %v5540
          %v5551 = vsel %vm5543, %v5540, %v5542
          %v5560 = vadd.f32 %v5447, %v5544
          %v5561 = vadd.f32 %v5448, %v5545
          %v5562 = vadd.f32 %v5449, %v5546
          %v5563 = vadd.f32 %v5450, %v5547
          %v5564 = vadd.f32 %v5451, %v5548
          %v5565 = vadd.f32 %v5452, %v5549
          %v5566 = vadd.f32 %v5453, %v5550
          %v5567 = vadd.f32 %v5454, %v5551
          %v5568 = vld [vmem:[%s454] sm:$0xff]
          %v5569 = vld [vmem:[%s454 + $0x8] sm:$0xff]
          %v5570 = vld [vmem:[%s454 + $0x10] sm:$0xff]
          %v5571 = vld [vmem:[%s454 + $0x18] sm:$0xff]
          %s5572 = smul.u32 %s1698, 16
          %s5573 = scalar_lea.vmem %s11, %s5572
          %v5574 = vld [vmem:[%s5573] sm:$0xff]
          %v5575 = vld [vmem:[%s5573 + $0x8] sm:$0xff]
          %v5577 = vsel %vm762, %v5574, 0
          %v5580 = vsel %vm762, %v5575, 0
          %5582 = vmatprep.subr.mxu0 0.0
          %5583 = vmatpush1.msra.mxu0 0.0
          %5584 = vmatprep.subr.mxu0 0.0
          %5585 = vmatpush1.msra.mxu0 0.0
          %5586 = vmatprep.subr.mxu0 0.0
          %5587 = vmatpush1.msra.mxu0 0.0
          %5588 = vmatprep.subr.mxu0 0.0
          %5589 = vmatpush1.msra.mxu0 0.0
          %5590 = vmatprep.subr.mxu0 0.0
          %5591 = vmatpush1.msra.mxu0 0.0
          %5592 = vmatprep.subr.mxu0 0.0
          %5593 = vmatpush1.msra.mxu0 0.0
          %5594 = vmatprep.subr.mxu0 0.0
          %5595 = vmatpush1.msra.mxu0 0.0
          %5596 = vmatprep.subr.mxu0 0.0
          %5597 = vmatpush1.msra.mxu0 0.0
          %5598 = vmatprep.subr.mxu0 0.0
          %5599 = vmatpush1.msra.mxu0 0.0
          %5600 = vmatprep.subr.mxu0 0.0
          %5601 = vmatpush1.msra.mxu0 0.0
          %5602 = vmatprep.subr.mxu0 0.0
          %5603 = vmatpush1.msra.mxu0 0.0
          %5604 = vmatprep.subr.mxu0 0.0
          %5605 = vmatpush1.msra.mxu0 0.0
          %5606 = vmatprep.subr.mxu0 %v5567
          %5607 = vmatpush1.msra.mxu0 %v5566
          %5608 = vmatprep.subr.mxu0 %v5565
          %5609 = vmatpush1.msra.mxu0 %v5564
          %5610 = vmatprep.subr.mxu0 %v5563
          %5611 = vmatpush1.msra.mxu0 %v5562
          %5612 = vmatprep.subr.mxu0 %v5561
          %5613 = vmatpush1.msra.mxu0 %v5560
          %5614 = vmatprep.subr.mxu0 0.0
          %5615 = vmatpush2.msra.mxu0 0.0
          %5616 = vmatprep.subr.mxu0 0.0
          %5617 = vmatpush2.msra.mxu0 0.0
          %5618 = vmatprep.subr.mxu0 0.0
          %5619 = vmatpush2.msra.mxu0 0.0
          %5620 = vmatprep.subr.mxu0 0.0
          %5621 = vmatpush2.msra.mxu0 0.0
          %5622 = vmatprep.subr.mxu0 0.0
          %5623 = vmatpush2.msra.mxu0 0.0
          %5624 = vmatprep.subr.mxu0 0.0
          %5625 = vmatpush2.msra.mxu0 0.0
          %5626 = vmatprep.subr.mxu0 0.0
          %5627 = vmatpush2.msra.mxu0 0.0
          %5628 = vmatprep.subr.mxu0 0.0
          %5629 = vmatpush2.msra.mxu0 0.0
          %5630 = vmatprep.subr.mxu0 0.0
          %5631 = vmatpush2.msra.mxu0 0.0
          %5632 = vmatprep.subr.mxu0 0.0
          %5633 = vmatpush2.msra.mxu0 0.0
          %5634 = vmatprep.subr.mxu0 0.0
          %5635 = vmatpush2.msra.mxu0 0.0
          %5636 = vmatprep.subr.mxu0 0.0
          %5637 = vmatpush2.msra.mxu0 0.0
          %5638 = vmatprep.subr.mxu0 0.0
          %5639 = vmatpush2.msra.mxu0 0.0
          %5640 = vmatprep.subr.mxu0 0.0
          %5641 = vmatpush2.msra.mxu0 0.0
          %5642 = vmatprep.subr.mxu0 0.0
          %5643 = vmatpush2.msra.mxu0 0.0
          %5644 = vmatprep.subr.mxu0 0.0
          %5645 = vmatpush2.msra.mxu0 0.0
          %5646 = vmatprep.mubr.f32.mxu0 0.0
          %5647 = vmatmul.mubr.f32.gmra.mxu0 %v5577
          %v5648 = vpop.f32.mrf.mxu0
          %v5649 = vadd.f32 0.0, %v5648
          %v5650 = vpop.f32.mrf.mxu0
          %v5651 = vadd.f32 0.0, %v5650
          %5652 = vmatprep.mubr.f32.mxu0 0.0
          %5653 = vmatmul.mubr.f32.gmra.mxu0 %v5580
          %v5654 = vpop.f32.mrf.mxu0
          %v5655 = vadd.f32 0.0, %v5654
          %v5656 = vpop.f32.mrf.mxu0
          %v5657 = vadd.f32 0.0, %v5656
          %5658 = vdwg.mxu0
          %v5659 = vadd.f32 %v5568, %v5649
          %v5660 = vadd.f32 %v5569, %v5651
          %v5661 = vadd.f32 %v5570, %v5655
          %v5662 = vadd.f32 %v5571, %v5657
          %5663 = vst [vmem:[%s454] sm:$0xff] %v5659
          %5664 = vst [vmem:[%s454 + $0x8] sm:$0xff] %v5660
          %5665 = vst [vmem:[%s454 + $0x10] sm:$0xff] %v5661
          %5666 = vst [vmem:[%s454 + $0x18] sm:$0xff] %v5662
        $region81: #{emcam_forward.1} parent=71 // loop_footer
          %s1702 = sadd.s32 1, %s1698
        $region82: #{emcam_forward.1} parent=71 // loop_footer_branch
          %1697 = sbr.rel target = $region78
        $region83: #{emcam_forward.1} parent=71 // loop_exit
          _
        %p5667 = scmp.lt.s32.totalorder %s25, 1
        %s5668 = scalar_select %p5667, %s25, 1
        %s5669 = smul.addr %s5668, 4
        %s5670 = smul.addr %s5669, 8
        %s5671 = scalar_lea.vmem %s13, %s5670
        // Predicated region
        $region84: #{emcam_forward.1} parent=71 // pred_check
          %p5672 = pneg %p321
        $region85: #{emcam_forward.1} parent=71 // pred_check_branch
          %5674 = sbr.rel (%p5672) target = $region87
        $region86: #{emcam_forward.1} parent=71 // pred_region
          _
        $region87: #{emcam_forward.1} parent=71 // pred_fallthru
          _
      $region72: #{emcam_forward.1} parent=5 // pred_fallthru
        _
      %p5675 = scmp.le.s32.totalorder 2, %s20
      // Predicated region
      $region88: #{emcam_forward.1} parent=5 // pred_check
        %p5676 = pneg %p5675
      $region89: #{emcam_forward.1} parent=5 // pred_check_branch
        %5678 = sbr.rel (%p5676) target = $region91
      $region90: #{emcam_forward.1} parent=5 // pred_region
        %s5679 = ssub.s32 %s20, 2
        // Predicated region
        $region92: #{emcam_forward.1} parent=90 // pred_check
          %p5680 = pneg %p327
        $region93: #{emcam_forward.1} parent=90 // pred_check_branch
          %5682 = sbr.rel (%p5680) target = $region95
        $region94: #{emcam_forward.1} parent=90 // pred_region
          %p5683 = scmp.lt.s32.totalorder %s26, 1
          %s5684 = scalar_select %p5683, %s26, 1
          %s5685 = smul.addr %s5684, 4
          %s5686 = smul.addr %s5685, 8
          %s5687 = scalar_lea.vmem %s13, %s5686
        $region95: #{emcam_forward.1} parent=90 // pred_fallthru
          _
      $region91: #{emcam_forward.1} parent=5 // pred_fallthru
        _
    $region6: #{emcam_forward.1} parent=1 // loop_footer
      %s24 = sadd.s32 1, %s20
    $region7: #{emcam_forward.1} parent=1 // loop_footer_branch
      %19 = sbr.rel target = $region3
    $region8: #{emcam_forward.1} parent=1 // loop_exit
      _
    %5688 = vsyncpa [#allocation5], 1
    %s5689 = scalar_lea.sflag [#allocation5], 1
    %5690 = vsyncpa %s5689, 1

</llo_original>
